<compile_context>
chip_gen: v5e
topology: v5e:2x2
jax: 0.10.0
libtpu: 0.0.40
codegen_flags: <defaults>
</compile_context>

<pallas_src>
import functools

import jax
import jax.numpy as jnp
from jax.experimental import pallas as pl
from jax.experimental.pallas import tpu as pltpu


# ---------------------------------------------------------------------------
# Fused Pallas kernel: all 3 targets x 2 sources for one batch element.
# ---------------------------------------------------------------------------
def _cross_modal_kernel(x_ref, wqkv_ref, bqkv_ref, wo_ref, bo2_ref,
                        out_ref, qkv_sc, *, feature_dim, n_tokens, chunk):
    C = feature_dim
    N = n_tokens
    M = chunk

    # ---- Q/K/V projections for every modality, computed exactly once. ----
    # x_ref: (C, 3N) f32 = [camera | lidar | radar] tokens, channel-major.
    xb = x_ref[...].astype(jnp.bfloat16)                              # (C, 3N)
    qkv = jnp.dot(wqkv_ref[...], xb,
                  preferred_element_type=jnp.float32) + bqkv_ref[...]  # (3C, 3N)
    # Stage bf16 projections in VMEM scratch; chunks are re-sliced from here.
    qkv_sc[...] = qkv.astype(jnp.bfloat16)

    wo_b = wo_ref[...]                                                # (C, C) bf16
    bo2 = bo2_ref[...]                                                # (C, 1) f32 (= 2*bo)

    for t in range(3):                                                # target modality
        for mc in range(N // M):                                      # query-row chunk
            col0 = t * N + mc * M
            q_c = qkv_sc[0:C, col0:col0 + M]                          # (C, M) bf16 (scale pre-folded)
            acc = jnp.zeros((M, C), jnp.float32)                      # token-major accumulator
            for s in range(3):                                        # source modality
                if s == t:
                    continue
                k_s = qkv_sc[C:2 * C, s * N:(s + 1) * N]              # (C, N) bf16
                v_s = qkv_sc[2 * C:3 * C, s * N:(s + 1) * N]          # (C, N) bf16
                # scores[i, j] = sum_c q_c[c, i] * k_s[c, j]   (scale already folded)
                scores = jax.lax.dot_general(
                    q_c, k_s, (((0,), (0,)), ((), ())),
                    preferred_element_type=jnp.float32)               # (M, N) f32
                mrow = jnp.max(scores, axis=-1, keepdims=True)
                e = jnp.exp(scores - mrow)                            # f32, un-normalized, e <= 1
                d = jnp.sum(e, axis=-1, keepdims=True)                # (M, 1)
                # pv[i, c] = sum_j e[i, j] * v_s[c, j]
                pv = jax.lax.dot_general(
                    e.astype(jnp.bfloat16), v_s, (((1,), (1,)), ((), ())),
                    preferred_element_type=jnp.float32)               # (M, C)
                # Deferred softmax normalization: scale the (M, C) result, not (M, N).
                acc = acc + pv * pl.reciprocal(d, approx=True)
            # Single output projection for both sources:
            #   out_proj(ao1) + out_proj(ao2) == Wo @ (ao1 + ao2) + 2*bo
            proj = jax.lax.dot_general(
                wo_b, acc.astype(jnp.bfloat16), (((1,), (1,)), ((), ())),
                preferred_element_type=jnp.float32)                   # (C, M)
            x_c = x_ref[:, col0:col0 + M]                             # residual (C, M) f32
            out_ref[:, col0:col0 + M] = (x_c + proj + bo2).astype(out_ref.dtype)


# ---------------------------------------------------------------------------
# Wrapper (NCHW in / NCHW out; only free reshapes + one XLA concat outside)
# ---------------------------------------------------------------------------
@functools.partial(jax.jit, static_argnames=("feature_dim",))
def cross_modal_attention(camera, lidar, radar, params, feature_dim):
    """camera/lidar/radar: NCHW (B, C, H, W). Returns dict of NCHW outputs."""
    B, C, H, W = camera.shape
    N = H * W
    chunk = 128 if N % 128 == 0 else N

    # Free reshapes + one concat done by XLA (outside the kernel).
    x_all = jnp.concatenate([camera.reshape(B, C, N),
                             lidar.reshape(B, C, N),
                             radar.reshape(B, C, N)], axis=-1)        # (B, C, 3N)

    wq, bq, wk, bk, wv, bv, wo, bo = params                           # (C, C) weights, (C,) biases
    scale = 1.0 / (float(feature_dim) ** 0.5)
    # Fold the attention scale into Wq/bq; merge Q/K/V; pre-cast weights to bf16.
    wqkv = jnp.concatenate([wq * scale, wk, wv], axis=0).astype(jnp.bfloat16)  # (3C, C)
    bqkv = jnp.concatenate([bq * scale, bk, bv]).reshape(3 * C, 1)             # (3C, 1) f32
    wo_b = wo.astype(jnp.bfloat16)                                              # (C, C)
    bo2 = (2.0 * bo).reshape(C, 1)                                              # (C, 1) f32

    feat_spec = pl.BlockSpec((pl.Squeezed(), C, 3 * N), lambda b: (b, 0, 0))

    def bcast_spec(shape):
        return pl.BlockSpec(shape, lambda b: (0,) * len(shape))

    kernel = functools.partial(_cross_modal_kernel, feature_dim=feature_dim,
                               n_tokens=N, chunk=chunk)
    # NOTE: at this size VMEM is far under budget on all generations; if H*W
    # grows, re-derive the per-step budget (chunked scores keep it O(M*N)).
    out = pl.pallas_call(
        kernel,
        out_shape=jax.ShapeDtypeStruct((B, C, 3 * N), camera.dtype),
        grid=(B,),
        in_specs=[feat_spec,
                  bcast_spec((3 * C, C)), bcast_spec((3 * C, 1)),
                  bcast_spec((C, C)), bcast_spec((C, 1))],
        out_specs=feat_spec,
        scratch_shapes=[pltpu.VMEM((3 * C, 3 * N), jnp.bfloat16)],
        compiler_params=pltpu.CompilerParams(
            dimension_semantics=("parallel",)),
    )(x_all, wqkv, bqkv, wo_b, bo2)

    return {"camera": out[:, :, 0 * N:1 * N].reshape(B, C, H, W),
            "lidar": out[:, :, 1 * N:2 * N].reshape(B, C, H, W),
            "radar": out[:, :, 2 * N:3 * N].reshape(B, C, H, W)}


# ---------------------------------------------------------------------------
# Pure-JAX reference (f32, highest precision) for correctness check
# ---------------------------------------------------------------------------
def reference(camera, lidar, radar, params, feature_dim):
    wq, bq, wk, bk, wv, bv, wo, bo = params
    hp = jax.lax.Precision.HIGHEST
    B, C, H, W = camera.shape
    N = H * W

    def proj(x, w, b):                       # x: (B, C, N)
        return jnp.einsum("oc,bcn->bon", w, x, precision=hp) + b[None, :, None]

    toks = {"camera": camera.reshape(B, C, N),
            "lidar": lidar.reshape(B, C, N),
            "radar": radar.reshape(B, C, N)}
    out = {}
    for tname, xt in toks.items():
        q = proj(xt, wq, bq)
        attended = xt
        for sname, xsrc in toks.items():
            if sname == tname:
                continue
            k = proj(xsrc, wk, bk)
            v = proj(xsrc, wv, bv)
            scores = jnp.einsum("bci,bcj->bij", q, k,
                                precision=hp) / (feature_dim ** 0.5)
            p = jax.nn.softmax(scores, axis=-1)
            ao = jnp.einsum("bij,bcj->bci", p, v, precision=hp)
            attended = attended + proj(ao, wo, bo)
        out[tname] = attended.reshape(B, C, H, W)
    return out


# ---------------------------------------------------------------------------
# Main
# ---------------------------------------------------------------------------
if __name__ == "__main__":
    B, C, H, W = 2, 32, 16, 16      # feature_dim = 32, N = 256
    feature_dim = C

    key = jax.random.PRNGKey(0)
    keys = jax.random.split(key, 11)

    camera = jax.random.normal(keys[0], (B, C, H, W), jnp.float32)
    lidar = jax.random.normal(keys[1], (B, C, H, W), jnp.float32)
    radar = jax.random.normal(keys[2], (B, C, H, W), jnp.float32)

    # 1x1 conv params: weight (C_out, C_in), bias (C,)
    def init_linear(kw, kb):
        w = jax.random.normal(kw, (C, C), jnp.float32) * (1.0 / (C ** 0.5))
        b = jax.random.normal(kb, (C,), jnp.float32) * 0.01
        return w, b

    wq, bq = init_linear(keys[3], keys[4])
    wk, bk = init_linear(keys[5], keys[6])
    wv, bv = init_linear(keys[7], keys[8])
    wo, bo = init_linear(keys[9], keys[10])
    params = (wq, bq, wk, bk, wv, bv, wo, bo)

    out = cross_modal_attention(camera, lidar, radar, params, feature_dim)
    out = jax.tree_util.tree_map(jax.block_until_ready, out)

    ref = reference(camera, lidar, radar, params, feature_dim)
    for name in ("camera", "lidar", "radar"):
        assert out[name].shape == (B, C, H, W)
        assert bool(jnp.all(jnp.isfinite(out[name])))
        # bf16 MXU operands with f32 accumulation vs f32-highest reference.
        assert jnp.allclose(out[name], ref[name], rtol=3e-2, atol=3e-2), name

    print("KERNEL_OK")
</pallas_src>

<mosaic_0001>
module attributes {stable_mosaic.version = 11 : i64} {
  func.func @_cross_modal_kernel(%arg0: i32, %arg1: memref<1x32x768xf32, #tpu.memory_space<vmem>>, %arg2: memref<96x32xbf16, #tpu.memory_space<vmem>>, %arg3: memref<96x1xf32, #tpu.memory_space<vmem>>, %arg4: memref<32x32xbf16, #tpu.memory_space<vmem>>, %arg5: memref<32x1xf32, #tpu.memory_space<vmem>>, %arg6: memref<1x32x768xf32, #tpu.memory_space<vmem>>, %arg7: memref<96x768xbf16, #tpu.memory_space<vmem>>) attributes {dimension_semantics = [#tpu.dimension_semantics<parallel>], iteration_bounds = array<i64: 2>, scalar_prefetch = 0 : i64, scratch_operands = 1 : i64, tpu.core_type = #tpu.core_type<tc>, window_params = [{transform_indices = @transform_0, window_bounds = array<i64: 1, 32, 768>}, {pipeline_mode = #tpu.pipeline_mode<synchronous>, transform_indices = @transform_1, window_bounds = array<i64: 96, 32>}, {pipeline_mode = #tpu.pipeline_mode<synchronous>, transform_indices = @transform_2, window_bounds = array<i64: 96, 1>}, {pipeline_mode = #tpu.pipeline_mode<synchronous>, transform_indices = @transform_3, window_bounds = array<i64: 32, 32>}, {pipeline_mode = #tpu.pipeline_mode<synchronous>, transform_indices = @transform_4, window_bounds = array<i64: 32, 1>}, {transform_indices = @transform_5, window_bounds = array<i64: 1, 32, 768>}]} {
    %c0 = arith.constant 0 : index
    %c0_0 = arith.constant 0 : index
    %c0_1 = arith.constant 0 : index
    %0 = vector.load %arg1[%c0, %c0_0, %c0_1] : memref<1x32x768xf32, #tpu.memory_space<vmem>>, vector<1x32x768xf32>
    %1 = vector.shape_cast %0 : vector<1x32x768xf32> to vector<32x768xf32>
    %2 = arith.truncf %1 : vector<32x768xf32> to vector<32x768xbf16>
    %c0_2 = arith.constant 0 : index
    %c0_3 = arith.constant 0 : index
    %3 = vector.load %arg2[%c0_2, %c0_3] : memref<96x32xbf16, #tpu.memory_space<vmem>>, vector<96x32xbf16>
    %cst = arith.constant dense<0.000000e+00> : vector<96x768xf32>
    %4 = tpu.matmul %3, %2, %cst {dimension_numbers = #tpu.dot_dimension_numbers<[1], [0], [0], [1], [0, 0, 1, 1], [], []>} : vector<96x32xbf16>, vector<32x768xbf16>, vector<96x768xf32> -> vector<96x768xf32>
    %c0_4 = arith.constant 0 : index
    %c0_5 = arith.constant 0 : index
    %5 = vector.load %arg3[%c0_4, %c0_5] : memref<96x1xf32, #tpu.memory_space<vmem>>, vector<96x1xf32>
    %6 = vector.broadcast %5 : vector<96x1xf32> to vector<96x768xf32>
    %7 = arith.addf %4, %6 : vector<96x768xf32>
    %8 = arith.truncf %7 : vector<96x768xf32> to vector<96x768xbf16>
    %c0_6 = arith.constant 0 : index
    %c0_7 = arith.constant 0 : index
    %9 = vector.load %arg7[%c0_6, %c0_7] : memref<96x768xbf16, #tpu.memory_space<vmem>>, vector<96x768xbf16>
    tpu.vector_store %arg7[%c0_6, %c0_7], %8 {strides = array<i32>} : memref<96x768xbf16, #tpu.memory_space<vmem>>, vector<96x768xbf16>,
    %c0_8 = arith.constant 0 : index
    %c0_9 = arith.constant 0 : index
    %10 = vector.load %arg4[%c0_8, %c0_9] : memref<32x32xbf16, #tpu.memory_space<vmem>>, vector<32x32xbf16>
    %c0_10 = arith.constant 0 : index
    %c0_11 = arith.constant 0 : index
    %11 = vector.load %arg5[%c0_10, %c0_11] : memref<32x1xf32, #tpu.memory_space<vmem>>, vector<32x1xf32>
    %c0_12 = arith.constant 0 : index
    %c0_13 = arith.constant 0 : index
    %12 = vector.load %arg7[%c0_12, %c0_13] : memref<96x768xbf16, #tpu.memory_space<vmem>>, vector<32x128xbf16>
    %cst_14 = arith.constant 0.000000e+00 : f32
    %13 = vector.broadcast %cst_14 : f32 to vector<128x32xf32>
    %c32 = arith.constant 32 : index
    %c256 = arith.constant 256 : index
    %14 = vector.load %arg7[%c32, %c256] : memref<96x768xbf16, #tpu.memory_space<vmem>>, vector<32x256xbf16>
    %c64 = arith.constant 64 : index
    %c256_15 = arith.constant 256 : index
    %15 = vector.load %arg7[%c64, %c256_15] : memref<96x768xbf16, #tpu.memory_space<vmem>>, vector<32x256xbf16>
    %cst_16 = arith.constant dense<0.000000e+00> : vector<128x256xf32>
    %16 = tpu.matmul %12, %14, %cst_16 {dimension_numbers = #tpu.dot_dimension_numbers<[0], [0], [1], [1], [0, 1, 1, 1], [], []>} : vector<32x128xbf16>, vector<32x256xbf16>, vector<128x256xf32> -> vector<128x256xf32>
    %cst_17 = arith.constant dense<0xFF800000> : vector<128xf32>
    %17 = vector.multi_reduction <maximumf>, %16, %cst_17 [1] : vector<128x256xf32> to vector<128xf32>
    %18 = vector.shape_cast %17 : vector<128xf32> to vector<128x1xf32>
    %19 = vector.broadcast %18 : vector<128x1xf32> to vector<128x256xf32>
    %20 = arith.subf %16, %19 : vector<128x256xf32>
    %21 = math.exp %20 : vector<128x256xf32>
    %cst_18 = arith.constant dense<0.000000e+00> : vector<128xf32>
    %22 = vector.multi_reduction <add>, %21, %cst_18 [1] : vector<128x256xf32> to vector<128xf32>
    %23 = vector.shape_cast %22 : vector<128xf32> to vector<128x1xf32>
    %24 = arith.truncf %21 : vector<128x256xf32> to vector<128x256xbf16>
    %cst_19 = arith.constant dense<0.000000e+00> : vector<128x32xf32>
    %25 = tpu.matmul %24, %15, %cst_19 {dimension_numbers = #tpu.dot_dimension_numbers<[1], [1], [0], [0], [0, 0, 1, 0], [], []>} : vector<128x256xbf16>, vector<32x256xbf16>, vector<128x32xf32> -> vector<128x32xf32>
    %26 = tpu.reciprocal %23 {approx = true} : vector<128x1xf32> -> vector<128x1xf32>
    %27 = vector.broadcast %26 : vector<128x1xf32> to vector<128x32xf32>
    %28 = arith.mulf %25, %27 : vector<128x32xf32>
    %29 = arith.addf %13, %28 : vector<128x32xf32>
    %c32_20 = arith.constant 32 : index
    %c512 = arith.constant 512 : index
    %30 = vector.load %arg7[%c32_20, %c512] : memref<96x768xbf16, #tpu.memory_space<vmem>>, vector<32x256xbf16>
    %c64_21 = arith.constant 64 : index
    %c512_22 = arith.constant 512 : index
    %31 = vector.load %arg7[%c64_21, %c512_22] : memref<96x768xbf16, #tpu.memory_space<vmem>>, vector<32x256xbf16>
    %cst_23 = arith.constant dense<0.000000e+00> : vector<128x256xf32>
    %32 = tpu.matmul %12, %30, %cst_23 {dimension_numbers = #tpu.dot_dimension_numbers<[0], [0], [1], [1], [0, 1, 1, 1], [], []>} : vector<32x128xbf16>, vector<32x256xbf16>, vector<128x256xf32> -> vector<128x256xf32>
    %cst_24 = arith.constant dense<0xFF800000> : vector<128xf32>
    %33 = vector.multi_reduction <maximumf>, %32, %cst_24 [1] : vector<128x256xf32> to vector<128xf32>
    %34 = vector.shape_cast %33 : vector<128xf32> to vector<128x1xf32>
    %35 = vector.broadcast %34 : vector<128x1xf32> to vector<128x256xf32>
    %36 = arith.subf %32, %35 : vector<128x256xf32>
    %37 = math.exp %36 : vector<128x256xf32>
    %cst_25 = arith.constant dense<0.000000e+00> : vector<128xf32>
    %38 = vector.multi_reduction <add>, %37, %cst_25 [1] : vector<128x256xf32> to vector<128xf32>
    %39 = vector.shape_cast %38 : vector<128xf32> to vector<128x1xf32>
    %40 = arith.truncf %37 : vector<128x256xf32> to vector<128x256xbf16>
    %cst_26 = arith.constant dense<0.000000e+00> : vector<128x32xf32>
    %41 = tpu.matmul %40, %31, %cst_26 {dimension_numbers = #tpu.dot_dimension_numbers<[1], [1], [0], [0], [0, 0, 1, 0], [], []>} : vector<128x256xbf16>, vector<32x256xbf16>, vector<128x32xf32> -> vector<128x32xf32>
    %42 = tpu.reciprocal %39 {approx = true} : vector<128x1xf32> -> vector<128x1xf32>
    %43 = vector.broadcast %42 : vector<128x1xf32> to vector<128x32xf32>
    %44 = arith.mulf %41, %43 : vector<128x32xf32>
    %45 = arith.addf %29, %44 : vector<128x32xf32>
    %46 = arith.truncf %45 : vector<128x32xf32> to vector<128x32xbf16>
    %cst_27 = arith.constant dense<0.000000e+00> : vector<32x128xf32>
    %47 = tpu.matmul %10, %46, %cst_27 {dimension_numbers = #tpu.dot_dimension_numbers<[1], [1], [0], [0], [0, 0, 1, 0], [], []>} : vector<32x32xbf16>, vector<128x32xbf16>, vector<32x128xf32> -> vector<32x128xf32>
    %c0_28 = arith.constant 0 : index
    %c0_29 = arith.constant 0 : index
    %c0_30 = arith.constant 0 : index
    %48 = vector.load %arg1[%c0_28, %c0_29, %c0_30] : memref<1x32x768xf32, #tpu.memory_space<vmem>>, vector<1x32x128xf32>
    %49 = vector.shape_cast %48 : vector<1x32x128xf32> to vector<32x128xf32>
    %50 = arith.addf %49, %47 : vector<32x128xf32>
    %51 = vector.broadcast %11 : vector<32x1xf32> to vector<32x128xf32>
    %52 = arith.addf %50, %51 : vector<32x128xf32>
    %c0_31 = arith.constant 0 : index
    %c0_32 = arith.constant 0 : index
    %c0_33 = arith.constant 0 : index
    %53 = vector.load %arg6[%c0_31, %c0_32, %c0_33] : memref<1x32x768xf32, #tpu.memory_space<vmem>>, vector<1x32x128xf32>
    %54 = vector.shape_cast %53 : vector<1x32x128xf32> to vector<32x128xf32>
    %55 = vector.shape_cast %52 : vector<32x128xf32> to vector<1x32x128xf32>
    tpu.vector_store %arg6[%c0_31, %c0_32, %c0_33], %55 {strides = array<i32>} : memref<1x32x768xf32, #tpu.memory_space<vmem>>, vector<1x32x128xf32>,
    %c0_34 = arith.constant 0 : index
    %c128 = arith.constant 128 : index
    %56 = vector.load %arg7[%c0_34, %c128] : memref<96x768xbf16, #tpu.memory_space<vmem>>, vector<32x128xbf16>
    %cst_35 = arith.constant 0.000000e+00 : f32
    %57 = vector.broadcast %cst_35 : f32 to vector<128x32xf32>
    %c32_36 = arith.constant 32 : index
    %c256_37 = arith.constant 256 : index
    %58 = vector.load %arg7[%c32_36, %c256_37] : memref<96x768xbf16, #tpu.memory_space<vmem>>, vector<32x256xbf16>
    %c64_38 = arith.constant 64 : index
    %c256_39 = arith.constant 256 : index
    %59 = vector.load %arg7[%c64_38, %c256_39] : memref<96x768xbf16, #tpu.memory_space<vmem>>, vector<32x256xbf16>
    %cst_40 = arith.constant dense<0.000000e+00> : vector<128x256xf32>
    %60 = tpu.matmul %56, %58, %cst_40 {dimension_numbers = #tpu.dot_dimension_numbers<[0], [0], [1], [1], [0, 1, 1, 1], [], []>} : vector<32x128xbf16>, vector<32x256xbf16>, vector<128x256xf32> -> vector<128x256xf32>
    %cst_41 = arith.constant dense<0xFF800000> : vector<128xf32>
    %61 = vector.multi_reduction <maximumf>, %60, %cst_41 [1] : vector<128x256xf32> to vector<128xf32>
    %62 = vector.shape_cast %61 : vector<128xf32> to vector<128x1xf32>
    %63 = vector.broadcast %62 : vector<128x1xf32> to vector<128x256xf32>
    %64 = arith.subf %60, %63 : vector<128x256xf32>
    %65 = math.exp %64 : vector<128x256xf32>
    %cst_42 = arith.constant dense<0.000000e+00> : vector<128xf32>
    %66 = vector.multi_reduction <add>, %65, %cst_42 [1] : vector<128x256xf32> to vector<128xf32>
    %67 = vector.shape_cast %66 : vector<128xf32> to vector<128x1xf32>
    %68 = arith.truncf %65 : vector<128x256xf32> to vector<128x256xbf16>
    %cst_43 = arith.constant dense<0.000000e+00> : vector<128x32xf32>
    %69 = tpu.matmul %68, %59, %cst_43 {dimension_numbers = #tpu.dot_dimension_numbers<[1], [1], [0], [0], [0, 0, 1, 0], [], []>} : vector<128x256xbf16>, vector<32x256xbf16>, vector<128x32xf32> -> vector<128x32xf32>
    %70 = tpu.reciprocal %67 {approx = true} : vector<128x1xf32> -> vector<128x1xf32>
    %71 = vector.broadcast %70 : vector<128x1xf32> to vector<128x32xf32>
    %72 = arith.mulf %69, %71 : vector<128x32xf32>
    %73 = arith.addf %57, %72 : vector<128x32xf32>
    %c32_44 = arith.constant 32 : index
    %c512_45 = arith.constant 512 : index
    %74 = vector.load %arg7[%c32_44, %c512_45] : memref<96x768xbf16, #tpu.memory_space<vmem>>, vector<32x256xbf16>
    %c64_46 = arith.constant 64 : index
    %c512_47 = arith.constant 512 : index
    %75 = vector.load %arg7[%c64_46, %c512_47] : memref<96x768xbf16, #tpu.memory_space<vmem>>, vector<32x256xbf16>
    %cst_48 = arith.constant dense<0.000000e+00> : vector<128x256xf32>
    %76 = tpu.matmul %56, %74, %cst_48 {dimension_numbers = #tpu.dot_dimension_numbers<[0], [0], [1], [1], [0, 1, 1, 1], [], []>} : vector<32x128xbf16>, vector<32x256xbf16>, vector<128x256xf32> -> vector<128x256xf32>
    %cst_49 = arith.constant dense<0xFF800000> : vector<128xf32>
    %77 = vector.multi_reduction <maximumf>, %76, %cst_49 [1] : vector<128x256xf32> to vector<128xf32>
    %78 = vector.shape_cast %77 : vector<128xf32> to vector<128x1xf32>
    %79 = vector.broadcast %78 : vector<128x1xf32> to vector<128x256xf32>
    %80 = arith.subf %76, %79 : vector<128x256xf32>
    %81 = math.exp %80 : vector<128x256xf32>
    %cst_50 = arith.constant dense<0.000000e+00> : vector<128xf32>
    %82 = vector.multi_reduction <add>, %81, %cst_50 [1] : vector<128x256xf32> to vector<128xf32>
    %83 = vector.shape_cast %82 : vector<128xf32> to vector<128x1xf32>
    %84 = arith.truncf %81 : vector<128x256xf32> to vector<128x256xbf16>
    %cst_51 = arith.constant dense<0.000000e+00> : vector<128x32xf32>
    %85 = tpu.matmul %84, %75, %cst_51 {dimension_numbers = #tpu.dot_dimension_numbers<[1], [1], [0], [0], [0, 0, 1, 0], [], []>} : vector<128x256xbf16>, vector<32x256xbf16>, vector<128x32xf32> -> vector<128x32xf32>
    %86 = tpu.reciprocal %83 {approx = true} : vector<128x1xf32> -> vector<128x1xf32>
    %87 = vector.broadcast %86 : vector<128x1xf32> to vector<128x32xf32>
    %88 = arith.mulf %85, %87 : vector<128x32xf32>
    %89 = arith.addf %73, %88 : vector<128x32xf32>
    %90 = arith.truncf %89 : vector<128x32xf32> to vector<128x32xbf16>
    %cst_52 = arith.constant dense<0.000000e+00> : vector<32x128xf32>
    %91 = tpu.matmul %10, %90, %cst_52 {dimension_numbers = #tpu.dot_dimension_numbers<[1], [1], [0], [0], [0, 0, 1, 0], [], []>} : vector<32x32xbf16>, vector<128x32xbf16>, vector<32x128xf32> -> vector<32x128xf32>
    %c0_53 = arith.constant 0 : index
    %c0_54 = arith.constant 0 : index
    %c128_55 = arith.constant 128 : index
    %92 = vector.load %arg1[%c0_53, %c0_54, %c128_55] : memref<1x32x768xf32, #tpu.memory_space<vmem>>, vector<1x32x128xf32>
    %93 = vector.shape_cast %92 : vector<1x32x128xf32> to vector<32x128xf32>
    %94 = arith.addf %93, %91 : vector<32x128xf32>
    %95 = vector.broadcast %11 : vector<32x1xf32> to vector<32x128xf32>
    %96 = arith.addf %94, %95 : vector<32x128xf32>
    %c0_56 = arith.constant 0 : index
    %c0_57 = arith.constant 0 : index
    %c128_58 = arith.constant 128 : index
    %97 = vector.load %arg6[%c0_56, %c0_57, %c128_58] : memref<1x32x768xf32, #tpu.memory_space<vmem>>, vector<1x32x128xf32>
    %98 = vector.shape_cast %97 : vector<1x32x128xf32> to vector<32x128xf32>
    %99 = vector.shape_cast %96 : vector<32x128xf32> to vector<1x32x128xf32>
    tpu.vector_store %arg6[%c0_56, %c0_57, %c128_58], %99 {strides = array<i32>} : memref<1x32x768xf32, #tpu.memory_space<vmem>>, vector<1x32x128xf32>,
    %c0_59 = arith.constant 0 : index
    %c256_60 = arith.constant 256 : index
    %100 = vector.load %arg7[%c0_59, %c256_60] : memref<96x768xbf16, #tpu.memory_space<vmem>>, vector<32x128xbf16>
    %cst_61 = arith.constant 0.000000e+00 : f32
    %101 = vector.broadcast %cst_61 : f32 to vector<128x32xf32>
    %c32_62 = arith.constant 32 : index
    %c0_63 = arith.constant 0 : index
    %102 = vector.load %arg7[%c32_62, %c0_63] : memref<96x768xbf16, #tpu.memory_space<vmem>>, vector<32x256xbf16>
    %c64_64 = arith.constant 64 : index
    %c0_65 = arith.constant 0 : index
    %103 = vector.load %arg7[%c64_64, %c0_65] : memref<96x768xbf16, #tpu.memory_space<vmem>>, vector<32x256xbf16>
    %cst_66 = arith.constant dense<0.000000e+00> : vector<128x256xf32>
    %104 = tpu.matmul %100, %102, %cst_66 {dimension_numbers = #tpu.dot_dimension_numbers<[0], [0], [1], [1], [0, 1, 1, 1], [], []>} : vector<32x128xbf16>, vector<32x256xbf16>, vector<128x256xf32> -> vector<128x256xf32>
    %cst_67 = arith.constant dense<0xFF800000> : vector<128xf32>
    %105 = vector.multi_reduction <maximumf>, %104, %cst_67 [1] : vector<128x256xf32> to vector<128xf32>
    %106 = vector.shape_cast %105 : vector<128xf32> to vector<128x1xf32>
    %107 = vector.broadcast %106 : vector<128x1xf32> to vector<128x256xf32>
    %108 = arith.subf %104, %107 : vector<128x256xf32>
    %109 = math.exp %108 : vector<128x256xf32>
    %cst_68 = arith.constant dense<0.000000e+00> : vector<128xf32>
    %110 = vector.multi_reduction <add>, %109, %cst_68 [1] : vector<128x256xf32> to vector<128xf32>
    %111 = vector.shape_cast %110 : vector<128xf32> to vector<128x1xf32>
    %112 = arith.truncf %109 : vector<128x256xf32> to vector<128x256xbf16>
    %cst_69 = arith.constant dense<0.000000e+00> : vector<128x32xf32>
    %113 = tpu.matmul %112, %103, %cst_69 {dimension_numbers = #tpu.dot_dimension_numbers<[1], [1], [0], [0], [0, 0, 1, 0], [], []>} : vector<128x256xbf16>, vector<32x256xbf16>, vector<128x32xf32> -> vector<128x32xf32>
    %114 = tpu.reciprocal %111 {approx = true} : vector<128x1xf32> -> vector<128x1xf32>
    %115 = vector.broadcast %114 : vector<128x1xf32> to vector<128x32xf32>
    %116 = arith.mulf %113, %115 : vector<128x32xf32>
    %117 = arith.addf %101, %116 : vector<128x32xf32>
    %c32_70 = arith.constant 32 : index
    %c512_71 = arith.constant 512 : index
    %118 = vector.load %arg7[%c32_70, %c512_71] : memref<96x768xbf16, #tpu.memory_space<vmem>>, vector<32x256xbf16>
    %c64_72 = arith.constant 64 : index
    %c512_73 = arith.constant 512 : index
    %119 = vector.load %arg7[%c64_72, %c512_73] : memref<96x768xbf16, #tpu.memory_space<vmem>>, vector<32x256xbf16>
    %cst_74 = arith.constant dense<0.000000e+00> : vector<128x256xf32>
    %120 = tpu.matmul %100, %118, %cst_74 {dimension_numbers = #tpu.dot_dimension_numbers<[0], [0], [1], [1], [0, 1, 1, 1], [], []>} : vector<32x128xbf16>, vector<32x256xbf16>, vector<128x256xf32> -> vector<128x256xf32>
    %cst_75 = arith.constant dense<0xFF800000> : vector<128xf32>
    %121 = vector.multi_reduction <maximumf>, %120, %cst_75 [1] : vector<128x256xf32> to vector<128xf32>
    %122 = vector.shape_cast %121 : vector<128xf32> to vector<128x1xf32>
    %123 = vector.broadcast %122 : vector<128x1xf32> to vector<128x256xf32>
    %124 = arith.subf %120, %123 : vector<128x256xf32>
    %125 = math.exp %124 : vector<128x256xf32>
    %cst_76 = arith.constant dense<0.000000e+00> : vector<128xf32>
    %126 = vector.multi_reduction <add>, %125, %cst_76 [1] : vector<128x256xf32> to vector<128xf32>
    %127 = vector.shape_cast %126 : vector<128xf32> to vector<128x1xf32>
    %128 = arith.truncf %125 : vector<128x256xf32> to vector<128x256xbf16>
    %cst_77 = arith.constant dense<0.000000e+00> : vector<128x32xf32>
    %129 = tpu.matmul %128, %119, %cst_77 {dimension_numbers = #tpu.dot_dimension_numbers<[1], [1], [0], [0], [0, 0, 1, 0], [], []>} : vector<128x256xbf16>, vector<32x256xbf16>, vector<128x32xf32> -> vector<128x32xf32>
    %130 = tpu.reciprocal %127 {approx = true} : vector<128x1xf32> -> vector<128x1xf32>
    %131 = vector.broadcast %130 : vector<128x1xf32> to vector<128x32xf32>
    %132 = arith.mulf %129, %131 : vector<128x32xf32>
    %133 = arith.addf %117, %132 : vector<128x32xf32>
    %134 = arith.truncf %133 : vector<128x32xf32> to vector<128x32xbf16>
    %cst_78 = arith.constant dense<0.000000e+00> : vector<32x128xf32>
    %135 = tpu.matmul %10, %134, %cst_78 {dimension_numbers = #tpu.dot_dimension_numbers<[1], [1], [0], [0], [0, 0, 1, 0], [], []>} : vector<32x32xbf16>, vector<128x32xbf16>, vector<32x128xf32> -> vector<32x128xf32>
    %c0_79 = arith.constant 0 : index
    %c0_80 = arith.constant 0 : index
    %c256_81 = arith.constant 256 : index
    %136 = vector.load %arg1[%c0_79, %c0_80, %c256_81] : memref<1x32x768xf32, #tpu.memory_space<vmem>>, vector<1x32x128xf32>
    %137 = vector.shape_cast %136 : vector<1x32x128xf32> to vector<32x128xf32>
    %138 = arith.addf %137, %135 : vector<32x128xf32>
    %139 = vector.broadcast %11 : vector<32x1xf32> to vector<32x128xf32>
    %140 = arith.addf %138, %139 : vector<32x128xf32>
    %c0_82 = arith.constant 0 : index
    %c0_83 = arith.constant 0 : index
    %c256_84 = arith.constant 256 : index
    %141 = vector.load %arg6[%c0_82, %c0_83, %c256_84] : memref<1x32x768xf32, #tpu.memory_space<vmem>>, vector<1x32x128xf32>
    %142 = vector.shape_cast %141 : vector<1x32x128xf32> to vector<32x128xf32>
    %143 = vector.shape_cast %140 : vector<32x128xf32> to vector<1x32x128xf32>
    tpu.vector_store %arg6[%c0_82, %c0_83, %c256_84], %143 {strides = array<i32>} : memref<1x32x768xf32, #tpu.memory_space<vmem>>, vector<1x32x128xf32>,
    %c0_85 = arith.constant 0 : index
    %c384 = arith.constant 384 : index
    %144 = vector.load %arg7[%c0_85, %c384] : memref<96x768xbf16, #tpu.memory_space<vmem>>, vector<32x128xbf16>
    %cst_86 = arith.constant 0.000000e+00 : f32
    %145 = vector.broadcast %cst_86 : f32 to vector<128x32xf32>
    %c32_87 = arith.constant 32 : index
    %c0_88 = arith.constant 0 : index
    %146 = vector.load %arg7[%c32_87, %c0_88] : memref<96x768xbf16, #tpu.memory_space<vmem>>, vector<32x256xbf16>
    %c64_89 = arith.constant 64 : index
    %c0_90 = arith.constant 0 : index
    %147 = vector.load %arg7[%c64_89, %c0_90] : memref<96x768xbf16, #tpu.memory_space<vmem>>, vector<32x256xbf16>
    %cst_91 = arith.constant dense<0.000000e+00> : vector<128x256xf32>
    %148 = tpu.matmul %144, %146, %cst_91 {dimension_numbers = #tpu.dot_dimension_numbers<[0], [0], [1], [1], [0, 1, 1, 1], [], []>} : vector<32x128xbf16>, vector<32x256xbf16>, vector<128x256xf32> -> vector<128x256xf32>
    %cst_92 = arith.constant dense<0xFF800000> : vector<128xf32>
    %149 = vector.multi_reduction <maximumf>, %148, %cst_92 [1] : vector<128x256xf32> to vector<128xf32>
    %150 = vector.shape_cast %149 : vector<128xf32> to vector<128x1xf32>
    %151 = vector.broadcast %150 : vector<128x1xf32> to vector<128x256xf32>
    %152 = arith.subf %148, %151 : vector<128x256xf32>
    %153 = math.exp %152 : vector<128x256xf32>
    %cst_93 = arith.constant dense<0.000000e+00> : vector<128xf32>
    %154 = vector.multi_reduction <add>, %153, %cst_93 [1] : vector<128x256xf32> to vector<128xf32>
    %155 = vector.shape_cast %154 : vector<128xf32> to vector<128x1xf32>
    %156 = arith.truncf %153 : vector<128x256xf32> to vector<128x256xbf16>
    %cst_94 = arith.constant dense<0.000000e+00> : vector<128x32xf32>
    %157 = tpu.matmul %156, %147, %cst_94 {dimension_numbers = #tpu.dot_dimension_numbers<[1], [1], [0], [0], [0, 0, 1, 0], [], []>} : vector<128x256xbf16>, vector<32x256xbf16>, vector<128x32xf32> -> vector<128x32xf32>
    %158 = tpu.reciprocal %155 {approx = true} : vector<128x1xf32> -> vector<128x1xf32>
    %159 = vector.broadcast %158 : vector<128x1xf32> to vector<128x32xf32>
    %160 = arith.mulf %157, %159 : vector<128x32xf32>
    %161 = arith.addf %145, %160 : vector<128x32xf32>
    %c32_95 = arith.constant 32 : index
    %c512_96 = arith.constant 512 : index
    %162 = vector.load %arg7[%c32_95, %c512_96] : memref<96x768xbf16, #tpu.memory_space<vmem>>, vector<32x256xbf16>
    %c64_97 = arith.constant 64 : index
    %c512_98 = arith.constant 512 : index
    %163 = vector.load %arg7[%c64_97, %c512_98] : memref<96x768xbf16, #tpu.memory_space<vmem>>, vector<32x256xbf16>
    %cst_99 = arith.constant dense<0.000000e+00> : vector<128x256xf32>
    %164 = tpu.matmul %144, %162, %cst_99 {dimension_numbers = #tpu.dot_dimension_numbers<[0], [0], [1], [1], [0, 1, 1, 1], [], []>} : vector<32x128xbf16>, vector<32x256xbf16>, vector<128x256xf32> -> vector<128x256xf32>
    %cst_100 = arith.constant dense<0xFF800000> : vector<128xf32>
    %165 = vector.multi_reduction <maximumf>, %164, %cst_100 [1] : vector<128x256xf32> to vector<128xf32>
    %166 = vector.shape_cast %165 : vector<128xf32> to vector<128x1xf32>
    %167 = vector.broadcast %166 : vector<128x1xf32> to vector<128x256xf32>
    %168 = arith.subf %164, %167 : vector<128x256xf32>
    %169 = math.exp %168 : vector<128x256xf32>
    %cst_101 = arith.constant dense<0.000000e+00> : vector<128xf32>
    %170 = vector.multi_reduction <add>, %169, %cst_101 [1] : vector<128x256xf32> to vector<128xf32>
    %171 = vector.shape_cast %170 : vector<128xf32> to vector<128x1xf32>
    %172 = arith.truncf %169 : vector<128x256xf32> to vector<128x256xbf16>
    %cst_102 = arith.constant dense<0.000000e+00> : vector<128x32xf32>
    %173 = tpu.matmul %172, %163, %cst_102 {dimension_numbers = #tpu.dot_dimension_numbers<[1], [1], [0], [0], [0, 0, 1, 0], [], []>} : vector<128x256xbf16>, vector<32x256xbf16>, vector<128x32xf32> -> vector<128x32xf32>
    %174 = tpu.reciprocal %171 {approx = true} : vector<128x1xf32> -> vector<128x1xf32>
    %175 = vector.broadcast %174 : vector<128x1xf32> to vector<128x32xf32>
    %176 = arith.mulf %173, %175 : vector<128x32xf32>
    %177 = arith.addf %161, %176 : vector<128x32xf32>
    %178 = arith.truncf %177 : vector<128x32xf32> to vector<128x32xbf16>
    %cst_103 = arith.constant dense<0.000000e+00> : vector<32x128xf32>
    %179 = tpu.matmul %10, %178, %cst_103 {dimension_numbers = #tpu.dot_dimension_numbers<[1], [1], [0], [0], [0, 0, 1, 0], [], []>} : vector<32x32xbf16>, vector<128x32xbf16>, vector<32x128xf32> -> vector<32x128xf32>
    %c0_104 = arith.constant 0 : index
    %c0_105 = arith.constant 0 : index
    %c384_106 = arith.constant 384 : index
    %180 = vector.load %arg1[%c0_104, %c0_105, %c384_106] : memref<1x32x768xf32, #tpu.memory_space<vmem>>, vector<1x32x128xf32>
    %181 = vector.shape_cast %180 : vector<1x32x128xf32> to vector<32x128xf32>
    %182 = arith.addf %181, %179 : vector<32x128xf32>
    %183 = vector.broadcast %11 : vector<32x1xf32> to vector<32x128xf32>
    %184 = arith.addf %182, %183 : vector<32x128xf32>
    %c0_107 = arith.constant 0 : index
    %c0_108 = arith.constant 0 : index
    %c384_109 = arith.constant 384 : index
    %185 = vector.load %arg6[%c0_107, %c0_108, %c384_109] : memref<1x32x768xf32, #tpu.memory_space<vmem>>, vector<1x32x128xf32>
    %186 = vector.shape_cast %185 : vector<1x32x128xf32> to vector<32x128xf32>
    %187 = vector.shape_cast %184 : vector<32x128xf32> to vector<1x32x128xf32>
    tpu.vector_store %arg6[%c0_107, %c0_108, %c384_109], %187 {strides = array<i32>} : memref<1x32x768xf32, #tpu.memory_space<vmem>>, vector<1x32x128xf32>,
    %c0_110 = arith.constant 0 : index
    %c512_111 = arith.constant 512 : index
    %188 = vector.load %arg7[%c0_110, %c512_111] : memref<96x768xbf16, #tpu.memory_space<vmem>>, vector<32x128xbf16>
    %cst_112 = arith.constant 0.000000e+00 : f32
    %189 = vector.broadcast %cst_112 : f32 to vector<128x32xf32>
    %c32_113 = arith.constant 32 : index
    %c0_114 = arith.constant 0 : index
    %190 = vector.load %arg7[%c32_113, %c0_114] : memref<96x768xbf16, #tpu.memory_space<vmem>>, vector<32x256xbf16>
    %c64_115 = arith.constant 64 : index
    %c0_116 = arith.constant 0 : index
    %191 = vector.load %arg7[%c64_115, %c0_116] : memref<96x768xbf16, #tpu.memory_space<vmem>>, vector<32x256xbf16>
    %cst_117 = arith.constant dense<0.000000e+00> : vector<128x256xf32>
    %192 = tpu.matmul %188, %190, %cst_117 {dimension_numbers = #tpu.dot_dimension_numbers<[0], [0], [1], [1], [0, 1, 1, 1], [], []>} : vector<32x128xbf16>, vector<32x256xbf16>, vector<128x256xf32> -> vector<128x256xf32>
    %cst_118 = arith.constant dense<0xFF800000> : vector<128xf32>
    %193 = vector.multi_reduction <maximumf>, %192, %cst_118 [1] : vector<128x256xf32> to vector<128xf32>
    %194 = vector.shape_cast %193 : vector<128xf32> to vector<128x1xf32>
    %195 = vector.broadcast %194 : vector<128x1xf32> to vector<128x256xf32>
    %196 = arith.subf %192, %195 : vector<128x256xf32>
    %197 = math.exp %196 : vector<128x256xf32>
    %cst_119 = arith.constant dense<0.000000e+00> : vector<128xf32>
    %198 = vector.multi_reduction <add>, %197, %cst_119 [1] : vector<128x256xf32> to vector<128xf32>
    %199 = vector.shape_cast %198 : vector<128xf32> to vector<128x1xf32>
    %200 = arith.truncf %197 : vector<128x256xf32> to vector<128x256xbf16>
    %cst_120 = arith.constant dense<0.000000e+00> : vector<128x32xf32>
    %201 = tpu.matmul %200, %191, %cst_120 {dimension_numbers = #tpu.dot_dimension_numbers<[1], [1], [0], [0], [0, 0, 1, 0], [], []>} : vector<128x256xbf16>, vector<32x256xbf16>, vector<128x32xf32> -> vector<128x32xf32>
    %202 = tpu.reciprocal %199 {approx = true} : vector<128x1xf32> -> vector<128x1xf32>
    %203 = vector.broadcast %202 : vector<128x1xf32> to vector<128x32xf32>
    %204 = arith.mulf %201, %203 : vector<128x32xf32>
    %205 = arith.addf %189, %204 : vector<128x32xf32>
    %c32_121 = arith.constant 32 : index
    %c256_122 = arith.constant 256 : index
    %206 = vector.load %arg7[%c32_121, %c256_122] : memref<96x768xbf16, #tpu.memory_space<vmem>>, vector<32x256xbf16>
    %c64_123 = arith.constant 64 : index
    %c256_124 = arith.constant 256 : index
    %207 = vector.load %arg7[%c64_123, %c256_124] : memref<96x768xbf16, #tpu.memory_space<vmem>>, vector<32x256xbf16>
    %cst_125 = arith.constant dense<0.000000e+00> : vector<128x256xf32>
    %208 = tpu.matmul %188, %206, %cst_125 {dimension_numbers = #tpu.dot_dimension_numbers<[0], [0], [1], [1], [0, 1, 1, 1], [], []>} : vector<32x128xbf16>, vector<32x256xbf16>, vector<128x256xf32> -> vector<128x256xf32>
    %cst_126 = arith.constant dense<0xFF800000> : vector<128xf32>
    %209 = vector.multi_reduction <maximumf>, %208, %cst_126 [1] : vector<128x256xf32> to vector<128xf32>
    %210 = vector.shape_cast %209 : vector<128xf32> to vector<128x1xf32>
    %211 = vector.broadcast %210 : vector<128x1xf32> to vector<128x256xf32>
    %212 = arith.subf %208, %211 : vector<128x256xf32>
    %213 = math.exp %212 : vector<128x256xf32>
    %cst_127 = arith.constant dense<0.000000e+00> : vector<128xf32>
    %214 = vector.multi_reduction <add>, %213, %cst_127 [1] : vector<128x256xf32> to vector<128xf32>
    %215 = vector.shape_cast %214 : vector<128xf32> to vector<128x1xf32>
    %216 = arith.truncf %213 : vector<128x256xf32> to vector<128x256xbf16>
    %cst_128 = arith.constant dense<0.000000e+00> : vector<128x32xf32>
    %217 = tpu.matmul %216, %207, %cst_128 {dimension_numbers = #tpu.dot_dimension_numbers<[1], [1], [0], [0], [0, 0, 1, 0], [], []>} : vector<128x256xbf16>, vector<32x256xbf16>, vector<128x32xf32> -> vector<128x32xf32>
    %218 = tpu.reciprocal %215 {approx = true} : vector<128x1xf32> -> vector<128x1xf32>
    %219 = vector.broadcast %218 : vector<128x1xf32> to vector<128x32xf32>
    %220 = arith.mulf %217, %219 : vector<128x32xf32>
    %221 = arith.addf %205, %220 : vector<128x32xf32>
    %222 = arith.truncf %221 : vector<128x32xf32> to vector<128x32xbf16>
    %cst_129 = arith.constant dense<0.000000e+00> : vector<32x128xf32>
    %223 = tpu.matmul %10, %222, %cst_129 {dimension_numbers = #tpu.dot_dimension_numbers<[1], [1], [0], [0], [0, 0, 1, 0], [], []>} : vector<32x32xbf16>, vector<128x32xbf16>, vector<32x128xf32> -> vector<32x128xf32>
    %c0_130 = arith.constant 0 : index
    %c0_131 = arith.constant 0 : index
    %c512_132 = arith.constant 512 : index
    %224 = vector.load %arg1[%c0_130, %c0_131, %c512_132] : memref<1x32x768xf32, #tpu.memory_space<vmem>>, vector<1x32x128xf32>
    %225 = vector.shape_cast %224 : vector<1x32x128xf32> to vector<32x128xf32>
    %226 = arith.addf %225, %223 : vector<32x128xf32>
    %227 = vector.broadcast %11 : vector<32x1xf32> to vector<32x128xf32>
    %228 = arith.addf %226, %227 : vector<32x128xf32>
    %c0_133 = arith.constant 0 : index
    %c0_134 = arith.constant 0 : index
    %c512_135 = arith.constant 512 : index
    %229 = vector.load %arg6[%c0_133, %c0_134, %c512_135] : memref<1x32x768xf32, #tpu.memory_space<vmem>>, vector<1x32x128xf32>
    %230 = vector.shape_cast %229 : vector<1x32x128xf32> to vector<32x128xf32>
    %231 = vector.shape_cast %228 : vector<32x128xf32> to vector<1x32x128xf32>
    tpu.vector_store %arg6[%c0_133, %c0_134, %c512_135], %231 {strides = array<i32>} : memref<1x32x768xf32, #tpu.memory_space<vmem>>, vector<1x32x128xf32>,
    %c0_136 = arith.constant 0 : index
    %c640 = arith.constant 640 : index
    %232 = vector.load %arg7[%c0_136, %c640] : memref<96x768xbf16, #tpu.memory_space<vmem>>, vector<32x128xbf16>
    %cst_137 = arith.constant 0.000000e+00 : f32
    %233 = vector.broadcast %cst_137 : f32 to vector<128x32xf32>
    %c32_138 = arith.constant 32 : index
    %c0_139 = arith.constant 0 : index
    %234 = vector.load %arg7[%c32_138, %c0_139] : memref<96x768xbf16, #tpu.memory_space<vmem>>, vector<32x256xbf16>
    %c64_140 = arith.constant 64 : index
    %c0_141 = arith.constant 0 : index
    %235 = vector.load %arg7[%c64_140, %c0_141] : memref<96x768xbf16, #tpu.memory_space<vmem>>, vector<32x256xbf16>
    %cst_142 = arith.constant dense<0.000000e+00> : vector<128x256xf32>
    %236 = tpu.matmul %232, %234, %cst_142 {dimension_numbers = #tpu.dot_dimension_numbers<[0], [0], [1], [1], [0, 1, 1, 1], [], []>} : vector<32x128xbf16>, vector<32x256xbf16>, vector<128x256xf32> -> vector<128x256xf32>
    %cst_143 = arith.constant dense<0xFF800000> : vector<128xf32>
    %237 = vector.multi_reduction <maximumf>, %236, %cst_143 [1] : vector<128x256xf32> to vector<128xf32>
    %238 = vector.shape_cast %237 : vector<128xf32> to vector<128x1xf32>
    %239 = vector.broadcast %238 : vector<128x1xf32> to vector<128x256xf32>
    %240 = arith.subf %236, %239 : vector<128x256xf32>
    %241 = math.exp %240 : vector<128x256xf32>
    %cst_144 = arith.constant dense<0.000000e+00> : vector<128xf32>
    %242 = vector.multi_reduction <add>, %241, %cst_144 [1] : vector<128x256xf32> to vector<128xf32>
    %243 = vector.shape_cast %242 : vector<128xf32> to vector<128x1xf32>
    %244 = arith.truncf %241 : vector<128x256xf32> to vector<128x256xbf16>
    %cst_145 = arith.constant dense<0.000000e+00> : vector<128x32xf32>
    %245 = tpu.matmul %244, %235, %cst_145 {dimension_numbers = #tpu.dot_dimension_numbers<[1], [1], [0], [0], [0, 0, 1, 0], [], []>} : vector<128x256xbf16>, vector<32x256xbf16>, vector<128x32xf32> -> vector<128x32xf32>
    %246 = tpu.reciprocal %243 {approx = true} : vector<128x1xf32> -> vector<128x1xf32>
    %247 = vector.broadcast %246 : vector<128x1xf32> to vector<128x32xf32>
    %248 = arith.mulf %245, %247 : vector<128x32xf32>
    %249 = arith.addf %233, %248 : vector<128x32xf32>
    %c32_146 = arith.constant 32 : index
    %c256_147 = arith.constant 256 : index
    %250 = vector.load %arg7[%c32_146, %c256_147] : memref<96x768xbf16, #tpu.memory_space<vmem>>, vector<32x256xbf16>
    %c64_148 = arith.constant 64 : index
    %c256_149 = arith.constant 256 : index
    %251 = vector.load %arg7[%c64_148, %c256_149] : memref<96x768xbf16, #tpu.memory_space<vmem>>, vector<32x256xbf16>
    %cst_150 = arith.constant dense<0.000000e+00> : vector<128x256xf32>
    %252 = tpu.matmul %232, %250, %cst_150 {dimension_numbers = #tpu.dot_dimension_numbers<[0], [0], [1], [1], [0, 1, 1, 1], [], []>} : vector<32x128xbf16>, vector<32x256xbf16>, vector<128x256xf32> -> vector<128x256xf32>
    %cst_151 = arith.constant dense<0xFF800000> : vector<128xf32>
    %253 = vector.multi_reduction <maximumf>, %252, %cst_151 [1] : vector<128x256xf32> to vector<128xf32>
    %254 = vector.shape_cast %253 : vector<128xf32> to vector<128x1xf32>
    %255 = vector.broadcast %254 : vector<128x1xf32> to vector<128x256xf32>
    %256 = arith.subf %252, %255 : vector<128x256xf32>
    %257 = math.exp %256 : vector<128x256xf32>
    %cst_152 = arith.constant dense<0.000000e+00> : vector<128xf32>
    %258 = vector.multi_reduction <add>, %257, %cst_152 [1] : vector<128x256xf32> to vector<128xf32>
    %259 = vector.shape_cast %258 : vector<128xf32> to vector<128x1xf32>
    %260 = arith.truncf %257 : vector<128x256xf32> to vector<128x256xbf16>
    %cst_153 = arith.constant dense<0.000000e+00> : vector<128x32xf32>
    %261 = tpu.matmul %260, %251, %cst_153 {dimension_numbers = #tpu.dot_dimension_numbers<[1], [1], [0], [0], [0, 0, 1, 0], [], []>} : vector<128x256xbf16>, vector<32x256xbf16>, vector<128x32xf32> -> vector<128x32xf32>
    %262 = tpu.reciprocal %259 {approx = true} : vector<128x1xf32> -> vector<128x1xf32>
    %263 = vector.broadcast %262 : vector<128x1xf32> to vector<128x32xf32>
    %264 = arith.mulf %261, %263 : vector<128x32xf32>
    %265 = arith.addf %249, %264 : vector<128x32xf32>
    %266 = arith.truncf %265 : vector<128x32xf32> to vector<128x32xbf16>
    %cst_154 = arith.constant dense<0.000000e+00> : vector<32x128xf32>
    %267 = tpu.matmul %10, %266, %cst_154 {dimension_numbers = #tpu.dot_dimension_numbers<[1], [1], [0], [0], [0, 0, 1, 0], [], []>} : vector<32x32xbf16>, vector<128x32xbf16>, vector<32x128xf32> -> vector<32x128xf32>
    %c0_155 = arith.constant 0 : index
    %c0_156 = arith.constant 0 : index
    %c640_157 = arith.constant 640 : index
    %268 = vector.load %arg1[%c0_155, %c0_156, %c640_157] : memref<1x32x768xf32, #tpu.memory_space<vmem>>, vector<1x32x128xf32>
    %269 = vector.shape_cast %268 : vector<1x32x128xf32> to vector<32x128xf32>
    %270 = arith.addf %269, %267 : vector<32x128xf32>
    %271 = vector.broadcast %11 : vector<32x1xf32> to vector<32x128xf32>
    %272 = arith.addf %270, %271 : vector<32x128xf32>
    %c0_158 = arith.constant 0 : index
    %c0_159 = arith.constant 0 : index
    %c640_160 = arith.constant 640 : index
    %273 = vector.load %arg6[%c0_158, %c0_159, %c640_160] : memref<1x32x768xf32, #tpu.memory_space<vmem>>, vector<1x32x128xf32>
    %274 = vector.shape_cast %273 : vector<1x32x128xf32> to vector<32x128xf32>
    %275 = vector.shape_cast %272 : vector<32x128xf32> to vector<1x32x128xf32>
    tpu.vector_store %arg6[%c0_158, %c0_159, %c640_160], %275 {strides = array<i32>} : memref<1x32x768xf32, #tpu.memory_space<vmem>>, vector<1x32x128xf32>,
    return
  }
  func.func @transform_0(%arg0: i32) -> (i32, i32, i32) {
    %c0_i32 = arith.constant 0 : i32
    %c0_i32_0 = arith.constant 0 : i32
    %c0_i32_1 = arith.constant 0 : i32
    return %arg0, %c0_i32, %c0_i32_0 : i32, i32, i32
  }
  func.func @transform_1(%arg0: i32) -> (i32, i32) {
    %c0_i32 = arith.constant 0 : i32
    %c0_i32_0 = arith.constant 0 : i32
    %c0_i32_1 = arith.constant 0 : i32
    return %c0_i32, %c0_i32_0 : i32, i32
  }
  func.func @transform_2(%arg0: i32) -> (i32, i32) {
    %c0_i32 = arith.constant 0 : i32
    %c0_i32_0 = arith.constant 0 : i32
    %c0_i32_1 = arith.constant 0 : i32
    return %c0_i32, %c0_i32_0 : i32, i32
  }
  func.func @transform_3(%arg0: i32) -> (i32, i32) {
    %c0_i32 = arith.constant 0 : i32
    %c0_i32_0 = arith.constant 0 : i32
    %c0_i32_1 = arith.constant 0 : i32
    return %c0_i32, %c0_i32_0 : i32, i32
  }
  func.func @transform_4(%arg0: i32) -> (i32, i32) {
    %c0_i32 = arith.constant 0 : i32
    %c0_i32_0 = arith.constant 0 : i32
    %c0_i32_1 = arith.constant 0 : i32
    return %c0_i32, %c0_i32_0 : i32, i32
  }
  func.func @transform_5(%arg0: i32) -> (i32, i32, i32) {
    %c0_i32 = arith.constant 0 : i32
    %c0_i32_0 = arith.constant 0 : i32
    %c0_i32_1 = arith.constant 0 : i32
    return %arg0, %c0_i32, %c0_i32_0 : i32, i32, i32
  }
}

</mosaic_0001>

<llo_original>
// kernel: cross_modal_attention.1
$region0: #{cross_modal_attention.1}
  #allocation0 [shape = 'u32[]', space=smem, size = 0x4, offset = 0x4, fixed_abs, tag = 'smem constant byte address 0x4 - core index']
  #allocation1 [shape = 'u32[72,128]{1,0:T(1,128)}', space=vmem, size = 0x9000, scoped, tag = 'internal scratch']
  #allocation2 [shape = 'bf16[96,768]{1,0:T(8,128)(2,1)}', space=vmem, size = 0x24000, scoped, tag = 'scratch operand']
  %s0 = inlined_call_operand.vmem [shape: f32[2,32,768], index: 0, kind: input, shape index: {}]
  %s1 = inlined_call_operand.vmem [shape: bf16[96,32], index: 1, kind: input, shape index: {}]
  %s2 = inlined_call_operand.vmem [shape: f32[96,1], index: 2, kind: input, shape index: {}]
  %s3 = inlined_call_operand.vmem [shape: bf16[32,32], index: 3, kind: input, shape index: {}]
  %s4 = inlined_call_operand.vmem [shape: f32[32,1], index: 4, kind: input, shape index: {}]
  %s5 = inlined_call_operand.vmem [shape: f32[2,32,768], index: 5, kind: output, shape index: {}]
  %s6 = sld [smem:[#allocation0]]
  $region53: #{cross_modal_attention.1} parent=0
    _
  %s8 = ssub.s32 1, %s6
  %s9 = scalar_select 0, %s8, %s6
  loop: start=0, step=1, limit=4
  $region2: #{cross_modal_attention.1} parent=0 // loop_pre_header
    _
  $region3: #{cross_modal_attention.1} parent=0 // loop_header
    %s11 = sphi 0, %s15
    %p12 = scmp.ge.s32.totalorder %s11, 4
    %s21 = sphi 0, %s23
    %s24 = sphi 0, %s21
    %s25 = sphi 0, %s24
    %s41 = sphi 0, %s25
    %s45 = sphi 0, %s45
    %s47 = sphi 0, %s45
    %s48 = sphi 0, %s47
    %s62 = sphi 0, %s48
    %s66 = sphi 0, %s66
    %s68 = sphi 0, %s66
    %s69 = sphi 0, %s68
    %s83 = sphi 0, %s69
    %s87 = sphi 0, %s87
    %s89 = sphi 0, %s87
    %s90 = sphi 0, %s89
    %s104 = sphi 0, %s90
    %s108 = sphi 0, %s108
    %s110 = sphi 0, %s108
    %s111 = sphi 0, %s110
    %s125 = sphi 0, %s111
    %s131 = sphi 0, %s133
    %s134 = sphi 0, %s131
    %s135 = sphi 0, %s134
    %s151 = sphi 0, %s135
  $region4: #{cross_modal_attention.1} parent=0 // loop_header_branch
    %14 = sbr.rel (%p12) target = $region8
  $region5: #{cross_modal_attention.1} parent=0 // loop_body
    %s16 = ssub.s32 %s11, 1
    %s17 = ssub.s32 %s11, 2
    %s18 = sadd.s32 %s11, 1
    %s19 = ssub.s32 %s11, %s18
    %p20 = scmp.eq.s32.totalorder %s19, 0
    %s22 = sadd.s32 %s21, 1
    %s23 = scalar_select %p20, %s21, %s22
    %p26 = pneg %p20
    %p27 = scmp.eq.s32.totalorder %s11, 1
    %p28 = por %p26, %p27
    %p29 = scmp.ne.s32.totalorder %s21, %s24
    %p30 = scmp.eq.s32.totalorder %s11, 0
    %p31 = por %p29, %p30
    %p32 = scmp.ne.s32.totalorder %s21, %s24
    %p33 = scmp.eq.s32.totalorder %s16, 1
    %p34 = por %p32, %p33
    %p35 = scmp.ne.s32.totalorder %s24, %s25
    %p36 = scmp.eq.s32.totalorder %s16, 0
    %p37 = por %p35, %p36
    %p38 = scmp.ne.s32.totalorder %s24, %s25
    %p39 = scmp.eq.s32.totalorder %s17, 1
    %p40 = por %p38, %p39
    %p42 = scmp.ne.s32.totalorder %s25, %s41
    %p43 = scmp.eq.s32.totalorder %s17, 0
    %p44 = por %p42, %p43
    %s46 = sadd.s32 %s45, 1
    %p49 = scmp.eq.s32.totalorder %s11, 1
    %p50 = scmp.ne.s32.totalorder %s45, %s47
    %p51 = scmp.eq.s32.totalorder %s11, 0
    %p52 = por %p50, %p51
    %p53 = scmp.ne.s32.totalorder %s45, %s47
    %p54 = scmp.eq.s32.totalorder %s16, 1
    %p55 = por %p53, %p54
    %p56 = scmp.ne.s32.totalorder %s47, %s48
    %p57 = scmp.eq.s32.totalorder %s16, 0
    %p58 = por %p56, %p57
    %p59 = scmp.ne.s32.totalorder %s47, %s48
    %p60 = scmp.eq.s32.totalorder %s17, 1
    %p61 = por %p59, %p60
    %p63 = scmp.ne.s32.totalorder %s48, %s62
    %p64 = scmp.eq.s32.totalorder %s17, 0
    %p65 = por %p63, %p64
    %s67 = sadd.s32 %s66, 1
    %p70 = scmp.eq.s32.totalorder %s11, 1
    %p71 = scmp.ne.s32.totalorder %s66, %s68
    %p72 = scmp.eq.s32.totalorder %s11, 0
    %p73 = por %p71, %p72
    %p74 = scmp.ne.s32.totalorder %s66, %s68
    %p75 = scmp.eq.s32.totalorder %s16, 1
    %p76 = por %p74, %p75
    %p77 = scmp.ne.s32.totalorder %s68, %s69
    %p78 = scmp.eq.s32.totalorder %s16, 0
    %p79 = por %p77, %p78
    %p80 = scmp.ne.s32.totalorder %s68, %s69
    %p81 = scmp.eq.s32.totalorder %s17, 1
    %p82 = por %p80, %p81
    %p84 = scmp.ne.s32.totalorder %s69, %s83
    %p85 = scmp.eq.s32.totalorder %s17, 0
    %p86 = por %p84, %p85
    %s88 = sadd.s32 %s87, 1
    %p91 = scmp.eq.s32.totalorder %s11, 1
    %p92 = scmp.ne.s32.totalorder %s87, %s89
    %p93 = scmp.eq.s32.totalorder %s11, 0
    %p94 = por %p92, %p93
    %p95 = scmp.ne.s32.totalorder %s87, %s89
    %p96 = scmp.eq.s32.totalorder %s16, 1
    %p97 = por %p95, %p96
    %p98 = scmp.ne.s32.totalorder %s89, %s90
    %p99 = scmp.eq.s32.totalorder %s16, 0
    %p100 = por %p98, %p99
    %p101 = scmp.ne.s32.totalorder %s89, %s90
    %p102 = scmp.eq.s32.totalorder %s17, 1
    %p103 = por %p101, %p102
    %p105 = scmp.ne.s32.totalorder %s90, %s104
    %p106 = scmp.eq.s32.totalorder %s17, 0
    %p107 = por %p105, %p106
    %s109 = sadd.s32 %s108, 1
    %p112 = scmp.eq.s32.totalorder %s11, 1
    %p113 = scmp.ne.s32.totalorder %s108, %s110
    %p114 = scmp.eq.s32.totalorder %s11, 0
    %p115 = por %p113, %p114
    %p116 = scmp.ne.s32.totalorder %s108, %s110
    %p117 = scmp.eq.s32.totalorder %s16, 1
    %p118 = por %p116, %p117
    %p119 = scmp.ne.s32.totalorder %s110, %s111
    %p120 = scmp.eq.s32.totalorder %s16, 0
    %p121 = por %p119, %p120
    %p122 = scmp.ne.s32.totalorder %s110, %s111
    %p123 = scmp.eq.s32.totalorder %s17, 1
    %p124 = por %p122, %p123
    %p126 = scmp.ne.s32.totalorder %s111, %s125
    %p127 = scmp.eq.s32.totalorder %s17, 0
    %p128 = por %p126, %p127
    %s129 = ssub.s32 %s11, %s18
    %p130 = scmp.eq.s32.totalorder %s129, 0
    %s132 = sadd.s32 %s131, 1
    %s133 = scalar_select %p130, %s131, %s132
    %p136 = pneg %p130
    %p137 = scmp.eq.s32.totalorder %s11, 1
    %p138 = por %p136, %p137
    %p139 = scmp.ne.s32.totalorder %s131, %s134
    %p140 = scmp.eq.s32.totalorder %s11, 0
    %p141 = por %p139, %p140
    %p142 = scmp.ne.s32.totalorder %s131, %s134
    %p143 = scmp.eq.s32.totalorder %s16, 1
    %p144 = por %p142, %p143
    %p145 = scmp.ne.s32.totalorder %s134, %s135
    %p146 = scmp.eq.s32.totalorder %s16, 0
    %p147 = por %p145, %p146
    %p148 = scmp.ne.s32.totalorder %s134, %s135
    %p149 = scmp.eq.s32.totalorder %s17, 1
    %p150 = por %p148, %p149
    %p152 = scmp.ne.s32.totalorder %s135, %s151
    %p153 = scmp.eq.s32.totalorder %s17, 0
    %p154 = por %p152, %p153
    %p155 = scmp.le.s32.totalorder 1, %s11
    %p156 = scmp.lt.s32.totalorder %s11, 3
    %p157 = pnand %p155, %p156
    %p158 = pneg %p157
    // Predicated region
    $region9: #{cross_modal_attention.1} parent=5 // pred_check
      _
    $region10: #{cross_modal_attention.1} parent=5 // pred_check_branch
      %160 = sbr.rel (%p157) target = $region12
    $region11: #{cross_modal_attention.1} parent=5 // pred_region
      %s161 = ssub.s32 %s11, 1
      // Predicated region
      $region13: #{cross_modal_attention.1} parent=11 // pred_check
        %p162 = pneg %p58
      $region14: #{cross_modal_attention.1} parent=11 // pred_check_branch
        %164 = sbr.rel (%p162) target = $region16
      $region15: #{cross_modal_attention.1} parent=11 // pred_region
        _
      $region16: #{cross_modal_attention.1} parent=11 // pred_fallthru
        _
      // Predicated region
      $region17: #{cross_modal_attention.1} parent=11 // pred_check
        %p165 = pneg %p79
      $region18: #{cross_modal_attention.1} parent=11 // pred_check_branch
        %167 = sbr.rel (%p165) target = $region20
      $region19: #{cross_modal_attention.1} parent=11 // pred_region
        _
      $region20: #{cross_modal_attention.1} parent=11 // pred_fallthru
        _
      // Predicated region
      $region21: #{cross_modal_attention.1} parent=11 // pred_check
        %p168 = pneg %p100
      $region22: #{cross_modal_attention.1} parent=11 // pred_check_branch
        %170 = sbr.rel (%p168) target = $region24
      $region23: #{cross_modal_attention.1} parent=11 // pred_region
        _
      $region24: #{cross_modal_attention.1} parent=11 // pred_fallthru
        _
      // Predicated region
      $region25: #{cross_modal_attention.1} parent=11 // pred_check
        %p171 = pneg %p121
      $region26: #{cross_modal_attention.1} parent=11 // pred_check_branch
        %173 = sbr.rel (%p171) target = $region28
      $region27: #{cross_modal_attention.1} parent=11 // pred_region
        _
      $region28: #{cross_modal_attention.1} parent=11 // pred_fallthru
        _
    $region12: #{cross_modal_attention.1} parent=5 // pred_fallthru
      _
    %p174 = scmp.lt.s32.totalorder %s11, 2
    // Predicated region
    $region29: #{cross_modal_attention.1} parent=5 // pred_check
      %p175 = pneg %p174
    $region30: #{cross_modal_attention.1} parent=5 // pred_check_branch
      %177 = sbr.rel (%p175) target = $region32
    $region31: #{cross_modal_attention.1} parent=5 // pred_region
      // Predicated region
      $region33: #{cross_modal_attention.1} parent=31 // pred_check
        %p178 = pneg %p31
      $region34: #{cross_modal_attention.1} parent=31 // pred_check_branch
        %180 = sbr.rel (%p178) target = $region36
      $region35: #{cross_modal_attention.1} parent=31 // pred_region
        %p181 = scmp.lt.s32.totalorder %s11, 1
        %s182 = scalar_select %p181, %s11, 1
        %s183 = smul.addr %s182, 24
        %s184 = smul.addr %s183, 8
        %s185 = scalar_lea.vmem %s0, %s184
      $region36: #{cross_modal_attention.1} parent=31 // pred_fallthru
        _
    $region32: #{cross_modal_attention.1} parent=5 // pred_fallthru
      _
    %p186 = scmp.le.s32.totalorder 1, %s11
    %p187 = scmp.lt.s32.totalorder %s11, 3
    %p188 = pnand %p186, %p187
    %p189 = pneg %p188
    // Predicated region
    $region37: #{cross_modal_attention.1} parent=5 // pred_check
      _
    $region38: #{cross_modal_attention.1} parent=5 // pred_check_branch
      %191 = sbr.rel (%p188) target = $region40
    $region39: #{cross_modal_attention.1} parent=5 // pred_region
      %s192 = ssub.s32 %s11, 1
      %p193 = scmp.lt.s32.totalorder %s16, 1
      %s194 = scalar_select %p193, %s16, 1
      %s195 = smul.addr %s194, 24
      %s196 = smul.addr %s195, 8
      %s197 = scalar_lea.vmem %s0, %s196
      %p198 = pneg %p37
      %p199 = pneg %p34
      %p200 = pneg %p58
      %p201 = pneg %p55
      %p202 = pneg %p79
      %p203 = pneg %p76
      %p204 = pneg %p100
      %p205 = pneg %p97
      %p206 = pneg %p121
      %p207 = pneg %p118
      %p208 = pneg %p147
      %p209 = pneg %p144
      %p210 = scmp.lt.s32.totalorder %s16, 1
      %s211 = scalar_select %p210, %s16, 1
      %s212 = smul.addr %s211, 24
      %s213 = smul.addr %s212, 8
      %s214 = scalar_lea.vmem %s5, %s213
      %p215 = scmp.lt.s32.totalorder %s16, 1
      %s216 = scalar_select %p215, %s16, 1
      %s217 = smul.addr %s216, 24
      %s218 = smul.addr %s217, 8
      %s219 = scalar_lea.vmem %s0, %s218
      %p220 = scmp.lt.s32.totalorder %s16, 1
      %s221 = scalar_select %p220, %s16, 1
      %s222 = smul.addr %s221, 24
      %s223 = smul.addr %s222, 8
      %s224 = scalar_lea.vmem %s5, %s223
      %v226 = vld [vmem:[%s219] sm:$0xff]
      %v227 = vld [vmem:[%s219 + $0x8] sm:$0xff]
      %v228 = vld [vmem:[%s219 + $0x10] sm:$0xff]
      %v229 = vld [vmem:[%s219 + $0x18] sm:$0xff]
      %v230 = vld [vmem:[%s219 + $0x20] sm:$0xff]
      %v231 = vld [vmem:[%s219 + $0x28] sm:$0xff]
      %v232 = vld [vmem:[%s219 + $0x30] sm:$0xff]
      %v233 = vld [vmem:[%s219 + $0x38] sm:$0xff]
      %v234 = vld [vmem:[%s219 + $0x40] sm:$0xff]
      %v235 = vld [vmem:[%s219 + $0x48] sm:$0xff]
      %v236 = vld [vmem:[%s219 + $0x50] sm:$0xff]
      %v237 = vld [vmem:[%s219 + $0x58] sm:$0xff]
      %v238 = vld [vmem:[%s219 + $0x60] sm:$0xff]
      %v239 = vld [vmem:[%s219 + $0x68] sm:$0xff]
      %v240 = vld [vmem:[%s219 + $0x70] sm:$0xff]
      %v241 = vld [vmem:[%s219 + $0x78] sm:$0xff]
      %v242 = vld [vmem:[%s219 + $0x80] sm:$0xff]
      %v243 = vld [vmem:[%s219 + $0x88] sm:$0xff]
      %v244 = vld [vmem:[%s219 + $0x90] sm:$0xff]
      %v245 = vld [vmem:[%s219 + $0x98] sm:$0xff]
      %v246 = vld [vmem:[%s219 + $0xa0] sm:$0xff]
      %v247 = vld [vmem:[%s219 + $0xa8] sm:$0xff]
      %v248 = vld [vmem:[%s219 + $0xb0] sm:$0xff]
      %v249 = vld [vmem:[%s219 + $0xb8] sm:$0xff]
      %v250 = vpack.c.bf16 %v232, %v226
      %v251 = vpack.c.bf16 %v233, %v227
      %v252 = vpack.c.bf16 %v234, %v228
      %v253 = vpack.c.bf16 %v235, %v229
      %v254 = vpack.c.bf16 %v236, %v230
      %v255 = vpack.c.bf16 %v237, %v231
      %v256 = vpack.c.bf16 %v244, %v238
      %v257 = vpack.c.bf16 %v245, %v239
      %v258 = vpack.c.bf16 %v246, %v240
      %v259 = vpack.c.bf16 %v247, %v241
      %v260 = vpack.c.bf16 %v248, %v242
      %v261 = vpack.c.bf16 %v249, %v243
      %v262 = vld [vmem:[%s1] sm:$0xf]
      %v263 = vld [vmem:[%s1 + $0x4] sm:$0xf]
      %v264 = vld [vmem:[%s1 + $0x8] sm:$0xf]
      %v265 = vld [vmem:[%s1 + $0xc] sm:$0xf]
      %v266 = vld [vmem:[%s1 + $0x10] sm:$0xf]
      %v267 = vld [vmem:[%s1 + $0x14] sm:$0xf]
      %v268 = vld [vmem:[%s1 + $0x18] sm:$0xf]
      %v269 = vld [vmem:[%s1 + $0x1c] sm:$0xf]
      %v270 = vld [vmem:[%s1 + $0x20] sm:$0xf]
      %v271 = vld [vmem:[%s1 + $0x24] sm:$0xf]
      %v272 = vld [vmem:[%s1 + $0x28] sm:$0xf]
      %v273 = vld [vmem:[%s1 + $0x2c] sm:$0xf]
      %v274 = vld [vmem:[%s2] sm:$0xff]
      %v275 = vld [vmem:[%s2 + $0x8] sm:$0xff]
      %v276 = vld [vmem:[%s2 + $0x10] sm:$0xff]
      %v277 = vld [vmem:[%s2 + $0x18] sm:$0xff]
      %v278 = vld [vmem:[%s2 + $0x20] sm:$0xff]
      %v279 = vld [vmem:[%s2 + $0x28] sm:$0xff]
      %v280 = vld [vmem:[%s2 + $0x30] sm:$0xff]
      %v281 = vld [vmem:[%s2 + $0x38] sm:$0xff]
      %v282 = vld [vmem:[%s2 + $0x40] sm:$0xff]
      %v283 = vld [vmem:[%s2 + $0x48] sm:$0xff]
      %v284 = vld [vmem:[%s2 + $0x50] sm:$0xff]
      %v285 = vld [vmem:[%s2 + $0x58] sm:$0xff]
      %287 = vset.pattern.permute.xlu0 0
      %288 = vperm.xlu0 %287, %v274
      %v289 = vpop.permute.xlu0 %288
      %292 = vset.pattern.permute.xlu0 0
      %293 = vperm.xlu0 %292, %v275
      %v294 = vpop.permute.xlu0 %293
      %297 = vset.pattern.permute.xlu0 0
      %298 = vperm.xlu0 %297, %v276
      %v299 = vpop.permute.xlu0 %298
      %302 = vset.pattern.permute.xlu0 0
      %303 = vperm.xlu0 %302, %v277
      %v304 = vpop.permute.xlu0 %303
      %307 = vset.pattern.permute.xlu0 0
      %308 = vperm.xlu0 %307, %v278
      %v309 = vpop.permute.xlu0 %308
      %312 = vset.pattern.permute.xlu0 0
      %313 = vperm.xlu0 %312, %v279
      %v314 = vpop.permute.xlu0 %313
      %317 = vset.pattern.permute.xlu0 0
      %318 = vperm.xlu0 %317, %v280
      %v319 = vpop.permute.xlu0 %318
      %322 = vset.pattern.permute.xlu0 0
      %323 = vperm.xlu0 %322, %v281
      %v324 = vpop.permute.xlu0 %323
      %327 = vset.pattern.permute.xlu0 0
      %328 = vperm.xlu0 %327, %v282
      %v329 = vpop.permute.xlu0 %328
      %332 = vset.pattern.permute.xlu0 0
      %333 = vperm.xlu0 %332, %v283
      %v334 = vpop.permute.xlu0 %333
      %337 = vset.pattern.permute.xlu0 0
      %338 = vperm.xlu0 %337, %v284
      %v339 = vpop.permute.xlu0 %338
      %342 = vset.pattern.permute.xlu0 0
      %343 = vperm.xlu0 %342, %v285
      %v344 = vpop.permute.xlu0 %343
      %v358 = vunpack.c.l.b16 %v262
      %v359 = vunpack.c.l.b16 %v263
      %v360 = vunpack.c.l.b16 %v264
      %v361 = vunpack.c.l.b16 %v265
      %v362 = vunpack.c.l.b16 %v266
      %v363 = vunpack.c.l.b16 %v267
      %v364 = vunpack.c.l.b16 %v268
      %v365 = vunpack.c.l.b16 %v269
      %v366 = vunpack.c.l.b16 %v270
      %v367 = vunpack.c.l.b16 %v271
      %v368 = vunpack.c.l.b16 %v272
      %v369 = vunpack.c.l.b16 %v273
      %v370 = vpack.c.b16 %v359, %v358
      %v371 = vpack.c.b16 %v361, %v360
      %v372 = vpack.c.b16 %v363, %v362
      %v373 = vpack.c.b16 %v365, %v364
      %v374 = vpack.c.b16 %v367, %v366
      %v375 = vpack.c.b16 %v369, %v368
      %vm376 = vcmask 261120
      %v378 = vsel %vm376, %v370, 0
      %v381 = vsel %vm376, %v371, 0
      %v384 = vsel %vm376, %v372, 0
      %v387 = vsel %vm376, %v373, 0
      %v390 = vsel %vm376, %v374, 0
      %v393 = vsel %vm376, %v375, 0
      %395 = vmatpush.bf16.msra.mxu0 0
      %396 = vmatpush.bf16.msra.mxu0 0
      %397 = vmatpush.bf16.msra.mxu0 0
      %398 = vmatpush.bf16.msra.mxu0 0
      %399 = vmatpush.bf16.msra.mxu0 0
      %400 = vmatpush.bf16.msra.mxu0 0
      %401 = vmatpush.bf16.msra.mxu0 %v256
      %402 = vmatpush.bf16.msra.mxu0 %v250
      %403 = vmatmul.bf16.gmra.mxu0 %v378
      %v404 = vpop.f32.mrf.mxu0
      %v405 = vadd.f32 %v289, %v404
      %v406 = vpop.f32.mrf.mxu0
      %v407 = vadd.f32 %v294, %v406
      %408 = vmatmul.bf16.gmra.mxu0 %v381
      %v409 = vpop.f32.mrf.mxu0
      %v410 = vadd.f32 %v299, %v409
      %v411 = vpop.f32.mrf.mxu0
      %v412 = vadd.f32 %v304, %v411
      %413 = vmatmul.bf16.gmra.mxu0 %v384
      %v414 = vpop.f32.mrf.mxu0
      %v415 = vadd.f32 %v309, %v414
      %v416 = vpop.f32.mrf.mxu0
      %v417 = vadd.f32 %v314, %v416
      %418 = vmatmul.bf16.gmra.mxu0 %v387
      %v419 = vpop.f32.mrf.mxu0
      %v420 = vadd.f32 %v319, %v419
      %v421 = vpop.f32.mrf.mxu0
      %v422 = vadd.f32 %v324, %v421
      %423 = vmatmul.bf16.gmra.mxu0 %v390
      %v424 = vpop.f32.mrf.mxu0
      %v425 = vadd.f32 %v329, %v424
      %v426 = vpop.f32.mrf.mxu0
      %v427 = vadd.f32 %v334, %v426
      %428 = vmatmul.bf16.gmra.mxu0 %v393
      %v429 = vpop.f32.mrf.mxu0
      %v430 = vadd.f32 %v339, %v429
      %v431 = vpop.f32.mrf.mxu0
      %v432 = vadd.f32 %v344, %v431
      %433 = vdwg.mxu0
      %434 = vmatpush.bf16.msra.mxu0 0
      %435 = vmatpush.bf16.msra.mxu0 0
      %436 = vmatpush.bf16.msra.mxu0 0
      %437 = vmatpush.bf16.msra.mxu0 0
      %438 = vmatpush.bf16.msra.mxu0 0
      %439 = vmatpush.bf16.msra.mxu0 0
      %440 = vmatpush.bf16.msra.mxu0 %v257
      %441 = vmatpush.bf16.msra.mxu0 %v251
      %442 = vmatmul.bf16.gmra.mxu0 %v378
      %v443 = vpop.f32.mrf.mxu0
      %v444 = vadd.f32 %v289, %v443
      %v445 = vpop.f32.mrf.mxu0
      %v446 = vadd.f32 %v294, %v445
      %447 = vmatmul.bf16.gmra.mxu0 %v381
      %v448 = vpop.f32.mrf.mxu0
      %v449 = vadd.f32 %v299, %v448
      %v450 = vpop.f32.mrf.mxu0
      %v451 = vadd.f32 %v304, %v450
      %452 = vmatmul.bf16.gmra.mxu0 %v384
      %v453 = vpop.f32.mrf.mxu0
      %v454 = vadd.f32 %v309, %v453
      %v455 = vpop.f32.mrf.mxu0
      %v456 = vadd.f32 %v314, %v455
      %457 = vmatmul.bf16.gmra.mxu0 %v387
      %v458 = vpop.f32.mrf.mxu0
      %v459 = vadd.f32 %v319, %v458
      %v460 = vpop.f32.mrf.mxu0
      %v461 = vadd.f32 %v324, %v460
      %462 = vmatmul.bf16.gmra.mxu0 %v390
      %v463 = vpop.f32.mrf.mxu0
      %v464 = vadd.f32 %v329, %v463
      %v465 = vpop.f32.mrf.mxu0
      %v466 = vadd.f32 %v334, %v465
      %467 = vmatmul.bf16.gmra.mxu0 %v393
      %v468 = vpop.f32.mrf.mxu0
      %v469 = vadd.f32 %v339, %v468
      %v470 = vpop.f32.mrf.mxu0
      %v471 = vadd.f32 %v344, %v470
      %472 = vdwg.mxu0
      %473 = vmatpush.bf16.msra.mxu0 0
      %474 = vmatpush.bf16.msra.mxu0 0
      %475 = vmatpush.bf16.msra.mxu0 0
      %476 = vmatpush.bf16.msra.mxu0 0
      %477 = vmatpush.bf16.msra.mxu0 0
      %478 = vmatpush.bf16.msra.mxu0 0
      %479 = vmatpush.bf16.msra.mxu0 %v258
      %480 = vmatpush.bf16.msra.mxu0 %v252
      %481 = vmatmul.bf16.gmra.mxu0 %v378
      %v482 = vpop.f32.mrf.mxu0
      %v483 = vadd.f32 %v289, %v482
      %v484 = vpop.f32.mrf.mxu0
      %v485 = vadd.f32 %v294, %v484
      %486 = vmatmul.bf16.gmra.mxu0 %v381
      %v487 = vpop.f32.mrf.mxu0
      %v488 = vadd.f32 %v299, %v487
      %v489 = vpop.f32.mrf.mxu0
      %v490 = vadd.f32 %v304, %v489
      %491 = vmatmul.bf16.gmra.mxu0 %v384
      %v492 = vpop.f32.mrf.mxu0
      %v493 = vadd.f32 %v309, %v492
      %v494 = vpop.f32.mrf.mxu0
      %v495 = vadd.f32 %v314, %v494
      %496 = vmatmul.bf16.gmra.mxu0 %v387
      %v497 = vpop.f32.mrf.mxu0
      %v498 = vadd.f32 %v319, %v497
      %v499 = vpop.f32.mrf.mxu0
      %v500 = vadd.f32 %v324, %v499
      %501 = vmatmul.bf16.gmra.mxu0 %v390
      %v502 = vpop.f32.mrf.mxu0
      %v503 = vadd.f32 %v329, %v502
      %v504 = vpop.f32.mrf.mxu0
      %v505 = vadd.f32 %v334, %v504
      %506 = vmatmul.bf16.gmra.mxu0 %v393
      %v507 = vpop.f32.mrf.mxu0
      %v508 = vadd.f32 %v339, %v507
      %v509 = vpop.f32.mrf.mxu0
      %v510 = vadd.f32 %v344, %v509
      %511 = vdwg.mxu0
      %512 = vmatpush.bf16.msra.mxu0 0
      %513 = vmatpush.bf16.msra.mxu0 0
      %514 = vmatpush.bf16.msra.mxu0 0
      %515 = vmatpush.bf16.msra.mxu0 0
      %516 = vmatpush.bf16.msra.mxu0 0
      %517 = vmatpush.bf16.msra.mxu0 0
      %518 = vmatpush.bf16.msra.mxu0 %v259
      %519 = vmatpush.bf16.msra.mxu0 %v253
      %520 = vmatmul.bf16.gmra.mxu0 %v378
      %v521 = vpop.f32.mrf.mxu0
      %v522 = vadd.f32 %v289, %v521
      %v523 = vpop.f32.mrf.mxu0
      %v524 = vadd.f32 %v294, %v523
      %525 = vmatmul.bf16.gmra.mxu0 %v381
      %v526 = vpop.f32.mrf.mxu0
      %v527 = vadd.f32 %v299, %v526
      %v528 = vpop.f32.mrf.mxu0
      %v529 = vadd.f32 %v304, %v528
      %530 = vmatmul.bf16.gmra.mxu0 %v384
      %v531 = vpop.f32.mrf.mxu0
      %v532 = vadd.f32 %v309, %v531
      %v533 = vpop.f32.mrf.mxu0
      %v534 = vadd.f32 %v314, %v533
      %535 = vmatmul.bf16.gmra.mxu0 %v387
      %v536 = vpop.f32.mrf.mxu0
      %v537 = vadd.f32 %v319, %v536
      %v538 = vpop.f32.mrf.mxu0
      %v539 = vadd.f32 %v324, %v538
      %540 = vmatmul.bf16.gmra.mxu0 %v390
      %v541 = vpop.f32.mrf.mxu0
      %v542 = vadd.f32 %v329, %v541
      %v543 = vpop.f32.mrf.mxu0
      %v544 = vadd.f32 %v334, %v543
      %545 = vmatmul.bf16.gmra.mxu0 %v393
      %v546 = vpop.f32.mrf.mxu0
      %v547 = vadd.f32 %v339, %v546
      %v548 = vpop.f32.mrf.mxu0
      %v549 = vadd.f32 %v344, %v548
      %550 = vdwg.mxu0
      %551 = vmatpush.bf16.msra.mxu0 0
      %552 = vmatpush.bf16.msra.mxu0 0
      %553 = vmatpush.bf16.msra.mxu0 0
      %554 = vmatpush.bf16.msra.mxu0 0
      %555 = vmatpush.bf16.msra.mxu0 0
      %556 = vmatpush.bf16.msra.mxu0 0
      %557 = vmatpush.bf16.msra.mxu0 %v260
      %558 = vmatpush.bf16.msra.mxu0 %v254
      %559 = vmatmul.bf16.gmra.mxu0 %v378
      %v560 = vpop.f32.mrf.mxu0
      %v561 = vadd.f32 %v289, %v560
      %v562 = vpop.f32.mrf.mxu0
      %v563 = vadd.f32 %v294, %v562
      %564 = vmatmul.bf16.gmra.mxu0 %v381
      %v565 = vpop.f32.mrf.mxu0
      %v566 = vadd.f32 %v299, %v565
      %v567 = vpop.f32.mrf.mxu0
      %v568 = vadd.f32 %v304, %v567
      %569 = vmatmul.bf16.gmra.mxu0 %v384
      %v570 = vpop.f32.mrf.mxu0
      %v571 = vadd.f32 %v309, %v570
      %v572 = vpop.f32.mrf.mxu0
      %v573 = vadd.f32 %v314, %v572
      %574 = vmatmul.bf16.gmra.mxu0 %v387
      %v575 = vpop.f32.mrf.mxu0
      %v576 = vadd.f32 %v319, %v575
      %v577 = vpop.f32.mrf.mxu0
      %v578 = vadd.f32 %v324, %v577
      %579 = vmatmul.bf16.gmra.mxu0 %v390
      %v580 = vpop.f32.mrf.mxu0
      %v581 = vadd.f32 %v329, %v580
      %v582 = vpop.f32.mrf.mxu0
      %v583 = vadd.f32 %v334, %v582
      %584 = vmatmul.bf16.gmra.mxu0 %v393
      %v585 = vpop.f32.mrf.mxu0
      %v586 = vadd.f32 %v339, %v585
      %v587 = vpop.f32.mrf.mxu0
      %v588 = vadd.f32 %v344, %v587
      %589 = vdwg.mxu0
      %590 = vmatpush.bf16.msra.mxu0 0
      %591 = vmatpush.bf16.msra.mxu0 0
      %592 = vmatpush.bf16.msra.mxu0 0
      %593 = vmatpush.bf16.msra.mxu0 0
      %594 = vmatpush.bf16.msra.mxu0 0
      %595 = vmatpush.bf16.msra.mxu0 0
      %596 = vmatpush.bf16.msra.mxu0 %v261
      %597 = vmatpush.bf16.msra.mxu0 %v255
      %598 = vmatmul.bf16.gmra.mxu0 %v378
      %v599 = vpop.f32.mrf.mxu0
      %v600 = vadd.f32 %v289, %v599
      %v601 = vpop.f32.mrf.mxu0
      %v602 = vadd.f32 %v294, %v601
      %603 = vmatmul.bf16.gmra.mxu0 %v381
      %v604 = vpop.f32.mrf.mxu0
      %v605 = vadd.f32 %v299, %v604
      %v606 = vpop.f32.mrf.mxu0
      %v607 = vadd.f32 %v304, %v606
      %608 = vmatmul.bf16.gmra.mxu0 %v384
      %v609 = vpop.f32.mrf.mxu0
      %v610 = vadd.f32 %v309, %v609
      %v611 = vpop.f32.mrf.mxu0
      %v612 = vadd.f32 %v314, %v611
      %613 = vmatmul.bf16.gmra.mxu0 %v387
      %v614 = vpop.f32.mrf.mxu0
      %v615 = vadd.f32 %v319, %v614
      %v616 = vpop.f32.mrf.mxu0
      %v617 = vadd.f32 %v324, %v616
      %618 = vmatmul.bf16.gmra.mxu0 %v390
      %v619 = vpop.f32.mrf.mxu0
      %v620 = vadd.f32 %v329, %v619
      %v621 = vpop.f32.mrf.mxu0
      %v622 = vadd.f32 %v334, %v621
      %623 = vmatmul.bf16.gmra.mxu0 %v393
      %v624 = vpop.f32.mrf.mxu0
      %v625 = vadd.f32 %v339, %v624
      %v626 = vpop.f32.mrf.mxu0
      %v627 = vadd.f32 %v344, %v626
      %628 = vdwg.mxu0
      %v629 = vpack.c.bf16 %v444, %v405
      %v630 = vpack.c.bf16 %v522, %v483
      %v631 = vpack.c.bf16 %v600, %v561
      %v632 = vpack.c.bf16 %v446, %v407
      %v633 = vpack.c.bf16 %v524, %v485
      %v634 = vpack.c.bf16 %v602, %v563
      %v635 = vpack.c.bf16 %v449, %v410
      %v636 = vpack.c.bf16 %v527, %v488
      %v637 = vpack.c.bf16 %v605, %v566
      %v638 = vpack.c.bf16 %v451, %v412
      %v639 = vpack.c.bf16 %v529, %v490
      %v640 = vpack.c.bf16 %v607, %v568
      %v641 = vpack.c.bf16 %v454, %v415
      %v642 = vpack.c.bf16 %v532, %v493
      %v643 = vpack.c.bf16 %v610, %v571
      %v644 = vpack.c.bf16 %v456, %v417
      %v645 = vpack.c.bf16 %v534, %v495
      %v646 = vpack.c.bf16 %v612, %v573
      %v647 = vpack.c.bf16 %v459, %v420
      %v648 = vpack.c.bf16 %v537, %v498
      %v649 = vpack.c.bf16 %v615, %v576
      %v650 = vpack.c.bf16 %v461, %v422
      %v651 = vpack.c.bf16 %v539, %v500
      %v652 = vpack.c.bf16 %v617, %v578
      %v653 = vpack.c.bf16 %v464, %v425
      %v654 = vpack.c.bf16 %v542, %v503
      %v655 = vpack.c.bf16 %v620, %v581
      %v656 = vpack.c.bf16 %v466, %v427
      %v657 = vpack.c.bf16 %v544, %v505
      %v658 = vpack.c.bf16 %v622, %v583
      %v659 = vpack.c.bf16 %v469, %v430
      %v660 = vpack.c.bf16 %v547, %v508
      %v661 = vpack.c.bf16 %v625, %v586
      %v662 = vpack.c.bf16 %v471, %v432
      %v663 = vpack.c.bf16 %v549, %v510
      %v664 = vpack.c.bf16 %v627, %v588
      %665 = vst [vmem:[#allocation2] sm:$0xff] %v629
      %666 = vst [vmem:[#allocation2 + $0x8] sm:$0xff] %v630
      %667 = vst [vmem:[#allocation2 + $0x10] sm:$0xff] %v631
      %668 = vst [vmem:[#allocation2 + $0x18] sm:$0xff] %v632
      %669 = vst [vmem:[#allocation2 + $0x20] sm:$0xff] %v633
      %670 = vst [vmem:[#allocation2 + $0x28] sm:$0xff] %v634
      %671 = vst [vmem:[#allocation2 + $0x30] sm:$0xff] %v635
      %672 = vst [vmem:[#allocation2 + $0x38] sm:$0xff] %v636
      %673 = vst [vmem:[#allocation2 + $0x40] sm:$0xff] %v637
      %674 = vst [vmem:[#allocation2 + $0x48] sm:$0xff] %v638
      %675 = vst [vmem:[#allocation2 + $0x50] sm:$0xff] %v639
      %676 = vst [vmem:[#allocation2 + $0x58] sm:$0xff] %v640
      %677 = vst [vmem:[#allocation2 + $0x60] sm:$0xff] %v641
      %678 = vst [vmem:[#allocation2 + $0x68] sm:$0xff] %v642
      %679 = vst [vmem:[#allocation2 + $0x70] sm:$0xff] %v643
      %680 = vst [vmem:[#allocation2 + $0x78] sm:$0xff] %v644
      %681 = vst [vmem:[#allocation2 + $0x80] sm:$0xff] %v645
      %682 = vst [vmem:[#allocation2 + $0x88] sm:$0xff] %v646
      %683 = vst [vmem:[#allocation2 + $0x90] sm:$0xff] %v647
      %684 = vst [vmem:[#allocation2 + $0x98] sm:$0xff] %v648
      %685 = vst [vmem:[#allocation2 + $0xa0] sm:$0xff] %v649
      %686 = vst [vmem:[#allocation2 + $0xa8] sm:$0xff] %v650
      %687 = vst [vmem:[#allocation2 + $0xb0] sm:$0xff] %v651
      %688 = vst [vmem:[#allocation2 + $0xb8] sm:$0xff] %v652
      %689 = vst [vmem:[#allocation2 + $0xc0] sm:$0xff] %v653
      %690 = vst [vmem:[#allocation2 + $0xc8] sm:$0xff] %v654
      %691 = vst [vmem:[#allocation2 + $0xd0] sm:$0xff] %v655
      %692 = vst [vmem:[#allocation2 + $0xd8] sm:$0xff] %v656
      %693 = vst [vmem:[#allocation2 + $0xe0] sm:$0xff] %v657
      %694 = vst [vmem:[#allocation2 + $0xe8] sm:$0xff] %v658
      %695 = vst [vmem:[#allocation2 + $0xf0] sm:$0xff] %v659
      %696 = vst [vmem:[#allocation2 + $0xf8] sm:$0xff] %v660
      %697 = vst [vmem:[#allocation2 + $0x100] sm:$0xff] %v661
      %698 = vst [vmem:[#allocation2 + $0x108] sm:$0xff] %v662
      %699 = vst [vmem:[#allocation2 + $0x110] sm:$0xff] %v663
      %700 = vst [vmem:[#allocation2 + $0x118] sm:$0xff] %v664
      %v701 = vld [vmem:[%s3] sm:$0xf]
      %v702 = vld [vmem:[%s3 + $0x4] sm:$0xf]
      %v703 = vld [vmem:[%s3 + $0x8] sm:$0xf]
      %v704 = vld [vmem:[%s3 + $0xc] sm:$0xf]
      %v705 = vld [vmem:[%s4] sm:$0xff]
      %v706 = vld [vmem:[%s4 + $0x8] sm:$0xff]
      %v707 = vld [vmem:[%s4 + $0x10] sm:$0xff]
      %v708 = vld [vmem:[%s4 + $0x18] sm:$0xff]
      %v709 = vld [vmem:[#allocation2] sm:$0xf]
      %v710 = vld [vmem:[#allocation2 + $0x18] sm:$0xf]
      %v711 = vld [vmem:[#allocation2 + $0x30] sm:$0xf]
      %v712 = vld [vmem:[#allocation2 + $0x48] sm:$0xf]
      %v713 = vld [vmem:[#allocation2 + $0x68] sm:$0xff]
      %v714 = vld [vmem:[#allocation2 + $0x80] sm:$0xff]
      %v715 = vld [vmem:[#allocation2 + $0x98] sm:$0xff]
      %v716 = vld [vmem:[#allocation2 + $0xb0] sm:$0xff]
      %v717 = vld [vmem:[#allocation2 + $0xc8] sm:$0xff]
      %v718 = vld [vmem:[#allocation2 + $0xe0] sm:$0xff]
      %v719 = vld [vmem:[#allocation2 + $0xf8] sm:$0xff]
      %v720 = vld [vmem:[#allocation2 + $0x110] sm:$0xff]
      %v725 = vunpack.c.l.b16 %v709
      %v726 = vunpack.c.l.b16 %v710
      %v727 = vunpack.c.l.b16 %v711
      %v728 = vunpack.c.l.b16 %v712
      %v729 = vpack.c.b16 %v726, %v725
      %v730 = vpack.c.b16 %v728, %v727
      %733 = vxpose.xlu0.c.b16.start [1/8] %v729, 128
      %734 = vxpose.xlu0.c.b16.cont [2/8] %v730, 128
      %735 = vxpose.xlu0.c.b16.cont [3/8] 0, 128
      %736 = vxpose.xlu0.c.b16.cont [4/8] 0, 128
      %737 = vxpose.xlu0.c.b16.cont [5/8] 0, 128
      %738 = vxpose.xlu0.c.b16.cont [6/8] 0, 128
      %739 = vxpose.xlu0.c.b16.cont [7/8] 0, 128
      %740 = vxpose.xlu0.c.b16.end [8/8] 0, 128
      %v741 = vpop.trf.xlu0
      %v742 = vpop.trf.xlu0
      %v743 = vpop.trf.xlu0
      %v744 = vpop.trf.xlu0
      %v745 = vpop.trf.xlu0
      %v746 = vpop.trf.xlu0
      %v747 = vpop.trf.xlu0
      %v748 = vpop.trf.xlu0
      %v753 = vunpack.c.l.b16 %v713
      %v754 = vunpack.c.h.b16 %v713
      %v755 = vunpack.c.l.b16 %v714
      %v756 = vunpack.c.h.b16 %v714
      %v757 = vunpack.c.l.b16 %v715
      %v758 = vunpack.c.h.b16 %v715
      %v759 = vunpack.c.l.b16 %v716
      %v760 = vunpack.c.h.b16 %v716
      %v761 = vpack.c.b16 %v755, %v753
      %v762 = vpack.c.b16 %v756, %v754
      %v763 = vpack.c.b16 %v759, %v757
      %v764 = vpack.c.b16 %v760, %v758
      %v770 = vsel %vm376, %v741, 0
      %v773 = vsel %vm376, %v742, 0
      %v776 = vsel %vm376, %v743, 0
      %v779 = vsel %vm376, %v744, 0
      %v782 = vsel %vm376, %v745, 0
      %v785 = vsel %vm376, %v746, 0
      %v788 = vsel %vm376, %v747, 0
      %v791 = vsel %vm376, %v748, 0
      %793 = vmatpush.bf16.msra.mxu0 0
      %794 = vmatpush.bf16.msra.mxu0 0
      %795 = vmatpush.bf16.msra.mxu0 0
      %796 = vmatpush.bf16.msra.mxu0 0
      %797 = vmatpush.bf16.msra.mxu0 0
      %798 = vmatpush.bf16.msra.mxu0 0
      %799 = vmatpush.bf16.msra.mxu0 %v763
      %800 = vmatpush.bf16.msra.mxu0 %v761
      %801 = vmatmul.bf16.gmra.mxu0 %v770
      %v802 = vpop.f32.mrf.mxu0
      %v803 = vadd.f32 0.0, %v802
      %v804 = vpop.f32.mrf.mxu0
      %v805 = vadd.f32 0.0, %v804
      %806 = vmatmul.bf16.gmra.mxu0 %v773
      %v807 = vpop.f32.mrf.mxu0
      %v808 = vadd.f32 0.0, %v807
      %v809 = vpop.f32.mrf.mxu0
      %v810 = vadd.f32 0.0, %v809
      %811 = vmatmul.bf16.gmra.mxu0 %v776
      %v812 = vpop.f32.mrf.mxu0
      %v813 = vadd.f32 0.0, %v812
      %v814 = vpop.f32.mrf.mxu0
      %v815 = vadd.f32 0.0, %v814
      %816 = vmatmul.bf16.gmra.mxu0 %v779
      %v817 = vpop.f32.mrf.mxu0
      %v818 = vadd.f32 0.0, %v817
      %v819 = vpop.f32.mrf.mxu0
      %v820 = vadd.f32 0.0, %v819
      %821 = vmatmul.bf16.gmra.mxu0 %v782
      %v822 = vpop.f32.mrf.mxu0
      %v823 = vadd.f32 0.0, %v822
      %v824 = vpop.f32.mrf.mxu0
      %v825 = vadd.f32 0.0, %v824
      %826 = vmatmul.bf16.gmra.mxu0 %v785
      %v827 = vpop.f32.mrf.mxu0
      %v828 = vadd.f32 0.0, %v827
      %v829 = vpop.f32.mrf.mxu0
      %v830 = vadd.f32 0.0, %v829
      %831 = vmatmul.bf16.gmra.mxu0 %v788
      %v832 = vpop.f32.mrf.mxu0
      %v833 = vadd.f32 0.0, %v832
      %v834 = vpop.f32.mrf.mxu0
      %v835 = vadd.f32 0.0, %v834
      %836 = vmatmul.bf16.gmra.mxu0 %v791
      %v837 = vpop.f32.mrf.mxu0
      %v838 = vadd.f32 0.0, %v837
      %v839 = vpop.f32.mrf.mxu0
      %v840 = vadd.f32 0.0, %v839
      %841 = vdwg.mxu0
      %842 = vmatpush.bf16.msra.mxu0 0
      %843 = vmatpush.bf16.msra.mxu0 0
      %844 = vmatpush.bf16.msra.mxu0 0
      %845 = vmatpush.bf16.msra.mxu0 0
      %846 = vmatpush.bf16.msra.mxu0 0
      %847 = vmatpush.bf16.msra.mxu0 0
      %848 = vmatpush.bf16.msra.mxu0 %v764
      %849 = vmatpush.bf16.msra.mxu0 %v762
      %850 = vmatmul.bf16.gmra.mxu0 %v770
      %v851 = vpop.f32.mrf.mxu0
      %v852 = vadd.f32 0.0, %v851
      %v853 = vpop.f32.mrf.mxu0
      %v854 = vadd.f32 0.0, %v853
      %855 = vmatmul.bf16.gmra.mxu0 %v773
      %v856 = vpop.f32.mrf.mxu0
      %v857 = vadd.f32 0.0, %v856
      %v858 = vpop.f32.mrf.mxu0
      %v859 = vadd.f32 0.0, %v858
      %860 = vmatmul.bf16.gmra.mxu0 %v776
      %v861 = vpop.f32.mrf.mxu0
      %v862 = vadd.f32 0.0, %v861
      %v863 = vpop.f32.mrf.mxu0
      %v864 = vadd.f32 0.0, %v863
      %865 = vmatmul.bf16.gmra.mxu0 %v779
      %v866 = vpop.f32.mrf.mxu0
      %v867 = vadd.f32 0.0, %v866
      %v868 = vpop.f32.mrf.mxu0
      %v869 = vadd.f32 0.0, %v868
      %870 = vmatmul.bf16.gmra.mxu0 %v782
      %v871 = vpop.f32.mrf.mxu0
      %v872 = vadd.f32 0.0, %v871
      %v873 = vpop.f32.mrf.mxu0
      %v874 = vadd.f32 0.0, %v873
      %875 = vmatmul.bf16.gmra.mxu0 %v785
      %v876 = vpop.f32.mrf.mxu0
      %v877 = vadd.f32 0.0, %v876
      %v878 = vpop.f32.mrf.mxu0
      %v879 = vadd.f32 0.0, %v878
      %880 = vmatmul.bf16.gmra.mxu0 %v788
      %v881 = vpop.f32.mrf.mxu0
      %v882 = vadd.f32 0.0, %v881
      %v883 = vpop.f32.mrf.mxu0
      %v884 = vadd.f32 0.0, %v883
      %885 = vmatmul.bf16.gmra.mxu0 %v791
      %v886 = vpop.f32.mrf.mxu0
      %v887 = vadd.f32 0.0, %v886
      %v888 = vpop.f32.mrf.mxu0
      %v889 = vadd.f32 0.0, %v888
      %890 = vdwg.mxu0
      %v891 = vmax.f32 %v803, %v852
      %892 = vmax.xlane.f32.xlu0 %v891
      %v893 = vpop.xlane.xlu0 %892
      %v894 = vmax.f32 %v805, %v854
      %895 = vmax.xlane.f32.xlu0 %v894
      %v896 = vpop.xlane.xlu0 %895
      %v897 = vmax.f32 %v808, %v857
      %898 = vmax.xlane.f32.xlu0 %v897
      %v899 = vpop.xlane.xlu0 %898
      %v900 = vmax.f32 %v810, %v859
      %901 = vmax.xlane.f32.xlu0 %v900
      %v902 = vpop.xlane.xlu0 %901
      %v903 = vmax.f32 %v813, %v862
      %904 = vmax.xlane.f32.xlu0 %v903
      %v905 = vpop.xlane.xlu0 %904
      %v906 = vmax.f32 %v815, %v864
      %907 = vmax.xlane.f32.xlu0 %v906
      %v908 = vpop.xlane.xlu0 %907
      %v909 = vmax.f32 %v818, %v867
      %910 = vmax.xlane.f32.xlu0 %v909
      %v911 = vpop.xlane.xlu0 %910
      %v912 = vmax.f32 %v820, %v869
      %913 = vmax.xlane.f32.xlu0 %v912
      %v914 = vpop.xlane.xlu0 %913
      %v915 = vmax.f32 %v823, %v872
      %916 = vmax.xlane.f32.xlu0 %v915
      %v917 = vpop.xlane.xlu0 %916
      %v918 = vmax.f32 %v825, %v874
      %919 = vmax.xlane.f32.xlu0 %v918
      %v920 = vpop.xlane.xlu0 %919
      %v921 = vmax.f32 %v828, %v877
      %922 = vmax.xlane.f32.xlu0 %v921
      %v923 = vpop.xlane.xlu0 %922
      %v924 = vmax.f32 %v830, %v879
      %925 = vmax.xlane.f32.xlu0 %v924
      %v926 = vpop.xlane.xlu0 %925
      %v927 = vmax.f32 %v833, %v882
      %928 = vmax.xlane.f32.xlu0 %v927
      %v929 = vpop.xlane.xlu0 %928
      %v930 = vmax.f32 %v835, %v884
      %931 = vmax.xlane.f32.xlu0 %v930
      %v932 = vpop.xlane.xlu0 %931
      %v933 = vmax.f32 %v838, %v887
      %934 = vmax.xlane.f32.xlu0 %v933
      %v935 = vpop.xlane.xlu0 %934
      %v936 = vmax.f32 %v840, %v889
      %937 = vmax.xlane.f32.xlu0 %v936
      %v938 = vpop.xlane.xlu0 %937
      %v939 = vsub.f32 %v803, %v893
      %v940 = vsub.f32 %v852, %v893
      %v941 = vsub.f32 %v805, %v896
      %v942 = vsub.f32 %v854, %v896
      %v943 = vsub.f32 %v808, %v899
      %v944 = vsub.f32 %v857, %v899
      %v945 = vsub.f32 %v810, %v902
      %v946 = vsub.f32 %v859, %v902
      %v947 = vsub.f32 %v813, %v905
      %v948 = vsub.f32 %v862, %v905
      %v949 = vsub.f32 %v815, %v908
      %v950 = vsub.f32 %v864, %v908
      %v951 = vsub.f32 %v818, %v911
      %v952 = vsub.f32 %v867, %v911
      %v953 = vsub.f32 %v820, %v914
      %v954 = vsub.f32 %v869, %v914
      %v955 = vsub.f32 %v823, %v917
      %v956 = vsub.f32 %v872, %v917
      %v957 = vsub.f32 %v825, %v920
      %v958 = vsub.f32 %v874, %v920
      %v959 = vsub.f32 %v828, %v923
      %v960 = vsub.f32 %v877, %v923
      %v961 = vsub.f32 %v830, %v926
      %v962 = vsub.f32 %v879, %v926
      %v963 = vsub.f32 %v833, %v929
      %v964 = vsub.f32 %v882, %v929
      %v965 = vsub.f32 %v835, %v932
      %v966 = vsub.f32 %v884, %v932
      %v967 = vsub.f32 %v838, %v935
      %v968 = vsub.f32 %v887, %v935
      %v969 = vsub.f32 %v840, %v938
      %v970 = vsub.f32 %v889, %v938
      %v971 = vmul.f32 %v939, 1.442695
      %v972 = vpow.pop %v971
      %v973 = vmul.f32 %v940, 1.442695
      %v974 = vpow.pop %v973
      %v975 = vmul.f32 %v941, 1.442695
      %v976 = vpow.pop %v975
      %v977 = vmul.f32 %v942, 1.442695
      %v978 = vpow.pop %v977
      %v979 = vmul.f32 %v943, 1.442695
      %v980 = vpow.pop %v979
      %v981 = vmul.f32 %v944, 1.442695
      %v982 = vpow.pop %v981
      %v983 = vmul.f32 %v945, 1.442695
      %v984 = vpow.pop %v983
      %v985 = vmul.f32 %v946, 1.442695
      %v986 = vpow.pop %v985
      %v987 = vmul.f32 %v947, 1.442695
      %v988 = vpow.pop %v987
      %v989 = vmul.f32 %v948, 1.442695
      %v990 = vpow.pop %v989
      %v991 = vmul.f32 %v949, 1.442695
      %v992 = vpow.pop %v991
      %v993 = vmul.f32 %v950, 1.442695
      %v994 = vpow.pop %v993
      %v995 = vmul.f32 %v951, 1.442695
      %v996 = vpow.pop %v995
      %v997 = vmul.f32 %v952, 1.442695
      %v998 = vpow.pop %v997
      %v999 = vmul.f32 %v953, 1.442695
      %v1000 = vpow.pop %v999
      %v1001 = vmul.f32 %v954, 1.442695
      %v1002 = vpow.pop %v1001
      %v1003 = vmul.f32 %v955, 1.442695
      %v1004 = vpow.pop %v1003
      %v1005 = vmul.f32 %v956, 1.442695
      %v1006 = vpow.pop %v1005
      %v1007 = vmul.f32 %v957, 1.442695
      %v1008 = vpow.pop %v1007
      %v1009 = vmul.f32 %v958, 1.442695
      %v1010 = vpow.pop %v1009
      %v1011 = vmul.f32 %v959, 1.442695
      %v1012 = vpow.pop %v1011
      %v1013 = vmul.f32 %v960, 1.442695
      %v1014 = vpow.pop %v1013
      %v1015 = vmul.f32 %v961, 1.442695
      %v1016 = vpow.pop %v1015
      %v1017 = vmul.f32 %v962, 1.442695
      %v1018 = vpow.pop %v1017
      %v1019 = vmul.f32 %v963, 1.442695
      %v1020 = vpow.pop %v1019
      %v1021 = vmul.f32 %v964, 1.442695
      %v1022 = vpow.pop %v1021
      %v1023 = vmul.f32 %v965, 1.442695
      %v1024 = vpow.pop %v1023
      %v1025 = vmul.f32 %v966, 1.442695
      %v1026 = vpow.pop %v1025
      %v1027 = vmul.f32 %v967, 1.442695
      %v1028 = vpow.pop %v1027
      %v1029 = vmul.f32 %v968, 1.442695
      %v1030 = vpow.pop %v1029
      %v1031 = vmul.f32 %v969, 1.442695
      %v1032 = vpow.pop %v1031
      %v1033 = vmul.f32 %v970, 1.442695
      %v1034 = vpow.pop %v1033
      %v1035 = vadd.f32 %v972, %v974
      %1036 = vadd.xlane.f32.xlu0 %v1035
      %v1037 = vpop.xlane.xlu0 %1036
      %v1038 = vadd.f32 %v976, %v978
      %1039 = vadd.xlane.f32.xlu0 %v1038
      %v1040 = vpop.xlane.xlu0 %1039
      %v1041 = vadd.f32 %v980, %v982
      %1042 = vadd.xlane.f32.xlu0 %v1041
      %v1043 = vpop.xlane.xlu0 %1042
      %v1044 = vadd.f32 %v984, %v986
      %1045 = vadd.xlane.f32.xlu0 %v1044
      %v1046 = vpop.xlane.xlu0 %1045
      %v1047 = vadd.f32 %v988, %v990
      %1048 = vadd.xlane.f32.xlu0 %v1047
      %v1049 = vpop.xlane.xlu0 %1048
      %v1050 = vadd.f32 %v992, %v994
      %1051 = vadd.xlane.f32.xlu0 %v1050
      %v1052 = vpop.xlane.xlu0 %1051
      %v1053 = vadd.f32 %v996, %v998
      %1054 = vadd.xlane.f32.xlu0 %v1053
      %v1055 = vpop.xlane.xlu0 %1054
      %v1056 = vadd.f32 %v1000, %v1002
      %1057 = vadd.xlane.f32.xlu0 %v1056
      %v1058 = vpop.xlane.xlu0 %1057
      %v1059 = vadd.f32 %v1004, %v1006
      %1060 = vadd.xlane.f32.xlu0 %v1059
      %v1061 = vpop.xlane.xlu0 %1060
      %v1062 = vadd.f32 %v1008, %v1010
      %1063 = vadd.xlane.f32.xlu0 %v1062
      %v1064 = vpop.xlane.xlu0 %1063
      %v1065 = vadd.f32 %v1012, %v1014
      %1066 = vadd.xlane.f32.xlu0 %v1065
      %v1067 = vpop.xlane.xlu0 %1066
      %v1068 = vadd.f32 %v1016, %v1018
      %1069 = vadd.xlane.f32.xlu0 %v1068
      %v1070 = vpop.xlane.xlu0 %1069
      %v1071 = vadd.f32 %v1020, %v1022
      %1072 = vadd.xlane.f32.xlu0 %v1071
      %v1073 = vpop.xlane.xlu0 %1072
      %v1074 = vadd.f32 %v1024, %v1026
      %1075 = vadd.xlane.f32.xlu0 %v1074
      %v1076 = vpop.xlane.xlu0 %1075
      %v1077 = vadd.f32 %v1028, %v1030
      %1078 = vadd.xlane.f32.xlu0 %v1077
      %v1079 = vpop.xlane.xlu0 %1078
      %v1080 = vadd.f32 %v1032, %v1034
      %1081 = vadd.xlane.f32.xlu0 %v1080
      %v1082 = vpop.xlane.xlu0 %1081
      %v1083 = vpack.c.bf16 %v976, %v972
      %v1084 = vpack.c.bf16 %v978, %v974
      %v1085 = vpack.c.bf16 %v984, %v980
      %v1086 = vpack.c.bf16 %v986, %v982
      %v1087 = vpack.c.bf16 %v992, %v988
      %v1088 = vpack.c.bf16 %v994, %v990
      %v1089 = vpack.c.bf16 %v1000, %v996
      %v1090 = vpack.c.bf16 %v1002, %v998
      %v1091 = vpack.c.bf16 %v1008, %v1004
      %v1092 = vpack.c.bf16 %v1010, %v1006
      %v1093 = vpack.c.bf16 %v1016, %v1012
      %v1094 = vpack.c.bf16 %v1018, %v1014
      %v1095 = vpack.c.bf16 %v1024, %v1020
      %v1096 = vpack.c.bf16 %v1026, %v1022
      %v1097 = vpack.c.bf16 %v1032, %v1028
      %v1098 = vpack.c.bf16 %v1034, %v1030
      %v1103 = vunpack.c.l.b16 %v717
      %v1104 = vunpack.c.h.b16 %v717
      %v1105 = vunpack.c.l.b16 %v718
      %v1106 = vunpack.c.h.b16 %v718
      %v1107 = vunpack.c.l.b16 %v719
      %v1108 = vunpack.c.h.b16 %v719
      %v1109 = vunpack.c.l.b16 %v720
      %v1110 = vunpack.c.h.b16 %v720
      %v1111 = vpack.c.b16 %v1105, %v1103
      %v1112 = vpack.c.b16 %v1106, %v1104
      %v1113 = vpack.c.b16 %v1109, %v1107
      %v1114 = vpack.c.b16 %v1110, %v1108
      %1119 = vmatpush.bf16.xpose.msra.mxu0 0
      %1120 = vmatpush.bf16.xpose.msra.mxu0 0
      %1121 = vmatpush.bf16.xpose.msra.mxu0 0
      %1122 = vmatpush.bf16.xpose.msra.mxu0 0
      %1123 = vmatpush.bf16.xpose.msra.mxu0 0
      %1124 = vmatpush.bf16.xpose.msra.mxu0 0
      %1125 = vmatpush.bf16.xpose.msra.mxu0 %v1113
      %1126 = vmatpush.bf16.xpose.msra.mxu0 %v1111
      %1127 = vmatmul.bf16.gmra.mxu0 %v1083
      %v1128 = vpop.f32.mrf.mxu0
      %v1129 = vadd.f32 0.0, %v1128
      %v1130 = vpop.f32.mrf.mxu0
      %v1131 = vadd.f32 0.0, %v1130
      %1132 = vmatmul.bf16.gmra.mxu0 %v1085
      %v1133 = vpop.f32.mrf.mxu0
      %v1134 = vadd.f32 0.0, %v1133
      %v1135 = vpop.f32.mrf.mxu0
      %v1136 = vadd.f32 0.0, %v1135
      %1137 = vmatmul.bf16.gmra.mxu0 %v1087
      %v1138 = vpop.f32.mrf.mxu0
      %v1139 = vadd.f32 0.0, %v1138
      %v1140 = vpop.f32.mrf.mxu0
      %v1141 = vadd.f32 0.0, %v1140
      %1142 = vmatmul.bf16.gmra.mxu0 %v1089
      %v1143 = vpop.f32.mrf.mxu0
      %v1144 = vadd.f32 0.0, %v1143
      %v1145 = vpop.f32.mrf.mxu0
      %v1146 = vadd.f32 0.0, %v1145
      %1147 = vmatmul.bf16.gmra.mxu0 %v1091
      %v1148 = vpop.f32.mrf.mxu0
      %v1149 = vadd.f32 0.0, %v1148
      %v1150 = vpop.f32.mrf.mxu0
      %v1151 = vadd.f32 0.0, %v1150
      %1152 = vmatmul.bf16.gmra.mxu0 %v1093
      %v1153 = vpop.f32.mrf.mxu0
      %v1154 = vadd.f32 0.0, %v1153
      %v1155 = vpop.f32.mrf.mxu0
      %v1156 = vadd.f32 0.0, %v1155
      %1157 = vmatmul.bf16.gmra.mxu0 %v1095
      %v1158 = vpop.f32.mrf.mxu0
      %v1159 = vadd.f32 0.0, %v1158
      %v1160 = vpop.f32.mrf.mxu0
      %v1161 = vadd.f32 0.0, %v1160
      %1162 = vmatmul.bf16.gmra.mxu0 %v1097
      %v1163 = vpop.f32.mrf.mxu0
      %v1164 = vadd.f32 0.0, %v1163
      %v1165 = vpop.f32.mrf.mxu0
      %v1166 = vadd.f32 0.0, %v1165
      %1167 = vdwg.mxu0
      %1168 = vmatpush.bf16.xpose.msra.mxu0 0
      %1169 = vmatpush.bf16.xpose.msra.mxu0 0
      %1170 = vmatpush.bf16.xpose.msra.mxu0 0
      %1171 = vmatpush.bf16.xpose.msra.mxu0 0
      %1172 = vmatpush.bf16.xpose.msra.mxu0 0
      %1173 = vmatpush.bf16.xpose.msra.mxu0 0
      %1174 = vmatpush.bf16.xpose.msra.mxu0 %v1114
      %1175 = vmatpush.bf16.xpose.msra.mxu0 %v1112
      %1176 = vmatmul.bf16.gmra.mxu0 %v1084
      %v1177 = vpop.f32.mrf.mxu0
      %v1178 = vadd.f32 %v1129, %v1177
      %v1179 = vpop.f32.mrf.mxu0
      %v1180 = vadd.f32 %v1131, %v1179
      %1181 = vmatmul.bf16.gmra.mxu0 %v1086
      %v1182 = vpop.f32.mrf.mxu0
      %v1183 = vadd.f32 %v1134, %v1182
      %v1184 = vpop.f32.mrf.mxu0
      %v1185 = vadd.f32 %v1136, %v1184
      %1186 = vmatmul.bf16.gmra.mxu0 %v1088
      %v1187 = vpop.f32.mrf.mxu0
      %v1188 = vadd.f32 %v1139, %v1187
      %v1189 = vpop.f32.mrf.mxu0
      %v1190 = vadd.f32 %v1141, %v1189
      %1191 = vmatmul.bf16.gmra.mxu0 %v1090
      %v1192 = vpop.f32.mrf.mxu0
      %v1193 = vadd.f32 %v1144, %v1192
      %v1194 = vpop.f32.mrf.mxu0
      %v1195 = vadd.f32 %v1146, %v1194
      %1196 = vmatmul.bf16.gmra.mxu0 %v1092
      %v1197 = vpop.f32.mrf.mxu0
      %v1198 = vadd.f32 %v1149, %v1197
      %v1199 = vpop.f32.mrf.mxu0
      %v1200 = vadd.f32 %v1151, %v1199
      %1201 = vmatmul.bf16.gmra.mxu0 %v1094
      %v1202 = vpop.f32.mrf.mxu0
      %v1203 = vadd.f32 %v1154, %v1202
      %v1204 = vpop.f32.mrf.mxu0
      %v1205 = vadd.f32 %v1156, %v1204
      %1206 = vmatmul.bf16.gmra.mxu0 %v1096
      %v1207 = vpop.f32.mrf.mxu0
      %v1208 = vadd.f32 %v1159, %v1207
      %v1209 = vpop.f32.mrf.mxu0
      %v1210 = vadd.f32 %v1161, %v1209
      %1211 = vmatmul.bf16.gmra.mxu0 %v1098
      %v1212 = vpop.f32.mrf.mxu0
      %v1213 = vadd.f32 %v1164, %v1212
      %v1214 = vpop.f32.mrf.mxu0
      %v1215 = vadd.f32 %v1166, %v1214
      %1216 = vdwg.mxu0
      %v1217 = vrcp.pop %v1037
      %v1218 = vrcp.pop %v1040
      %v1219 = vrcp.pop %v1043
      %v1220 = vrcp.pop %v1046
      %v1221 = vrcp.pop %v1049
      %v1222 = vrcp.pop %v1052
      %v1223 = vrcp.pop %v1055
      %v1224 = vrcp.pop %v1058
      %v1225 = vrcp.pop %v1061
      %v1226 = vrcp.pop %v1064
      %v1227 = vrcp.pop %v1067
      %v1228 = vrcp.pop %v1070
      %v1229 = vrcp.pop %v1073
      %v1230 = vrcp.pop %v1076
      %v1231 = vrcp.pop %v1079
      %v1232 = vrcp.pop %v1082
      %v1233 = vmul.f32 %v1178, %v1217
      %v1234 = vmul.f32 %v1180, %v1218
      %v1235 = vmul.f32 %v1183, %v1219
      %v1236 = vmul.f32 %v1185, %v1220
      %v1237 = vmul.f32 %v1188, %v1221
      %v1238 = vmul.f32 %v1190, %v1222
      %v1239 = vmul.f32 %v1193, %v1223
      %v1240 = vmul.f32 %v1195, %v1224
      %v1241 = vmul.f32 %v1198, %v1225
      %v1242 = vmul.f32 %v1200, %v1226
      %v1243 = vmul.f32 %v1203, %v1227
      %v1244 = vmul.f32 %v1205, %v1228
      %v1245 = vmul.f32 %v1208, %v1229
      %v1246 = vmul.f32 %v1210, %v1230
      %v1247 = vmul.f32 %v1213, %v1231
      %v1248 = vmul.f32 %v1215, %v1232
      %v1249 = vadd.f32 %v1233, 0.0
      %v1250 = vadd.f32 %v1234, 0.0
      %v1251 = vadd.f32 %v1235, 0.0
      %v1252 = vadd.f32 %v1236, 0.0
      %v1253 = vadd.f32 %v1237, 0.0
      %v1254 = vadd.f32 %v1238, 0.0
      %v1255 = vadd.f32 %v1239, 0.0
      %v1256 = vadd.f32 %v1240, 0.0
      %v1257 = vadd.f32 %v1241, 0.0
      %v1258 = vadd.f32 %v1242, 0.0
      %v1259 = vadd.f32 %v1243, 0.0
      %v1260 = vadd.f32 %v1244, 0.0
      %v1261 = vadd.f32 %v1245, 0.0
      %v1262 = vadd.f32 %v1246, 0.0
      %v1263 = vadd.f32 %v1247, 0.0
      %v1264 = vadd.f32 %v1248, 0.0
      %v1265 = vld [vmem:[#allocation2 + $0x70] sm:$0xff]
      %v1266 = vld [vmem:[#allocation2 + $0x88] sm:$0xff]
      %v1267 = vld [vmem:[#allocation2 + $0xa0] sm:$0xff]
      %v1268 = vld [vmem:[#allocation2 + $0xb8] sm:$0xff]
      %v1269 = vld [vmem:[#allocation2 + $0xd0] sm:$0xff]
      %v1270 = vld [vmem:[#allocation2 + $0xe8] sm:$0xff]
      %v1271 = vld [vmem:[#allocation2 + $0x100] sm:$0xff]
      %v1272 = vld [vmem:[#allocation2 + $0x118] sm:$0xff]
      %v1277 = vunpack.c.l.b16 %v1265
      %v1278 = vunpack.c.h.b16 %v1265
      %v1279 = vunpack.c.l.b16 %v1266
      %v1280 = vunpack.c.h.b16 %v1266
      %v1281 = vunpack.c.l.b16 %v1267
      %v1282 = vunpack.c.h.b16 %v1267
      %v1283 = vunpack.c.l.b16 %v1268
      %v1284 = vunpack.c.h.b16 %v1268
      %v1285 = vpack.c.b16 %v1279, %v1277
      %v1286 = vpack.c.b16 %v1280, %v1278
      %v1287 = vpack.c.b16 %v1283, %v1281
      %v1288 = vpack.c.b16 %v1284, %v1282
      %1293 = vmatpush.bf16.msra.mxu0 0
      %1294 = vmatpush.bf16.msra.mxu0 0
      %1295 = vmatpush.bf16.msra.mxu0 0
      %1296 = vmatpush.bf16.msra.mxu0 0
      %1297 = vmatpush.bf16.msra.mxu0 0
      %1298 = vmatpush.bf16.msra.mxu0 0
      %1299 = vmatpush.bf16.msra.mxu0 %v1287
      %1300 = vmatpush.bf16.msra.mxu0 %v1285
      %1301 = vmatmul.bf16.gmra.mxu0 %v770
      %v1302 = vpop.f32.mrf.mxu0
      %v1303 = vadd.f32 0.0, %v1302
      %v1304 = vpop.f32.mrf.mxu0
      %v1305 = vadd.f32 0.0, %v1304
      %1306 = vmatmul.bf16.gmra.mxu0 %v773
      %v1307 = vpop.f32.mrf.mxu0
      %v1308 = vadd.f32 0.0, %v1307
      %v1309 = vpop.f32.mrf.mxu0
      %v1310 = vadd.f32 0.0, %v1309
      %1311 = vmatmul.bf16.gmra.mxu0 %v776
      %v1312 = vpop.f32.mrf.mxu0
      %v1313 = vadd.f32 0.0, %v1312
      %v1314 = vpop.f32.mrf.mxu0
      %v1315 = vadd.f32 0.0, %v1314
      %1316 = vmatmul.bf16.gmra.mxu0 %v779
      %v1317 = vpop.f32.mrf.mxu0
      %v1318 = vadd.f32 0.0, %v1317
      %v1319 = vpop.f32.mrf.mxu0
      %v1320 = vadd.f32 0.0, %v1319
      %1321 = vmatmul.bf16.gmra.mxu0 %v782
      %v1322 = vpop.f32.mrf.mxu0
      %v1323 = vadd.f32 0.0, %v1322
      %v1324 = vpop.f32.mrf.mxu0
      %v1325 = vadd.f32 0.0, %v1324
      %1326 = vmatmul.bf16.gmra.mxu0 %v785
      %v1327 = vpop.f32.mrf.mxu0
      %v1328 = vadd.f32 0.0, %v1327
      %v1329 = vpop.f32.mrf.mxu0
      %v1330 = vadd.f32 0.0, %v1329
      %1331 = vmatmul.bf16.gmra.mxu0 %v788
      %v1332 = vpop.f32.mrf.mxu0
      %v1333 = vadd.f32 0.0, %v1332
      %v1334 = vpop.f32.mrf.mxu0
      %v1335 = vadd.f32 0.0, %v1334
      %1336 = vmatmul.bf16.gmra.mxu0 %v791
      %v1337 = vpop.f32.mrf.mxu0
      %v1338 = vadd.f32 0.0, %v1337
      %v1339 = vpop.f32.mrf.mxu0
      %v1340 = vadd.f32 0.0, %v1339
      %1341 = vdwg.mxu0
      %1342 = vmatpush.bf16.msra.mxu0 0
      %1343 = vmatpush.bf16.msra.mxu0 0
      %1344 = vmatpush.bf16.msra.mxu0 0
      %1345 = vmatpush.bf16.msra.mxu0 0
      %1346 = vmatpush.bf16.msra.mxu0 0
      %1347 = vmatpush.bf16.msra.mxu0 0
      %1348 = vmatpush.bf16.msra.mxu0 %v1288
      %1349 = vmatpush.bf16.msra.mxu0 %v1286
      %1350 = vmatmul.bf16.gmra.mxu0 %v770
      %v1351 = vpop.f32.mrf.mxu0
      %v1352 = vadd.f32 0.0, %v1351
      %v1353 = vpop.f32.mrf.mxu0
      %v1354 = vadd.f32 0.0, %v1353
      %1355 = vmatmul.bf16.gmra.mxu0 %v773
      %v1356 = vpop.f32.mrf.mxu0
      %v1357 = vadd.f32 0.0, %v1356
      %v1358 = vpop.f32.mrf.mxu0
      %v1359 = vadd.f32 0.0, %v1358
      %1360 = vmatmul.bf16.gmra.mxu0 %v776
      %v1361 = vpop.f32.mrf.mxu0
      %v1362 = vadd.f32 0.0, %v1361
      %v1363 = vpop.f32.mrf.mxu0
      %v1364 = vadd.f32 0.0, %v1363
      %1365 = vmatmul.bf16.gmra.mxu0 %v779
      %v1366 = vpop.f32.mrf.mxu0
      %v1367 = vadd.f32 0.0, %v1366
      %v1368 = vpop.f32.mrf.mxu0
      %v1369 = vadd.f32 0.0, %v1368
      %1370 = vmatmul.bf16.gmra.mxu0 %v782
      %v1371 = vpop.f32.mrf.mxu0
      %v1372 = vadd.f32 0.0, %v1371
      %v1373 = vpop.f32.mrf.mxu0
      %v1374 = vadd.f32 0.0, %v1373
      %1375 = vmatmul.bf16.gmra.mxu0 %v785
      %v1376 = vpop.f32.mrf.mxu0
      %v1377 = vadd.f32 0.0, %v1376
      %v1378 = vpop.f32.mrf.mxu0
      %v1379 = vadd.f32 0.0, %v1378
      %1380 = vmatmul.bf16.gmra.mxu0 %v788
      %v1381 = vpop.f32.mrf.mxu0
      %v1382 = vadd.f32 0.0, %v1381
      %v1383 = vpop.f32.mrf.mxu0
      %v1384 = vadd.f32 0.0, %v1383
      %1385 = vmatmul.bf16.gmra.mxu0 %v791
      %v1386 = vpop.f32.mrf.mxu0
      %v1387 = vadd.f32 0.0, %v1386
      %v1388 = vpop.f32.mrf.mxu0
      %v1389 = vadd.f32 0.0, %v1388
      %1390 = vdwg.mxu0
      %v1391 = vmax.f32 %v1303, %v1352
      %1392 = vmax.xlane.f32.xlu0 %v1391
      %v1393 = vpop.xlane.xlu0 %1392
      %v1394 = vmax.f32 %v1305, %v1354
      %1395 = vmax.xlane.f32.xlu0 %v1394
      %v1396 = vpop.xlane.xlu0 %1395
      %v1397 = vmax.f32 %v1308, %v1357
      %1398 = vmax.xlane.f32.xlu0 %v1397
      %v1399 = vpop.xlane.xlu0 %1398
      %v1400 = vmax.f32 %v1310, %v1359
      %1401 = vmax.xlane.f32.xlu0 %v1400
      %v1402 = vpop.xlane.xlu0 %1401
      %v1403 = vmax.f32 %v1313, %v1362
      %1404 = vmax.xlane.f32.xlu0 %v1403
      %v1405 = vpop.xlane.xlu0 %1404
      %v1406 = vmax.f32 %v1315, %v1364
      %1407 = vmax.xlane.f32.xlu0 %v1406
      %v1408 = vpop.xlane.xlu0 %1407
      %v1409 = vmax.f32 %v1318, %v1367
      %1410 = vmax.xlane.f32.xlu0 %v1409
      %v1411 = vpop.xlane.xlu0 %1410
      %v1412 = vmax.f32 %v1320, %v1369
      %1413 = vmax.xlane.f32.xlu0 %v1412
      %v1414 = vpop.xlane.xlu0 %1413
      %v1415 = vmax.f32 %v1323, %v1372
      %1416 = vmax.xlane.f32.xlu0 %v1415
      %v1417 = vpop.xlane.xlu0 %1416
      %v1418 = vmax.f32 %v1325, %v1374
      %1419 = vmax.xlane.f32.xlu0 %v1418
      %v1420 = vpop.xlane.xlu0 %1419
      %v1421 = vmax.f32 %v1328, %v1377
      %1422 = vmax.xlane.f32.xlu0 %v1421
      %v1423 = vpop.xlane.xlu0 %1422
      %v1424 = vmax.f32 %v1330, %v1379
      %1425 = vmax.xlane.f32.xlu0 %v1424
      %v1426 = vpop.xlane.xlu0 %1425
      %v1427 = vmax.f32 %v1333, %v1382
      %1428 = vmax.xlane.f32.xlu0 %v1427
      %v1429 = vpop.xlane.xlu0 %1428
      %v1430 = vmax.f32 %v1335, %v1384
      %1431 = vmax.xlane.f32.xlu0 %v1430
      %v1432 = vpop.xlane.xlu0 %1431
      %v1433 = vmax.f32 %v1338, %v1387
      %1434 = vmax.xlane.f32.xlu0 %v1433
      %v1435 = vpop.xlane.xlu0 %1434
      %v1436 = vmax.f32 %v1340, %v1389
      %1437 = vmax.xlane.f32.xlu0 %v1436
      %v1438 = vpop.xlane.xlu0 %1437
      %v1439 = vsub.f32 %v1303, %v1393
      %v1440 = vsub.f32 %v1352, %v1393
      %v1441 = vsub.f32 %v1305, %v1396
      %v1442 = vsub.f32 %v1354, %v1396
      %v1443 = vsub.f32 %v1308, %v1399
      %v1444 = vsub.f32 %v1357, %v1399
      %v1445 = vsub.f32 %v1310, %v1402
      %v1446 = vsub.f32 %v1359, %v1402
      %v1447 = vsub.f32 %v1313, %v1405
      %v1448 = vsub.f32 %v1362, %v1405
      %v1449 = vsub.f32 %v1315, %v1408
      %v1450 = vsub.f32 %v1364, %v1408
      %v1451 = vsub.f32 %v1318, %v1411
      %v1452 = vsub.f32 %v1367, %v1411
      %v1453 = vsub.f32 %v1320, %v1414
      %v1454 = vsub.f32 %v1369, %v1414
      %v1455 = vsub.f32 %v1323, %v1417
      %v1456 = vsub.f32 %v1372, %v1417
      %v1457 = vsub.f32 %v1325, %v1420
      %v1458 = vsub.f32 %v1374, %v1420
      %v1459 = vsub.f32 %v1328, %v1423
      %v1460 = vsub.f32 %v1377, %v1423
      %v1461 = vsub.f32 %v1330, %v1426
      %v1462 = vsub.f32 %v1379, %v1426
      %v1463 = vsub.f32 %v1333, %v1429
      %v1464 = vsub.f32 %v1382, %v1429
      %v1465 = vsub.f32 %v1335, %v1432
      %v1466 = vsub.f32 %v1384, %v1432
      %v1467 = vsub.f32 %v1338, %v1435
      %v1468 = vsub.f32 %v1387, %v1435
      %v1469 = vsub.f32 %v1340, %v1438
      %v1470 = vsub.f32 %v1389, %v1438
      %v1471 = vmul.f32 %v1439, 1.442695
      %v1472 = vpow.pop %v1471
      %v1473 = vmul.f32 %v1440, 1.442695
      %v1474 = vpow.pop %v1473
      %v1475 = vmul.f32 %v1441, 1.442695
      %v1476 = vpow.pop %v1475
      %v1477 = vmul.f32 %v1442, 1.442695
      %v1478 = vpow.pop %v1477
      %v1479 = vmul.f32 %v1443, 1.442695
      %v1480 = vpow.pop %v1479
      %v1481 = vmul.f32 %v1444, 1.442695
      %v1482 = vpow.pop %v1481
      %v1483 = vmul.f32 %v1445, 1.442695
      %v1484 = vpow.pop %v1483
      %v1485 = vmul.f32 %v1446, 1.442695
      %v1486 = vpow.pop %v1485
      %v1487 = vmul.f32 %v1447, 1.442695
      %v1488 = vpow.pop %v1487
      %v1489 = vmul.f32 %v1448, 1.442695
      %v1490 = vpow.pop %v1489
      %v1491 = vmul.f32 %v1449, 1.442695
      %v1492 = vpow.pop %v1491
      %v1493 = vmul.f32 %v1450, 1.442695
      %v1494 = vpow.pop %v1493
      %v1495 = vmul.f32 %v1451, 1.442695
      %v1496 = vpow.pop %v1495
      %v1497 = vmul.f32 %v1452, 1.442695
      %v1498 = vpow.pop %v1497
      %v1499 = vmul.f32 %v1453, 1.442695
      %v1500 = vpow.pop %v1499
      %v1501 = vmul.f32 %v1454, 1.442695
      %v1502 = vpow.pop %v1501
      %v1503 = vmul.f32 %v1455, 1.442695
      %v1504 = vpow.pop %v1503
      %v1505 = vmul.f32 %v1456, 1.442695
      %v1506 = vpow.pop %v1505
      %v1507 = vmul.f32 %v1457, 1.442695
      %v1508 = vpow.pop %v1507
      %v1509 = vmul.f32 %v1458, 1.442695
      %v1510 = vpow.pop %v1509
      %v1511 = vmul.f32 %v1459, 1.442695
      %v1512 = vpow.pop %v1511
      %v1513 = vmul.f32 %v1460, 1.442695
      %v1514 = vpow.pop %v1513
      %v1515 = vmul.f32 %v1461, 1.442695
      %v1516 = vpow.pop %v1515
      %v1517 = vmul.f32 %v1462, 1.442695
      %v1518 = vpow.pop %v1517
      %v1519 = vmul.f32 %v1463, 1.442695
      %v1520 = vpow.pop %v1519
      %v1521 = vmul.f32 %v1464, 1.442695
      %v1522 = vpow.pop %v1521
      %v1523 = vmul.f32 %v1465, 1.442695
      %v1524 = vpow.pop %v1523
      %v1525 = vmul.f32 %v1466, 1.442695
      %v1526 = vpow.pop %v1525
      %v1527 = vmul.f32 %v1467, 1.442695
      %v1528 = vpow.pop %v1527
      %v1529 = vmul.f32 %v1468, 1.442695
      %v1530 = vpow.pop %v1529
      %v1531 = vmul.f32 %v1469, 1.442695
      %v1532 = vpow.pop %v1531
      %v1533 = vmul.f32 %v1470, 1.442695
      %v1534 = vpow.pop %v1533
      %v1535 = vadd.f32 %v1472, %v1474
      %1536 = vadd.xlane.f32.xlu0 %v1535
      %v1537 = vpop.xlane.xlu0 %1536
      %v1538 = vadd.f32 %v1476, %v1478
      %1539 = vadd.xlane.f32.xlu0 %v1538
      %v1540 = vpop.xlane.xlu0 %1539
      %v1541 = vadd.f32 %v1480, %v1482
      %1542 = vadd.xlane.f32.xlu0 %v1541
      %v1543 = vpop.xlane.xlu0 %1542
      %v1544 = vadd.f32 %v1484, %v1486
      %1545 = vadd.xlane.f32.xlu0 %v1544
      %v1546 = vpop.xlane.xlu0 %1545
      %v1547 = vadd.f32 %v1488, %v1490
      %1548 = vadd.xlane.f32.xlu0 %v1547
      %v1549 = vpop.xlane.xlu0 %1548
      %v1550 = vadd.f32 %v1492, %v1494
      %1551 = vadd.xlane.f32.xlu0 %v1550
      %v1552 = vpop.xlane.xlu0 %1551
      %v1553 = vadd.f32 %v1496, %v1498
      %1554 = vadd.xlane.f32.xlu0 %v1553
      %v1555 = vpop.xlane.xlu0 %1554
      %v1556 = vadd.f32 %v1500, %v1502
      %1557 = vadd.xlane.f32.xlu0 %v1556
      %v1558 = vpop.xlane.xlu0 %1557
      %v1559 = vadd.f32 %v1504, %v1506
      %1560 = vadd.xlane.f32.xlu0 %v1559
      %v1561 = vpop.xlane.xlu0 %1560
      %v1562 = vadd.f32 %v1508, %v1510
      %1563 = vadd.xlane.f32.xlu0 %v1562
      %v1564 = vpop.xlane.xlu0 %1563
      %v1565 = vadd.f32 %v1512, %v1514
      %1566 = vadd.xlane.f32.xlu0 %v1565
      %v1567 = vpop.xlane.xlu0 %1566
      %v1568 = vadd.f32 %v1516, %v1518
      %1569 = vadd.xlane.f32.xlu0 %v1568
      %v1570 = vpop.xlane.xlu0 %1569
      %v1571 = vadd.f32 %v1520, %v1522
      %1572 = vadd.xlane.f32.xlu0 %v1571
      %v1573 = vpop.xlane.xlu0 %1572
      %v1574 = vadd.f32 %v1524, %v1526
      %1575 = vadd.xlane.f32.xlu0 %v1574
      %v1576 = vpop.xlane.xlu0 %1575
      %v1577 = vadd.f32 %v1528, %v1530
      %1578 = vadd.xlane.f32.xlu0 %v1577
      %v1579 = vpop.xlane.xlu0 %1578
      %v1580 = vadd.f32 %v1532, %v1534
      %1581 = vadd.xlane.f32.xlu0 %v1580
      %v1582 = vpop.xlane.xlu0 %1581
      %v1583 = vpack.c.bf16 %v1476, %v1472
      %v1584 = vpack.c.bf16 %v1478, %v1474
      %v1585 = vpack.c.bf16 %v1484, %v1480
      %v1586 = vpack.c.bf16 %v1486, %v1482
      %v1587 = vpack.c.bf16 %v1492, %v1488
      %v1588 = vpack.c.bf16 %v1494, %v1490
      %v1589 = vpack.c.bf16 %v1500, %v1496
      %v1590 = vpack.c.bf16 %v1502, %v1498
      %v1591 = vpack.c.bf16 %v1508, %v1504
      %v1592 = vpack.c.bf16 %v1510, %v1506
      %v1593 = vpack.c.bf16 %v1516, %v1512
      %v1594 = vpack.c.bf16 %v1518, %v1514
      %v1595 = vpack.c.bf16 %v1524, %v1520
      %v1596 = vpack.c.bf16 %v1526, %v1522
      %v1597 = vpack.c.bf16 %v1532, %v1528
      %v1598 = vpack.c.bf16 %v1534, %v1530
      %v1603 = vunpack.c.l.b16 %v1269
      %v1604 = vunpack.c.h.b16 %v1269
      %v1605 = vunpack.c.l.b16 %v1270
      %v1606 = vunpack.c.h.b16 %v1270
      %v1607 = vunpack.c.l.b16 %v1271
      %v1608 = vunpack.c.h.b16 %v1271
      %v1609 = vunpack.c.l.b16 %v1272
      %v1610 = vunpack.c.h.b16 %v1272
      %v1611 = vpack.c.b16 %v1605, %v1603
      %v1612 = vpack.c.b16 %v1606, %v1604
      %v1613 = vpack.c.b16 %v1609, %v1607
      %v1614 = vpack.c.b16 %v1610, %v1608
      %1619 = vmatpush.bf16.xpose.msra.mxu0 0
      %1620 = vmatpush.bf16.xpose.msra.mxu0 0
      %1621 = vmatpush.bf16.xpose.msra.mxu0 0
      %1622 = vmatpush.bf16.xpose.msra.mxu0 0
      %1623 = vmatpush.bf16.xpose.msra.mxu0 0
      %1624 = vmatpush.bf16.xpose.msra.mxu0 0
      %1625 = vmatpush.bf16.xpose.msra.mxu0 %v1613
      %1626 = vmatpush.bf16.xpose.msra.mxu0 %v1611
      %1627 = vmatmul.bf16.gmra.mxu0 %v1583
      %v1628 = vpop.f32.mrf.mxu0
      %v1629 = vadd.f32 0.0, %v1628
      %v1630 = vpop.f32.mrf.mxu0
      %v1631 = vadd.f32 0.0, %v1630
      %1632 = vmatmul.bf16.gmra.mxu0 %v1585
      %v1633 = vpop.f32.mrf.mxu0
      %v1634 = vadd.f32 0.0, %v1633
      %v1635 = vpop.f32.mrf.mxu0
      %v1636 = vadd.f32 0.0, %v1635
      %1637 = vmatmul.bf16.gmra.mxu0 %v1587
      %v1638 = vpop.f32.mrf.mxu0
      %v1639 = vadd.f32 0.0, %v1638
      %v1640 = vpop.f32.mrf.mxu0
      %v1641 = vadd.f32 0.0, %v1640
      %1642 = vmatmul.bf16.gmra.mxu0 %v1589
      %v1643 = vpop.f32.mrf.mxu0
      %v1644 = vadd.f32 0.0, %v1643
      %v1645 = vpop.f32.mrf.mxu0
      %v1646 = vadd.f32 0.0, %v1645
      %1647 = vmatmul.bf16.gmra.mxu0 %v1591
      %v1648 = vpop.f32.mrf.mxu0
      %v1649 = vadd.f32 0.0, %v1648
      %v1650 = vpop.f32.mrf.mxu0
      %v1651 = vadd.f32 0.0, %v1650
      %1652 = vmatmul.bf16.gmra.mxu0 %v1593
      %v1653 = vpop.f32.mrf.mxu0
      %v1654 = vadd.f32 0.0, %v1653
      %v1655 = vpop.f32.mrf.mxu0
      %v1656 = vadd.f32 0.0, %v1655
      %1657 = vmatmul.bf16.gmra.mxu0 %v1595
      %v1658 = vpop.f32.mrf.mxu0
      %v1659 = vadd.f32 0.0, %v1658
      %v1660 = vpop.f32.mrf.mxu0
      %v1661 = vadd.f32 0.0, %v1660
      %1662 = vmatmul.bf16.gmra.mxu0 %v1597
      %v1663 = vpop.f32.mrf.mxu0
      %v1664 = vadd.f32 0.0, %v1663
      %v1665 = vpop.f32.mrf.mxu0
      %v1666 = vadd.f32 0.0, %v1665
      %1667 = vdwg.mxu0
      %1668 = vmatpush.bf16.xpose.msra.mxu0 0
      %1669 = vmatpush.bf16.xpose.msra.mxu0 0
      %1670 = vmatpush.bf16.xpose.msra.mxu0 0
      %1671 = vmatpush.bf16.xpose.msra.mxu0 0
      %1672 = vmatpush.bf16.xpose.msra.mxu0 0
      %1673 = vmatpush.bf16.xpose.msra.mxu0 0
      %1674 = vmatpush.bf16.xpose.msra.mxu0 %v1614
      %1675 = vmatpush.bf16.xpose.msra.mxu0 %v1612
      %1676 = vmatmul.bf16.gmra.mxu0 %v1584
      %v1677 = vpop.f32.mrf.mxu0
      %v1678 = vadd.f32 %v1629, %v1677
      %v1679 = vpop.f32.mrf.mxu0
      %v1680 = vadd.f32 %v1631, %v1679
      %1681 = vmatmul.bf16.gmra.mxu0 %v1586
      %v1682 = vpop.f32.mrf.mxu0
      %v1683 = vadd.f32 %v1634, %v1682
      %v1684 = vpop.f32.mrf.mxu0
      %v1685 = vadd.f32 %v1636, %v1684
      %1686 = vmatmul.bf16.gmra.mxu0 %v1588
      %v1687 = vpop.f32.mrf.mxu0
      %v1688 = vadd.f32 %v1639, %v1687
      %v1689 = vpop.f32.mrf.mxu0
      %v1690 = vadd.f32 %v1641, %v1689
      %1691 = vmatmul.bf16.gmra.mxu0 %v1590
      %v1692 = vpop.f32.mrf.mxu0
      %v1693 = vadd.f32 %v1644, %v1692
      %v1694 = vpop.f32.mrf.mxu0
      %v1695 = vadd.f32 %v1646, %v1694
      %1696 = vmatmul.bf16.gmra.mxu0 %v1592
      %v1697 = vpop.f32.mrf.mxu0
      %v1698 = vadd.f32 %v1649, %v1697
      %v1699 = vpop.f32.mrf.mxu0
      %v1700 = vadd.f32 %v1651, %v1699
      %1701 = vmatmul.bf16.gmra.mxu0 %v1594
      %v1702 = vpop.f32.mrf.mxu0
      %v1703 = vadd.f32 %v1654, %v1702
      %v1704 = vpop.f32.mrf.mxu0
      %v1705 = vadd.f32 %v1656, %v1704
      %1706 = vmatmul.bf16.gmra.mxu0 %v1596
      %v1707 = vpop.f32.mrf.mxu0
      %v1708 = vadd.f32 %v1659, %v1707
      %v1709 = vpop.f32.mrf.mxu0
      %v1710 = vadd.f32 %v1661, %v1709
      %1711 = vmatmul.bf16.gmra.mxu0 %v1598
      %v1712 = vpop.f32.mrf.mxu0
      %v1713 = vadd.f32 %v1664, %v1712
      %v1714 = vpop.f32.mrf.mxu0
      %v1715 = vadd.f32 %v1666, %v1714
      %1716 = vdwg.mxu0
      %v1717 = vrcp.pop %v1537
      %v1718 = vrcp.pop %v1540
      %v1719 = vrcp.pop %v1543
      %v1720 = vrcp.pop %v1546
      %v1721 = vrcp.pop %v1549
      %v1722 = vrcp.pop %v1552
      %v1723 = vrcp.pop %v1555
      %v1724 = vrcp.pop %v1558
      %v1725 = vrcp.pop %v1561
      %v1726 = vrcp.pop %v1564
      %v1727 = vrcp.pop %v1567
      %v1728 = vrcp.pop %v1570
      %v1729 = vrcp.pop %v1573
      %v1730 = vrcp.pop %v1576
      %v1731 = vrcp.pop %v1579
      %v1732 = vrcp.pop %v1582
      %v1733 = vmul.f32 %v1678, %v1717
      %v1734 = vmul.f32 %v1680, %v1718
      %v1735 = vmul.f32 %v1683, %v1719
      %v1736 = vmul.f32 %v1685, %v1720
      %v1737 = vmul.f32 %v1688, %v1721
      %v1738 = vmul.f32 %v1690, %v1722
      %v1739 = vmul.f32 %v1693, %v1723
      %v1740 = vmul.f32 %v1695, %v1724
      %v1741 = vmul.f32 %v1698, %v1725
      %v1742 = vmul.f32 %v1700, %v1726
      %v1743 = vmul.f32 %v1703, %v1727
      %v1744 = vmul.f32 %v1705, %v1728
      %v1745 = vmul.f32 %v1708, %v1729
      %v1746 = vmul.f32 %v1710, %v1730
      %v1747 = vmul.f32 %v1713, %v1731
      %v1748 = vmul.f32 %v1715, %v1732
      %v1749 = vadd.f32 %v1249, %v1733
      %v1750 = vadd.f32 %v1250, %v1734
      %v1751 = vadd.f32 %v1251, %v1735
      %v1752 = vadd.f32 %v1252, %v1736
      %v1753 = vadd.f32 %v1253, %v1737
      %v1754 = vadd.f32 %v1254, %v1738
      %v1755 = vadd.f32 %v1255, %v1739
      %v1756 = vadd.f32 %v1256, %v1740
      %v1757 = vadd.f32 %v1257, %v1741
      %v1758 = vadd.f32 %v1258, %v1742
      %v1759 = vadd.f32 %v1259, %v1743
      %v1760 = vadd.f32 %v1260, %v1744
      %v1761 = vadd.f32 %v1261, %v1745
      %v1762 = vadd.f32 %v1262, %v1746
      %v1763 = vadd.f32 %v1263, %v1747
      %v1764 = vadd.f32 %v1264, %v1748
      %v1765 = vpack.c.bf16 %v1750, %v1749
      %v1766 = vpack.c.bf16 %v1752, %v1751
      %v1767 = vpack.c.bf16 %v1754, %v1753
      %v1768 = vpack.c.bf16 %v1756, %v1755
      %v1769 = vpack.c.bf16 %v1758, %v1757
      %v1770 = vpack.c.bf16 %v1760, %v1759
      %v1771 = vpack.c.bf16 %v1762, %v1761
      %v1772 = vpack.c.bf16 %v1764, %v1763
      %v1777 = vunpack.c.l.b16 %v701
      %v1778 = vunpack.c.l.b16 %v702
      %v1779 = vunpack.c.l.b16 %v703
      %v1780 = vunpack.c.l.b16 %v704
      %v1781 = vpack.c.b16 %v1778, %v1777
      %v1782 = vpack.c.b16 %v1780, %v1779
      %v1784 = vsel %vm376, %v1781, 0
      %v1787 = vsel %vm376, %v1782, 0
      %v1790 = vsel %vm376, %v1765, 0
      %v1793 = vsel %vm376, %v1766, 0
      %v1796 = vsel %vm376, %v1767, 0
      %v1799 = vsel %vm376, %v1768, 0
      %v1802 = vsel %vm376, %v1769, 0
      %v1805 = vsel %vm376, %v1770, 0
      %v1808 = vsel %vm376, %v1771, 0
      %v1811 = vsel %vm376, %v1772, 0
      %1813 = vmatpush.bf16.xpose.msra.mxu0 %v1811
      %1814 = vmatpush.bf16.xpose.msra.mxu0 %v1808
      %1815 = vmatpush.bf16.xpose.msra.mxu0 %v1805
      %1816 = vmatpush.bf16.xpose.msra.mxu0 %v1802
      %1817 = vmatpush.bf16.xpose.msra.mxu0 %v1799
      %1818 = vmatpush.bf16.xpose.msra.mxu0 %v1796
      %1819 = vmatpush.bf16.xpose.msra.mxu0 %v1793
      %1820 = vmatpush.bf16.xpose.msra.mxu0 %v1790
      %1821 = vmatmul.bf16.gmra.mxu0 %v1784
      %v1822 = vpop.f32.mrf.mxu0
      %v1823 = vadd.f32 0.0, %v1822
      %v1824 = vpop.f32.mrf.mxu0
      %v1825 = vadd.f32 0.0, %v1824
      %1826 = vmatmul.bf16.gmra.mxu0 %v1787
      %v1827 = vpop.f32.mrf.mxu0
      %v1828 = vadd.f32 0.0, %v1827
      %v1829 = vpop.f32.mrf.mxu0
      %v1830 = vadd.f32 0.0, %v1829
      %1831 = vdwg.mxu0
      %v1832 = vld [vmem:[%s219] sm:$0xff]
      %v1833 = vld [vmem:[%s219 + $0x30] sm:$0xff]
      %v1834 = vld [vmem:[%s219 + $0x60] sm:$0xff]
      %v1835 = vld [vmem:[%s219 + $0x90] sm:$0xff]
      %v1836 = vadd.f32 %v1832, %v1823
      %v1837 = vadd.f32 %v1833, %v1825
      %v1838 = vadd.f32 %v1834, %v1828
      %v1839 = vadd.f32 %v1835, %v1830
      %1841 = vset.pattern.permute.xlu0 0
      %1842 = vperm.xlu0 %1841, %v705
      %v1843 = vpop.permute.xlu0 %1842
      %1846 = vset.pattern.permute.xlu0 0
      %1847 = vperm.xlu0 %1846, %v706
      %v1848 = vpop.permute.xlu0 %1847
      %1851 = vset.pattern.permute.xlu0 0
      %1852 = vperm.xlu0 %1851, %v707
      %v1853 = vpop.permute.xlu0 %1852
      %1856 = vset.pattern.permute.xlu0 0
      %1857 = vperm.xlu0 %1856, %v708
      %v1858 = vpop.permute.xlu0 %1857
      %v1860 = vadd.f32 %v1836, %v1843
      %v1861 = vadd.f32 %v1837, %v1848
      %v1862 = vadd.f32 %v1838, %v1853
      %v1863 = vadd.f32 %v1839, %v1858
      %1864 = vst [vmem:[%s224] sm:$0xff] %v1860
      %1865 = vst [vmem:[%s224 + $0x30] sm:$0xff] %v1861
      %1866 = vst [vmem:[%s224 + $0x60] sm:$0xff] %v1862
      %1867 = vst [vmem:[%s224 + $0x90] sm:$0xff] %v1863
      %v1868 = vld [vmem:[#allocation2 + $0x4] sm:$0xf]
      %v1869 = vld [vmem:[#allocation2 + $0x1c] sm:$0xf]
      %v1870 = vld [vmem:[#allocation2 + $0x34] sm:$0xf]
      %v1871 = vld [vmem:[#allocation2 + $0x4c] sm:$0xf]
      %v1872 = vld [vmem:[#allocation2 + $0x68] sm:$0xff]
      %v1873 = vld [vmem:[#allocation2 + $0x80] sm:$0xff]
      %v1874 = vld [vmem:[#allocation2 + $0x98] sm:$0xff]
      %v1875 = vld [vmem:[#allocation2 + $0xb0] sm:$0xff]
      %v1876 = vld [vmem:[#allocation2 + $0xc8] sm:$0xff]
      %v1877 = vld [vmem:[#allocation2 + $0xe0] sm:$0xff]
      %v1878 = vld [vmem:[#allocation2 + $0xf8] sm:$0xff]
      %v1879 = vld [vmem:[#allocation2 + $0x110] sm:$0xff]
      %v1884 = vunpack.c.l.b16 %v1868
      %v1885 = vunpack.c.l.b16 %v1869
      %v1886 = vunpack.c.l.b16 %v1870
      %v1887 = vunpack.c.l.b16 %v1871
      %v1888 = vpack.c.b16 %v1885, %v1884
      %v1889 = vpack.c.b16 %v1887, %v1886
      %1892 = vxpose.xlu0.c.b16.start [1/8] %v1888, 128
      %1893 = vxpose.xlu0.c.b16.cont [2/8] %v1889, 128
      %1894 = vxpose.xlu0.c.b16.cont [3/8] 0, 128
      %1895 = vxpose.xlu0.c.b16.cont [4/8] 0, 128
      %1896 = vxpose.xlu0.c.b16.cont [5/8] 0, 128
      %1897 = vxpose.xlu0.c.b16.cont [6/8] 0, 128
      %1898 = vxpose.xlu0.c.b16.cont [7/8] 0, 128
      %1899 = vxpose.xlu0.c.b16.end [8/8] 0, 128
      %v1900 = vpop.trf.xlu0
      %v1901 = vpop.trf.xlu0
      %v1902 = vpop.trf.xlu0
      %v1903 = vpop.trf.xlu0
      %v1904 = vpop.trf.xlu0
      %v1905 = vpop.trf.xlu0
      %v1906 = vpop.trf.xlu0
      %v1907 = vpop.trf.xlu0
      %v1912 = vunpack.c.l.b16 %v1872
      %v1913 = vunpack.c.h.b16 %v1872
      %v1914 = vunpack.c.l.b16 %v1873
      %v1915 = vunpack.c.h.b16 %v1873
      %v1916 = vunpack.c.l.b16 %v1874
      %v1917 = vunpack.c.h.b16 %v1874
      %v1918 = vunpack.c.l.b16 %v1875
      %v1919 = vunpack.c.h.b16 %v1875
      %v1920 = vpack.c.b16 %v1914, %v1912
      %v1921 = vpack.c.b16 %v1915, %v1913
      %v1922 = vpack.c.b16 %v1918, %v1916
      %v1923 = vpack.c.b16 %v1919, %v1917
      %v1929 = vsel %vm376, %v1900, 0
      %v1932 = vsel %vm376, %v1901, 0
      %v1935 = vsel %vm376, %v1902, 0
      %v1938 = vsel %vm376, %v1903, 0
      %v1941 = vsel %vm376, %v1904, 0
      %v1944 = vsel %vm376, %v1905, 0
      %v1947 = vsel %vm376, %v1906, 0
      %v1950 = vsel %vm376, %v1907, 0
      %1952 = vmatpush.bf16.msra.mxu0 0
      %1953 = vmatpush.bf16.msra.mxu0 0
      %1954 = vmatpush.bf16.msra.mxu0 0
      %1955 = vmatpush.bf16.msra.mxu0 0
      %1956 = vmatpush.bf16.msra.mxu0 0
      %1957 = vmatpush.bf16.msra.mxu0 0
      %1958 = vmatpush.bf16.msra.mxu0 %v1922
      %1959 = vmatpush.bf16.msra.mxu0 %v1920
      %1960 = vmatmul.bf16.gmra.mxu0 %v1929
      %v1961 = vpop.f32.mrf.mxu0
      %v1962 = vadd.f32 0.0, %v1961
      %v1963 = vpop.f32.mrf.mxu0
      %v1964 = vadd.f32 0.0, %v1963
      %1965 = vmatmul.bf16.gmra.mxu0 %v1932
      %v1966 = vpop.f32.mrf.mxu0
      %v1967 = vadd.f32 0.0, %v1966
      %v1968 = vpop.f32.mrf.mxu0
      %v1969 = vadd.f32 0.0, %v1968
      %1970 = vmatmul.bf16.gmra.mxu0 %v1935
      %v1971 = vpop.f32.mrf.mxu0
      %v1972 = vadd.f32 0.0, %v1971
      %v1973 = vpop.f32.mrf.mxu0
      %v1974 = vadd.f32 0.0, %v1973
      %1975 = vmatmul.bf16.gmra.mxu0 %v1938
      %v1976 = vpop.f32.mrf.mxu0
      %v1977 = vadd.f32 0.0, %v1976
      %v1978 = vpop.f32.mrf.mxu0
      %v1979 = vadd.f32 0.0, %v1978
      %1980 = vmatmul.bf16.gmra.mxu0 %v1941
      %v1981 = vpop.f32.mrf.mxu0
      %v1982 = vadd.f32 0.0, %v1981
      %v1983 = vpop.f32.mrf.mxu0
      %v1984 = vadd.f32 0.0, %v1983
      %1985 = vmatmul.bf16.gmra.mxu0 %v1944
      %v1986 = vpop.f32.mrf.mxu0
      %v1987 = vadd.f32 0.0, %v1986
      %v1988 = vpop.f32.mrf.mxu0
      %v1989 = vadd.f32 0.0, %v1988
      %1990 = vmatmul.bf16.gmra.mxu0 %v1947
      %v1991 = vpop.f32.mrf.mxu0
      %v1992 = vadd.f32 0.0, %v1991
      %v1993 = vpop.f32.mrf.mxu0
      %v1994 = vadd.f32 0.0, %v1993
      %1995 = vmatmul.bf16.gmra.mxu0 %v1950
      %v1996 = vpop.f32.mrf.mxu0
      %v1997 = vadd.f32 0.0, %v1996
      %v1998 = vpop.f32.mrf.mxu0
      %v1999 = vadd.f32 0.0, %v1998
      %2000 = vdwg.mxu0
      %2001 = vmatpush.bf16.msra.mxu0 0
      %2002 = vmatpush.bf16.msra.mxu0 0
      %2003 = vmatpush.bf16.msra.mxu0 0
      %2004 = vmatpush.bf16.msra.mxu0 0
      %2005 = vmatpush.bf16.msra.mxu0 0
      %2006 = vmatpush.bf16.msra.mxu0 0
      %2007 = vmatpush.bf16.msra.mxu0 %v1923
      %2008 = vmatpush.bf16.msra.mxu0 %v1921
      %2009 = vmatmul.bf16.gmra.mxu0 %v1929
      %v2010 = vpop.f32.mrf.mxu0
      %v2011 = vadd.f32 0.0, %v2010
      %v2012 = vpop.f32.mrf.mxu0
      %v2013 = vadd.f32 0.0, %v2012
      %2014 = vmatmul.bf16.gmra.mxu0 %v1932
      %v2015 = vpop.f32.mrf.mxu0
      %v2016 = vadd.f32 0.0, %v2015
      %v2017 = vpop.f32.mrf.mxu0
      %v2018 = vadd.f32 0.0, %v2017
      %2019 = vmatmul.bf16.gmra.mxu0 %v1935
      %v2020 = vpop.f32.mrf.mxu0
      %v2021 = vadd.f32 0.0, %v2020
      %v2022 = vpop.f32.mrf.mxu0
      %v2023 = vadd.f32 0.0, %v2022
      %2024 = vmatmul.bf16.gmra.mxu0 %v1938
      %v2025 = vpop.f32.mrf.mxu0
      %v2026 = vadd.f32 0.0, %v2025
      %v2027 = vpop.f32.mrf.mxu0
      %v2028 = vadd.f32 0.0, %v2027
      %2029 = vmatmul.bf16.gmra.mxu0 %v1941
      %v2030 = vpop.f32.mrf.mxu0
      %v2031 = vadd.f32 0.0, %v2030
      %v2032 = vpop.f32.mrf.mxu0
      %v2033 = vadd.f32 0.0, %v2032
      %2034 = vmatmul.bf16.gmra.mxu0 %v1944
      %v2035 = vpop.f32.mrf.mxu0
      %v2036 = vadd.f32 0.0, %v2035
      %v2037 = vpop.f32.mrf.mxu0
      %v2038 = vadd.f32 0.0, %v2037
      %2039 = vmatmul.bf16.gmra.mxu0 %v1947
      %v2040 = vpop.f32.mrf.mxu0
      %v2041 = vadd.f32 0.0, %v2040
      %v2042 = vpop.f32.mrf.mxu0
      %v2043 = vadd.f32 0.0, %v2042
      %2044 = vmatmul.bf16.gmra.mxu0 %v1950
      %v2045 = vpop.f32.mrf.mxu0
      %v2046 = vadd.f32 0.0, %v2045
      %v2047 = vpop.f32.mrf.mxu0
      %v2048 = vadd.f32 0.0, %v2047
      %2049 = vdwg.mxu0
      %v2050 = vmax.f32 %v1962, %v2011
      %2051 = vmax.xlane.f32.xlu0 %v2050
      %v2052 = vpop.xlane.xlu0 %2051
      %v2053 = vmax.f32 %v1964, %v2013
      %2054 = vmax.xlane.f32.xlu0 %v2053
      %v2055 = vpop.xlane.xlu0 %2054
      %v2056 = vmax.f32 %v1967, %v2016
      %2057 = vmax.xlane.f32.xlu0 %v2056
      %v2058 = vpop.xlane.xlu0 %2057
      %v2059 = vmax.f32 %v1969, %v2018
      %2060 = vmax.xlane.f32.xlu0 %v2059
      %v2061 = vpop.xlane.xlu0 %2060
      %v2062 = vmax.f32 %v1972, %v2021
      %2063 = vmax.xlane.f32.xlu0 %v2062
      %v2064 = vpop.xlane.xlu0 %2063
      %v2065 = vmax.f32 %v1974, %v2023
      %2066 = vmax.xlane.f32.xlu0 %v2065
      %v2067 = vpop.xlane.xlu0 %2066
      %v2068 = vmax.f32 %v1977, %v2026
      %2069 = vmax.xlane.f32.xlu0 %v2068
      %v2070 = vpop.xlane.xlu0 %2069
      %v2071 = vmax.f32 %v1979, %v2028
      %2072 = vmax.xlane.f32.xlu0 %v2071
      %v2073 = vpop.xlane.xlu0 %2072
      %v2074 = vmax.f32 %v1982, %v2031
      %2075 = vmax.xlane.f32.xlu0 %v2074
      %v2076 = vpop.xlane.xlu0 %2075
      %v2077 = vmax.f32 %v1984, %v2033
      %2078 = vmax.xlane.f32.xlu0 %v2077
      %v2079 = vpop.xlane.xlu0 %2078
      %v2080 = vmax.f32 %v1987, %v2036
      %2081 = vmax.xlane.f32.xlu0 %v2080
      %v2082 = vpop.xlane.xlu0 %2081
      %v2083 = vmax.f32 %v1989, %v2038
      %2084 = vmax.xlane.f32.xlu0 %v2083
      %v2085 = vpop.xlane.xlu0 %2084
      %v2086 = vmax.f32 %v1992, %v2041
      %2087 = vmax.xlane.f32.xlu0 %v2086
      %v2088 = vpop.xlane.xlu0 %2087
      %v2089 = vmax.f32 %v1994, %v2043
      %2090 = vmax.xlane.f32.xlu0 %v2089
      %v2091 = vpop.xlane.xlu0 %2090
      %v2092 = vmax.f32 %v1997, %v2046
      %2093 = vmax.xlane.f32.xlu0 %v2092
      %v2094 = vpop.xlane.xlu0 %2093
      %v2095 = vmax.f32 %v1999, %v2048
      %2096 = vmax.xlane.f32.xlu0 %v2095
      %v2097 = vpop.xlane.xlu0 %2096
      %v2098 = vsub.f32 %v1962, %v2052
      %v2099 = vsub.f32 %v2011, %v2052
      %v2100 = vsub.f32 %v1964, %v2055
      %v2101 = vsub.f32 %v2013, %v2055
      %v2102 = vsub.f32 %v1967, %v2058
      %v2103 = vsub.f32 %v2016, %v2058
      %v2104 = vsub.f32 %v1969, %v2061
      %v2105 = vsub.f32 %v2018, %v2061
      %v2106 = vsub.f32 %v1972, %v2064
      %v2107 = vsub.f32 %v2021, %v2064
      %v2108 = vsub.f32 %v1974, %v2067
      %v2109 = vsub.f32 %v2023, %v2067
      %v2110 = vsub.f32 %v1977, %v2070
      %v2111 = vsub.f32 %v2026, %v2070
      %v2112 = vsub.f32 %v1979, %v2073
      %v2113 = vsub.f32 %v2028, %v2073
      %v2114 = vsub.f32 %v1982, %v2076
      %v2115 = vsub.f32 %v2031, %v2076
      %v2116 = vsub.f32 %v1984, %v2079
      %v2117 = vsub.f32 %v2033, %v2079
      %v2118 = vsub.f32 %v1987, %v2082
      %v2119 = vsub.f32 %v2036, %v2082
      %v2120 = vsub.f32 %v1989, %v2085
      %v2121 = vsub.f32 %v2038, %v2085
      %v2122 = vsub.f32 %v1992, %v2088
      %v2123 = vsub.f32 %v2041, %v2088
      %v2124 = vsub.f32 %v1994, %v2091
      %v2125 = vsub.f32 %v2043, %v2091
      %v2126 = vsub.f32 %v1997, %v2094
      %v2127 = vsub.f32 %v2046, %v2094
      %v2128 = vsub.f32 %v1999, %v2097
      %v2129 = vsub.f32 %v2048, %v2097
      %v2130 = vmul.f32 %v2098, 1.442695
      %v2131 = vpow.pop %v2130
      %v2132 = vmul.f32 %v2099, 1.442695
      %v2133 = vpow.pop %v2132
      %v2134 = vmul.f32 %v2100, 1.442695
      %v2135 = vpow.pop %v2134
      %v2136 = vmul.f32 %v2101, 1.442695
      %v2137 = vpow.pop %v2136
      %v2138 = vmul.f32 %v2102, 1.442695
      %v2139 = vpow.pop %v2138
      %v2140 = vmul.f32 %v2103, 1.442695
      %v2141 = vpow.pop %v2140
      %v2142 = vmul.f32 %v2104, 1.442695
      %v2143 = vpow.pop %v2142
      %v2144 = vmul.f32 %v2105, 1.442695
      %v2145 = vpow.pop %v2144
      %v2146 = vmul.f32 %v2106, 1.442695
      %v2147 = vpow.pop %v2146
      %v2148 = vmul.f32 %v2107, 1.442695
      %v2149 = vpow.pop %v2148
      %v2150 = vmul.f32 %v2108, 1.442695
      %v2151 = vpow.pop %v2150
      %v2152 = vmul.f32 %v2109, 1.442695
      %v2153 = vpow.pop %v2152
      %v2154 = vmul.f32 %v2110, 1.442695
      %v2155 = vpow.pop %v2154
      %v2156 = vmul.f32 %v2111, 1.442695
      %v2157 = vpow.pop %v2156
      %v2158 = vmul.f32 %v2112, 1.442695
      %v2159 = vpow.pop %v2158
      %v2160 = vmul.f32 %v2113, 1.442695
      %v2161 = vpow.pop %v2160
      %v2162 = vmul.f32 %v2114, 1.442695
      %v2163 = vpow.pop %v2162
      %v2164 = vmul.f32 %v2115, 1.442695
      %v2165 = vpow.pop %v2164
      %v2166 = vmul.f32 %v2116, 1.442695
      %v2167 = vpow.pop %v2166
      %v2168 = vmul.f32 %v2117, 1.442695
      %v2169 = vpow.pop %v2168
      %v2170 = vmul.f32 %v2118, 1.442695
      %v2171 = vpow.pop %v2170
      %v2172 = vmul.f32 %v2119, 1.442695
      %v2173 = vpow.pop %v2172
      %v2174 = vmul.f32 %v2120, 1.442695
      %v2175 = vpow.pop %v2174
      %v2176 = vmul.f32 %v2121, 1.442695
      %v2177 = vpow.pop %v2176
      %v2178 = vmul.f32 %v2122, 1.442695
      %v2179 = vpow.pop %v2178
      %v2180 = vmul.f32 %v2123, 1.442695
      %v2181 = vpow.pop %v2180
      %v2182 = vmul.f32 %v2124, 1.442695
      %v2183 = vpow.pop %v2182
      %v2184 = vmul.f32 %v2125, 1.442695
      %v2185 = vpow.pop %v2184
      %v2186 = vmul.f32 %v2126, 1.442695
      %v2187 = vpow.pop %v2186
      %v2188 = vmul.f32 %v2127, 1.442695
      %v2189 = vpow.pop %v2188
      %v2190 = vmul.f32 %v2128, 1.442695
      %v2191 = vpow.pop %v2190
      %v2192 = vmul.f32 %v2129, 1.442695
      %v2193 = vpow.pop %v2192
      %v2194 = vadd.f32 %v2131, %v2133
      %2195 = vadd.xlane.f32.xlu0 %v2194
      %v2196 = vpop.xlane.xlu0 %2195
      %v2197 = vadd.f32 %v2135, %v2137
      %2198 = vadd.xlane.f32.xlu0 %v2197
      %v2199 = vpop.xlane.xlu0 %2198
      %v2200 = vadd.f32 %v2139, %v2141
      %2201 = vadd.xlane.f32.xlu0 %v2200
      %v2202 = vpop.xlane.xlu0 %2201
      %v2203 = vadd.f32 %v2143, %v2145
      %2204 = vadd.xlane.f32.xlu0 %v2203
      %v2205 = vpop.xlane.xlu0 %2204
      %v2206 = vadd.f32 %v2147, %v2149
      %2207 = vadd.xlane.f32.xlu0 %v2206
      %v2208 = vpop.xlane.xlu0 %2207
      %v2209 = vadd.f32 %v2151, %v2153
      %2210 = vadd.xlane.f32.xlu0 %v2209
      %v2211 = vpop.xlane.xlu0 %2210
      %v2212 = vadd.f32 %v2155, %v2157
      %2213 = vadd.xlane.f32.xlu0 %v2212
      %v2214 = vpop.xlane.xlu0 %2213
      %v2215 = vadd.f32 %v2159, %v2161
      %2216 = vadd.xlane.f32.xlu0 %v2215
      %v2217 = vpop.xlane.xlu0 %2216
      %v2218 = vadd.f32 %v2163, %v2165
      %2219 = vadd.xlane.f32.xlu0 %v2218
      %v2220 = vpop.xlane.xlu0 %2219
      %v2221 = vadd.f32 %v2167, %v2169
      %2222 = vadd.xlane.f32.xlu0 %v2221
      %v2223 = vpop.xlane.xlu0 %2222
      %v2224 = vadd.f32 %v2171, %v2173
      %2225 = vadd.xlane.f32.xlu0 %v2224
      %v2226 = vpop.xlane.xlu0 %2225
      %v2227 = vadd.f32 %v2175, %v2177
      %2228 = vadd.xlane.f32.xlu0 %v2227
      %v2229 = vpop.xlane.xlu0 %2228
      %v2230 = vadd.f32 %v2179, %v2181
      %2231 = vadd.xlane.f32.xlu0 %v2230
      %v2232 = vpop.xlane.xlu0 %2231
      %v2233 = vadd.f32 %v2183, %v2185
      %2234 = vadd.xlane.f32.xlu0 %v2233
      %v2235 = vpop.xlane.xlu0 %2234
      %v2236 = vadd.f32 %v2187, %v2189
      %2237 = vadd.xlane.f32.xlu0 %v2236
      %v2238 = vpop.xlane.xlu0 %2237
      %v2239 = vadd.f32 %v2191, %v2193
      %2240 = vadd.xlane.f32.xlu0 %v2239
      %v2241 = vpop.xlane.xlu0 %2240
      %v2242 = vpack.c.bf16 %v2135, %v2131
      %v2243 = vpack.c.bf16 %v2137, %v2133
      %v2244 = vpack.c.bf16 %v2143, %v2139
      %v2245 = vpack.c.bf16 %v2145, %v2141
      %v2246 = vpack.c.bf16 %v2151, %v2147
      %v2247 = vpack.c.bf16 %v2153, %v2149
      %v2248 = vpack.c.bf16 %v2159, %v2155
      %v2249 = vpack.c.bf16 %v2161, %v2157
      %v2250 = vpack.c.bf16 %v2167, %v2163
      %v2251 = vpack.c.bf16 %v2169, %v2165
      %v2252 = vpack.c.bf16 %v2175, %v2171
      %v2253 = vpack.c.bf16 %v2177, %v2173
      %v2254 = vpack.c.bf16 %v2183, %v2179
      %v2255 = vpack.c.bf16 %v2185, %v2181
      %v2256 = vpack.c.bf16 %v2191, %v2187
      %v2257 = vpack.c.bf16 %v2193, %v2189
      %v2262 = vunpack.c.l.b16 %v1876
      %v2263 = vunpack.c.h.b16 %v1876
      %v2264 = vunpack.c.l.b16 %v1877
      %v2265 = vunpack.c.h.b16 %v1877
      %v2266 = vunpack.c.l.b16 %v1878
      %v2267 = vunpack.c.h.b16 %v1878
      %v2268 = vunpack.c.l.b16 %v1879
      %v2269 = vunpack.c.h.b16 %v1879
      %v2270 = vpack.c.b16 %v2264, %v2262
      %v2271 = vpack.c.b16 %v2265, %v2263
      %v2272 = vpack.c.b16 %v2268, %v2266
      %v2273 = vpack.c.b16 %v2269, %v2267
      %2278 = vmatpush.bf16.xpose.msra.mxu0 0
      %2279 = vmatpush.bf16.xpose.msra.mxu0 0
      %2280 = vmatpush.bf16.xpose.msra.mxu0 0
      %2281 = vmatpush.bf16.xpose.msra.mxu0 0
      %2282 = vmatpush.bf16.xpose.msra.mxu0 0
      %2283 = vmatpush.bf16.xpose.msra.mxu0 0
      %2284 = vmatpush.bf16.xpose.msra.mxu0 %v2272
      %2285 = vmatpush.bf16.xpose.msra.mxu0 %v2270
      %2286 = vmatmul.bf16.gmra.mxu0 %v2242
      %v2287 = vpop.f32.mrf.mxu0
      %v2288 = vadd.f32 0.0, %v2287
      %v2289 = vpop.f32.mrf.mxu0
      %v2290 = vadd.f32 0.0, %v2289
      %2291 = vmatmul.bf16.gmra.mxu0 %v2244
      %v2292 = vpop.f32.mrf.mxu0
      %v2293 = vadd.f32 0.0, %v2292
      %v2294 = vpop.f32.mrf.mxu0
      %v2295 = vadd.f32 0.0, %v2294
      %2296 = vmatmul.bf16.gmra.mxu0 %v2246
      %v2297 = vpop.f32.mrf.mxu0
      %v2298 = vadd.f32 0.0, %v2297
      %v2299 = vpop.f32.mrf.mxu0
      %v2300 = vadd.f32 0.0, %v2299
      %2301 = vmatmul.bf16.gmra.mxu0 %v2248
      %v2302 = vpop.f32.mrf.mxu0
      %v2303 = vadd.f32 0.0, %v2302
      %v2304 = vpop.f32.mrf.mxu0
      %v2305 = vadd.f32 0.0, %v2304
      %2306 = vmatmul.bf16.gmra.mxu0 %v2250
      %v2307 = vpop.f32.mrf.mxu0
      %v2308 = vadd.f32 0.0, %v2307
      %v2309 = vpop.f32.mrf.mxu0
      %v2310 = vadd.f32 0.0, %v2309
      %2311 = vmatmul.bf16.gmra.mxu0 %v2252
      %v2312 = vpop.f32.mrf.mxu0
      %v2313 = vadd.f32 0.0, %v2312
      %v2314 = vpop.f32.mrf.mxu0
      %v2315 = vadd.f32 0.0, %v2314
      %2316 = vmatmul.bf16.gmra.mxu0 %v2254
      %v2317 = vpop.f32.mrf.mxu0
      %v2318 = vadd.f32 0.0, %v2317
      %v2319 = vpop.f32.mrf.mxu0
      %v2320 = vadd.f32 0.0, %v2319
      %2321 = vmatmul.bf16.gmra.mxu0 %v2256
      %v2322 = vpop.f32.mrf.mxu0
      %v2323 = vadd.f32 0.0, %v2322
      %v2324 = vpop.f32.mrf.mxu0
      %v2325 = vadd.f32 0.0, %v2324
      %2326 = vdwg.mxu0
      %2327 = vmatpush.bf16.xpose.msra.mxu0 0
      %2328 = vmatpush.bf16.xpose.msra.mxu0 0
      %2329 = vmatpush.bf16.xpose.msra.mxu0 0
      %2330 = vmatpush.bf16.xpose.msra.mxu0 0
      %2331 = vmatpush.bf16.xpose.msra.mxu0 0
      %2332 = vmatpush.bf16.xpose.msra.mxu0 0
      %2333 = vmatpush.bf16.xpose.msra.mxu0 %v2273
      %2334 = vmatpush.bf16.xpose.msra.mxu0 %v2271
      %2335 = vmatmul.bf16.gmra.mxu0 %v2243
      %v2336 = vpop.f32.mrf.mxu0
      %v2337 = vadd.f32 %v2288, %v2336
      %v2338 = vpop.f32.mrf.mxu0
      %v2339 = vadd.f32 %v2290, %v2338
      %2340 = vmatmul.bf16.gmra.mxu0 %v2245
      %v2341 = vpop.f32.mrf.mxu0
      %v2342 = vadd.f32 %v2293, %v2341
      %v2343 = vpop.f32.mrf.mxu0
      %v2344 = vadd.f32 %v2295, %v2343
      %2345 = vmatmul.bf16.gmra.mxu0 %v2247
      %v2346 = vpop.f32.mrf.mxu0
      %v2347 = vadd.f32 %v2298, %v2346
      %v2348 = vpop.f32.mrf.mxu0
      %v2349 = vadd.f32 %v2300, %v2348
      %2350 = vmatmul.bf16.gmra.mxu0 %v2249
      %v2351 = vpop.f32.mrf.mxu0
      %v2352 = vadd.f32 %v2303, %v2351
      %v2353 = vpop.f32.mrf.mxu0
      %v2354 = vadd.f32 %v2305, %v2353
      %2355 = vmatmul.bf16.gmra.mxu0 %v2251
      %v2356 = vpop.f32.mrf.mxu0
      %v2357 = vadd.f32 %v2308, %v2356
      %v2358 = vpop.f32.mrf.mxu0
      %v2359 = vadd.f32 %v2310, %v2358
      %2360 = vmatmul.bf16.gmra.mxu0 %v2253
      %v2361 = vpop.f32.mrf.mxu0
      %v2362 = vadd.f32 %v2313, %v2361
      %v2363 = vpop.f32.mrf.mxu0
      %v2364 = vadd.f32 %v2315, %v2363
      %2365 = vmatmul.bf16.gmra.mxu0 %v2255
      %v2366 = vpop.f32.mrf.mxu0
      %v2367 = vadd.f32 %v2318, %v2366
      %v2368 = vpop.f32.mrf.mxu0
      %v2369 = vadd.f32 %v2320, %v2368
      %2370 = vmatmul.bf16.gmra.mxu0 %v2257
      %v2371 = vpop.f32.mrf.mxu0
      %v2372 = vadd.f32 %v2323, %v2371
      %v2373 = vpop.f32.mrf.mxu0
      %v2374 = vadd.f32 %v2325, %v2373
      %2375 = vdwg.mxu0
      %v2376 = vrcp.pop %v2196
      %v2377 = vrcp.pop %v2199
      %v2378 = vrcp.pop %v2202
      %v2379 = vrcp.pop %v2205
      %v2380 = vrcp.pop %v2208
      %v2381 = vrcp.pop %v2211
      %v2382 = vrcp.pop %v2214
      %v2383 = vrcp.pop %v2217
      %v2384 = vrcp.pop %v2220
      %v2385 = vrcp.pop %v2223
      %v2386 = vrcp.pop %v2226
      %v2387 = vrcp.pop %v2229
      %v2388 = vrcp.pop %v2232
      %v2389 = vrcp.pop %v2235
      %v2390 = vrcp.pop %v2238
      %v2391 = vrcp.pop %v2241
      %v2392 = vmul.f32 %v2337, %v2376
      %v2393 = vmul.f32 %v2339, %v2377
      %v2394 = vmul.f32 %v2342, %v2378
      %v2395 = vmul.f32 %v2344, %v2379
      %v2396 = vmul.f32 %v2347, %v2380
      %v2397 = vmul.f32 %v2349, %v2381
      %v2398 = vmul.f32 %v2352, %v2382
      %v2399 = vmul.f32 %v2354, %v2383
      %v2400 = vmul.f32 %v2357, %v2384
      %v2401 = vmul.f32 %v2359, %v2385
      %v2402 = vmul.f32 %v2362, %v2386
      %v2403 = vmul.f32 %v2364, %v2387
      %v2404 = vmul.f32 %v2367, %v2388
      %v2405 = vmul.f32 %v2369, %v2389
      %v2406 = vmul.f32 %v2372, %v2390
      %v2407 = vmul.f32 %v2374, %v2391
      %v2408 = vadd.f32 %v2392, 0.0
      %v2409 = vadd.f32 %v2393, 0.0
      %v2410 = vadd.f32 %v2394, 0.0
      %v2411 = vadd.f32 %v2395, 0.0
      %v2412 = vadd.f32 %v2396, 0.0
      %v2413 = vadd.f32 %v2397, 0.0
      %v2414 = vadd.f32 %v2398, 0.0
      %v2415 = vadd.f32 %v2399, 0.0
      %v2416 = vadd.f32 %v2400, 0.0
      %v2417 = vadd.f32 %v2401, 0.0
      %v2418 = vadd.f32 %v2402, 0.0
      %v2419 = vadd.f32 %v2403, 0.0
      %v2420 = vadd.f32 %v2404, 0.0
      %v2421 = vadd.f32 %v2405, 0.0
      %v2422 = vadd.f32 %v2406, 0.0
      %v2423 = vadd.f32 %v2407, 0.0
      %v2424 = vld [vmem:[#allocation2 + $0x70] sm:$0xff]
      %v2425 = vld [vmem:[#allocation2 + $0x88] sm:$0xff]
      %v2426 = vld [vmem:[#allocation2 + $0xa0] sm:$0xff]
      %v2427 = vld [vmem:[#allocation2 + $0xb8] sm:$0xff]
      %v2428 = vld [vmem:[#allocation2 + $0xd0] sm:$0xff]
      %v2429 = vld [vmem:[#allocation2 + $0xe8] sm:$0xff]
      %v2430 = vld [vmem:[#allocation2 + $0x100] sm:$0xff]
      %v2431 = vld [vmem:[#allocation2 + $0x118] sm:$0xff]
      %v2436 = vunpack.c.l.b16 %v2424
      %v2437 = vunpack.c.h.b16 %v2424
      %v2438 = vunpack.c.l.b16 %v2425
      %v2439 = vunpack.c.h.b16 %v2425
      %v2440 = vunpack.c.l.b16 %v2426
      %v2441 = vunpack.c.h.b16 %v2426
      %v2442 = vunpack.c.l.b16 %v2427
      %v2443 = vunpack.c.h.b16 %v2427
      %v2444 = vpack.c.b16 %v2438, %v2436
      %v2445 = vpack.c.b16 %v2439, %v2437
      %v2446 = vpack.c.b16 %v2442, %v2440
      %v2447 = vpack.c.b16 %v2443, %v2441
      %2452 = vmatpush.bf16.msra.mxu0 0
      %2453 = vmatpush.bf16.msra.mxu0 0
      %2454 = vmatpush.bf16.msra.mxu0 0
      %2455 = vmatpush.bf16.msra.mxu0 0
      %2456 = vmatpush.bf16.msra.mxu0 0
      %2457 = vmatpush.bf16.msra.mxu0 0
      %2458 = vmatpush.bf16.msra.mxu0 %v2446
      %2459 = vmatpush.bf16.msra.mxu0 %v2444
      %2460 = vmatmul.bf16.gmra.mxu0 %v1929
      %v2461 = vpop.f32.mrf.mxu0
      %v2462 = vadd.f32 0.0, %v2461
      %v2463 = vpop.f32.mrf.mxu0
      %v2464 = vadd.f32 0.0, %v2463
      %2465 = vmatmul.bf16.gmra.mxu0 %v1932
      %v2466 = vpop.f32.mrf.mxu0
      %v2467 = vadd.f32 0.0, %v2466
      %v2468 = vpop.f32.mrf.mxu0
      %v2469 = vadd.f32 0.0, %v2468
      %2470 = vmatmul.bf16.gmra.mxu0 %v1935
      %v2471 = vpop.f32.mrf.mxu0
      %v2472 = vadd.f32 0.0, %v2471
      %v2473 = vpop.f32.mrf.mxu0
      %v2474 = vadd.f32 0.0, %v2473
      %2475 = vmatmul.bf16.gmra.mxu0 %v1938
      %v2476 = vpop.f32.mrf.mxu0
      %v2477 = vadd.f32 0.0, %v2476
      %v2478 = vpop.f32.mrf.mxu0
      %v2479 = vadd.f32 0.0, %v2478
      %2480 = vmatmul.bf16.gmra.mxu0 %v1941
      %v2481 = vpop.f32.mrf.mxu0
      %v2482 = vadd.f32 0.0, %v2481
      %v2483 = vpop.f32.mrf.mxu0
      %v2484 = vadd.f32 0.0, %v2483
      %2485 = vmatmul.bf16.gmra.mxu0 %v1944
      %v2486 = vpop.f32.mrf.mxu0
      %v2487 = vadd.f32 0.0, %v2486
      %v2488 = vpop.f32.mrf.mxu0
      %v2489 = vadd.f32 0.0, %v2488
      %2490 = vmatmul.bf16.gmra.mxu0 %v1947
      %v2491 = vpop.f32.mrf.mxu0
      %v2492 = vadd.f32 0.0, %v2491
      %v2493 = vpop.f32.mrf.mxu0
      %v2494 = vadd.f32 0.0, %v2493
      %2495 = vmatmul.bf16.gmra.mxu0 %v1950
      %v2496 = vpop.f32.mrf.mxu0
      %v2497 = vadd.f32 0.0, %v2496
      %v2498 = vpop.f32.mrf.mxu0
      %v2499 = vadd.f32 0.0, %v2498
      %2500 = vdwg.mxu0
      %2501 = vmatpush.bf16.msra.mxu0 0
      %2502 = vmatpush.bf16.msra.mxu0 0
      %2503 = vmatpush.bf16.msra.mxu0 0
      %2504 = vmatpush.bf16.msra.mxu0 0
      %2505 = vmatpush.bf16.msra.mxu0 0
      %2506 = vmatpush.bf16.msra.mxu0 0
      %2507 = vmatpush.bf16.msra.mxu0 %v2447
      %2508 = vmatpush.bf16.msra.mxu0 %v2445
      %2509 = vmatmul.bf16.gmra.mxu0 %v1929
      %v2510 = vpop.f32.mrf.mxu0
      %v2511 = vadd.f32 0.0, %v2510
      %v2512 = vpop.f32.mrf.mxu0
      %v2513 = vadd.f32 0.0, %v2512
      %2514 = vmatmul.bf16.gmra.mxu0 %v1932
      %v2515 = vpop.f32.mrf.mxu0
      %v2516 = vadd.f32 0.0, %v2515
      %v2517 = vpop.f32.mrf.mxu0
      %v2518 = vadd.f32 0.0, %v2517
      %2519 = vmatmul.bf16.gmra.mxu0 %v1935
      %v2520 = vpop.f32.mrf.mxu0
      %v2521 = vadd.f32 0.0, %v2520
      %v2522 = vpop.f32.mrf.mxu0
      %v2523 = vadd.f32 0.0, %v2522
      %2524 = vmatmul.bf16.gmra.mxu0 %v1938
      %v2525 = vpop.f32.mrf.mxu0
      %v2526 = vadd.f32 0.0, %v2525
      %v2527 = vpop.f32.mrf.mxu0
      %v2528 = vadd.f32 0.0, %v2527
      %2529 = vmatmul.bf16.gmra.mxu0 %v1941
      %v2530 = vpop.f32.mrf.mxu0
      %v2531 = vadd.f32 0.0, %v2530
      %v2532 = vpop.f32.mrf.mxu0
      %v2533 = vadd.f32 0.0, %v2532
      %2534 = vmatmul.bf16.gmra.mxu0 %v1944
      %v2535 = vpop.f32.mrf.mxu0
      %v2536 = vadd.f32 0.0, %v2535
      %v2537 = vpop.f32.mrf.mxu0
      %v2538 = vadd.f32 0.0, %v2537
      %2539 = vmatmul.bf16.gmra.mxu0 %v1947
      %v2540 = vpop.f32.mrf.mxu0
      %v2541 = vadd.f32 0.0, %v2540
      %v2542 = vpop.f32.mrf.mxu0
      %v2543 = vadd.f32 0.0, %v2542
      %2544 = vmatmul.bf16.gmra.mxu0 %v1950
      %v2545 = vpop.f32.mrf.mxu0
      %v2546 = vadd.f32 0.0, %v2545
      %v2547 = vpop.f32.mrf.mxu0
      %v2548 = vadd.f32 0.0, %v2547
      %2549 = vdwg.mxu0
      %v2550 = vmax.f32 %v2462, %v2511
      %2551 = vmax.xlane.f32.xlu0 %v2550
      %v2552 = vpop.xlane.xlu0 %2551
      %v2553 = vmax.f32 %v2464, %v2513
      %2554 = vmax.xlane.f32.xlu0 %v2553
      %v2555 = vpop.xlane.xlu0 %2554
      %v2556 = vmax.f32 %v2467, %v2516
      %2557 = vmax.xlane.f32.xlu0 %v2556
      %v2558 = vpop.xlane.xlu0 %2557
      %v2559 = vmax.f32 %v2469, %v2518
      %2560 = vmax.xlane.f32.xlu0 %v2559
      %v2561 = vpop.xlane.xlu0 %2560
      %v2562 = vmax.f32 %v2472, %v2521
      %2563 = vmax.xlane.f32.xlu0 %v2562
      %v2564 = vpop.xlane.xlu0 %2563
      %v2565 = vmax.f32 %v2474, %v2523
      %2566 = vmax.xlane.f32.xlu0 %v2565
      %v2567 = vpop.xlane.xlu0 %2566
      %v2568 = vmax.f32 %v2477, %v2526
      %2569 = vmax.xlane.f32.xlu0 %v2568
      %v2570 = vpop.xlane.xlu0 %2569
      %v2571 = vmax.f32 %v2479, %v2528
      %2572 = vmax.xlane.f32.xlu0 %v2571
      %v2573 = vpop.xlane.xlu0 %2572
      %v2574 = vmax.f32 %v2482, %v2531
      %2575 = vmax.xlane.f32.xlu0 %v2574
      %v2576 = vpop.xlane.xlu0 %2575
      %v2577 = vmax.f32 %v2484, %v2533
      %2578 = vmax.xlane.f32.xlu0 %v2577
      %v2579 = vpop.xlane.xlu0 %2578
      %v2580 = vmax.f32 %v2487, %v2536
      %2581 = vmax.xlane.f32.xlu0 %v2580
      %v2582 = vpop.xlane.xlu0 %2581
      %v2583 = vmax.f32 %v2489, %v2538
      %2584 = vmax.xlane.f32.xlu0 %v2583
      %v2585 = vpop.xlane.xlu0 %2584
      %v2586 = vmax.f32 %v2492, %v2541
      %2587 = vmax.xlane.f32.xlu0 %v2586
      %v2588 = vpop.xlane.xlu0 %2587
      %v2589 = vmax.f32 %v2494, %v2543
      %2590 = vmax.xlane.f32.xlu0 %v2589
      %v2591 = vpop.xlane.xlu0 %2590
      %v2592 = vmax.f32 %v2497, %v2546
      %2593 = vmax.xlane.f32.xlu0 %v2592
      %v2594 = vpop.xlane.xlu0 %2593
      %v2595 = vmax.f32 %v2499, %v2548
      %2596 = vmax.xlane.f32.xlu0 %v2595
      %v2597 = vpop.xlane.xlu0 %2596
      %v2598 = vsub.f32 %v2462, %v2552
      %v2599 = vsub.f32 %v2511, %v2552
      %v2600 = vsub.f32 %v2464, %v2555
      %v2601 = vsub.f32 %v2513, %v2555
      %v2602 = vsub.f32 %v2467, %v2558
      %v2603 = vsub.f32 %v2516, %v2558
      %v2604 = vsub.f32 %v2469, %v2561
      %v2605 = vsub.f32 %v2518, %v2561
      %v2606 = vsub.f32 %v2472, %v2564
      %v2607 = vsub.f32 %v2521, %v2564
      %v2608 = vsub.f32 %v2474, %v2567
      %v2609 = vsub.f32 %v2523, %v2567
      %v2610 = vsub.f32 %v2477, %v2570
      %v2611 = vsub.f32 %v2526, %v2570
      %v2612 = vsub.f32 %v2479, %v2573
      %v2613 = vsub.f32 %v2528, %v2573
      %v2614 = vsub.f32 %v2482, %v2576
      %v2615 = vsub.f32 %v2531, %v2576
      %v2616 = vsub.f32 %v2484, %v2579
      %v2617 = vsub.f32 %v2533, %v2579
      %v2618 = vsub.f32 %v2487, %v2582
      %v2619 = vsub.f32 %v2536, %v2582
      %v2620 = vsub.f32 %v2489, %v2585
      %v2621 = vsub.f32 %v2538, %v2585
      %v2622 = vsub.f32 %v2492, %v2588
      %v2623 = vsub.f32 %v2541, %v2588
      %v2624 = vsub.f32 %v2494, %v2591
      %v2625 = vsub.f32 %v2543, %v2591
      %v2626 = vsub.f32 %v2497, %v2594
      %v2627 = vsub.f32 %v2546, %v2594
      %v2628 = vsub.f32 %v2499, %v2597
      %v2629 = vsub.f32 %v2548, %v2597
      %v2630 = vmul.f32 %v2598, 1.442695
      %v2631 = vpow.pop %v2630
      %v2632 = vmul.f32 %v2599, 1.442695
      %v2633 = vpow.pop %v2632
      %v2634 = vmul.f32 %v2600, 1.442695
      %v2635 = vpow.pop %v2634
      %v2636 = vmul.f32 %v2601, 1.442695
      %v2637 = vpow.pop %v2636
      %v2638 = vmul.f32 %v2602, 1.442695
      %v2639 = vpow.pop %v2638
      %v2640 = vmul.f32 %v2603, 1.442695
      %v2641 = vpow.pop %v2640
      %v2642 = vmul.f32 %v2604, 1.442695
      %v2643 = vpow.pop %v2642
      %v2644 = vmul.f32 %v2605, 1.442695
      %v2645 = vpow.pop %v2644
      %v2646 = vmul.f32 %v2606, 1.442695
      %v2647 = vpow.pop %v2646
      %v2648 = vmul.f32 %v2607, 1.442695
      %v2649 = vpow.pop %v2648
      %v2650 = vmul.f32 %v2608, 1.442695
      %v2651 = vpow.pop %v2650
      %v2652 = vmul.f32 %v2609, 1.442695
      %v2653 = vpow.pop %v2652
      %v2654 = vmul.f32 %v2610, 1.442695
      %v2655 = vpow.pop %v2654
      %v2656 = vmul.f32 %v2611, 1.442695
      %v2657 = vpow.pop %v2656
      %v2658 = vmul.f32 %v2612, 1.442695
      %v2659 = vpow.pop %v2658
      %v2660 = vmul.f32 %v2613, 1.442695
      %v2661 = vpow.pop %v2660
      %v2662 = vmul.f32 %v2614, 1.442695
      %v2663 = vpow.pop %v2662
      %v2664 = vmul.f32 %v2615, 1.442695
      %v2665 = vpow.pop %v2664
      %v2666 = vmul.f32 %v2616, 1.442695
      %v2667 = vpow.pop %v2666
      %v2668 = vmul.f32 %v2617, 1.442695
      %v2669 = vpow.pop %v2668
      %v2670 = vmul.f32 %v2618, 1.442695
      %v2671 = vpow.pop %v2670
      %v2672 = vmul.f32 %v2619, 1.442695
      %v2673 = vpow.pop %v2672
      %v2674 = vmul.f32 %v2620, 1.442695
      %v2675 = vpow.pop %v2674
      %v2676 = vmul.f32 %v2621, 1.442695
      %v2677 = vpow.pop %v2676
      %v2678 = vmul.f32 %v2622, 1.442695
      %v2679 = vpow.pop %v2678
      %v2680 = vmul.f32 %v2623, 1.442695
      %v2681 = vpow.pop %v2680
      %v2682 = vmul.f32 %v2624, 1.442695
      %v2683 = vpow.pop %v2682
      %v2684 = vmul.f32 %v2625, 1.442695
      %v2685 = vpow.pop %v2684
      %v2686 = vmul.f32 %v2626, 1.442695
      %v2687 = vpow.pop %v2686
      %v2688 = vmul.f32 %v2627, 1.442695
      %v2689 = vpow.pop %v2688
      %v2690 = vmul.f32 %v2628, 1.442695
      %v2691 = vpow.pop %v2690
      %v2692 = vmul.f32 %v2629, 1.442695
      %v2693 = vpow.pop %v2692
      %v2694 = vadd.f32 %v2631, %v2633
      %2695 = vadd.xlane.f32.xlu0 %v2694
      %v2696 = vpop.xlane.xlu0 %2695
      %v2697 = vadd.f32 %v2635, %v2637
      %2698 = vadd.xlane.f32.xlu0 %v2697
      %v2699 = vpop.xlane.xlu0 %2698
      %v2700 = vadd.f32 %v2639, %v2641
      %2701 = vadd.xlane.f32.xlu0 %v2700
      %v2702 = vpop.xlane.xlu0 %2701
      %v2703 = vadd.f32 %v2643, %v2645
      %2704 = vadd.xlane.f32.xlu0 %v2703
      %v2705 = vpop.xlane.xlu0 %2704
      %v2706 = vadd.f32 %v2647, %v2649
      %2707 = vadd.xlane.f32.xlu0 %v2706
      %v2708 = vpop.xlane.xlu0 %2707
      %v2709 = vadd.f32 %v2651, %v2653
      %2710 = vadd.xlane.f32.xlu0 %v2709
      %v2711 = vpop.xlane.xlu0 %2710
      %v2712 = vadd.f32 %v2655, %v2657
      %2713 = vadd.xlane.f32.xlu0 %v2712
      %v2714 = vpop.xlane.xlu0 %2713
      %v2715 = vadd.f32 %v2659, %v2661
      %2716 = vadd.xlane.f32.xlu0 %v2715
      %v2717 = vpop.xlane.xlu0 %2716
      %v2718 = vadd.f32 %v2663, %v2665
      %2719 = vadd.xlane.f32.xlu0 %v2718
      %v2720 = vpop.xlane.xlu0 %2719
      %v2721 = vadd.f32 %v2667, %v2669
      %2722 = vadd.xlane.f32.xlu0 %v2721
      %v2723 = vpop.xlane.xlu0 %2722
      %v2724 = vadd.f32 %v2671, %v2673
      %2725 = vadd.xlane.f32.xlu0 %v2724
      %v2726 = vpop.xlane.xlu0 %2725
      %v2727 = vadd.f32 %v2675, %v2677
      %2728 = vadd.xlane.f32.xlu0 %v2727
      %v2729 = vpop.xlane.xlu0 %2728
      %v2730 = vadd.f32 %v2679, %v2681
      %2731 = vadd.xlane.f32.xlu0 %v2730
      %v2732 = vpop.xlane.xlu0 %2731
      %v2733 = vadd.f32 %v2683, %v2685
      %2734 = vadd.xlane.f32.xlu0 %v2733
      %v2735 = vpop.xlane.xlu0 %2734
      %v2736 = vadd.f32 %v2687, %v2689
      %2737 = vadd.xlane.f32.xlu0 %v2736
      %v2738 = vpop.xlane.xlu0 %2737
      %v2739 = vadd.f32 %v2691, %v2693
      %2740 = vadd.xlane.f32.xlu0 %v2739
      %v2741 = vpop.xlane.xlu0 %2740
      %v2742 = vpack.c.bf16 %v2635, %v2631
      %v2743 = vpack.c.bf16 %v2637, %v2633
      %v2744 = vpack.c.bf16 %v2643, %v2639
      %v2745 = vpack.c.bf16 %v2645, %v2641
      %v2746 = vpack.c.bf16 %v2651, %v2647
      %v2747 = vpack.c.bf16 %v2653, %v2649
      %v2748 = vpack.c.bf16 %v2659, %v2655
      %v2749 = vpack.c.bf16 %v2661, %v2657
      %v2750 = vpack.c.bf16 %v2667, %v2663
      %v2751 = vpack.c.bf16 %v2669, %v2665
      %v2752 = vpack.c.bf16 %v2675, %v2671
      %v2753 = vpack.c.bf16 %v2677, %v2673
      %v2754 = vpack.c.bf16 %v2683, %v2679
      %v2755 = vpack.c.bf16 %v2685, %v2681
      %v2756 = vpack.c.bf16 %v2691, %v2687
      %v2757 = vpack.c.bf16 %v2693, %v2689
      %v2762 = vunpack.c.l.b16 %v2428
      %v2763 = vunpack.c.h.b16 %v2428
      %v2764 = vunpack.c.l.b16 %v2429
      %v2765 = vunpack.c.h.b16 %v2429
      %v2766 = vunpack.c.l.b16 %v2430
      %v2767 = vunpack.c.h.b16 %v2430
      %v2768 = vunpack.c.l.b16 %v2431
      %v2769 = vunpack.c.h.b16 %v2431
      %v2770 = vpack.c.b16 %v2764, %v2762
      %v2771 = vpack.c.b16 %v2765, %v2763
      %v2772 = vpack.c.b16 %v2768, %v2766
      %v2773 = vpack.c.b16 %v2769, %v2767
      %2778 = vmatpush.bf16.xpose.msra.mxu0 0
      %2779 = vmatpush.bf16.xpose.msra.mxu0 0
      %2780 = vmatpush.bf16.xpose.msra.mxu0 0
      %2781 = vmatpush.bf16.xpose.msra.mxu0 0
      %2782 = vmatpush.bf16.xpose.msra.mxu0 0
      %2783 = vmatpush.bf16.xpose.msra.mxu0 0
      %2784 = vmatpush.bf16.xpose.msra.mxu0 %v2772
      %2785 = vmatpush.bf16.xpose.msra.mxu0 %v2770
      %2786 = vmatmul.bf16.gmra.mxu0 %v2742
      %v2787 = vpop.f32.mrf.mxu0
      %v2788 = vadd.f32 0.0, %v2787
      %v2789 = vpop.f32.mrf.mxu0
      %v2790 = vadd.f32 0.0, %v2789
      %2791 = vmatmul.bf16.gmra.mxu0 %v2744
      %v2792 = vpop.f32.mrf.mxu0
      %v2793 = vadd.f32 0.0, %v2792
      %v2794 = vpop.f32.mrf.mxu0
      %v2795 = vadd.f32 0.0, %v2794
      %2796 = vmatmul.bf16.gmra.mxu0 %v2746
      %v2797 = vpop.f32.mrf.mxu0
      %v2798 = vadd.f32 0.0, %v2797
      %v2799 = vpop.f32.mrf.mxu0
      %v2800 = vadd.f32 0.0, %v2799
      %2801 = vmatmul.bf16.gmra.mxu0 %v2748
      %v2802 = vpop.f32.mrf.mxu0
      %v2803 = vadd.f32 0.0, %v2802
      %v2804 = vpop.f32.mrf.mxu0
      %v2805 = vadd.f32 0.0, %v2804
      %2806 = vmatmul.bf16.gmra.mxu0 %v2750
      %v2807 = vpop.f32.mrf.mxu0
      %v2808 = vadd.f32 0.0, %v2807
      %v2809 = vpop.f32.mrf.mxu0
      %v2810 = vadd.f32 0.0, %v2809
      %2811 = vmatmul.bf16.gmra.mxu0 %v2752
      %v2812 = vpop.f32.mrf.mxu0
      %v2813 = vadd.f32 0.0, %v2812
      %v2814 = vpop.f32.mrf.mxu0
      %v2815 = vadd.f32 0.0, %v2814
      %2816 = vmatmul.bf16.gmra.mxu0 %v2754
      %v2817 = vpop.f32.mrf.mxu0
      %v2818 = vadd.f32 0.0, %v2817
      %v2819 = vpop.f32.mrf.mxu0
      %v2820 = vadd.f32 0.0, %v2819
      %2821 = vmatmul.bf16.gmra.mxu0 %v2756
      %v2822 = vpop.f32.mrf.mxu0
      %v2823 = vadd.f32 0.0, %v2822
      %v2824 = vpop.f32.mrf.mxu0
      %v2825 = vadd.f32 0.0, %v2824
      %2826 = vdwg.mxu0
      %2827 = vmatpush.bf16.xpose.msra.mxu0 0
      %2828 = vmatpush.bf16.xpose.msra.mxu0 0
      %2829 = vmatpush.bf16.xpose.msra.mxu0 0
      %2830 = vmatpush.bf16.xpose.msra.mxu0 0
      %2831 = vmatpush.bf16.xpose.msra.mxu0 0
      %2832 = vmatpush.bf16.xpose.msra.mxu0 0
      %2833 = vmatpush.bf16.xpose.msra.mxu0 %v2773
      %2834 = vmatpush.bf16.xpose.msra.mxu0 %v2771
      %2835 = vmatmul.bf16.gmra.mxu0 %v2743
      %v2836 = vpop.f32.mrf.mxu0
      %v2837 = vadd.f32 %v2788, %v2836
      %v2838 = vpop.f32.mrf.mxu0
      %v2839 = vadd.f32 %v2790, %v2838
      %2840 = vmatmul.bf16.gmra.mxu0 %v2745
      %v2841 = vpop.f32.mrf.mxu0
      %v2842 = vadd.f32 %v2793, %v2841
      %v2843 = vpop.f32.mrf.mxu0
      %v2844 = vadd.f32 %v2795, %v2843
      %2845 = vmatmul.bf16.gmra.mxu0 %v2747
      %v2846 = vpop.f32.mrf.mxu0
      %v2847 = vadd.f32 %v2798, %v2846
      %v2848 = vpop.f32.mrf.mxu0
      %v2849 = vadd.f32 %v2800, %v2848
      %2850 = vmatmul.bf16.gmra.mxu0 %v2749
      %v2851 = vpop.f32.mrf.mxu0
      %v2852 = vadd.f32 %v2803, %v2851
      %v2853 = vpop.f32.mrf.mxu0
      %v2854 = vadd.f32 %v2805, %v2853
      %2855 = vmatmul.bf16.gmra.mxu0 %v2751
      %v2856 = vpop.f32.mrf.mxu0
      %v2857 = vadd.f32 %v2808, %v2856
      %v2858 = vpop.f32.mrf.mxu0
      %v2859 = vadd.f32 %v2810, %v2858
      %2860 = vmatmul.bf16.gmra.mxu0 %v2753
      %v2861 = vpop.f32.mrf.mxu0
      %v2862 = vadd.f32 %v2813, %v2861
      %v2863 = vpop.f32.mrf.mxu0
      %v2864 = vadd.f32 %v2815, %v2863
      %2865 = vmatmul.bf16.gmra.mxu0 %v2755
      %v2866 = vpop.f32.mrf.mxu0
      %v2867 = vadd.f32 %v2818, %v2866
      %v2868 = vpop.f32.mrf.mxu0
      %v2869 = vadd.f32 %v2820, %v2868
      %2870 = vmatmul.bf16.gmra.mxu0 %v2757
      %v2871 = vpop.f32.mrf.mxu0
      %v2872 = vadd.f32 %v2823, %v2871
      %v2873 = vpop.f32.mrf.mxu0
      %v2874 = vadd.f32 %v2825, %v2873
      %2875 = vdwg.mxu0
      %v2876 = vrcp.pop %v2696
      %v2877 = vrcp.pop %v2699
      %v2878 = vrcp.pop %v2702
      %v2879 = vrcp.pop %v2705
      %v2880 = vrcp.pop %v2708
      %v2881 = vrcp.pop %v2711
      %v2882 = vrcp.pop %v2714
      %v2883 = vrcp.pop %v2717
      %v2884 = vrcp.pop %v2720
      %v2885 = vrcp.pop %v2723
      %v2886 = vrcp.pop %v2726
      %v2887 = vrcp.pop %v2729
      %v2888 = vrcp.pop %v2732
      %v2889 = vrcp.pop %v2735
      %v2890 = vrcp.pop %v2738
      %v2891 = vrcp.pop %v2741
      %v2892 = vmul.f32 %v2837, %v2876
      %v2893 = vmul.f32 %v2839, %v2877
      %v2894 = vmul.f32 %v2842, %v2878
      %v2895 = vmul.f32 %v2844, %v2879
      %v2896 = vmul.f32 %v2847, %v2880
      %v2897 = vmul.f32 %v2849, %v2881
      %v2898 = vmul.f32 %v2852, %v2882
      %v2899 = vmul.f32 %v2854, %v2883
      %v2900 = vmul.f32 %v2857, %v2884
      %v2901 = vmul.f32 %v2859, %v2885
      %v2902 = vmul.f32 %v2862, %v2886
      %v2903 = vmul.f32 %v2864, %v2887
      %v2904 = vmul.f32 %v2867, %v2888
      %v2905 = vmul.f32 %v2869, %v2889
      %v2906 = vmul.f32 %v2872, %v2890
      %v2907 = vmul.f32 %v2874, %v2891
      %v2908 = vadd.f32 %v2408, %v2892
      %v2909 = vadd.f32 %v2409, %v2893
      %v2910 = vadd.f32 %v2410, %v2894
      %v2911 = vadd.f32 %v2411, %v2895
      %v2912 = vadd.f32 %v2412, %v2896
      %v2913 = vadd.f32 %v2413, %v2897
      %v2914 = vadd.f32 %v2414, %v2898
      %v2915 = vadd.f32 %v2415, %v2899
      %v2916 = vadd.f32 %v2416, %v2900
      %v2917 = vadd.f32 %v2417, %v2901
      %v2918 = vadd.f32 %v2418, %v2902
      %v2919 = vadd.f32 %v2419, %v2903
      %v2920 = vadd.f32 %v2420, %v2904
      %v2921 = vadd.f32 %v2421, %v2905
      %v2922 = vadd.f32 %v2422, %v2906
      %v2923 = vadd.f32 %v2423, %v2907
      %v2924 = vpack.c.bf16 %v2909, %v2908
      %v2925 = vpack.c.bf16 %v2911, %v2910
      %v2926 = vpack.c.bf16 %v2913, %v2912
      %v2927 = vpack.c.bf16 %v2915, %v2914
      %v2928 = vpack.c.bf16 %v2917, %v2916
      %v2929 = vpack.c.bf16 %v2919, %v2918
      %v2930 = vpack.c.bf16 %v2921, %v2920
      %v2931 = vpack.c.bf16 %v2923, %v2922
      %v2933 = vsel %vm376, %v2924, 0
      %v2936 = vsel %vm376, %v2925, 0
      %v2939 = vsel %vm376, %v2926, 0
      %v2942 = vsel %vm376, %v2927, 0
      %v2945 = vsel %vm376, %v2928, 0
      %v2948 = vsel %vm376, %v2929, 0
      %v2951 = vsel %vm376, %v2930, 0
      %v2954 = vsel %vm376, %v2931, 0
      %2956 = vmatpush.bf16.xpose.msra.mxu0 %v2954
      %2957 = vmatpush.bf16.xpose.msra.mxu0 %v2951
      %2958 = vmatpush.bf16.xpose.msra.mxu0 %v2948
      %2959 = vmatpush.bf16.xpose.msra.mxu0 %v2945
      %2960 = vmatpush.bf16.xpose.msra.mxu0 %v2942
      %2961 = vmatpush.bf16.xpose.msra.mxu0 %v2939
      %2962 = vmatpush.bf16.xpose.msra.mxu0 %v2936
      %2963 = vmatpush.bf16.xpose.msra.mxu0 %v2933
      %2964 = vmatmul.bf16.gmra.mxu0 %v1784
      %v2965 = vpop.f32.mrf.mxu0
      %v2966 = vadd.f32 0.0, %v2965
      %v2967 = vpop.f32.mrf.mxu0
      %v2968 = vadd.f32 0.0, %v2967
      %2969 = vmatmul.bf16.gmra.mxu0 %v1787
      %v2970 = vpop.f32.mrf.mxu0
      %v2971 = vadd.f32 0.0, %v2970
      %v2972 = vpop.f32.mrf.mxu0
      %v2973 = vadd.f32 0.0, %v2972
      %2974 = vdwg.mxu0
      %v2975 = vld [vmem:[%s219 + $0x8] sm:$0xff]
      %v2976 = vld [vmem:[%s219 + $0x38] sm:$0xff]
      %v2977 = vld [vmem:[%s219 + $0x68] sm:$0xff]
      %v2978 = vld [vmem:[%s219 + $0x98] sm:$0xff]
      %v2979 = vadd.f32 %v2975, %v2966
      %v2980 = vadd.f32 %v2976, %v2968
      %v2981 = vadd.f32 %v2977, %v2971
      %v2982 = vadd.f32 %v2978, %v2973
      %v2983 = vadd.f32 %v2979, %v1843
      %v2984 = vadd.f32 %v2980, %v1848
      %v2985 = vadd.f32 %v2981, %v1853
      %v2986 = vadd.f32 %v2982, %v1858
      %2987 = vst [vmem:[%s224 + $0x8] sm:$0xff] %v2983
      %2988 = vst [vmem:[%s224 + $0x38] sm:$0xff] %v2984
      %2989 = vst [vmem:[%s224 + $0x68] sm:$0xff] %v2985
      %2990 = vst [vmem:[%s224 + $0x98] sm:$0xff] %v2986
      %v2991 = vld [vmem:[#allocation2 + $0x8] sm:$0xf]
      %v2992 = vld [vmem:[#allocation2 + $0x20] sm:$0xf]
      %v2993 = vld [vmem:[#allocation2 + $0x38] sm:$0xf]
      %v2994 = vld [vmem:[#allocation2 + $0x50] sm:$0xf]
      %v2995 = vld [vmem:[#allocation2 + $0x60] sm:$0xff]
      %v2996 = vld [vmem:[#allocation2 + $0x78] sm:$0xff]
      %v2997 = vld [vmem:[#allocation2 + $0x90] sm:$0xff]
      %v2998 = vld [vmem:[#allocation2 + $0xa8] sm:$0xff]
      %v2999 = vld [vmem:[#allocation2 + $0xc0] sm:$0xff]
      %v3000 = vld [vmem:[#allocation2 + $0xd8] sm:$0xff]
      %v3001 = vld [vmem:[#allocation2 + $0xf0] sm:$0xff]
      %v3002 = vld [vmem:[#allocation2 + $0x108] sm:$0xff]
      %v3007 = vunpack.c.l.b16 %v2991
      %v3008 = vunpack.c.l.b16 %v2992
      %v3009 = vunpack.c.l.b16 %v2993
      %v3010 = vunpack.c.l.b16 %v2994
      %v3011 = vpack.c.b16 %v3008, %v3007
      %v3012 = vpack.c.b16 %v3010, %v3009
      %3015 = vxpose.xlu0.c.b16.start [1/8] %v3011, 128
      %3016 = vxpose.xlu0.c.b16.cont [2/8] %v3012, 128
      %3017 = vxpose.xlu0.c.b16.cont [3/8] 0, 128
      %3018 = vxpose.xlu0.c.b16.cont [4/8] 0, 128
      %3019 = vxpose.xlu0.c.b16.cont [5/8] 0, 128
      %3020 = vxpose.xlu0.c.b16.cont [6/8] 0, 128
      %3021 = vxpose.xlu0.c.b16.cont [7/8] 0, 128
      %3022 = vxpose.xlu0.c.b16.end [8/8] 0, 128
      %v3023 = vpop.trf.xlu0
      %v3024 = vpop.trf.xlu0
      %v3025 = vpop.trf.xlu0
      %v3026 = vpop.trf.xlu0
      %v3027 = vpop.trf.xlu0
      %v3028 = vpop.trf.xlu0
      %v3029 = vpop.trf.xlu0
      %v3030 = vpop.trf.xlu0
      %v3035 = vunpack.c.l.b16 %v2995
      %v3036 = vunpack.c.h.b16 %v2995
      %v3037 = vunpack.c.l.b16 %v2996
      %v3038 = vunpack.c.h.b16 %v2996
      %v3039 = vunpack.c.l.b16 %v2997
      %v3040 = vunpack.c.h.b16 %v2997
      %v3041 = vunpack.c.l.b16 %v2998
      %v3042 = vunpack.c.h.b16 %v2998
      %v3043 = vpack.c.b16 %v3037, %v3035
      %v3044 = vpack.c.b16 %v3038, %v3036
      %v3045 = vpack.c.b16 %v3041, %v3039
      %v3046 = vpack.c.b16 %v3042, %v3040
      %v3052 = vsel %vm376, %v3023, 0
      %v3055 = vsel %vm376, %v3024, 0
      %v3058 = vsel %vm376, %v3025, 0
      %v3061 = vsel %vm376, %v3026, 0
      %v3064 = vsel %vm376, %v3027, 0
      %v3067 = vsel %vm376, %v3028, 0
      %v3070 = vsel %vm376, %v3029, 0
      %v3073 = vsel %vm376, %v3030, 0
      %3075 = vmatpush.bf16.msra.mxu0 0
      %3076 = vmatpush.bf16.msra.mxu0 0
      %3077 = vmatpush.bf16.msra.mxu0 0
      %3078 = vmatpush.bf16.msra.mxu0 0
      %3079 = vmatpush.bf16.msra.mxu0 0
      %3080 = vmatpush.bf16.msra.mxu0 0
      %3081 = vmatpush.bf16.msra.mxu0 %v3045
      %3082 = vmatpush.bf16.msra.mxu0 %v3043
      %3083 = vmatmul.bf16.gmra.mxu0 %v3052
      %v3084 = vpop.f32.mrf.mxu0
      %v3085 = vadd.f32 0.0, %v3084
      %v3086 = vpop.f32.mrf.mxu0
      %v3087 = vadd.f32 0.0, %v3086
      %3088 = vmatmul.bf16.gmra.mxu0 %v3055
      %v3089 = vpop.f32.mrf.mxu0
      %v3090 = vadd.f32 0.0, %v3089
      %v3091 = vpop.f32.mrf.mxu0
      %v3092 = vadd.f32 0.0, %v3091
      %3093 = vmatmul.bf16.gmra.mxu0 %v3058
      %v3094 = vpop.f32.mrf.mxu0
      %v3095 = vadd.f32 0.0, %v3094
      %v3096 = vpop.f32.mrf.mxu0
      %v3097 = vadd.f32 0.0, %v3096
      %3098 = vmatmul.bf16.gmra.mxu0 %v3061
      %v3099 = vpop.f32.mrf.mxu0
      %v3100 = vadd.f32 0.0, %v3099
      %v3101 = vpop.f32.mrf.mxu0
      %v3102 = vadd.f32 0.0, %v3101
      %3103 = vmatmul.bf16.gmra.mxu0 %v3064
      %v3104 = vpop.f32.mrf.mxu0
      %v3105 = vadd.f32 0.0, %v3104
      %v3106 = vpop.f32.mrf.mxu0
      %v3107 = vadd.f32 0.0, %v3106
      %3108 = vmatmul.bf16.gmra.mxu0 %v3067
      %v3109 = vpop.f32.mrf.mxu0
      %v3110 = vadd.f32 0.0, %v3109
      %v3111 = vpop.f32.mrf.mxu0
      %v3112 = vadd.f32 0.0, %v3111
      %3113 = vmatmul.bf16.gmra.mxu0 %v3070
      %v3114 = vpop.f32.mrf.mxu0
      %v3115 = vadd.f32 0.0, %v3114
      %v3116 = vpop.f32.mrf.mxu0
      %v3117 = vadd.f32 0.0, %v3116
      %3118 = vmatmul.bf16.gmra.mxu0 %v3073
      %v3119 = vpop.f32.mrf.mxu0
      %v3120 = vadd.f32 0.0, %v3119
      %v3121 = vpop.f32.mrf.mxu0
      %v3122 = vadd.f32 0.0, %v3121
      %3123 = vdwg.mxu0
      %3124 = vmatpush.bf16.msra.mxu0 0
      %3125 = vmatpush.bf16.msra.mxu0 0
      %3126 = vmatpush.bf16.msra.mxu0 0
      %3127 = vmatpush.bf16.msra.mxu0 0
      %3128 = vmatpush.bf16.msra.mxu0 0
      %3129 = vmatpush.bf16.msra.mxu0 0
      %3130 = vmatpush.bf16.msra.mxu0 %v3046
      %3131 = vmatpush.bf16.msra.mxu0 %v3044
      %3132 = vmatmul.bf16.gmra.mxu0 %v3052
      %v3133 = vpop.f32.mrf.mxu0
      %v3134 = vadd.f32 0.0, %v3133
      %v3135 = vpop.f32.mrf.mxu0
      %v3136 = vadd.f32 0.0, %v3135
      %3137 = vmatmul.bf16.gmra.mxu0 %v3055
      %v3138 = vpop.f32.mrf.mxu0
      %v3139 = vadd.f32 0.0, %v3138
      %v3140 = vpop.f32.mrf.mxu0
      %v3141 = vadd.f32 0.0, %v3140
      %3142 = vmatmul.bf16.gmra.mxu0 %v3058
      %v3143 = vpop.f32.mrf.mxu0
      %v3144 = vadd.f32 0.0, %v3143
      %v3145 = vpop.f32.mrf.mxu0
      %v3146 = vadd.f32 0.0, %v3145
      %3147 = vmatmul.bf16.gmra.mxu0 %v3061
      %v3148 = vpop.f32.mrf.mxu0
      %v3149 = vadd.f32 0.0, %v3148
      %v3150 = vpop.f32.mrf.mxu0
      %v3151 = vadd.f32 0.0, %v3150
      %3152 = vmatmul.bf16.gmra.mxu0 %v3064
      %v3153 = vpop.f32.mrf.mxu0
      %v3154 = vadd.f32 0.0, %v3153
      %v3155 = vpop.f32.mrf.mxu0
      %v3156 = vadd.f32 0.0, %v3155
      %3157 = vmatmul.bf16.gmra.mxu0 %v3067
      %v3158 = vpop.f32.mrf.mxu0
      %v3159 = vadd.f32 0.0, %v3158
      %v3160 = vpop.f32.mrf.mxu0
      %v3161 = vadd.f32 0.0, %v3160
      %3162 = vmatmul.bf16.gmra.mxu0 %v3070
      %v3163 = vpop.f32.mrf.mxu0
      %v3164 = vadd.f32 0.0, %v3163
      %v3165 = vpop.f32.mrf.mxu0
      %v3166 = vadd.f32 0.0, %v3165
      %3167 = vmatmul.bf16.gmra.mxu0 %v3073
      %v3168 = vpop.f32.mrf.mxu0
      %v3169 = vadd.f32 0.0, %v3168
      %v3170 = vpop.f32.mrf.mxu0
      %v3171 = vadd.f32 0.0, %v3170
      %3172 = vdwg.mxu0
      %v3173 = vmax.f32 %v3085, %v3134
      %3174 = vmax.xlane.f32.xlu0 %v3173
      %v3175 = vpop.xlane.xlu0 %3174
      %v3176 = vmax.f32 %v3087, %v3136
      %3177 = vmax.xlane.f32.xlu0 %v3176
      %v3178 = vpop.xlane.xlu0 %3177
      %v3179 = vmax.f32 %v3090, %v3139
      %3180 = vmax.xlane.f32.xlu0 %v3179
      %v3181 = vpop.xlane.xlu0 %3180
      %v3182 = vmax.f32 %v3092, %v3141
      %3183 = vmax.xlane.f32.xlu0 %v3182
      %v3184 = vpop.xlane.xlu0 %3183
      %v3185 = vmax.f32 %v3095, %v3144
      %3186 = vmax.xlane.f32.xlu0 %v3185
      %v3187 = vpop.xlane.xlu0 %3186
      %v3188 = vmax.f32 %v3097, %v3146
      %3189 = vmax.xlane.f32.xlu0 %v3188
      %v3190 = vpop.xlane.xlu0 %3189
      %v3191 = vmax.f32 %v3100, %v3149
      %3192 = vmax.xlane.f32.xlu0 %v3191
      %v3193 = vpop.xlane.xlu0 %3192
      %v3194 = vmax.f32 %v3102, %v3151
      %3195 = vmax.xlane.f32.xlu0 %v3194
      %v3196 = vpop.xlane.xlu0 %3195
      %v3197 = vmax.f32 %v3105, %v3154
      %3198 = vmax.xlane.f32.xlu0 %v3197
      %v3199 = vpop.xlane.xlu0 %3198
      %v3200 = vmax.f32 %v3107, %v3156
      %3201 = vmax.xlane.f32.xlu0 %v3200
      %v3202 = vpop.xlane.xlu0 %3201
      %v3203 = vmax.f32 %v3110, %v3159
      %3204 = vmax.xlane.f32.xlu0 %v3203
      %v3205 = vpop.xlane.xlu0 %3204
      %v3206 = vmax.f32 %v3112, %v3161
      %3207 = vmax.xlane.f32.xlu0 %v3206
      %v3208 = vpop.xlane.xlu0 %3207
      %v3209 = vmax.f32 %v3115, %v3164
      %3210 = vmax.xlane.f32.xlu0 %v3209
      %v3211 = vpop.xlane.xlu0 %3210
      %v3212 = vmax.f32 %v3117, %v3166
      %3213 = vmax.xlane.f32.xlu0 %v3212
      %v3214 = vpop.xlane.xlu0 %3213
      %v3215 = vmax.f32 %v3120, %v3169
      %3216 = vmax.xlane.f32.xlu0 %v3215
      %v3217 = vpop.xlane.xlu0 %3216
      %v3218 = vmax.f32 %v3122, %v3171
      %3219 = vmax.xlane.f32.xlu0 %v3218
      %v3220 = vpop.xlane.xlu0 %3219
      %v3221 = vsub.f32 %v3085, %v3175
      %v3222 = vsub.f32 %v3134, %v3175
      %v3223 = vsub.f32 %v3087, %v3178
      %v3224 = vsub.f32 %v3136, %v3178
      %v3225 = vsub.f32 %v3090, %v3181
      %v3226 = vsub.f32 %v3139, %v3181
      %v3227 = vsub.f32 %v3092, %v3184
      %v3228 = vsub.f32 %v3141, %v3184
      %v3229 = vsub.f32 %v3095, %v3187
      %v3230 = vsub.f32 %v3144, %v3187
      %v3231 = vsub.f32 %v3097, %v3190
      %v3232 = vsub.f32 %v3146, %v3190
      %v3233 = vsub.f32 %v3100, %v3193
      %v3234 = vsub.f32 %v3149, %v3193
      %v3235 = vsub.f32 %v3102, %v3196
      %v3236 = vsub.f32 %v3151, %v3196
      %v3237 = vsub.f32 %v3105, %v3199
      %v3238 = vsub.f32 %v3154, %v3199
      %v3239 = vsub.f32 %v3107, %v3202
      %v3240 = vsub.f32 %v3156, %v3202
      %v3241 = vsub.f32 %v3110, %v3205
      %v3242 = vsub.f32 %v3159, %v3205
      %v3243 = vsub.f32 %v3112, %v3208
      %v3244 = vsub.f32 %v3161, %v3208
      %v3245 = vsub.f32 %v3115, %v3211
      %v3246 = vsub.f32 %v3164, %v3211
      %v3247 = vsub.f32 %v3117, %v3214
      %v3248 = vsub.f32 %v3166, %v3214
      %v3249 = vsub.f32 %v3120, %v3217
      %v3250 = vsub.f32 %v3169, %v3217
      %v3251 = vsub.f32 %v3122, %v3220
      %v3252 = vsub.f32 %v3171, %v3220
      %v3253 = vmul.f32 %v3221, 1.442695
      %v3254 = vpow.pop %v3253
      %v3255 = vmul.f32 %v3222, 1.442695
      %v3256 = vpow.pop %v3255
      %v3257 = vmul.f32 %v3223, 1.442695
      %v3258 = vpow.pop %v3257
      %v3259 = vmul.f32 %v3224, 1.442695
      %v3260 = vpow.pop %v3259
      %v3261 = vmul.f32 %v3225, 1.442695
      %v3262 = vpow.pop %v3261
      %v3263 = vmul.f32 %v3226, 1.442695
      %v3264 = vpow.pop %v3263
      %v3265 = vmul.f32 %v3227, 1.442695
      %v3266 = vpow.pop %v3265
      %v3267 = vmul.f32 %v3228, 1.442695
      %v3268 = vpow.pop %v3267
      %v3269 = vmul.f32 %v3229, 1.442695
      %v3270 = vpow.pop %v3269
      %v3271 = vmul.f32 %v3230, 1.442695
      %v3272 = vpow.pop %v3271
      %v3273 = vmul.f32 %v3231, 1.442695
      %v3274 = vpow.pop %v3273
      %v3275 = vmul.f32 %v3232, 1.442695
      %v3276 = vpow.pop %v3275
      %v3277 = vmul.f32 %v3233, 1.442695
      %v3278 = vpow.pop %v3277
      %v3279 = vmul.f32 %v3234, 1.442695
      %v3280 = vpow.pop %v3279
      %v3281 = vmul.f32 %v3235, 1.442695
      %v3282 = vpow.pop %v3281
      %v3283 = vmul.f32 %v3236, 1.442695
      %v3284 = vpow.pop %v3283
      %v3285 = vmul.f32 %v3237, 1.442695
      %v3286 = vpow.pop %v3285
      %v3287 = vmul.f32 %v3238, 1.442695
      %v3288 = vpow.pop %v3287
      %v3289 = vmul.f32 %v3239, 1.442695
      %v3290 = vpow.pop %v3289
      %v3291 = vmul.f32 %v3240, 1.442695
      %v3292 = vpow.pop %v3291
      %v3293 = vmul.f32 %v3241, 1.442695
      %v3294 = vpow.pop %v3293
      %v3295 = vmul.f32 %v3242, 1.442695
      %v3296 = vpow.pop %v3295
      %v3297 = vmul.f32 %v3243, 1.442695
      %v3298 = vpow.pop %v3297
      %v3299 = vmul.f32 %v3244, 1.442695
      %v3300 = vpow.pop %v3299
      %v3301 = vmul.f32 %v3245, 1.442695
      %v3302 = vpow.pop %v3301
      %v3303 = vmul.f32 %v3246, 1.442695
      %v3304 = vpow.pop %v3303
      %v3305 = vmul.f32 %v3247, 1.442695
      %v3306 = vpow.pop %v3305
      %v3307 = vmul.f32 %v3248, 1.442695
      %v3308 = vpow.pop %v3307
      %v3309 = vmul.f32 %v3249, 1.442695
      %v3310 = vpow.pop %v3309
      %v3311 = vmul.f32 %v3250, 1.442695
      %v3312 = vpow.pop %v3311
      %v3313 = vmul.f32 %v3251, 1.442695
      %v3314 = vpow.pop %v3313
      %v3315 = vmul.f32 %v3252, 1.442695
      %v3316 = vpow.pop %v3315
      %v3317 = vadd.f32 %v3254, %v3256
      %3318 = vadd.xlane.f32.xlu0 %v3317
      %v3319 = vpop.xlane.xlu0 %3318
      %v3320 = vadd.f32 %v3258, %v3260
      %3321 = vadd.xlane.f32.xlu0 %v3320
      %v3322 = vpop.xlane.xlu0 %3321
      %v3323 = vadd.f32 %v3262, %v3264
      %3324 = vadd.xlane.f32.xlu0 %v3323
      %v3325 = vpop.xlane.xlu0 %3324
      %v3326 = vadd.f32 %v3266, %v3268
      %3327 = vadd.xlane.f32.xlu0 %v3326
      %v3328 = vpop.xlane.xlu0 %3327
      %v3329 = vadd.f32 %v3270, %v3272
      %3330 = vadd.xlane.f32.xlu0 %v3329
      %v3331 = vpop.xlane.xlu0 %3330
      %v3332 = vadd.f32 %v3274, %v3276
      %3333 = vadd.xlane.f32.xlu0 %v3332
      %v3334 = vpop.xlane.xlu0 %3333
      %v3335 = vadd.f32 %v3278, %v3280
      %3336 = vadd.xlane.f32.xlu0 %v3335
      %v3337 = vpop.xlane.xlu0 %3336
      %v3338 = vadd.f32 %v3282, %v3284
      %3339 = vadd.xlane.f32.xlu0 %v3338
      %v3340 = vpop.xlane.xlu0 %3339
      %v3341 = vadd.f32 %v3286, %v3288
      %3342 = vadd.xlane.f32.xlu0 %v3341
      %v3343 = vpop.xlane.xlu0 %3342
      %v3344 = vadd.f32 %v3290, %v3292
      %3345 = vadd.xlane.f32.xlu0 %v3344
      %v3346 = vpop.xlane.xlu0 %3345
      %v3347 = vadd.f32 %v3294, %v3296
      %3348 = vadd.xlane.f32.xlu0 %v3347
      %v3349 = vpop.xlane.xlu0 %3348
      %v3350 = vadd.f32 %v3298, %v3300
      %3351 = vadd.xlane.f32.xlu0 %v3350
      %v3352 = vpop.xlane.xlu0 %3351
      %v3353 = vadd.f32 %v3302, %v3304
      %3354 = vadd.xlane.f32.xlu0 %v3353
      %v3355 = vpop.xlane.xlu0 %3354
      %v3356 = vadd.f32 %v3306, %v3308
      %3357 = vadd.xlane.f32.xlu0 %v3356
      %v3358 = vpop.xlane.xlu0 %3357
      %v3359 = vadd.f32 %v3310, %v3312
      %3360 = vadd.xlane.f32.xlu0 %v3359
      %v3361 = vpop.xlane.xlu0 %3360
      %v3362 = vadd.f32 %v3314, %v3316
      %3363 = vadd.xlane.f32.xlu0 %v3362
      %v3364 = vpop.xlane.xlu0 %3363
      %v3365 = vpack.c.bf16 %v3258, %v3254
      %v3366 = vpack.c.bf16 %v3260, %v3256
      %v3367 = vpack.c.bf16 %v3266, %v3262
      %v3368 = vpack.c.bf16 %v3268, %v3264
      %v3369 = vpack.c.bf16 %v3274, %v3270
      %v3370 = vpack.c.bf16 %v3276, %v3272
      %v3371 = vpack.c.bf16 %v3282, %v3278
      %v3372 = vpack.c.bf16 %v3284, %v3280
      %v3373 = vpack.c.bf16 %v3290, %v3286
      %v3374 = vpack.c.bf16 %v3292, %v3288
      %v3375 = vpack.c.bf16 %v3298, %v3294
      %v3376 = vpack.c.bf16 %v3300, %v3296
      %v3377 = vpack.c.bf16 %v3306, %v3302
      %v3378 = vpack.c.bf16 %v3308, %v3304
      %v3379 = vpack.c.bf16 %v3314, %v3310
      %v3380 = vpack.c.bf16 %v3316, %v3312
      %v3385 = vunpack.c.l.b16 %v2999
      %v3386 = vunpack.c.h.b16 %v2999
      %v3387 = vunpack.c.l.b16 %v3000
      %v3388 = vunpack.c.h.b16 %v3000
      %v3389 = vunpack.c.l.b16 %v3001
      %v3390 = vunpack.c.h.b16 %v3001
      %v3391 = vunpack.c.l.b16 %v3002
      %v3392 = vunpack.c.h.b16 %v3002
      %v3393 = vpack.c.b16 %v3387, %v3385
      %v3394 = vpack.c.b16 %v3388, %v3386
      %v3395 = vpack.c.b16 %v3391, %v3389
      %v3396 = vpack.c.b16 %v3392, %v3390
      %3401 = vmatpush.bf16.xpose.msra.mxu0 0
      %3402 = vmatpush.bf16.xpose.msra.mxu0 0
      %3403 = vmatpush.bf16.xpose.msra.mxu0 0
      %3404 = vmatpush.bf16.xpose.msra.mxu0 0
      %3405 = vmatpush.bf16.xpose.msra.mxu0 0
      %3406 = vmatpush.bf16.xpose.msra.mxu0 0
      %3407 = vmatpush.bf16.xpose.msra.mxu0 %v3395
      %3408 = vmatpush.bf16.xpose.msra.mxu0 %v3393
      %3409 = vmatmul.bf16.gmra.mxu0 %v3365
      %v3410 = vpop.f32.mrf.mxu0
      %v3411 = vadd.f32 0.0, %v3410
      %v3412 = vpop.f32.mrf.mxu0
      %v3413 = vadd.f32 0.0, %v3412
      %3414 = vmatmul.bf16.gmra.mxu0 %v3367
      %v3415 = vpop.f32.mrf.mxu0
      %v3416 = vadd.f32 0.0, %v3415
      %v3417 = vpop.f32.mrf.mxu0
      %v3418 = vadd.f32 0.0, %v3417
      %3419 = vmatmul.bf16.gmra.mxu0 %v3369
      %v3420 = vpop.f32.mrf.mxu0
      %v3421 = vadd.f32 0.0, %v3420
      %v3422 = vpop.f32.mrf.mxu0
      %v3423 = vadd.f32 0.0, %v3422
      %3424 = vmatmul.bf16.gmra.mxu0 %v3371
      %v3425 = vpop.f32.mrf.mxu0
      %v3426 = vadd.f32 0.0, %v3425
      %v3427 = vpop.f32.mrf.mxu0
      %v3428 = vadd.f32 0.0, %v3427
      %3429 = vmatmul.bf16.gmra.mxu0 %v3373
      %v3430 = vpop.f32.mrf.mxu0
      %v3431 = vadd.f32 0.0, %v3430
      %v3432 = vpop.f32.mrf.mxu0
      %v3433 = vadd.f32 0.0, %v3432
      %3434 = vmatmul.bf16.gmra.mxu0 %v3375
      %v3435 = vpop.f32.mrf.mxu0
      %v3436 = vadd.f32 0.0, %v3435
      %v3437 = vpop.f32.mrf.mxu0
      %v3438 = vadd.f32 0.0, %v3437
      %3439 = vmatmul.bf16.gmra.mxu0 %v3377
      %v3440 = vpop.f32.mrf.mxu0
      %v3441 = vadd.f32 0.0, %v3440
      %v3442 = vpop.f32.mrf.mxu0
      %v3443 = vadd.f32 0.0, %v3442
      %3444 = vmatmul.bf16.gmra.mxu0 %v3379
      %v3445 = vpop.f32.mrf.mxu0
      %v3446 = vadd.f32 0.0, %v3445
      %v3447 = vpop.f32.mrf.mxu0
      %v3448 = vadd.f32 0.0, %v3447
      %3449 = vdwg.mxu0
      %3450 = vmatpush.bf16.xpose.msra.mxu0 0
      %3451 = vmatpush.bf16.xpose.msra.mxu0 0
      %3452 = vmatpush.bf16.xpose.msra.mxu0 0
      %3453 = vmatpush.bf16.xpose.msra.mxu0 0
      %3454 = vmatpush.bf16.xpose.msra.mxu0 0
      %3455 = vmatpush.bf16.xpose.msra.mxu0 0
      %3456 = vmatpush.bf16.xpose.msra.mxu0 %v3396
      %3457 = vmatpush.bf16.xpose.msra.mxu0 %v3394
      %3458 = vmatmul.bf16.gmra.mxu0 %v3366
      %v3459 = vpop.f32.mrf.mxu0
      %v3460 = vadd.f32 %v3411, %v3459
      %v3461 = vpop.f32.mrf.mxu0
      %v3462 = vadd.f32 %v3413, %v3461
      %3463 = vmatmul.bf16.gmra.mxu0 %v3368
      %v3464 = vpop.f32.mrf.mxu0
      %v3465 = vadd.f32 %v3416, %v3464
      %v3466 = vpop.f32.mrf.mxu0
      %v3467 = vadd.f32 %v3418, %v3466
      %3468 = vmatmul.bf16.gmra.mxu0 %v3370
      %v3469 = vpop.f32.mrf.mxu0
      %v3470 = vadd.f32 %v3421, %v3469
      %v3471 = vpop.f32.mrf.mxu0
      %v3472 = vadd.f32 %v3423, %v3471
      %3473 = vmatmul.bf16.gmra.mxu0 %v3372
      %v3474 = vpop.f32.mrf.mxu0
      %v3475 = vadd.f32 %v3426, %v3474
      %v3476 = vpop.f32.mrf.mxu0
      %v3477 = vadd.f32 %v3428, %v3476
      %3478 = vmatmul.bf16.gmra.mxu0 %v3374
      %v3479 = vpop.f32.mrf.mxu0
      %v3480 = vadd.f32 %v3431, %v3479
      %v3481 = vpop.f32.mrf.mxu0
      %v3482 = vadd.f32 %v3433, %v3481
      %3483 = vmatmul.bf16.gmra.mxu0 %v3376
      %v3484 = vpop.f32.mrf.mxu0
      %v3485 = vadd.f32 %v3436, %v3484
      %v3486 = vpop.f32.mrf.mxu0
      %v3487 = vadd.f32 %v3438, %v3486
      %3488 = vmatmul.bf16.gmra.mxu0 %v3378
      %v3489 = vpop.f32.mrf.mxu0
      %v3490 = vadd.f32 %v3441, %v3489
      %v3491 = vpop.f32.mrf.mxu0
      %v3492 = vadd.f32 %v3443, %v3491
      %3493 = vmatmul.bf16.gmra.mxu0 %v3380
      %v3494 = vpop.f32.mrf.mxu0
      %v3495 = vadd.f32 %v3446, %v3494
      %v3496 = vpop.f32.mrf.mxu0
      %v3497 = vadd.f32 %v3448, %v3496
      %3498 = vdwg.mxu0
      %v3499 = vrcp.pop %v3319
      %v3500 = vrcp.pop %v3322
      %v3501 = vrcp.pop %v3325
      %v3502 = vrcp.pop %v3328
      %v3503 = vrcp.pop %v3331
      %v3504 = vrcp.pop %v3334
      %v3505 = vrcp.pop %v3337
      %v3506 = vrcp.pop %v3340
      %v3507 = vrcp.pop %v3343
      %v3508 = vrcp.pop %v3346
      %v3509 = vrcp.pop %v3349
      %v3510 = vrcp.pop %v3352
      %v3511 = vrcp.pop %v3355
      %v3512 = vrcp.pop %v3358
      %v3513 = vrcp.pop %v3361
      %v3514 = vrcp.pop %v3364
      %v3515 = vmul.f32 %v3460, %v3499
      %v3516 = vmul.f32 %v3462, %v3500
      %v3517 = vmul.f32 %v3465, %v3501
      %v3518 = vmul.f32 %v3467, %v3502
      %v3519 = vmul.f32 %v3470, %v3503
      %v3520 = vmul.f32 %v3472, %v3504
      %v3521 = vmul.f32 %v3475, %v3505
      %v3522 = vmul.f32 %v3477, %v3506
      %v3523 = vmul.f32 %v3480, %v3507
      %v3524 = vmul.f32 %v3482, %v3508
      %v3525 = vmul.f32 %v3485, %v3509
      %v3526 = vmul.f32 %v3487, %v3510
      %v3527 = vmul.f32 %v3490, %v3511
      %v3528 = vmul.f32 %v3492, %v3512
      %v3529 = vmul.f32 %v3495, %v3513
      %v3530 = vmul.f32 %v3497, %v3514
      %v3531 = vadd.f32 %v3515, 0.0
      %v3532 = vadd.f32 %v3516, 0.0
      %v3533 = vadd.f32 %v3517, 0.0
      %v3534 = vadd.f32 %v3518, 0.0
      %v3535 = vadd.f32 %v3519, 0.0
      %v3536 = vadd.f32 %v3520, 0.0
      %v3537 = vadd.f32 %v3521, 0.0
      %v3538 = vadd.f32 %v3522, 0.0
      %v3539 = vadd.f32 %v3523, 0.0
      %v3540 = vadd.f32 %v3524, 0.0
      %v3541 = vadd.f32 %v3525, 0.0
      %v3542 = vadd.f32 %v3526, 0.0
      %v3543 = vadd.f32 %v3527, 0.0
      %v3544 = vadd.f32 %v3528, 0.0
      %v3545 = vadd.f32 %v3529, 0.0
      %v3546 = vadd.f32 %v3530, 0.0
      %v3547 = vld [vmem:[#allocation2 + $0x70] sm:$0xff]
      %v3548 = vld [vmem:[#allocation2 + $0x88] sm:$0xff]
      %v3549 = vld [vmem:[#allocation2 + $0xa0] sm:$0xff]
      %v3550 = vld [vmem:[#allocation2 + $0xb8] sm:$0xff]
      %v3551 = vld [vmem:[#allocation2 + $0xd0] sm:$0xff]
      %v3552 = vld [vmem:[#allocation2 + $0xe8] sm:$0xff]
      %v3553 = vld [vmem:[#allocation2 + $0x100] sm:$0xff]
      %v3554 = vld [vmem:[#allocation2 + $0x118] sm:$0xff]
      %v3559 = vunpack.c.l.b16 %v3547
      %v3560 = vunpack.c.h.b16 %v3547
      %v3561 = vunpack.c.l.b16 %v3548
      %v3562 = vunpack.c.h.b16 %v3548
      %v3563 = vunpack.c.l.b16 %v3549
      %v3564 = vunpack.c.h.b16 %v3549
      %v3565 = vunpack.c.l.b16 %v3550
      %v3566 = vunpack.c.h.b16 %v3550
      %v3567 = vpack.c.b16 %v3561, %v3559
      %v3568 = vpack.c.b16 %v3562, %v3560
      %v3569 = vpack.c.b16 %v3565, %v3563
      %v3570 = vpack.c.b16 %v3566, %v3564
      %3575 = vmatpush.bf16.msra.mxu0 0
      %3576 = vmatpush.bf16.msra.mxu0 0
      %3577 = vmatpush.bf16.msra.mxu0 0
      %3578 = vmatpush.bf16.msra.mxu0 0
      %3579 = vmatpush.bf16.msra.mxu0 0
      %3580 = vmatpush.bf16.msra.mxu0 0
      %3581 = vmatpush.bf16.msra.mxu0 %v3569
      %3582 = vmatpush.bf16.msra.mxu0 %v3567
      %3583 = vmatmul.bf16.gmra.mxu0 %v3052
      %v3584 = vpop.f32.mrf.mxu0
      %v3585 = vadd.f32 0.0, %v3584
      %v3586 = vpop.f32.mrf.mxu0
      %v3587 = vadd.f32 0.0, %v3586
      %3588 = vmatmul.bf16.gmra.mxu0 %v3055
      %v3589 = vpop.f32.mrf.mxu0
      %v3590 = vadd.f32 0.0, %v3589
      %v3591 = vpop.f32.mrf.mxu0
      %v3592 = vadd.f32 0.0, %v3591
      %3593 = vmatmul.bf16.gmra.mxu0 %v3058
      %v3594 = vpop.f32.mrf.mxu0
      %v3595 = vadd.f32 0.0, %v3594
      %v3596 = vpop.f32.mrf.mxu0
      %v3597 = vadd.f32 0.0, %v3596
      %3598 = vmatmul.bf16.gmra.mxu0 %v3061
      %v3599 = vpop.f32.mrf.mxu0
      %v3600 = vadd.f32 0.0, %v3599
      %v3601 = vpop.f32.mrf.mxu0
      %v3602 = vadd.f32 0.0, %v3601
      %3603 = vmatmul.bf16.gmra.mxu0 %v3064
      %v3604 = vpop.f32.mrf.mxu0
      %v3605 = vadd.f32 0.0, %v3604
      %v3606 = vpop.f32.mrf.mxu0
      %v3607 = vadd.f32 0.0, %v3606
      %3608 = vmatmul.bf16.gmra.mxu0 %v3067
      %v3609 = vpop.f32.mrf.mxu0
      %v3610 = vadd.f32 0.0, %v3609
      %v3611 = vpop.f32.mrf.mxu0
      %v3612 = vadd.f32 0.0, %v3611
      %3613 = vmatmul.bf16.gmra.mxu0 %v3070
      %v3614 = vpop.f32.mrf.mxu0
      %v3615 = vadd.f32 0.0, %v3614
      %v3616 = vpop.f32.mrf.mxu0
      %v3617 = vadd.f32 0.0, %v3616
      %3618 = vmatmul.bf16.gmra.mxu0 %v3073
      %v3619 = vpop.f32.mrf.mxu0
      %v3620 = vadd.f32 0.0, %v3619
      %v3621 = vpop.f32.mrf.mxu0
      %v3622 = vadd.f32 0.0, %v3621
      %3623 = vdwg.mxu0
      %3624 = vmatpush.bf16.msra.mxu0 0
      %3625 = vmatpush.bf16.msra.mxu0 0
      %3626 = vmatpush.bf16.msra.mxu0 0
      %3627 = vmatpush.bf16.msra.mxu0 0
      %3628 = vmatpush.bf16.msra.mxu0 0
      %3629 = vmatpush.bf16.msra.mxu0 0
      %3630 = vmatpush.bf16.msra.mxu0 %v3570
      %3631 = vmatpush.bf16.msra.mxu0 %v3568
      %3632 = vmatmul.bf16.gmra.mxu0 %v3052
      %v3633 = vpop.f32.mrf.mxu0
      %v3634 = vadd.f32 0.0, %v3633
      %v3635 = vpop.f32.mrf.mxu0
      %v3636 = vadd.f32 0.0, %v3635
      %3637 = vmatmul.bf16.gmra.mxu0 %v3055
      %v3638 = vpop.f32.mrf.mxu0
      %v3639 = vadd.f32 0.0, %v3638
      %v3640 = vpop.f32.mrf.mxu0
      %v3641 = vadd.f32 0.0, %v3640
      %3642 = vmatmul.bf16.gmra.mxu0 %v3058
      %v3643 = vpop.f32.mrf.mxu0
      %v3644 = vadd.f32 0.0, %v3643
      %v3645 = vpop.f32.mrf.mxu0
      %v3646 = vadd.f32 0.0, %v3645
      %3647 = vmatmul.bf16.gmra.mxu0 %v3061
      %v3648 = vpop.f32.mrf.mxu0
      %v3649 = vadd.f32 0.0, %v3648
      %v3650 = vpop.f32.mrf.mxu0
      %v3651 = vadd.f32 0.0, %v3650
      %3652 = vmatmul.bf16.gmra.mxu0 %v3064
      %v3653 = vpop.f32.mrf.mxu0
      %v3654 = vadd.f32 0.0, %v3653
      %v3655 = vpop.f32.mrf.mxu0
      %v3656 = vadd.f32 0.0, %v3655
      %3657 = vmatmul.bf16.gmra.mxu0 %v3067
      %v3658 = vpop.f32.mrf.mxu0
      %v3659 = vadd.f32 0.0, %v3658
      %v3660 = vpop.f32.mrf.mxu0
      %v3661 = vadd.f32 0.0, %v3660
      %3662 = vmatmul.bf16.gmra.mxu0 %v3070
      %v3663 = vpop.f32.mrf.mxu0
      %v3664 = vadd.f32 0.0, %v3663
      %v3665 = vpop.f32.mrf.mxu0
      %v3666 = vadd.f32 0.0, %v3665
      %3667 = vmatmul.bf16.gmra.mxu0 %v3073
      %v3668 = vpop.f32.mrf.mxu0
      %v3669 = vadd.f32 0.0, %v3668
      %v3670 = vpop.f32.mrf.mxu0
      %v3671 = vadd.f32 0.0, %v3670
      %3672 = vdwg.mxu0
      %v3673 = vmax.f32 %v3585, %v3634
      %3674 = vmax.xlane.f32.xlu0 %v3673
      %v3675 = vpop.xlane.xlu0 %3674
      %v3676 = vmax.f32 %v3587, %v3636
      %3677 = vmax.xlane.f32.xlu0 %v3676
      %v3678 = vpop.xlane.xlu0 %3677
      %v3679 = vmax.f32 %v3590, %v3639
      %3680 = vmax.xlane.f32.xlu0 %v3679
      %v3681 = vpop.xlane.xlu0 %3680
      %v3682 = vmax.f32 %v3592, %v3641
      %3683 = vmax.xlane.f32.xlu0 %v3682
      %v3684 = vpop.xlane.xlu0 %3683
      %v3685 = vmax.f32 %v3595, %v3644
      %3686 = vmax.xlane.f32.xlu0 %v3685
      %v3687 = vpop.xlane.xlu0 %3686
      %v3688 = vmax.f32 %v3597, %v3646
      %3689 = vmax.xlane.f32.xlu0 %v3688
      %v3690 = vpop.xlane.xlu0 %3689
      %v3691 = vmax.f32 %v3600, %v3649
      %3692 = vmax.xlane.f32.xlu0 %v3691
      %v3693 = vpop.xlane.xlu0 %3692
      %v3694 = vmax.f32 %v3602, %v3651
      %3695 = vmax.xlane.f32.xlu0 %v3694
      %v3696 = vpop.xlane.xlu0 %3695
      %v3697 = vmax.f32 %v3605, %v3654
      %3698 = vmax.xlane.f32.xlu0 %v3697
      %v3699 = vpop.xlane.xlu0 %3698
      %v3700 = vmax.f32 %v3607, %v3656
      %3701 = vmax.xlane.f32.xlu0 %v3700
      %v3702 = vpop.xlane.xlu0 %3701
      %v3703 = vmax.f32 %v3610, %v3659
      %3704 = vmax.xlane.f32.xlu0 %v3703
      %v3705 = vpop.xlane.xlu0 %3704
      %v3706 = vmax.f32 %v3612, %v3661
      %3707 = vmax.xlane.f32.xlu0 %v3706
      %v3708 = vpop.xlane.xlu0 %3707
      %v3709 = vmax.f32 %v3615, %v3664
      %3710 = vmax.xlane.f32.xlu0 %v3709
      %v3711 = vpop.xlane.xlu0 %3710
      %v3712 = vmax.f32 %v3617, %v3666
      %3713 = vmax.xlane.f32.xlu0 %v3712
      %v3714 = vpop.xlane.xlu0 %3713
      %v3715 = vmax.f32 %v3620, %v3669
      %3716 = vmax.xlane.f32.xlu0 %v3715
      %v3717 = vpop.xlane.xlu0 %3716
      %v3718 = vmax.f32 %v3622, %v3671
      %3719 = vmax.xlane.f32.xlu0 %v3718
      %v3720 = vpop.xlane.xlu0 %3719
      %v3721 = vsub.f32 %v3585, %v3675
      %v3722 = vsub.f32 %v3634, %v3675
      %v3723 = vsub.f32 %v3587, %v3678
      %v3724 = vsub.f32 %v3636, %v3678
      %v3725 = vsub.f32 %v3590, %v3681
      %v3726 = vsub.f32 %v3639, %v3681
      %v3727 = vsub.f32 %v3592, %v3684
      %v3728 = vsub.f32 %v3641, %v3684
      %v3729 = vsub.f32 %v3595, %v3687
      %v3730 = vsub.f32 %v3644, %v3687
      %v3731 = vsub.f32 %v3597, %v3690
      %v3732 = vsub.f32 %v3646, %v3690
      %v3733 = vsub.f32 %v3600, %v3693
      %v3734 = vsub.f32 %v3649, %v3693
      %v3735 = vsub.f32 %v3602, %v3696
      %v3736 = vsub.f32 %v3651, %v3696
      %v3737 = vsub.f32 %v3605, %v3699
      %v3738 = vsub.f32 %v3654, %v3699
      %v3739 = vsub.f32 %v3607, %v3702
      %v3740 = vsub.f32 %v3656, %v3702
      %v3741 = vsub.f32 %v3610, %v3705
      %v3742 = vsub.f32 %v3659, %v3705
      %v3743 = vsub.f32 %v3612, %v3708
      %v3744 = vsub.f32 %v3661, %v3708
      %v3745 = vsub.f32 %v3615, %v3711
      %v3746 = vsub.f32 %v3664, %v3711
      %v3747 = vsub.f32 %v3617, %v3714
      %v3748 = vsub.f32 %v3666, %v3714
      %v3749 = vsub.f32 %v3620, %v3717
      %v3750 = vsub.f32 %v3669, %v3717
      %v3751 = vsub.f32 %v3622, %v3720
      %v3752 = vsub.f32 %v3671, %v3720
      %v3753 = vmul.f32 %v3721, 1.442695
      %v3754 = vpow.pop %v3753
      %v3755 = vmul.f32 %v3722, 1.442695
      %v3756 = vpow.pop %v3755
      %v3757 = vmul.f32 %v3723, 1.442695
      %v3758 = vpow.pop %v3757
      %v3759 = vmul.f32 %v3724, 1.442695
      %v3760 = vpow.pop %v3759
      %v3761 = vmul.f32 %v3725, 1.442695
      %v3762 = vpow.pop %v3761
      %v3763 = vmul.f32 %v3726, 1.442695
      %v3764 = vpow.pop %v3763
      %v3765 = vmul.f32 %v3727, 1.442695
      %v3766 = vpow.pop %v3765
      %v3767 = vmul.f32 %v3728, 1.442695
      %v3768 = vpow.pop %v3767
      %v3769 = vmul.f32 %v3729, 1.442695
      %v3770 = vpow.pop %v3769
      %v3771 = vmul.f32 %v3730, 1.442695
      %v3772 = vpow.pop %v3771
      %v3773 = vmul.f32 %v3731, 1.442695
      %v3774 = vpow.pop %v3773
      %v3775 = vmul.f32 %v3732, 1.442695
      %v3776 = vpow.pop %v3775
      %v3777 = vmul.f32 %v3733, 1.442695
      %v3778 = vpow.pop %v3777
      %v3779 = vmul.f32 %v3734, 1.442695
      %v3780 = vpow.pop %v3779
      %v3781 = vmul.f32 %v3735, 1.442695
      %v3782 = vpow.pop %v3781
      %v3783 = vmul.f32 %v3736, 1.442695
      %v3784 = vpow.pop %v3783
      %v3785 = vmul.f32 %v3737, 1.442695
      %v3786 = vpow.pop %v3785
      %v3787 = vmul.f32 %v3738, 1.442695
      %v3788 = vpow.pop %v3787
      %v3789 = vmul.f32 %v3739, 1.442695
      %v3790 = vpow.pop %v3789
      %v3791 = vmul.f32 %v3740, 1.442695
      %v3792 = vpow.pop %v3791
      %v3793 = vmul.f32 %v3741, 1.442695
      %v3794 = vpow.pop %v3793
      %v3795 = vmul.f32 %v3742, 1.442695
      %v3796 = vpow.pop %v3795
      %v3797 = vmul.f32 %v3743, 1.442695
      %v3798 = vpow.pop %v3797
      %v3799 = vmul.f32 %v3744, 1.442695
      %v3800 = vpow.pop %v3799
      %v3801 = vmul.f32 %v3745, 1.442695
      %v3802 = vpow.pop %v3801
      %v3803 = vmul.f32 %v3746, 1.442695
      %v3804 = vpow.pop %v3803
      %v3805 = vmul.f32 %v3747, 1.442695
      %v3806 = vpow.pop %v3805
      %v3807 = vmul.f32 %v3748, 1.442695
      %v3808 = vpow.pop %v3807
      %v3809 = vmul.f32 %v3749, 1.442695
      %v3810 = vpow.pop %v3809
      %v3811 = vmul.f32 %v3750, 1.442695
      %v3812 = vpow.pop %v3811
      %v3813 = vmul.f32 %v3751, 1.442695
      %v3814 = vpow.pop %v3813
      %v3815 = vmul.f32 %v3752, 1.442695
      %v3816 = vpow.pop %v3815
      %v3817 = vadd.f32 %v3754, %v3756
      %3818 = vadd.xlane.f32.xlu0 %v3817
      %v3819 = vpop.xlane.xlu0 %3818
      %v3820 = vadd.f32 %v3758, %v3760
      %3821 = vadd.xlane.f32.xlu0 %v3820
      %v3822 = vpop.xlane.xlu0 %3821
      %v3823 = vadd.f32 %v3762, %v3764
      %3824 = vadd.xlane.f32.xlu0 %v3823
      %v3825 = vpop.xlane.xlu0 %3824
      %v3826 = vadd.f32 %v3766, %v3768
      %3827 = vadd.xlane.f32.xlu0 %v3826
      %v3828 = vpop.xlane.xlu0 %3827
      %v3829 = vadd.f32 %v3770, %v3772
      %3830 = vadd.xlane.f32.xlu0 %v3829
      %v3831 = vpop.xlane.xlu0 %3830
      %v3832 = vadd.f32 %v3774, %v3776
      %3833 = vadd.xlane.f32.xlu0 %v3832
      %v3834 = vpop.xlane.xlu0 %3833
      %v3835 = vadd.f32 %v3778, %v3780
      %3836 = vadd.xlane.f32.xlu0 %v3835
      %v3837 = vpop.xlane.xlu0 %3836
      %v3838 = vadd.f32 %v3782, %v3784
      %3839 = vadd.xlane.f32.xlu0 %v3838
      %v3840 = vpop.xlane.xlu0 %3839
      %v3841 = vadd.f32 %v3786, %v3788
      %3842 = vadd.xlane.f32.xlu0 %v3841
      %v3843 = vpop.xlane.xlu0 %3842
      %v3844 = vadd.f32 %v3790, %v3792
      %3845 = vadd.xlane.f32.xlu0 %v3844
      %v3846 = vpop.xlane.xlu0 %3845
      %v3847 = vadd.f32 %v3794, %v3796
      %3848 = vadd.xlane.f32.xlu0 %v3847
      %v3849 = vpop.xlane.xlu0 %3848
      %v3850 = vadd.f32 %v3798, %v3800
      %3851 = vadd.xlane.f32.xlu0 %v3850
      %v3852 = vpop.xlane.xlu0 %3851
      %v3853 = vadd.f32 %v3802, %v3804
      %3854 = vadd.xlane.f32.xlu0 %v3853
      %v3855 = vpop.xlane.xlu0 %3854
      %v3856 = vadd.f32 %v3806, %v3808
      %3857 = vadd.xlane.f32.xlu0 %v3856
      %v3858 = vpop.xlane.xlu0 %3857
      %v3859 = vadd.f32 %v3810, %v3812
      %3860 = vadd.xlane.f32.xlu0 %v3859
      %v3861 = vpop.xlane.xlu0 %3860
      %v3862 = vadd.f32 %v3814, %v3816
      %3863 = vadd.xlane.f32.xlu0 %v3862
      %v3864 = vpop.xlane.xlu0 %3863
      %v3865 = vpack.c.bf16 %v3758, %v3754
      %v3866 = vpack.c.bf16 %v3760, %v3756
      %v3867 = vpack.c.bf16 %v3766, %v3762
      %v3868 = vpack.c.bf16 %v3768, %v3764
      %v3869 = vpack.c.bf16 %v3774, %v3770
      %v3870 = vpack.c.bf16 %v3776, %v3772
      %v3871 = vpack.c.bf16 %v3782, %v3778
      %v3872 = vpack.c.bf16 %v3784, %v3780
      %v3873 = vpack.c.bf16 %v3790, %v3786
      %v3874 = vpack.c.bf16 %v3792, %v3788
      %v3875 = vpack.c.bf16 %v3798, %v3794
      %v3876 = vpack.c.bf16 %v3800, %v3796
      %v3877 = vpack.c.bf16 %v3806, %v3802
      %v3878 = vpack.c.bf16 %v3808, %v3804
      %v3879 = vpack.c.bf16 %v3814, %v3810
      %v3880 = vpack.c.bf16 %v3816, %v3812
      %v3885 = vunpack.c.l.b16 %v3551
      %v3886 = vunpack.c.h.b16 %v3551
      %v3887 = vunpack.c.l.b16 %v3552
      %v3888 = vunpack.c.h.b16 %v3552
      %v3889 = vunpack.c.l.b16 %v3553
      %v3890 = vunpack.c.h.b16 %v3553
      %v3891 = vunpack.c.l.b16 %v3554
      %v3892 = vunpack.c.h.b16 %v3554
      %v3893 = vpack.c.b16 %v3887, %v3885
      %v3894 = vpack.c.b16 %v3888, %v3886
      %v3895 = vpack.c.b16 %v3891, %v3889
      %v3896 = vpack.c.b16 %v3892, %v3890
      %3901 = vmatpush.bf16.xpose.msra.mxu0 0
      %3902 = vmatpush.bf16.xpose.msra.mxu0 0
      %3903 = vmatpush.bf16.xpose.msra.mxu0 0
      %3904 = vmatpush.bf16.xpose.msra.mxu0 0
      %3905 = vmatpush.bf16.xpose.msra.mxu0 0
      %3906 = vmatpush.bf16.xpose.msra.mxu0 0
      %3907 = vmatpush.bf16.xpose.msra.mxu0 %v3895
      %3908 = vmatpush.bf16.xpose.msra.mxu0 %v3893
      %3909 = vmatmul.bf16.gmra.mxu0 %v3865
      %v3910 = vpop.f32.mrf.mxu0
      %v3911 = vadd.f32 0.0, %v3910
      %v3912 = vpop.f32.mrf.mxu0
      %v3913 = vadd.f32 0.0, %v3912
      %3914 = vmatmul.bf16.gmra.mxu0 %v3867
      %v3915 = vpop.f32.mrf.mxu0
      %v3916 = vadd.f32 0.0, %v3915
      %v3917 = vpop.f32.mrf.mxu0
      %v3918 = vadd.f32 0.0, %v3917
      %3919 = vmatmul.bf16.gmra.mxu0 %v3869
      %v3920 = vpop.f32.mrf.mxu0
      %v3921 = vadd.f32 0.0, %v3920
      %v3922 = vpop.f32.mrf.mxu0
      %v3923 = vadd.f32 0.0, %v3922
      %3924 = vmatmul.bf16.gmra.mxu0 %v3871
      %v3925 = vpop.f32.mrf.mxu0
      %v3926 = vadd.f32 0.0, %v3925
      %v3927 = vpop.f32.mrf.mxu0
      %v3928 = vadd.f32 0.0, %v3927
      %3929 = vmatmul.bf16.gmra.mxu0 %v3873
      %v3930 = vpop.f32.mrf.mxu0
      %v3931 = vadd.f32 0.0, %v3930
      %v3932 = vpop.f32.mrf.mxu0
      %v3933 = vadd.f32 0.0, %v3932
      %3934 = vmatmul.bf16.gmra.mxu0 %v3875
      %v3935 = vpop.f32.mrf.mxu0
      %v3936 = vadd.f32 0.0, %v3935
      %v3937 = vpop.f32.mrf.mxu0
      %v3938 = vadd.f32 0.0, %v3937
      %3939 = vmatmul.bf16.gmra.mxu0 %v3877
      %v3940 = vpop.f32.mrf.mxu0
      %v3941 = vadd.f32 0.0, %v3940
      %v3942 = vpop.f32.mrf.mxu0
      %v3943 = vadd.f32 0.0, %v3942
      %3944 = vmatmul.bf16.gmra.mxu0 %v3879
      %v3945 = vpop.f32.mrf.mxu0
      %v3946 = vadd.f32 0.0, %v3945
      %v3947 = vpop.f32.mrf.mxu0
      %v3948 = vadd.f32 0.0, %v3947
      %3949 = vdwg.mxu0
      %3950 = vmatpush.bf16.xpose.msra.mxu0 0
      %3951 = vmatpush.bf16.xpose.msra.mxu0 0
      %3952 = vmatpush.bf16.xpose.msra.mxu0 0
      %3953 = vmatpush.bf16.xpose.msra.mxu0 0
      %3954 = vmatpush.bf16.xpose.msra.mxu0 0
      %3955 = vmatpush.bf16.xpose.msra.mxu0 0
      %3956 = vmatpush.bf16.xpose.msra.mxu0 %v3896
      %3957 = vmatpush.bf16.xpose.msra.mxu0 %v3894
      %3958 = vmatmul.bf16.gmra.mxu0 %v3866
      %v3959 = vpop.f32.mrf.mxu0
      %v3960 = vadd.f32 %v3911, %v3959
      %v3961 = vpop.f32.mrf.mxu0
      %v3962 = vadd.f32 %v3913, %v3961
      %3963 = vmatmul.bf16.gmra.mxu0 %v3868
      %v3964 = vpop.f32.mrf.mxu0
      %v3965 = vadd.f32 %v3916, %v3964
      %v3966 = vpop.f32.mrf.mxu0
      %v3967 = vadd.f32 %v3918, %v3966
      %3968 = vmatmul.bf16.gmra.mxu0 %v3870
      %v3969 = vpop.f32.mrf.mxu0
      %v3970 = vadd.f32 %v3921, %v3969
      %v3971 = vpop.f32.mrf.mxu0
      %v3972 = vadd.f32 %v3923, %v3971
      %3973 = vmatmul.bf16.gmra.mxu0 %v3872
      %v3974 = vpop.f32.mrf.mxu0
      %v3975 = vadd.f32 %v3926, %v3974
      %v3976 = vpop.f32.mrf.mxu0
      %v3977 = vadd.f32 %v3928, %v3976
      %3978 = vmatmul.bf16.gmra.mxu0 %v3874
      %v3979 = vpop.f32.mrf.mxu0
      %v3980 = vadd.f32 %v3931, %v3979
      %v3981 = vpop.f32.mrf.mxu0
      %v3982 = vadd.f32 %v3933, %v3981
      %3983 = vmatmul.bf16.gmra.mxu0 %v3876
      %v3984 = vpop.f32.mrf.mxu0
      %v3985 = vadd.f32 %v3936, %v3984
      %v3986 = vpop.f32.mrf.mxu0
      %v3987 = vadd.f32 %v3938, %v3986
      %3988 = vmatmul.bf16.gmra.mxu0 %v3878
      %v3989 = vpop.f32.mrf.mxu0
      %v3990 = vadd.f32 %v3941, %v3989
      %v3991 = vpop.f32.mrf.mxu0
      %v3992 = vadd.f32 %v3943, %v3991
      %3993 = vmatmul.bf16.gmra.mxu0 %v3880
      %v3994 = vpop.f32.mrf.mxu0
      %v3995 = vadd.f32 %v3946, %v3994
      %v3996 = vpop.f32.mrf.mxu0
      %v3997 = vadd.f32 %v3948, %v3996
      %3998 = vdwg.mxu0
      %v3999 = vrcp.pop %v3819
      %v4000 = vrcp.pop %v3822
      %v4001 = vrcp.pop %v3825
      %v4002 = vrcp.pop %v3828
      %v4003 = vrcp.pop %v3831
      %v4004 = vrcp.pop %v3834
      %v4005 = vrcp.pop %v3837
      %v4006 = vrcp.pop %v3840
      %v4007 = vrcp.pop %v3843
      %v4008 = vrcp.pop %v3846
      %v4009 = vrcp.pop %v3849
      %v4010 = vrcp.pop %v3852
      %v4011 = vrcp.pop %v3855
      %v4012 = vrcp.pop %v3858
      %v4013 = vrcp.pop %v3861
      %v4014 = vrcp.pop %v3864
      %v4015 = vmul.f32 %v3960, %v3999
      %v4016 = vmul.f32 %v3962, %v4000
      %v4017 = vmul.f32 %v3965, %v4001
      %v4018 = vmul.f32 %v3967, %v4002
      %v4019 = vmul.f32 %v3970, %v4003
      %v4020 = vmul.f32 %v3972, %v4004
      %v4021 = vmul.f32 %v3975, %v4005
      %v4022 = vmul.f32 %v3977, %v4006
      %v4023 = vmul.f32 %v3980, %v4007
      %v4024 = vmul.f32 %v3982, %v4008
      %v4025 = vmul.f32 %v3985, %v4009
      %v4026 = vmul.f32 %v3987, %v4010
      %v4027 = vmul.f32 %v3990, %v4011
      %v4028 = vmul.f32 %v3992, %v4012
      %v4029 = vmul.f32 %v3995, %v4013
      %v4030 = vmul.f32 %v3997, %v4014
      %v4031 = vadd.f32 %v3531, %v4015
      %v4032 = vadd.f32 %v3532, %v4016
      %v4033 = vadd.f32 %v3533, %v4017
      %v4034 = vadd.f32 %v3534, %v4018
      %v4035 = vadd.f32 %v3535, %v4019
      %v4036 = vadd.f32 %v3536, %v4020
      %v4037 = vadd.f32 %v3537, %v4021
      %v4038 = vadd.f32 %v3538, %v4022
      %v4039 = vadd.f32 %v3539, %v4023
      %v4040 = vadd.f32 %v3540, %v4024
      %v4041 = vadd.f32 %v3541, %v4025
      %v4042 = vadd.f32 %v3542, %v4026
      %v4043 = vadd.f32 %v3543, %v4027
      %v4044 = vadd.f32 %v3544, %v4028
      %v4045 = vadd.f32 %v3545, %v4029
      %v4046 = vadd.f32 %v3546, %v4030
      %v4047 = vpack.c.bf16 %v4032, %v4031
      %v4048 = vpack.c.bf16 %v4034, %v4033
      %v4049 = vpack.c.bf16 %v4036, %v4035
      %v4050 = vpack.c.bf16 %v4038, %v4037
      %v4051 = vpack.c.bf16 %v4040, %v4039
      %v4052 = vpack.c.bf16 %v4042, %v4041
      %v4053 = vpack.c.bf16 %v4044, %v4043
      %v4054 = vpack.c.bf16 %v4046, %v4045
      %v4056 = vsel %vm376, %v4047, 0
      %v4059 = vsel %vm376, %v4048, 0
      %v4062 = vsel %vm376, %v4049, 0
      %v4065 = vsel %vm376, %v4050, 0
      %v4068 = vsel %vm376, %v4051, 0
      %v4071 = vsel %vm376, %v4052, 0
      %v4074 = vsel %vm376, %v4053, 0
      %v4077 = vsel %vm376, %v4054, 0
      %4079 = vmatpush.bf16.xpose.msra.mxu0 %v4077
      %4080 = vmatpush.bf16.xpose.msra.mxu0 %v4074
      %4081 = vmatpush.bf16.xpose.msra.mxu0 %v4071
      %4082 = vmatpush.bf16.xpose.msra.mxu0 %v4068
      %4083 = vmatpush.bf16.xpose.msra.mxu0 %v4065
      %4084 = vmatpush.bf16.xpose.msra.mxu0 %v4062
      %4085 = vmatpush.bf16.xpose.msra.mxu0 %v4059
      %4086 = vmatpush.bf16.xpose.msra.mxu0 %v4056
      %4087 = vmatmul.bf16.gmra.mxu0 %v1784
      %v4088 = vpop.f32.mrf.mxu0
      %v4089 = vadd.f32 0.0, %v4088
      %v4090 = vpop.f32.mrf.mxu0
      %v4091 = vadd.f32 0.0, %v4090
      %4092 = vmatmul.bf16.gmra.mxu0 %v1787
      %v4093 = vpop.f32.mrf.mxu0
      %v4094 = vadd.f32 0.0, %v4093
      %v4095 = vpop.f32.mrf.mxu0
      %v4096 = vadd.f32 0.0, %v4095
      %4097 = vdwg.mxu0
      %v4098 = vld [vmem:[%s219 + $0x10] sm:$0xff]
      %v4099 = vld [vmem:[%s219 + $0x40] sm:$0xff]
      %v4100 = vld [vmem:[%s219 + $0x70] sm:$0xff]
      %v4101 = vld [vmem:[%s219 + $0xa0] sm:$0xff]
      %v4102 = vadd.f32 %v4098, %v4089
      %v4103 = vadd.f32 %v4099, %v4091
      %v4104 = vadd.f32 %v4100, %v4094
      %v4105 = vadd.f32 %v4101, %v4096
      %v4106 = vadd.f32 %v4102, %v1843
      %v4107 = vadd.f32 %v4103, %v1848
      %v4108 = vadd.f32 %v4104, %v1853
      %v4109 = vadd.f32 %v4105, %v1858
      %4110 = vst [vmem:[%s224 + $0x10] sm:$0xff] %v4106
      %4111 = vst [vmem:[%s224 + $0x40] sm:$0xff] %v4107
      %4112 = vst [vmem:[%s224 + $0x70] sm:$0xff] %v4108
      %4113 = vst [vmem:[%s224 + $0xa0] sm:$0xff] %v4109
      %v4114 = vld [vmem:[#allocation2 + $0xc] sm:$0xf]
      %v4115 = vld [vmem:[#allocation2 + $0x24] sm:$0xf]
      %v4116 = vld [vmem:[#allocation2 + $0x3c] sm:$0xf]
      %v4117 = vld [vmem:[#allocation2 + $0x54] sm:$0xf]
      %v4118 = vld [vmem:[#allocation2 + $0x60] sm:$0xff]
      %v4119 = vld [vmem:[#allocation2 + $0x78] sm:$0xff]
      %v4120 = vld [vmem:[#allocation2 + $0x90] sm:$0xff]
      %v4121 = vld [vmem:[#allocation2 + $0xa8] sm:$0xff]
      %v4122 = vld [vmem:[#allocation2 + $0xc0] sm:$0xff]
      %v4123 = vld [vmem:[#allocation2 + $0xd8] sm:$0xff]
      %v4124 = vld [vmem:[#allocation2 + $0xf0] sm:$0xff]
      %v4125 = vld [vmem:[#allocation2 + $0x108] sm:$0xff]
      %v4130 = vunpack.c.l.b16 %v4114
      %v4131 = vunpack.c.l.b16 %v4115
      %v4132 = vunpack.c.l.b16 %v4116
      %v4133 = vunpack.c.l.b16 %v4117
      %v4134 = vpack.c.b16 %v4131, %v4130
      %v4135 = vpack.c.b16 %v4133, %v4132
      %4138 = vxpose.xlu0.c.b16.start [1/8] %v4134, 128
      %4139 = vxpose.xlu0.c.b16.cont [2/8] %v4135, 128
      %4140 = vxpose.xlu0.c.b16.cont [3/8] 0, 128
      %4141 = vxpose.xlu0.c.b16.cont [4/8] 0, 128
      %4142 = vxpose.xlu0.c.b16.cont [5/8] 0, 128
      %4143 = vxpose.xlu0.c.b16.cont [6/8] 0, 128
      %4144 = vxpose.xlu0.c.b16.cont [7/8] 0, 128
      %4145 = vxpose.xlu0.c.b16.end [8/8] 0, 128
      %v4146 = vpop.trf.xlu0
      %v4147 = vpop.trf.xlu0
      %v4148 = vpop.trf.xlu0
      %v4149 = vpop.trf.xlu0
      %v4150 = vpop.trf.xlu0
      %v4151 = vpop.trf.xlu0
      %v4152 = vpop.trf.xlu0
      %v4153 = vpop.trf.xlu0
      %v4158 = vunpack.c.l.b16 %v4118
      %v4159 = vunpack.c.h.b16 %v4118
      %v4160 = vunpack.c.l.b16 %v4119
      %v4161 = vunpack.c.h.b16 %v4119
      %v4162 = vunpack.c.l.b16 %v4120
      %v4163 = vunpack.c.h.b16 %v4120
      %v4164 = vunpack.c.l.b16 %v4121
      %v4165 = vunpack.c.h.b16 %v4121
      %v4166 = vpack.c.b16 %v4160, %v4158
      %v4167 = vpack.c.b16 %v4161, %v4159
      %v4168 = vpack.c.b16 %v4164, %v4162
      %v4169 = vpack.c.b16 %v4165, %v4163
      %v4175 = vsel %vm376, %v4146, 0
      %v4178 = vsel %vm376, %v4147, 0
      %v4181 = vsel %vm376, %v4148, 0
      %v4184 = vsel %vm376, %v4149, 0
      %v4187 = vsel %vm376, %v4150, 0
      %v4190 = vsel %vm376, %v4151, 0
      %v4193 = vsel %vm376, %v4152, 0
      %v4196 = vsel %vm376, %v4153, 0
      %4198 = vmatpush.bf16.msra.mxu0 0
      %4199 = vmatpush.bf16.msra.mxu0 0
      %4200 = vmatpush.bf16.msra.mxu0 0
      %4201 = vmatpush.bf16.msra.mxu0 0
      %4202 = vmatpush.bf16.msra.mxu0 0
      %4203 = vmatpush.bf16.msra.mxu0 0
      %4204 = vmatpush.bf16.msra.mxu0 %v4168
      %4205 = vmatpush.bf16.msra.mxu0 %v4166
      %4206 = vmatmul.bf16.gmra.mxu0 %v4175
      %v4207 = vpop.f32.mrf.mxu0
      %v4208 = vadd.f32 0.0, %v4207
      %v4209 = vpop.f32.mrf.mxu0
      %v4210 = vadd.f32 0.0, %v4209
      %4211 = vmatmul.bf16.gmra.mxu0 %v4178
      %v4212 = vpop.f32.mrf.mxu0
      %v4213 = vadd.f32 0.0, %v4212
      %v4214 = vpop.f32.mrf.mxu0
      %v4215 = vadd.f32 0.0, %v4214
      %4216 = vmatmul.bf16.gmra.mxu0 %v4181
      %v4217 = vpop.f32.mrf.mxu0
      %v4218 = vadd.f32 0.0, %v4217
      %v4219 = vpop.f32.mrf.mxu0
      %v4220 = vadd.f32 0.0, %v4219
      %4221 = vmatmul.bf16.gmra.mxu0 %v4184
      %v4222 = vpop.f32.mrf.mxu0
      %v4223 = vadd.f32 0.0, %v4222
      %v4224 = vpop.f32.mrf.mxu0
      %v4225 = vadd.f32 0.0, %v4224
      %4226 = vmatmul.bf16.gmra.mxu0 %v4187
      %v4227 = vpop.f32.mrf.mxu0
      %v4228 = vadd.f32 0.0, %v4227
      %v4229 = vpop.f32.mrf.mxu0
      %v4230 = vadd.f32 0.0, %v4229
      %4231 = vmatmul.bf16.gmra.mxu0 %v4190
      %v4232 = vpop.f32.mrf.mxu0
      %v4233 = vadd.f32 0.0, %v4232
      %v4234 = vpop.f32.mrf.mxu0
      %v4235 = vadd.f32 0.0, %v4234
      %4236 = vmatmul.bf16.gmra.mxu0 %v4193
      %v4237 = vpop.f32.mrf.mxu0
      %v4238 = vadd.f32 0.0, %v4237
      %v4239 = vpop.f32.mrf.mxu0
      %v4240 = vadd.f32 0.0, %v4239
      %4241 = vmatmul.bf16.gmra.mxu0 %v4196
      %v4242 = vpop.f32.mrf.mxu0
      %v4243 = vadd.f32 0.0, %v4242
      %v4244 = vpop.f32.mrf.mxu0
      %v4245 = vadd.f32 0.0, %v4244
      %4246 = vdwg.mxu0
      %4247 = vmatpush.bf16.msra.mxu0 0
      %4248 = vmatpush.bf16.msra.mxu0 0
      %4249 = vmatpush.bf16.msra.mxu0 0
      %4250 = vmatpush.bf16.msra.mxu0 0
      %4251 = vmatpush.bf16.msra.mxu0 0
      %4252 = vmatpush.bf16.msra.mxu0 0
      %4253 = vmatpush.bf16.msra.mxu0 %v4169
      %4254 = vmatpush.bf16.msra.mxu0 %v4167
      %4255 = vmatmul.bf16.gmra.mxu0 %v4175
      %v4256 = vpop.f32.mrf.mxu0
      %v4257 = vadd.f32 0.0, %v4256
      %v4258 = vpop.f32.mrf.mxu0
      %v4259 = vadd.f32 0.0, %v4258
      %4260 = vmatmul.bf16.gmra.mxu0 %v4178
      %v4261 = vpop.f32.mrf.mxu0
      %v4262 = vadd.f32 0.0, %v4261
      %v4263 = vpop.f32.mrf.mxu0
      %v4264 = vadd.f32 0.0, %v4263
      %4265 = vmatmul.bf16.gmra.mxu0 %v4181
      %v4266 = vpop.f32.mrf.mxu0
      %v4267 = vadd.f32 0.0, %v4266
      %v4268 = vpop.f32.mrf.mxu0
      %v4269 = vadd.f32 0.0, %v4268
      %4270 = vmatmul.bf16.gmra.mxu0 %v4184
      %v4271 = vpop.f32.mrf.mxu0
      %v4272 = vadd.f32 0.0, %v4271
      %v4273 = vpop.f32.mrf.mxu0
      %v4274 = vadd.f32 0.0, %v4273
      %4275 = vmatmul.bf16.gmra.mxu0 %v4187
      %v4276 = vpop.f32.mrf.mxu0
      %v4277 = vadd.f32 0.0, %v4276
      %v4278 = vpop.f32.mrf.mxu0
      %v4279 = vadd.f32 0.0, %v4278
      %4280 = vmatmul.bf16.gmra.mxu0 %v4190
      %v4281 = vpop.f32.mrf.mxu0
      %v4282 = vadd.f32 0.0, %v4281
      %v4283 = vpop.f32.mrf.mxu0
      %v4284 = vadd.f32 0.0, %v4283
      %4285 = vmatmul.bf16.gmra.mxu0 %v4193
      %v4286 = vpop.f32.mrf.mxu0
      %v4287 = vadd.f32 0.0, %v4286
      %v4288 = vpop.f32.mrf.mxu0
      %v4289 = vadd.f32 0.0, %v4288
      %4290 = vmatmul.bf16.gmra.mxu0 %v4196
      %v4291 = vpop.f32.mrf.mxu0
      %v4292 = vadd.f32 0.0, %v4291
      %v4293 = vpop.f32.mrf.mxu0
      %v4294 = vadd.f32 0.0, %v4293
      %4295 = vdwg.mxu0
      %v4296 = vmax.f32 %v4208, %v4257
      %4297 = vmax.xlane.f32.xlu0 %v4296
      %v4298 = vpop.xlane.xlu0 %4297
      %v4299 = vmax.f32 %v4210, %v4259
      %4300 = vmax.xlane.f32.xlu0 %v4299
      %v4301 = vpop.xlane.xlu0 %4300
      %v4302 = vmax.f32 %v4213, %v4262
      %4303 = vmax.xlane.f32.xlu0 %v4302
      %v4304 = vpop.xlane.xlu0 %4303
      %v4305 = vmax.f32 %v4215, %v4264
      %4306 = vmax.xlane.f32.xlu0 %v4305
      %v4307 = vpop.xlane.xlu0 %4306
      %v4308 = vmax.f32 %v4218, %v4267
      %4309 = vmax.xlane.f32.xlu0 %v4308
      %v4310 = vpop.xlane.xlu0 %4309
      %v4311 = vmax.f32 %v4220, %v4269
      %4312 = vmax.xlane.f32.xlu0 %v4311
      %v4313 = vpop.xlane.xlu0 %4312
      %v4314 = vmax.f32 %v4223, %v4272
      %4315 = vmax.xlane.f32.xlu0 %v4314
      %v4316 = vpop.xlane.xlu0 %4315
      %v4317 = vmax.f32 %v4225, %v4274
      %4318 = vmax.xlane.f32.xlu0 %v4317
      %v4319 = vpop.xlane.xlu0 %4318
      %v4320 = vmax.f32 %v4228, %v4277
      %4321 = vmax.xlane.f32.xlu0 %v4320
      %v4322 = vpop.xlane.xlu0 %4321
      %v4323 = vmax.f32 %v4230, %v4279
      %4324 = vmax.xlane.f32.xlu0 %v4323
      %v4325 = vpop.xlane.xlu0 %4324
      %v4326 = vmax.f32 %v4233, %v4282
      %4327 = vmax.xlane.f32.xlu0 %v4326
      %v4328 = vpop.xlane.xlu0 %4327
      %v4329 = vmax.f32 %v4235, %v4284
      %4330 = vmax.xlane.f32.xlu0 %v4329
      %v4331 = vpop.xlane.xlu0 %4330
      %v4332 = vmax.f32 %v4238, %v4287
      %4333 = vmax.xlane.f32.xlu0 %v4332
      %v4334 = vpop.xlane.xlu0 %4333
      %v4335 = vmax.f32 %v4240, %v4289
      %4336 = vmax.xlane.f32.xlu0 %v4335
      %v4337 = vpop.xlane.xlu0 %4336
      %v4338 = vmax.f32 %v4243, %v4292
      %4339 = vmax.xlane.f32.xlu0 %v4338
      %v4340 = vpop.xlane.xlu0 %4339
      %v4341 = vmax.f32 %v4245, %v4294
      %4342 = vmax.xlane.f32.xlu0 %v4341
      %v4343 = vpop.xlane.xlu0 %4342
      %v4344 = vsub.f32 %v4208, %v4298
      %v4345 = vsub.f32 %v4257, %v4298
      %v4346 = vsub.f32 %v4210, %v4301
      %v4347 = vsub.f32 %v4259, %v4301
      %v4348 = vsub.f32 %v4213, %v4304
      %v4349 = vsub.f32 %v4262, %v4304
      %v4350 = vsub.f32 %v4215, %v4307
      %v4351 = vsub.f32 %v4264, %v4307
      %v4352 = vsub.f32 %v4218, %v4310
      %v4353 = vsub.f32 %v4267, %v4310
      %v4354 = vsub.f32 %v4220, %v4313
      %v4355 = vsub.f32 %v4269, %v4313
      %v4356 = vsub.f32 %v4223, %v4316
      %v4357 = vsub.f32 %v4272, %v4316
      %v4358 = vsub.f32 %v4225, %v4319
      %v4359 = vsub.f32 %v4274, %v4319
      %v4360 = vsub.f32 %v4228, %v4322
      %v4361 = vsub.f32 %v4277, %v4322
      %v4362 = vsub.f32 %v4230, %v4325
      %v4363 = vsub.f32 %v4279, %v4325
      %v4364 = vsub.f32 %v4233, %v4328
      %v4365 = vsub.f32 %v4282, %v4328
      %v4366 = vsub.f32 %v4235, %v4331
      %v4367 = vsub.f32 %v4284, %v4331
      %v4368 = vsub.f32 %v4238, %v4334
      %v4369 = vsub.f32 %v4287, %v4334
      %v4370 = vsub.f32 %v4240, %v4337
      %v4371 = vsub.f32 %v4289, %v4337
      %v4372 = vsub.f32 %v4243, %v4340
      %v4373 = vsub.f32 %v4292, %v4340
      %v4374 = vsub.f32 %v4245, %v4343
      %v4375 = vsub.f32 %v4294, %v4343
      %v4376 = vmul.f32 %v4344, 1.442695
      %v4377 = vpow.pop %v4376
      %v4378 = vmul.f32 %v4345, 1.442695
      %v4379 = vpow.pop %v4378
      %v4380 = vmul.f32 %v4346, 1.442695
      %v4381 = vpow.pop %v4380
      %v4382 = vmul.f32 %v4347, 1.442695
      %v4383 = vpow.pop %v4382
      %v4384 = vmul.f32 %v4348, 1.442695
      %v4385 = vpow.pop %v4384
      %v4386 = vmul.f32 %v4349, 1.442695
      %v4387 = vpow.pop %v4386
      %v4388 = vmul.f32 %v4350, 1.442695
      %v4389 = vpow.pop %v4388
      %v4390 = vmul.f32 %v4351, 1.442695
      %v4391 = vpow.pop %v4390
      %v4392 = vmul.f32 %v4352, 1.442695
      %v4393 = vpow.pop %v4392
      %v4394 = vmul.f32 %v4353, 1.442695
      %v4395 = vpow.pop %v4394
      %v4396 = vmul.f32 %v4354, 1.442695
      %v4397 = vpow.pop %v4396
      %v4398 = vmul.f32 %v4355, 1.442695
      %v4399 = vpow.pop %v4398
      %v4400 = vmul.f32 %v4356, 1.442695
      %v4401 = vpow.pop %v4400
      %v4402 = vmul.f32 %v4357, 1.442695
      %v4403 = vpow.pop %v4402
      %v4404 = vmul.f32 %v4358, 1.442695
      %v4405 = vpow.pop %v4404
      %v4406 = vmul.f32 %v4359, 1.442695
      %v4407 = vpow.pop %v4406
      %v4408 = vmul.f32 %v4360, 1.442695
      %v4409 = vpow.pop %v4408
      %v4410 = vmul.f32 %v4361, 1.442695
      %v4411 = vpow.pop %v4410
      %v4412 = vmul.f32 %v4362, 1.442695
      %v4413 = vpow.pop %v4412
      %v4414 = vmul.f32 %v4363, 1.442695
      %v4415 = vpow.pop %v4414
      %v4416 = vmul.f32 %v4364, 1.442695
      %v4417 = vpow.pop %v4416
      %v4418 = vmul.f32 %v4365, 1.442695
      %v4419 = vpow.pop %v4418
      %v4420 = vmul.f32 %v4366, 1.442695
      %v4421 = vpow.pop %v4420
      %v4422 = vmul.f32 %v4367, 1.442695
      %v4423 = vpow.pop %v4422
      %v4424 = vmul.f32 %v4368, 1.442695
      %v4425 = vpow.pop %v4424
      %v4426 = vmul.f32 %v4369, 1.442695
      %v4427 = vpow.pop %v4426
      %v4428 = vmul.f32 %v4370, 1.442695
      %v4429 = vpow.pop %v4428
      %v4430 = vmul.f32 %v4371, 1.442695
      %v4431 = vpow.pop %v4430
      %v4432 = vmul.f32 %v4372, 1.442695
      %v4433 = vpow.pop %v4432
      %v4434 = vmul.f32 %v4373, 1.442695
      %v4435 = vpow.pop %v4434
      %v4436 = vmul.f32 %v4374, 1.442695
      %v4437 = vpow.pop %v4436
      %v4438 = vmul.f32 %v4375, 1.442695
      %v4439 = vpow.pop %v4438
      %v4440 = vadd.f32 %v4377, %v4379
      %4441 = vadd.xlane.f32.xlu0 %v4440
      %v4442 = vpop.xlane.xlu0 %4441
      %v4443 = vadd.f32 %v4381, %v4383
      %4444 = vadd.xlane.f32.xlu0 %v4443
      %v4445 = vpop.xlane.xlu0 %4444
      %v4446 = vadd.f32 %v4385, %v4387
      %4447 = vadd.xlane.f32.xlu0 %v4446
      %v4448 = vpop.xlane.xlu0 %4447
      %v4449 = vadd.f32 %v4389, %v4391
      %4450 = vadd.xlane.f32.xlu0 %v4449
      %v4451 = vpop.xlane.xlu0 %4450
      %v4452 = vadd.f32 %v4393, %v4395
      %4453 = vadd.xlane.f32.xlu0 %v4452
      %v4454 = vpop.xlane.xlu0 %4453
      %v4455 = vadd.f32 %v4397, %v4399
      %4456 = vadd.xlane.f32.xlu0 %v4455
      %v4457 = vpop.xlane.xlu0 %4456
      %v4458 = vadd.f32 %v4401, %v4403
      %4459 = vadd.xlane.f32.xlu0 %v4458
      %v4460 = vpop.xlane.xlu0 %4459
      %v4461 = vadd.f32 %v4405, %v4407
      %4462 = vadd.xlane.f32.xlu0 %v4461
      %v4463 = vpop.xlane.xlu0 %4462
      %v4464 = vadd.f32 %v4409, %v4411
      %4465 = vadd.xlane.f32.xlu0 %v4464
      %v4466 = vpop.xlane.xlu0 %4465
      %v4467 = vadd.f32 %v4413, %v4415
      %4468 = vadd.xlane.f32.xlu0 %v4467
      %v4469 = vpop.xlane.xlu0 %4468
      %v4470 = vadd.f32 %v4417, %v4419
      %4471 = vadd.xlane.f32.xlu0 %v4470
      %v4472 = vpop.xlane.xlu0 %4471
      %v4473 = vadd.f32 %v4421, %v4423
      %4474 = vadd.xlane.f32.xlu0 %v4473
      %v4475 = vpop.xlane.xlu0 %4474
      %v4476 = vadd.f32 %v4425, %v4427
      %4477 = vadd.xlane.f32.xlu0 %v4476
      %v4478 = vpop.xlane.xlu0 %4477
      %v4479 = vadd.f32 %v4429, %v4431
      %4480 = vadd.xlane.f32.xlu0 %v4479
      %v4481 = vpop.xlane.xlu0 %4480
      %v4482 = vadd.f32 %v4433, %v4435
      %4483 = vadd.xlane.f32.xlu0 %v4482
      %v4484 = vpop.xlane.xlu0 %4483
      %v4485 = vadd.f32 %v4437, %v4439
      %4486 = vadd.xlane.f32.xlu0 %v4485
      %v4487 = vpop.xlane.xlu0 %4486
      %v4488 = vpack.c.bf16 %v4381, %v4377
      %v4489 = vpack.c.bf16 %v4383, %v4379
      %v4490 = vpack.c.bf16 %v4389, %v4385
      %v4491 = vpack.c.bf16 %v4391, %v4387
      %v4492 = vpack.c.bf16 %v4397, %v4393
      %v4493 = vpack.c.bf16 %v4399, %v4395
      %v4494 = vpack.c.bf16 %v4405, %v4401
      %v4495 = vpack.c.bf16 %v4407, %v4403
      %v4496 = vpack.c.bf16 %v4413, %v4409
      %v4497 = vpack.c.bf16 %v4415, %v4411
      %v4498 = vpack.c.bf16 %v4421, %v4417
      %v4499 = vpack.c.bf16 %v4423, %v4419
      %v4500 = vpack.c.bf16 %v4429, %v4425
      %v4501 = vpack.c.bf16 %v4431, %v4427
      %v4502 = vpack.c.bf16 %v4437, %v4433
      %v4503 = vpack.c.bf16 %v4439, %v4435
      %v4508 = vunpack.c.l.b16 %v4122
      %v4509 = vunpack.c.h.b16 %v4122
      %v4510 = vunpack.c.l.b16 %v4123
      %v4511 = vunpack.c.h.b16 %v4123
      %v4512 = vunpack.c.l.b16 %v4124
      %v4513 = vunpack.c.h.b16 %v4124
      %v4514 = vunpack.c.l.b16 %v4125
      %v4515 = vunpack.c.h.b16 %v4125
      %v4516 = vpack.c.b16 %v4510, %v4508
      %v4517 = vpack.c.b16 %v4511, %v4509
      %v4518 = vpack.c.b16 %v4514, %v4512
      %v4519 = vpack.c.b16 %v4515, %v4513
      %4524 = vmatpush.bf16.xpose.msra.mxu0 0
      %4525 = vmatpush.bf16.xpose.msra.mxu0 0
      %4526 = vmatpush.bf16.xpose.msra.mxu0 0
      %4527 = vmatpush.bf16.xpose.msra.mxu0 0
      %4528 = vmatpush.bf16.xpose.msra.mxu0 0
      %4529 = vmatpush.bf16.xpose.msra.mxu0 0
      %4530 = vmatpush.bf16.xpose.msra.mxu0 %v4518
      %4531 = vmatpush.bf16.xpose.msra.mxu0 %v4516
      %4532 = vmatmul.bf16.gmra.mxu0 %v4488
      %v4533 = vpop.f32.mrf.mxu0
      %v4534 = vadd.f32 0.0, %v4533
      %v4535 = vpop.f32.mrf.mxu0
      %v4536 = vadd.f32 0.0, %v4535
      %4537 = vmatmul.bf16.gmra.mxu0 %v4490
      %v4538 = vpop.f32.mrf.mxu0
      %v4539 = vadd.f32 0.0, %v4538
      %v4540 = vpop.f32.mrf.mxu0
      %v4541 = vadd.f32 0.0, %v4540
      %4542 = vmatmul.bf16.gmra.mxu0 %v4492
      %v4543 = vpop.f32.mrf.mxu0
      %v4544 = vadd.f32 0.0, %v4543
      %v4545 = vpop.f32.mrf.mxu0
      %v4546 = vadd.f32 0.0, %v4545
      %4547 = vmatmul.bf16.gmra.mxu0 %v4494
      %v4548 = vpop.f32.mrf.mxu0
      %v4549 = vadd.f32 0.0, %v4548
      %v4550 = vpop.f32.mrf.mxu0
      %v4551 = vadd.f32 0.0, %v4550
      %4552 = vmatmul.bf16.gmra.mxu0 %v4496
      %v4553 = vpop.f32.mrf.mxu0
      %v4554 = vadd.f32 0.0, %v4553
      %v4555 = vpop.f32.mrf.mxu0
      %v4556 = vadd.f32 0.0, %v4555
      %4557 = vmatmul.bf16.gmra.mxu0 %v4498
      %v4558 = vpop.f32.mrf.mxu0
      %v4559 = vadd.f32 0.0, %v4558
      %v4560 = vpop.f32.mrf.mxu0
      %v4561 = vadd.f32 0.0, %v4560
      %4562 = vmatmul.bf16.gmra.mxu0 %v4500
      %v4563 = vpop.f32.mrf.mxu0
      %v4564 = vadd.f32 0.0, %v4563
      %v4565 = vpop.f32.mrf.mxu0
      %v4566 = vadd.f32 0.0, %v4565
      %4567 = vmatmul.bf16.gmra.mxu0 %v4502
      %v4568 = vpop.f32.mrf.mxu0
      %v4569 = vadd.f32 0.0, %v4568
      %v4570 = vpop.f32.mrf.mxu0
      %v4571 = vadd.f32 0.0, %v4570
      %4572 = vdwg.mxu0
      %4573 = vmatpush.bf16.xpose.msra.mxu0 0
      %4574 = vmatpush.bf16.xpose.msra.mxu0 0
      %4575 = vmatpush.bf16.xpose.msra.mxu0 0
      %4576 = vmatpush.bf16.xpose.msra.mxu0 0
      %4577 = vmatpush.bf16.xpose.msra.mxu0 0
      %4578 = vmatpush.bf16.xpose.msra.mxu0 0
      %4579 = vmatpush.bf16.xpose.msra.mxu0 %v4519
      %4580 = vmatpush.bf16.xpose.msra.mxu0 %v4517
      %4581 = vmatmul.bf16.gmra.mxu0 %v4489
      %v4582 = vpop.f32.mrf.mxu0
      %v4583 = vadd.f32 %v4534, %v4582
      %v4584 = vpop.f32.mrf.mxu0
      %v4585 = vadd.f32 %v4536, %v4584
      %4586 = vmatmul.bf16.gmra.mxu0 %v4491
      %v4587 = vpop.f32.mrf.mxu0
      %v4588 = vadd.f32 %v4539, %v4587
      %v4589 = vpop.f32.mrf.mxu0
      %v4590 = vadd.f32 %v4541, %v4589
      %4591 = vmatmul.bf16.gmra.mxu0 %v4493
      %v4592 = vpop.f32.mrf.mxu0
      %v4593 = vadd.f32 %v4544, %v4592
      %v4594 = vpop.f32.mrf.mxu0
      %v4595 = vadd.f32 %v4546, %v4594
      %4596 = vmatmul.bf16.gmra.mxu0 %v4495
      %v4597 = vpop.f32.mrf.mxu0
      %v4598 = vadd.f32 %v4549, %v4597
      %v4599 = vpop.f32.mrf.mxu0
      %v4600 = vadd.f32 %v4551, %v4599
      %4601 = vmatmul.bf16.gmra.mxu0 %v4497
      %v4602 = vpop.f32.mrf.mxu0
      %v4603 = vadd.f32 %v4554, %v4602
      %v4604 = vpop.f32.mrf.mxu0
      %v4605 = vadd.f32 %v4556, %v4604
      %4606 = vmatmul.bf16.gmra.mxu0 %v4499
      %v4607 = vpop.f32.mrf.mxu0
      %v4608 = vadd.f32 %v4559, %v4607
      %v4609 = vpop.f32.mrf.mxu0
      %v4610 = vadd.f32 %v4561, %v4609
      %4611 = vmatmul.bf16.gmra.mxu0 %v4501
      %v4612 = vpop.f32.mrf.mxu0
      %v4613 = vadd.f32 %v4564, %v4612
      %v4614 = vpop.f32.mrf.mxu0
      %v4615 = vadd.f32 %v4566, %v4614
      %4616 = vmatmul.bf16.gmra.mxu0 %v4503
      %v4617 = vpop.f32.mrf.mxu0
      %v4618 = vadd.f32 %v4569, %v4617
      %v4619 = vpop.f32.mrf.mxu0
      %v4620 = vadd.f32 %v4571, %v4619
      %4621 = vdwg.mxu0
      %v4622 = vrcp.pop %v4442
      %v4623 = vrcp.pop %v4445
      %v4624 = vrcp.pop %v4448
      %v4625 = vrcp.pop %v4451
      %v4626 = vrcp.pop %v4454
      %v4627 = vrcp.pop %v4457
      %v4628 = vrcp.pop %v4460
      %v4629 = vrcp.pop %v4463
      %v4630 = vrcp.pop %v4466
      %v4631 = vrcp.pop %v4469
      %v4632 = vrcp.pop %v4472
      %v4633 = vrcp.pop %v4475
      %v4634 = vrcp.pop %v4478
      %v4635 = vrcp.pop %v4481
      %v4636 = vrcp.pop %v4484
      %v4637 = vrcp.pop %v4487
      %v4638 = vmul.f32 %v4583, %v4622
      %v4639 = vmul.f32 %v4585, %v4623
      %v4640 = vmul.f32 %v4588, %v4624
      %v4641 = vmul.f32 %v4590, %v4625
      %v4642 = vmul.f32 %v4593, %v4626
      %v4643 = vmul.f32 %v4595, %v4627
      %v4644 = vmul.f32 %v4598, %v4628
      %v4645 = vmul.f32 %v4600, %v4629
      %v4646 = vmul.f32 %v4603, %v4630
      %v4647 = vmul.f32 %v4605, %v4631
      %v4648 = vmul.f32 %v4608, %v4632
      %v4649 = vmul.f32 %v4610, %v4633
      %v4650 = vmul.f32 %v4613, %v4634
      %v4651 = vmul.f32 %v4615, %v4635
      %v4652 = vmul.f32 %v4618, %v4636
      %v4653 = vmul.f32 %v4620, %v4637
      %v4654 = vadd.f32 %v4638, 0.0
      %v4655 = vadd.f32 %v4639, 0.0
      %v4656 = vadd.f32 %v4640, 0.0
      %v4657 = vadd.f32 %v4641, 0.0
      %v4658 = vadd.f32 %v4642, 0.0
      %v4659 = vadd.f32 %v4643, 0.0
      %v4660 = vadd.f32 %v4644, 0.0
      %v4661 = vadd.f32 %v4645, 0.0
      %v4662 = vadd.f32 %v4646, 0.0
      %v4663 = vadd.f32 %v4647, 0.0
      %v4664 = vadd.f32 %v4648, 0.0
      %v4665 = vadd.f32 %v4649, 0.0
      %v4666 = vadd.f32 %v4650, 0.0
      %v4667 = vadd.f32 %v4651, 0.0
      %v4668 = vadd.f32 %v4652, 0.0
      %v4669 = vadd.f32 %v4653, 0.0
      %v4670 = vld [vmem:[#allocation2 + $0x70] sm:$0xff]
      %v4671 = vld [vmem:[#allocation2 + $0x88] sm:$0xff]
      %v4672 = vld [vmem:[#allocation2 + $0xa0] sm:$0xff]
      %v4673 = vld [vmem:[#allocation2 + $0xb8] sm:$0xff]
      %v4674 = vld [vmem:[#allocation2 + $0xd0] sm:$0xff]
      %v4675 = vld [vmem:[#allocation2 + $0xe8] sm:$0xff]
      %v4676 = vld [vmem:[#allocation2 + $0x100] sm:$0xff]
      %v4677 = vld [vmem:[#allocation2 + $0x118] sm:$0xff]
      %v4682 = vunpack.c.l.b16 %v4670
      %v4683 = vunpack.c.h.b16 %v4670
      %v4684 = vunpack.c.l.b16 %v4671
      %v4685 = vunpack.c.h.b16 %v4671
      %v4686 = vunpack.c.l.b16 %v4672
      %v4687 = vunpack.c.h.b16 %v4672
      %v4688 = vunpack.c.l.b16 %v4673
      %v4689 = vunpack.c.h.b16 %v4673
      %v4690 = vpack.c.b16 %v4684, %v4682
      %v4691 = vpack.c.b16 %v4685, %v4683
      %v4692 = vpack.c.b16 %v4688, %v4686
      %v4693 = vpack.c.b16 %v4689, %v4687
      %4698 = vmatpush.bf16.msra.mxu0 0
      %4699 = vmatpush.bf16.msra.mxu0 0
      %4700 = vmatpush.bf16.msra.mxu0 0
      %4701 = vmatpush.bf16.msra.mxu0 0
      %4702 = vmatpush.bf16.msra.mxu0 0
      %4703 = vmatpush.bf16.msra.mxu0 0
      %4704 = vmatpush.bf16.msra.mxu0 %v4692
      %4705 = vmatpush.bf16.msra.mxu0 %v4690
      %4706 = vmatmul.bf16.gmra.mxu0 %v4175
      %v4707 = vpop.f32.mrf.mxu0
      %v4708 = vadd.f32 0.0, %v4707
      %v4709 = vpop.f32.mrf.mxu0
      %v4710 = vadd.f32 0.0, %v4709
      %4711 = vmatmul.bf16.gmra.mxu0 %v4178
      %v4712 = vpop.f32.mrf.mxu0
      %v4713 = vadd.f32 0.0, %v4712
      %v4714 = vpop.f32.mrf.mxu0
      %v4715 = vadd.f32 0.0, %v4714
      %4716 = vmatmul.bf16.gmra.mxu0 %v4181
      %v4717 = vpop.f32.mrf.mxu0
      %v4718 = vadd.f32 0.0, %v4717
      %v4719 = vpop.f32.mrf.mxu0
      %v4720 = vadd.f32 0.0, %v4719
      %4721 = vmatmul.bf16.gmra.mxu0 %v4184
      %v4722 = vpop.f32.mrf.mxu0
      %v4723 = vadd.f32 0.0, %v4722
      %v4724 = vpop.f32.mrf.mxu0
      %v4725 = vadd.f32 0.0, %v4724
      %4726 = vmatmul.bf16.gmra.mxu0 %v4187
      %v4727 = vpop.f32.mrf.mxu0
      %v4728 = vadd.f32 0.0, %v4727
      %v4729 = vpop.f32.mrf.mxu0
      %v4730 = vadd.f32 0.0, %v4729
      %4731 = vmatmul.bf16.gmra.mxu0 %v4190
      %v4732 = vpop.f32.mrf.mxu0
      %v4733 = vadd.f32 0.0, %v4732
      %v4734 = vpop.f32.mrf.mxu0
      %v4735 = vadd.f32 0.0, %v4734
      %4736 = vmatmul.bf16.gmra.mxu0 %v4193
      %v4737 = vpop.f32.mrf.mxu0
      %v4738 = vadd.f32 0.0, %v4737
      %v4739 = vpop.f32.mrf.mxu0
      %v4740 = vadd.f32 0.0, %v4739
      %4741 = vmatmul.bf16.gmra.mxu0 %v4196
      %v4742 = vpop.f32.mrf.mxu0
      %v4743 = vadd.f32 0.0, %v4742
      %v4744 = vpop.f32.mrf.mxu0
      %v4745 = vadd.f32 0.0, %v4744
      %4746 = vdwg.mxu0
      %4747 = vmatpush.bf16.msra.mxu0 0
      %4748 = vmatpush.bf16.msra.mxu0 0
      %4749 = vmatpush.bf16.msra.mxu0 0
      %4750 = vmatpush.bf16.msra.mxu0 0
      %4751 = vmatpush.bf16.msra.mxu0 0
      %4752 = vmatpush.bf16.msra.mxu0 0
      %4753 = vmatpush.bf16.msra.mxu0 %v4693
      %4754 = vmatpush.bf16.msra.mxu0 %v4691
      %4755 = vmatmul.bf16.gmra.mxu0 %v4175
      %v4756 = vpop.f32.mrf.mxu0
      %v4757 = vadd.f32 0.0, %v4756
      %v4758 = vpop.f32.mrf.mxu0
      %v4759 = vadd.f32 0.0, %v4758
      %4760 = vmatmul.bf16.gmra.mxu0 %v4178
      %v4761 = vpop.f32.mrf.mxu0
      %v4762 = vadd.f32 0.0, %v4761
      %v4763 = vpop.f32.mrf.mxu0
      %v4764 = vadd.f32 0.0, %v4763
      %4765 = vmatmul.bf16.gmra.mxu0 %v4181
      %v4766 = vpop.f32.mrf.mxu0
      %v4767 = vadd.f32 0.0, %v4766
      %v4768 = vpop.f32.mrf.mxu0
      %v4769 = vadd.f32 0.0, %v4768
      %4770 = vmatmul.bf16.gmra.mxu0 %v4184
      %v4771 = vpop.f32.mrf.mxu0
      %v4772 = vadd.f32 0.0, %v4771
      %v4773 = vpop.f32.mrf.mxu0
      %v4774 = vadd.f32 0.0, %v4773
      %4775 = vmatmul.bf16.gmra.mxu0 %v4187
      %v4776 = vpop.f32.mrf.mxu0
      %v4777 = vadd.f32 0.0, %v4776
      %v4778 = vpop.f32.mrf.mxu0
      %v4779 = vadd.f32 0.0, %v4778
      %4780 = vmatmul.bf16.gmra.mxu0 %v4190
      %v4781 = vpop.f32.mrf.mxu0
      %v4782 = vadd.f32 0.0, %v4781
      %v4783 = vpop.f32.mrf.mxu0
      %v4784 = vadd.f32 0.0, %v4783
      %4785 = vmatmul.bf16.gmra.mxu0 %v4193
      %v4786 = vpop.f32.mrf.mxu0
      %v4787 = vadd.f32 0.0, %v4786
      %v4788 = vpop.f32.mrf.mxu0
      %v4789 = vadd.f32 0.0, %v4788
      %4790 = vmatmul.bf16.gmra.mxu0 %v4196
      %v4791 = vpop.f32.mrf.mxu0
      %v4792 = vadd.f32 0.0, %v4791
      %v4793 = vpop.f32.mrf.mxu0
      %v4794 = vadd.f32 0.0, %v4793
      %4795 = vdwg.mxu0
      %v4796 = vmax.f32 %v4708, %v4757
      %4797 = vmax.xlane.f32.xlu0 %v4796
      %v4798 = vpop.xlane.xlu0 %4797
      %v4799 = vmax.f32 %v4710, %v4759
      %4800 = vmax.xlane.f32.xlu0 %v4799
      %v4801 = vpop.xlane.xlu0 %4800
      %v4802 = vmax.f32 %v4713, %v4762
      %4803 = vmax.xlane.f32.xlu0 %v4802
      %v4804 = vpop.xlane.xlu0 %4803
      %v4805 = vmax.f32 %v4715, %v4764
      %4806 = vmax.xlane.f32.xlu0 %v4805
      %v4807 = vpop.xlane.xlu0 %4806
      %v4808 = vmax.f32 %v4718, %v4767
      %4809 = vmax.xlane.f32.xlu0 %v4808
      %v4810 = vpop.xlane.xlu0 %4809
      %v4811 = vmax.f32 %v4720, %v4769
      %4812 = vmax.xlane.f32.xlu0 %v4811
      %v4813 = vpop.xlane.xlu0 %4812
      %v4814 = vmax.f32 %v4723, %v4772
      %4815 = vmax.xlane.f32.xlu0 %v4814
      %v4816 = vpop.xlane.xlu0 %4815
      %v4817 = vmax.f32 %v4725, %v4774
      %4818 = vmax.xlane.f32.xlu0 %v4817
      %v4819 = vpop.xlane.xlu0 %4818
      %v4820 = vmax.f32 %v4728, %v4777
      %4821 = vmax.xlane.f32.xlu0 %v4820
      %v4822 = vpop.xlane.xlu0 %4821
      %v4823 = vmax.f32 %v4730, %v4779
      %4824 = vmax.xlane.f32.xlu0 %v4823
      %v4825 = vpop.xlane.xlu0 %4824
      %v4826 = vmax.f32 %v4733, %v4782
      %4827 = vmax.xlane.f32.xlu0 %v4826
      %v4828 = vpop.xlane.xlu0 %4827
      %v4829 = vmax.f32 %v4735, %v4784
      %4830 = vmax.xlane.f32.xlu0 %v4829
      %v4831 = vpop.xlane.xlu0 %4830
      %v4832 = vmax.f32 %v4738, %v4787
      %4833 = vmax.xlane.f32.xlu0 %v4832
      %v4834 = vpop.xlane.xlu0 %4833
      %v4835 = vmax.f32 %v4740, %v4789
      %4836 = vmax.xlane.f32.xlu0 %v4835
      %v4837 = vpop.xlane.xlu0 %4836
      %v4838 = vmax.f32 %v4743, %v4792
      %4839 = vmax.xlane.f32.xlu0 %v4838
      %v4840 = vpop.xlane.xlu0 %4839
      %v4841 = vmax.f32 %v4745, %v4794
      %4842 = vmax.xlane.f32.xlu0 %v4841
      %v4843 = vpop.xlane.xlu0 %4842
      %v4844 = vsub.f32 %v4708, %v4798
      %v4845 = vsub.f32 %v4757, %v4798
      %v4846 = vsub.f32 %v4710, %v4801
      %v4847 = vsub.f32 %v4759, %v4801
      %v4848 = vsub.f32 %v4713, %v4804
      %v4849 = vsub.f32 %v4762, %v4804
      %v4850 = vsub.f32 %v4715, %v4807
      %v4851 = vsub.f32 %v4764, %v4807
      %v4852 = vsub.f32 %v4718, %v4810
      %v4853 = vsub.f32 %v4767, %v4810
      %v4854 = vsub.f32 %v4720, %v4813
      %v4855 = vsub.f32 %v4769, %v4813
      %v4856 = vsub.f32 %v4723, %v4816
      %v4857 = vsub.f32 %v4772, %v4816
      %v4858 = vsub.f32 %v4725, %v4819
      %v4859 = vsub.f32 %v4774, %v4819
      %v4860 = vsub.f32 %v4728, %v4822
      %v4861 = vsub.f32 %v4777, %v4822
      %v4862 = vsub.f32 %v4730, %v4825
      %v4863 = vsub.f32 %v4779, %v4825
      %v4864 = vsub.f32 %v4733, %v4828
      %v4865 = vsub.f32 %v4782, %v4828
      %v4866 = vsub.f32 %v4735, %v4831
      %v4867 = vsub.f32 %v4784, %v4831
      %v4868 = vsub.f32 %v4738, %v4834
      %v4869 = vsub.f32 %v4787, %v4834
      %v4870 = vsub.f32 %v4740, %v4837
      %v4871 = vsub.f32 %v4789, %v4837
      %v4872 = vsub.f32 %v4743, %v4840
      %v4873 = vsub.f32 %v4792, %v4840
      %v4874 = vsub.f32 %v4745, %v4843
      %v4875 = vsub.f32 %v4794, %v4843
      %v4876 = vmul.f32 %v4844, 1.442695
      %v4877 = vpow.pop %v4876
      %v4878 = vmul.f32 %v4845, 1.442695
      %v4879 = vpow.pop %v4878
      %v4880 = vmul.f32 %v4846, 1.442695
      %v4881 = vpow.pop %v4880
      %v4882 = vmul.f32 %v4847, 1.442695
      %v4883 = vpow.pop %v4882
      %v4884 = vmul.f32 %v4848, 1.442695
      %v4885 = vpow.pop %v4884
      %v4886 = vmul.f32 %v4849, 1.442695
      %v4887 = vpow.pop %v4886
      %v4888 = vmul.f32 %v4850, 1.442695
      %v4889 = vpow.pop %v4888
      %v4890 = vmul.f32 %v4851, 1.442695
      %v4891 = vpow.pop %v4890
      %v4892 = vmul.f32 %v4852, 1.442695
      %v4893 = vpow.pop %v4892
      %v4894 = vmul.f32 %v4853, 1.442695
      %v4895 = vpow.pop %v4894
      %v4896 = vmul.f32 %v4854, 1.442695
      %v4897 = vpow.pop %v4896
      %v4898 = vmul.f32 %v4855, 1.442695
      %v4899 = vpow.pop %v4898
      %v4900 = vmul.f32 %v4856, 1.442695
      %v4901 = vpow.pop %v4900
      %v4902 = vmul.f32 %v4857, 1.442695
      %v4903 = vpow.pop %v4902
      %v4904 = vmul.f32 %v4858, 1.442695
      %v4905 = vpow.pop %v4904
      %v4906 = vmul.f32 %v4859, 1.442695
      %v4907 = vpow.pop %v4906
      %v4908 = vmul.f32 %v4860, 1.442695
      %v4909 = vpow.pop %v4908
      %v4910 = vmul.f32 %v4861, 1.442695
      %v4911 = vpow.pop %v4910
      %v4912 = vmul.f32 %v4862, 1.442695
      %v4913 = vpow.pop %v4912
      %v4914 = vmul.f32 %v4863, 1.442695
      %v4915 = vpow.pop %v4914
      %v4916 = vmul.f32 %v4864, 1.442695
      %v4917 = vpow.pop %v4916
      %v4918 = vmul.f32 %v4865, 1.442695
      %v4919 = vpow.pop %v4918
      %v4920 = vmul.f32 %v4866, 1.442695
      %v4921 = vpow.pop %v4920
      %v4922 = vmul.f32 %v4867, 1.442695
      %v4923 = vpow.pop %v4922
      %v4924 = vmul.f32 %v4868, 1.442695
      %v4925 = vpow.pop %v4924
      %v4926 = vmul.f32 %v4869, 1.442695
      %v4927 = vpow.pop %v4926
      %v4928 = vmul.f32 %v4870, 1.442695
      %v4929 = vpow.pop %v4928
      %v4930 = vmul.f32 %v4871, 1.442695
      %v4931 = vpow.pop %v4930
      %v4932 = vmul.f32 %v4872, 1.442695
      %v4933 = vpow.pop %v4932
      %v4934 = vmul.f32 %v4873, 1.442695
      %v4935 = vpow.pop %v4934
      %v4936 = vmul.f32 %v4874, 1.442695
      %v4937 = vpow.pop %v4936
      %v4938 = vmul.f32 %v4875, 1.442695
      %v4939 = vpow.pop %v4938
      %v4940 = vadd.f32 %v4877, %v4879
      %4941 = vadd.xlane.f32.xlu0 %v4940
      %v4942 = vpop.xlane.xlu0 %4941
      %v4943 = vadd.f32 %v4881, %v4883
      %4944 = vadd.xlane.f32.xlu0 %v4943
      %v4945 = vpop.xlane.xlu0 %4944
      %v4946 = vadd.f32 %v4885, %v4887
      %4947 = vadd.xlane.f32.xlu0 %v4946
      %v4948 = vpop.xlane.xlu0 %4947
      %v4949 = vadd.f32 %v4889, %v4891
      %4950 = vadd.xlane.f32.xlu0 %v4949
      %v4951 = vpop.xlane.xlu0 %4950
      %v4952 = vadd.f32 %v4893, %v4895
      %4953 = vadd.xlane.f32.xlu0 %v4952
      %v4954 = vpop.xlane.xlu0 %4953
      %v4955 = vadd.f32 %v4897, %v4899
      %4956 = vadd.xlane.f32.xlu0 %v4955
      %v4957 = vpop.xlane.xlu0 %4956
      %v4958 = vadd.f32 %v4901, %v4903
      %4959 = vadd.xlane.f32.xlu0 %v4958
      %v4960 = vpop.xlane.xlu0 %4959
      %v4961 = vadd.f32 %v4905, %v4907
      %4962 = vadd.xlane.f32.xlu0 %v4961
      %v4963 = vpop.xlane.xlu0 %4962
      %v4964 = vadd.f32 %v4909, %v4911
      %4965 = vadd.xlane.f32.xlu0 %v4964
      %v4966 = vpop.xlane.xlu0 %4965
      %v4967 = vadd.f32 %v4913, %v4915
      %4968 = vadd.xlane.f32.xlu0 %v4967
      %v4969 = vpop.xlane.xlu0 %4968
      %v4970 = vadd.f32 %v4917, %v4919
      %4971 = vadd.xlane.f32.xlu0 %v4970
      %v4972 = vpop.xlane.xlu0 %4971
      %v4973 = vadd.f32 %v4921, %v4923
      %4974 = vadd.xlane.f32.xlu0 %v4973
      %v4975 = vpop.xlane.xlu0 %4974
      %v4976 = vadd.f32 %v4925, %v4927
      %4977 = vadd.xlane.f32.xlu0 %v4976
      %v4978 = vpop.xlane.xlu0 %4977
      %v4979 = vadd.f32 %v4929, %v4931
      %4980 = vadd.xlane.f32.xlu0 %v4979
      %v4981 = vpop.xlane.xlu0 %4980
      %v4982 = vadd.f32 %v4933, %v4935
      %4983 = vadd.xlane.f32.xlu0 %v4982
      %v4984 = vpop.xlane.xlu0 %4983
      %v4985 = vadd.f32 %v4937, %v4939
      %4986 = vadd.xlane.f32.xlu0 %v4985
      %v4987 = vpop.xlane.xlu0 %4986
      %v4988 = vpack.c.bf16 %v4881, %v4877
      %v4989 = vpack.c.bf16 %v4883, %v4879
      %v4990 = vpack.c.bf16 %v4889, %v4885
      %v4991 = vpack.c.bf16 %v4891, %v4887
      %v4992 = vpack.c.bf16 %v4897, %v4893
      %v4993 = vpack.c.bf16 %v4899, %v4895
      %v4994 = vpack.c.bf16 %v4905, %v4901
      %v4995 = vpack.c.bf16 %v4907, %v4903
      %v4996 = vpack.c.bf16 %v4913, %v4909
      %v4997 = vpack.c.bf16 %v4915, %v4911
      %v4998 = vpack.c.bf16 %v4921, %v4917
      %v4999 = vpack.c.bf16 %v4923, %v4919
      %v5000 = vpack.c.bf16 %v4929, %v4925
      %v5001 = vpack.c.bf16 %v4931, %v4927
      %v5002 = vpack.c.bf16 %v4937, %v4933
      %v5003 = vpack.c.bf16 %v4939, %v4935
      %v5008 = vunpack.c.l.b16 %v4674
      %v5009 = vunpack.c.h.b16 %v4674
      %v5010 = vunpack.c.l.b16 %v4675
      %v5011 = vunpack.c.h.b16 %v4675
      %v5012 = vunpack.c.l.b16 %v4676
      %v5013 = vunpack.c.h.b16 %v4676
      %v5014 = vunpack.c.l.b16 %v4677
      %v5015 = vunpack.c.h.b16 %v4677
      %v5016 = vpack.c.b16 %v5010, %v5008
      %v5017 = vpack.c.b16 %v5011, %v5009
      %v5018 = vpack.c.b16 %v5014, %v5012
      %v5019 = vpack.c.b16 %v5015, %v5013
      %5024 = vmatpush.bf16.xpose.msra.mxu0 0
      %5025 = vmatpush.bf16.xpose.msra.mxu0 0
      %5026 = vmatpush.bf16.xpose.msra.mxu0 0
      %5027 = vmatpush.bf16.xpose.msra.mxu0 0
      %5028 = vmatpush.bf16.xpose.msra.mxu0 0
      %5029 = vmatpush.bf16.xpose.msra.mxu0 0
      %5030 = vmatpush.bf16.xpose.msra.mxu0 %v5018
      %5031 = vmatpush.bf16.xpose.msra.mxu0 %v5016
      %5032 = vmatmul.bf16.gmra.mxu0 %v4988
      %v5033 = vpop.f32.mrf.mxu0
      %v5034 = vadd.f32 0.0, %v5033
      %v5035 = vpop.f32.mrf.mxu0
      %v5036 = vadd.f32 0.0, %v5035
      %5037 = vmatmul.bf16.gmra.mxu0 %v4990
      %v5038 = vpop.f32.mrf.mxu0
      %v5039 = vadd.f32 0.0, %v5038
      %v5040 = vpop.f32.mrf.mxu0
      %v5041 = vadd.f32 0.0, %v5040
      %5042 = vmatmul.bf16.gmra.mxu0 %v4992
      %v5043 = vpop.f32.mrf.mxu0
      %v5044 = vadd.f32 0.0, %v5043
      %v5045 = vpop.f32.mrf.mxu0
      %v5046 = vadd.f32 0.0, %v5045
      %5047 = vmatmul.bf16.gmra.mxu0 %v4994
      %v5048 = vpop.f32.mrf.mxu0
      %v5049 = vadd.f32 0.0, %v5048
      %v5050 = vpop.f32.mrf.mxu0
      %v5051 = vadd.f32 0.0, %v5050
      %5052 = vmatmul.bf16.gmra.mxu0 %v4996
      %v5053 = vpop.f32.mrf.mxu0
      %v5054 = vadd.f32 0.0, %v5053
      %v5055 = vpop.f32.mrf.mxu0
      %v5056 = vadd.f32 0.0, %v5055
      %5057 = vmatmul.bf16.gmra.mxu0 %v4998
      %v5058 = vpop.f32.mrf.mxu0
      %v5059 = vadd.f32 0.0, %v5058
      %v5060 = vpop.f32.mrf.mxu0
      %v5061 = vadd.f32 0.0, %v5060
      %5062 = vmatmul.bf16.gmra.mxu0 %v5000
      %v5063 = vpop.f32.mrf.mxu0
      %v5064 = vadd.f32 0.0, %v5063
      %v5065 = vpop.f32.mrf.mxu0
      %v5066 = vadd.f32 0.0, %v5065
      %5067 = vmatmul.bf16.gmra.mxu0 %v5002
      %v5068 = vpop.f32.mrf.mxu0
      %v5069 = vadd.f32 0.0, %v5068
      %v5070 = vpop.f32.mrf.mxu0
      %v5071 = vadd.f32 0.0, %v5070
      %5072 = vdwg.mxu0
      %5073 = vmatpush.bf16.xpose.msra.mxu0 0
      %5074 = vmatpush.bf16.xpose.msra.mxu0 0
      %5075 = vmatpush.bf16.xpose.msra.mxu0 0
      %5076 = vmatpush.bf16.xpose.msra.mxu0 0
      %5077 = vmatpush.bf16.xpose.msra.mxu0 0
      %5078 = vmatpush.bf16.xpose.msra.mxu0 0
      %5079 = vmatpush.bf16.xpose.msra.mxu0 %v5019
      %5080 = vmatpush.bf16.xpose.msra.mxu0 %v5017
      %5081 = vmatmul.bf16.gmra.mxu0 %v4989
      %v5082 = vpop.f32.mrf.mxu0
      %v5083 = vadd.f32 %v5034, %v5082
      %v5084 = vpop.f32.mrf.mxu0
      %v5085 = vadd.f32 %v5036, %v5084
      %5086 = vmatmul.bf16.gmra.mxu0 %v4991
      %v5087 = vpop.f32.mrf.mxu0
      %v5088 = vadd.f32 %v5039, %v5087
      %v5089 = vpop.f32.mrf.mxu0
      %v5090 = vadd.f32 %v5041, %v5089
      %5091 = vmatmul.bf16.gmra.mxu0 %v4993
      %v5092 = vpop.f32.mrf.mxu0
      %v5093 = vadd.f32 %v5044, %v5092
      %v5094 = vpop.f32.mrf.mxu0
      %v5095 = vadd.f32 %v5046, %v5094
      %5096 = vmatmul.bf16.gmra.mxu0 %v4995
      %v5097 = vpop.f32.mrf.mxu0
      %v5098 = vadd.f32 %v5049, %v5097
      %v5099 = vpop.f32.mrf.mxu0
      %v5100 = vadd.f32 %v5051, %v5099
      %5101 = vmatmul.bf16.gmra.mxu0 %v4997
      %v5102 = vpop.f32.mrf.mxu0
      %v5103 = vadd.f32 %v5054, %v5102
      %v5104 = vpop.f32.mrf.mxu0
      %v5105 = vadd.f32 %v5056, %v5104
      %5106 = vmatmul.bf16.gmra.mxu0 %v4999
      %v5107 = vpop.f32.mrf.mxu0
      %v5108 = vadd.f32 %v5059, %v5107
      %v5109 = vpop.f32.mrf.mxu0
      %v5110 = vadd.f32 %v5061, %v5109
      %5111 = vmatmul.bf16.gmra.mxu0 %v5001
      %v5112 = vpop.f32.mrf.mxu0
      %v5113 = vadd.f32 %v5064, %v5112
      %v5114 = vpop.f32.mrf.mxu0
      %v5115 = vadd.f32 %v5066, %v5114
      %5116 = vmatmul.bf16.gmra.mxu0 %v5003
      %v5117 = vpop.f32.mrf.mxu0
      %v5118 = vadd.f32 %v5069, %v5117
      %v5119 = vpop.f32.mrf.mxu0
      %v5120 = vadd.f32 %v5071, %v5119
      %5121 = vdwg.mxu0
      %v5122 = vrcp.pop %v4942
      %v5123 = vrcp.pop %v4945
      %v5124 = vrcp.pop %v4948
      %v5125 = vrcp.pop %v4951
      %v5126 = vrcp.pop %v4954
      %v5127 = vrcp.pop %v4957
      %v5128 = vrcp.pop %v4960
      %v5129 = vrcp.pop %v4963
      %v5130 = vrcp.pop %v4966
      %v5131 = vrcp.pop %v4969
      %v5132 = vrcp.pop %v4972
      %v5133 = vrcp.pop %v4975
      %v5134 = vrcp.pop %v4978
      %v5135 = vrcp.pop %v4981
      %v5136 = vrcp.pop %v4984
      %v5137 = vrcp.pop %v4987
      %v5138 = vmul.f32 %v5083, %v5122
      %v5139 = vmul.f32 %v5085, %v5123
      %v5140 = vmul.f32 %v5088, %v5124
      %v5141 = vmul.f32 %v5090, %v5125
      %v5142 = vmul.f32 %v5093, %v5126
      %v5143 = vmul.f32 %v5095, %v5127
      %v5144 = vmul.f32 %v5098, %v5128
      %v5145 = vmul.f32 %v5100, %v5129
      %v5146 = vmul.f32 %v5103, %v5130
      %v5147 = vmul.f32 %v5105, %v5131
      %v5148 = vmul.f32 %v5108, %v5132
      %v5149 = vmul.f32 %v5110, %v5133
      %v5150 = vmul.f32 %v5113, %v5134
      %v5151 = vmul.f32 %v5115, %v5135
      %v5152 = vmul.f32 %v5118, %v5136
      %v5153 = vmul.f32 %v5120, %v5137
      %v5154 = vadd.f32 %v4654, %v5138
      %v5155 = vadd.f32 %v4655, %v5139
      %v5156 = vadd.f32 %v4656, %v5140
      %v5157 = vadd.f32 %v4657, %v5141
      %v5158 = vadd.f32 %v4658, %v5142
      %v5159 = vadd.f32 %v4659, %v5143
      %v5160 = vadd.f32 %v4660, %v5144
      %v5161 = vadd.f32 %v4661, %v5145
      %v5162 = vadd.f32 %v4662, %v5146
      %v5163 = vadd.f32 %v4663, %v5147
      %v5164 = vadd.f32 %v4664, %v5148
      %v5165 = vadd.f32 %v4665, %v5149
      %v5166 = vadd.f32 %v4666, %v5150
      %v5167 = vadd.f32 %v4667, %v5151
      %v5168 = vadd.f32 %v4668, %v5152
      %v5169 = vadd.f32 %v4669, %v5153
      %v5170 = vpack.c.bf16 %v5155, %v5154
      %v5171 = vpack.c.bf16 %v5157, %v5156
      %v5172 = vpack.c.bf16 %v5159, %v5158
      %v5173 = vpack.c.bf16 %v5161, %v5160
      %v5174 = vpack.c.bf16 %v5163, %v5162
      %v5175 = vpack.c.bf16 %v5165, %v5164
      %v5176 = vpack.c.bf16 %v5167, %v5166
      %v5177 = vpack.c.bf16 %v5169, %v5168
      %v5179 = vsel %vm376, %v5170, 0
      %v5182 = vsel %vm376, %v5171, 0
      %v5185 = vsel %vm376, %v5172, 0
      %v5188 = vsel %vm376, %v5173, 0
      %v5191 = vsel %vm376, %v5174, 0
      %v5194 = vsel %vm376, %v5175, 0
      %v5197 = vsel %vm376, %v5176, 0
      %v5200 = vsel %vm376, %v5177, 0
      %5202 = vmatpush.bf16.xpose.msra.mxu0 %v5200
      %5203 = vmatpush.bf16.xpose.msra.mxu0 %v5197
      %5204 = vmatpush.bf16.xpose.msra.mxu0 %v5194
      %5205 = vmatpush.bf16.xpose.msra.mxu0 %v5191
      %5206 = vmatpush.bf16.xpose.msra.mxu0 %v5188
      %5207 = vmatpush.bf16.xpose.msra.mxu0 %v5185
      %5208 = vmatpush.bf16.xpose.msra.mxu0 %v5182
      %5209 = vmatpush.bf16.xpose.msra.mxu0 %v5179
      %5210 = vmatmul.bf16.gmra.mxu0 %v1784
      %v5211 = vpop.f32.mrf.mxu0
      %v5212 = vadd.f32 0.0, %v5211
      %v5213 = vpop.f32.mrf.mxu0
      %v5214 = vadd.f32 0.0, %v5213
      %5215 = vmatmul.bf16.gmra.mxu0 %v1787
      %v5216 = vpop.f32.mrf.mxu0
      %v5217 = vadd.f32 0.0, %v5216
      %v5218 = vpop.f32.mrf.mxu0
      %v5219 = vadd.f32 0.0, %v5218
      %5220 = vdwg.mxu0
      %v5221 = vld [vmem:[%s219 + $0x18] sm:$0xff]
      %v5222 = vld [vmem:[%s219 + $0x48] sm:$0xff]
      %v5223 = vld [vmem:[%s219 + $0x78] sm:$0xff]
      %v5224 = vld [vmem:[%s219 + $0xa8] sm:$0xff]
      %v5225 = vadd.f32 %v5221, %v5212
      %v5226 = vadd.f32 %v5222, %v5214
      %v5227 = vadd.f32 %v5223, %v5217
      %v5228 = vadd.f32 %v5224, %v5219
      %v5229 = vadd.f32 %v5225, %v1843
      %v5230 = vadd.f32 %v5226, %v1848
      %v5231 = vadd.f32 %v5227, %v1853
      %v5232 = vadd.f32 %v5228, %v1858
      %5233 = vst [vmem:[%s224 + $0x18] sm:$0xff] %v5229
      %5234 = vst [vmem:[%s224 + $0x48] sm:$0xff] %v5230
      %5235 = vst [vmem:[%s224 + $0x78] sm:$0xff] %v5231
      %5236 = vst [vmem:[%s224 + $0xa8] sm:$0xff] %v5232
      %v5237 = vld [vmem:[#allocation2 + $0x10] sm:$0xf]
      %v5238 = vld [vmem:[#allocation2 + $0x28] sm:$0xf]
      %v5239 = vld [vmem:[#allocation2 + $0x40] sm:$0xf]
      %v5240 = vld [vmem:[#allocation2 + $0x58] sm:$0xf]
      %v5241 = vld [vmem:[#allocation2 + $0x60] sm:$0xff]
      %v5242 = vld [vmem:[#allocation2 + $0x78] sm:$0xff]
      %v5243 = vld [vmem:[#allocation2 + $0x90] sm:$0xff]
      %v5244 = vld [vmem:[#allocation2 + $0xa8] sm:$0xff]
      %v5245 = vld [vmem:[#allocation2 + $0xc0] sm:$0xff]
      %v5246 = vld [vmem:[#allocation2 + $0xd8] sm:$0xff]
      %v5247 = vld [vmem:[#allocation2 + $0xf0] sm:$0xff]
      %v5248 = vld [vmem:[#allocation2 + $0x108] sm:$0xff]
      %v5253 = vunpack.c.l.b16 %v5237
      %v5254 = vunpack.c.l.b16 %v5238
      %v5255 = vunpack.c.l.b16 %v5239
      %v5256 = vunpack.c.l.b16 %v5240
      %v5257 = vpack.c.b16 %v5254, %v5253
      %v5258 = vpack.c.b16 %v5256, %v5255
      %5261 = vxpose.xlu0.c.b16.start [1/8] %v5257, 128
      %5262 = vxpose.xlu0.c.b16.cont [2/8] %v5258, 128
      %5263 = vxpose.xlu0.c.b16.cont [3/8] 0, 128
      %5264 = vxpose.xlu0.c.b16.cont [4/8] 0, 128
      %5265 = vxpose.xlu0.c.b16.cont [5/8] 0, 128
      %5266 = vxpose.xlu0.c.b16.cont [6/8] 0, 128
      %5267 = vxpose.xlu0.c.b16.cont [7/8] 0, 128
      %5268 = vxpose.xlu0.c.b16.end [8/8] 0, 128
      %v5269 = vpop.trf.xlu0
      %v5270 = vpop.trf.xlu0
      %v5271 = vpop.trf.xlu0
      %v5272 = vpop.trf.xlu0
      %v5273 = vpop.trf.xlu0
      %v5274 = vpop.trf.xlu0
      %v5275 = vpop.trf.xlu0
      %v5276 = vpop.trf.xlu0
      %v5281 = vunpack.c.l.b16 %v5241
      %v5282 = vunpack.c.h.b16 %v5241
      %v5283 = vunpack.c.l.b16 %v5242
      %v5284 = vunpack.c.h.b16 %v5242
      %v5285 = vunpack.c.l.b16 %v5243
      %v5286 = vunpack.c.h.b16 %v5243
      %v5287 = vunpack.c.l.b16 %v5244
      %v5288 = vunpack.c.h.b16 %v5244
      %v5289 = vpack.c.b16 %v5283, %v5281
      %v5290 = vpack.c.b16 %v5284, %v5282
      %v5291 = vpack.c.b16 %v5287, %v5285
      %v5292 = vpack.c.b16 %v5288, %v5286
      %v5298 = vsel %vm376, %v5269, 0
      %v5301 = vsel %vm376, %v5270, 0
      %v5304 = vsel %vm376, %v5271, 0
      %v5307 = vsel %vm376, %v5272, 0
      %v5310 = vsel %vm376, %v5273, 0
      %v5313 = vsel %vm376, %v5274, 0
      %v5316 = vsel %vm376, %v5275, 0
      %v5319 = vsel %vm376, %v5276, 0
      %5321 = vmatpush.bf16.msra.mxu0 0
      %5322 = vmatpush.bf16.msra.mxu0 0
      %5323 = vmatpush.bf16.msra.mxu0 0
      %5324 = vmatpush.bf16.msra.mxu0 0
      %5325 = vmatpush.bf16.msra.mxu0 0
      %5326 = vmatpush.bf16.msra.mxu0 0
      %5327 = vmatpush.bf16.msra.mxu0 %v5291
      %5328 = vmatpush.bf16.msra.mxu0 %v5289
      %5329 = vmatmul.bf16.gmra.mxu0 %v5298
      %v5330 = vpop.f32.mrf.mxu0
      %v5331 = vadd.f32 0.0, %v5330
      %v5332 = vpop.f32.mrf.mxu0
      %v5333 = vadd.f32 0.0, %v5332
      %5334 = vmatmul.bf16.gmra.mxu0 %v5301
      %v5335 = vpop.f32.mrf.mxu0
      %v5336 = vadd.f32 0.0, %v5335
      %v5337 = vpop.f32.mrf.mxu0
      %v5338 = vadd.f32 0.0, %v5337
      %5339 = vmatmul.bf16.gmra.mxu0 %v5304
      %v5340 = vpop.f32.mrf.mxu0
      %v5341 = vadd.f32 0.0, %v5340
      %v5342 = vpop.f32.mrf.mxu0
      %v5343 = vadd.f32 0.0, %v5342
      %5344 = vmatmul.bf16.gmra.mxu0 %v5307
      %v5345 = vpop.f32.mrf.mxu0
      %v5346 = vadd.f32 0.0, %v5345
      %v5347 = vpop.f32.mrf.mxu0
      %v5348 = vadd.f32 0.0, %v5347
      %5349 = vmatmul.bf16.gmra.mxu0 %v5310
      %v5350 = vpop.f32.mrf.mxu0
      %v5351 = vadd.f32 0.0, %v5350
      %v5352 = vpop.f32.mrf.mxu0
      %v5353 = vadd.f32 0.0, %v5352
      %5354 = vmatmul.bf16.gmra.mxu0 %v5313
      %v5355 = vpop.f32.mrf.mxu0
      %v5356 = vadd.f32 0.0, %v5355
      %v5357 = vpop.f32.mrf.mxu0
      %v5358 = vadd.f32 0.0, %v5357
      %5359 = vmatmul.bf16.gmra.mxu0 %v5316
      %v5360 = vpop.f32.mrf.mxu0
      %v5361 = vadd.f32 0.0, %v5360
      %v5362 = vpop.f32.mrf.mxu0
      %v5363 = vadd.f32 0.0, %v5362
      %5364 = vmatmul.bf16.gmra.mxu0 %v5319
      %v5365 = vpop.f32.mrf.mxu0
      %v5366 = vadd.f32 0.0, %v5365
      %v5367 = vpop.f32.mrf.mxu0
      %v5368 = vadd.f32 0.0, %v5367
      %5369 = vdwg.mxu0
      %5370 = vmatpush.bf16.msra.mxu0 0
      %5371 = vmatpush.bf16.msra.mxu0 0
      %5372 = vmatpush.bf16.msra.mxu0 0
      %5373 = vmatpush.bf16.msra.mxu0 0
      %5374 = vmatpush.bf16.msra.mxu0 0
      %5375 = vmatpush.bf16.msra.mxu0 0
      %5376 = vmatpush.bf16.msra.mxu0 %v5292
      %5377 = vmatpush.bf16.msra.mxu0 %v5290
      %5378 = vmatmul.bf16.gmra.mxu0 %v5298
      %v5379 = vpop.f32.mrf.mxu0
      %v5380 = vadd.f32 0.0, %v5379
      %v5381 = vpop.f32.mrf.mxu0
      %v5382 = vadd.f32 0.0, %v5381
      %5383 = vmatmul.bf16.gmra.mxu0 %v5301
      %v5384 = vpop.f32.mrf.mxu0
      %v5385 = vadd.f32 0.0, %v5384
      %v5386 = vpop.f32.mrf.mxu0
      %v5387 = vadd.f32 0.0, %v5386
      %5388 = vmatmul.bf16.gmra.mxu0 %v5304
      %v5389 = vpop.f32.mrf.mxu0
      %v5390 = vadd.f32 0.0, %v5389
      %v5391 = vpop.f32.mrf.mxu0
      %v5392 = vadd.f32 0.0, %v5391
      %5393 = vmatmul.bf16.gmra.mxu0 %v5307
      %v5394 = vpop.f32.mrf.mxu0
      %v5395 = vadd.f32 0.0, %v5394
      %v5396 = vpop.f32.mrf.mxu0
      %v5397 = vadd.f32 0.0, %v5396
      %5398 = vmatmul.bf16.gmra.mxu0 %v5310
      %v5399 = vpop.f32.mrf.mxu0
      %v5400 = vadd.f32 0.0, %v5399
      %v5401 = vpop.f32.mrf.mxu0
      %v5402 = vadd.f32 0.0, %v5401
      %5403 = vmatmul.bf16.gmra.mxu0 %v5313
      %v5404 = vpop.f32.mrf.mxu0
      %v5405 = vadd.f32 0.0, %v5404
      %v5406 = vpop.f32.mrf.mxu0
      %v5407 = vadd.f32 0.0, %v5406
      %5408 = vmatmul.bf16.gmra.mxu0 %v5316
      %v5409 = vpop.f32.mrf.mxu0
      %v5410 = vadd.f32 0.0, %v5409
      %v5411 = vpop.f32.mrf.mxu0
      %v5412 = vadd.f32 0.0, %v5411
      %5413 = vmatmul.bf16.gmra.mxu0 %v5319
      %v5414 = vpop.f32.mrf.mxu0
      %v5415 = vadd.f32 0.0, %v5414
      %v5416 = vpop.f32.mrf.mxu0
      %v5417 = vadd.f32 0.0, %v5416
      %5418 = vdwg.mxu0
      %v5419 = vmax.f32 %v5331, %v5380
      %5420 = vmax.xlane.f32.xlu0 %v5419
      %v5421 = vpop.xlane.xlu0 %5420
      %v5422 = vmax.f32 %v5333, %v5382
      %5423 = vmax.xlane.f32.xlu0 %v5422
      %v5424 = vpop.xlane.xlu0 %5423
      %v5425 = vmax.f32 %v5336, %v5385
      %5426 = vmax.xlane.f32.xlu0 %v5425
      %v5427 = vpop.xlane.xlu0 %5426
      %v5428 = vmax.f32 %v5338, %v5387
      %5429 = vmax.xlane.f32.xlu0 %v5428
      %v5430 = vpop.xlane.xlu0 %5429
      %v5431 = vmax.f32 %v5341, %v5390
      %5432 = vmax.xlane.f32.xlu0 %v5431
      %v5433 = vpop.xlane.xlu0 %5432
      %v5434 = vmax.f32 %v5343, %v5392
      %5435 = vmax.xlane.f32.xlu0 %v5434
      %v5436 = vpop.xlane.xlu0 %5435
      %v5437 = vmax.f32 %v5346, %v5395
      %5438 = vmax.xlane.f32.xlu0 %v5437
      %v5439 = vpop.xlane.xlu0 %5438
      %v5440 = vmax.f32 %v5348, %v5397
      %5441 = vmax.xlane.f32.xlu0 %v5440
      %v5442 = vpop.xlane.xlu0 %5441
      %v5443 = vmax.f32 %v5351, %v5400
      %5444 = vmax.xlane.f32.xlu0 %v5443
      %v5445 = vpop.xlane.xlu0 %5444
      %v5446 = vmax.f32 %v5353, %v5402
      %5447 = vmax.xlane.f32.xlu0 %v5446
      %v5448 = vpop.xlane.xlu0 %5447
      %v5449 = vmax.f32 %v5356, %v5405
      %5450 = vmax.xlane.f32.xlu0 %v5449
      %v5451 = vpop.xlane.xlu0 %5450
      %v5452 = vmax.f32 %v5358, %v5407
      %5453 = vmax.xlane.f32.xlu0 %v5452
      %v5454 = vpop.xlane.xlu0 %5453
      %v5455 = vmax.f32 %v5361, %v5410
      %5456 = vmax.xlane.f32.xlu0 %v5455
      %v5457 = vpop.xlane.xlu0 %5456
      %v5458 = vmax.f32 %v5363, %v5412
      %5459 = vmax.xlane.f32.xlu0 %v5458
      %v5460 = vpop.xlane.xlu0 %5459
      %v5461 = vmax.f32 %v5366, %v5415
      %5462 = vmax.xlane.f32.xlu0 %v5461
      %v5463 = vpop.xlane.xlu0 %5462
      %v5464 = vmax.f32 %v5368, %v5417
      %5465 = vmax.xlane.f32.xlu0 %v5464
      %v5466 = vpop.xlane.xlu0 %5465
      %v5467 = vsub.f32 %v5331, %v5421
      %v5468 = vsub.f32 %v5380, %v5421
      %v5469 = vsub.f32 %v5333, %v5424
      %v5470 = vsub.f32 %v5382, %v5424
      %v5471 = vsub.f32 %v5336, %v5427
      %v5472 = vsub.f32 %v5385, %v5427
      %v5473 = vsub.f32 %v5338, %v5430
      %v5474 = vsub.f32 %v5387, %v5430
      %v5475 = vsub.f32 %v5341, %v5433
      %v5476 = vsub.f32 %v5390, %v5433
      %v5477 = vsub.f32 %v5343, %v5436
      %v5478 = vsub.f32 %v5392, %v5436
      %v5479 = vsub.f32 %v5346, %v5439
      %v5480 = vsub.f32 %v5395, %v5439
      %v5481 = vsub.f32 %v5348, %v5442
      %v5482 = vsub.f32 %v5397, %v5442
      %v5483 = vsub.f32 %v5351, %v5445
      %v5484 = vsub.f32 %v5400, %v5445
      %v5485 = vsub.f32 %v5353, %v5448
      %v5486 = vsub.f32 %v5402, %v5448
      %v5487 = vsub.f32 %v5356, %v5451
      %v5488 = vsub.f32 %v5405, %v5451
      %v5489 = vsub.f32 %v5358, %v5454
      %v5490 = vsub.f32 %v5407, %v5454
      %v5491 = vsub.f32 %v5361, %v5457
      %v5492 = vsub.f32 %v5410, %v5457
      %v5493 = vsub.f32 %v5363, %v5460
      %v5494 = vsub.f32 %v5412, %v5460
      %v5495 = vsub.f32 %v5366, %v5463
      %v5496 = vsub.f32 %v5415, %v5463
      %v5497 = vsub.f32 %v5368, %v5466
      %v5498 = vsub.f32 %v5417, %v5466
      %v5499 = vmul.f32 %v5467, 1.442695
      %v5500 = vpow.pop %v5499
      %v5501 = vmul.f32 %v5468, 1.442695
      %v5502 = vpow.pop %v5501
      %v5503 = vmul.f32 %v5469, 1.442695
      %v5504 = vpow.pop %v5503
      %v5505 = vmul.f32 %v5470, 1.442695
      %v5506 = vpow.pop %v5505
      %v5507 = vmul.f32 %v5471, 1.442695
      %v5508 = vpow.pop %v5507
      %v5509 = vmul.f32 %v5472, 1.442695
      %v5510 = vpow.pop %v5509
      %v5511 = vmul.f32 %v5473, 1.442695
      %v5512 = vpow.pop %v5511
      %v5513 = vmul.f32 %v5474, 1.442695
      %v5514 = vpow.pop %v5513
      %v5515 = vmul.f32 %v5475, 1.442695
      %v5516 = vpow.pop %v5515
      %v5517 = vmul.f32 %v5476, 1.442695
      %v5518 = vpow.pop %v5517
      %v5519 = vmul.f32 %v5477, 1.442695
      %v5520 = vpow.pop %v5519
      %v5521 = vmul.f32 %v5478, 1.442695
      %v5522 = vpow.pop %v5521
      %v5523 = vmul.f32 %v5479, 1.442695
      %v5524 = vpow.pop %v5523
      %v5525 = vmul.f32 %v5480, 1.442695
      %v5526 = vpow.pop %v5525
      %v5527 = vmul.f32 %v5481, 1.442695
      %v5528 = vpow.pop %v5527
      %v5529 = vmul.f32 %v5482, 1.442695
      %v5530 = vpow.pop %v5529
      %v5531 = vmul.f32 %v5483, 1.442695
      %v5532 = vpow.pop %v5531
      %v5533 = vmul.f32 %v5484, 1.442695
      %v5534 = vpow.pop %v5533
      %v5535 = vmul.f32 %v5485, 1.442695
      %v5536 = vpow.pop %v5535
      %v5537 = vmul.f32 %v5486, 1.442695
      %v5538 = vpow.pop %v5537
      %v5539 = vmul.f32 %v5487, 1.442695
      %v5540 = vpow.pop %v5539
      %v5541 = vmul.f32 %v5488, 1.442695
      %v5542 = vpow.pop %v5541
      %v5543 = vmul.f32 %v5489, 1.442695
      %v5544 = vpow.pop %v5543
      %v5545 = vmul.f32 %v5490, 1.442695
      %v5546 = vpow.pop %v5545
      %v5547 = vmul.f32 %v5491, 1.442695
      %v5548 = vpow.pop %v5547
      %v5549 = vmul.f32 %v5492, 1.442695
      %v5550 = vpow.pop %v5549
      %v5551 = vmul.f32 %v5493, 1.442695
      %v5552 = vpow.pop %v5551
      %v5553 = vmul.f32 %v5494, 1.442695
      %v5554 = vpow.pop %v5553
      %v5555 = vmul.f32 %v5495, 1.442695
      %v5556 = vpow.pop %v5555
      %v5557 = vmul.f32 %v5496, 1.442695
      %v5558 = vpow.pop %v5557
      %v5559 = vmul.f32 %v5497, 1.442695
      %v5560 = vpow.pop %v5559
      %v5561 = vmul.f32 %v5498, 1.442695
      %v5562 = vpow.pop %v5561
      %v5563 = vadd.f32 %v5500, %v5502
      %5564 = vadd.xlane.f32.xlu0 %v5563
      %v5565 = vpop.xlane.xlu0 %5564
      %v5566 = vadd.f32 %v5504, %v5506
      %5567 = vadd.xlane.f32.xlu0 %v5566
      %v5568 = vpop.xlane.xlu0 %5567
      %v5569 = vadd.f32 %v5508, %v5510
      %5570 = vadd.xlane.f32.xlu0 %v5569
      %v5571 = vpop.xlane.xlu0 %5570
      %v5572 = vadd.f32 %v5512, %v5514
      %5573 = vadd.xlane.f32.xlu0 %v5572
      %v5574 = vpop.xlane.xlu0 %5573
      %v5575 = vadd.f32 %v5516, %v5518
      %5576 = vadd.xlane.f32.xlu0 %v5575
      %v5577 = vpop.xlane.xlu0 %5576
      %v5578 = vadd.f32 %v5520, %v5522
      %5579 = vadd.xlane.f32.xlu0 %v5578
      %v5580 = vpop.xlane.xlu0 %5579
      %v5581 = vadd.f32 %v5524, %v5526
      %5582 = vadd.xlane.f32.xlu0 %v5581
      %v5583 = vpop.xlane.xlu0 %5582
      %v5584 = vadd.f32 %v5528, %v5530
      %5585 = vadd.xlane.f32.xlu0 %v5584
      %v5586 = vpop.xlane.xlu0 %5585
      %v5587 = vadd.f32 %v5532, %v5534
      %5588 = vadd.xlane.f32.xlu0 %v5587
      %v5589 = vpop.xlane.xlu0 %5588
      %v5590 = vadd.f32 %v5536, %v5538
      %5591 = vadd.xlane.f32.xlu0 %v5590
      %v5592 = vpop.xlane.xlu0 %5591
      %v5593 = vadd.f32 %v5540, %v5542
      %5594 = vadd.xlane.f32.xlu0 %v5593
      %v5595 = vpop.xlane.xlu0 %5594
      %v5596 = vadd.f32 %v5544, %v5546
      %5597 = vadd.xlane.f32.xlu0 %v5596
      %v5598 = vpop.xlane.xlu0 %5597
      %v5599 = vadd.f32 %v5548, %v5550
      %5600 = vadd.xlane.f32.xlu0 %v5599
      %v5601 = vpop.xlane.xlu0 %5600
      %v5602 = vadd.f32 %v5552, %v5554
      %5603 = vadd.xlane.f32.xlu0 %v5602
      %v5604 = vpop.xlane.xlu0 %5603
      %v5605 = vadd.f32 %v5556, %v5558
      %5606 = vadd.xlane.f32.xlu0 %v5605
      %v5607 = vpop.xlane.xlu0 %5606
      %v5608 = vadd.f32 %v5560, %v5562
      %5609 = vadd.xlane.f32.xlu0 %v5608
      %v5610 = vpop.xlane.xlu0 %5609
      %v5611 = vpack.c.bf16 %v5504, %v5500
      %v5612 = vpack.c.bf16 %v5506, %v5502
      %v5613 = vpack.c.bf16 %v5512, %v5508
      %v5614 = vpack.c.bf16 %v5514, %v5510
      %v5615 = vpack.c.bf16 %v5520, %v5516
      %v5616 = vpack.c.bf16 %v5522, %v5518
      %v5617 = vpack.c.bf16 %v5528, %v5524
      %v5618 = vpack.c.bf16 %v5530, %v5526
      %v5619 = vpack.c.bf16 %v5536, %v5532
      %v5620 = vpack.c.bf16 %v5538, %v5534
      %v5621 = vpack.c.bf16 %v5544, %v5540
      %v5622 = vpack.c.bf16 %v5546, %v5542
      %v5623 = vpack.c.bf16 %v5552, %v5548
      %v5624 = vpack.c.bf16 %v5554, %v5550
      %v5625 = vpack.c.bf16 %v5560, %v5556
      %v5626 = vpack.c.bf16 %v5562, %v5558
      %v5631 = vunpack.c.l.b16 %v5245
      %v5632 = vunpack.c.h.b16 %v5245
      %v5633 = vunpack.c.l.b16 %v5246
      %v5634 = vunpack.c.h.b16 %v5246
      %v5635 = vunpack.c.l.b16 %v5247
      %v5636 = vunpack.c.h.b16 %v5247
      %v5637 = vunpack.c.l.b16 %v5248
      %v5638 = vunpack.c.h.b16 %v5248
      %v5639 = vpack.c.b16 %v5633, %v5631
      %v5640 = vpack.c.b16 %v5634, %v5632
      %v5641 = vpack.c.b16 %v5637, %v5635
      %v5642 = vpack.c.b16 %v5638, %v5636
      %5647 = vmatpush.bf16.xpose.msra.mxu0 0
      %5648 = vmatpush.bf16.xpose.msra.mxu0 0
      %5649 = vmatpush.bf16.xpose.msra.mxu0 0
      %5650 = vmatpush.bf16.xpose.msra.mxu0 0
      %5651 = vmatpush.bf16.xpose.msra.mxu0 0
      %5652 = vmatpush.bf16.xpose.msra.mxu0 0
      %5653 = vmatpush.bf16.xpose.msra.mxu0 %v5641
      %5654 = vmatpush.bf16.xpose.msra.mxu0 %v5639
      %5655 = vmatmul.bf16.gmra.mxu0 %v5611
      %v5656 = vpop.f32.mrf.mxu0
      %v5657 = vadd.f32 0.0, %v5656
      %v5658 = vpop.f32.mrf.mxu0
      %v5659 = vadd.f32 0.0, %v5658
      %5660 = vmatmul.bf16.gmra.mxu0 %v5613
      %v5661 = vpop.f32.mrf.mxu0
      %v5662 = vadd.f32 0.0, %v5661
      %v5663 = vpop.f32.mrf.mxu0
      %v5664 = vadd.f32 0.0, %v5663
      %5665 = vmatmul.bf16.gmra.mxu0 %v5615
      %v5666 = vpop.f32.mrf.mxu0
      %v5667 = vadd.f32 0.0, %v5666
      %v5668 = vpop.f32.mrf.mxu0
      %v5669 = vadd.f32 0.0, %v5668
      %5670 = vmatmul.bf16.gmra.mxu0 %v5617
      %v5671 = vpop.f32.mrf.mxu0
      %v5672 = vadd.f32 0.0, %v5671
      %v5673 = vpop.f32.mrf.mxu0
      %v5674 = vadd.f32 0.0, %v5673
      %5675 = vmatmul.bf16.gmra.mxu0 %v5619
      %v5676 = vpop.f32.mrf.mxu0
      %v5677 = vadd.f32 0.0, %v5676
      %v5678 = vpop.f32.mrf.mxu0
      %v5679 = vadd.f32 0.0, %v5678
      %5680 = vmatmul.bf16.gmra.mxu0 %v5621
      %v5681 = vpop.f32.mrf.mxu0
      %v5682 = vadd.f32 0.0, %v5681
      %v5683 = vpop.f32.mrf.mxu0
      %v5684 = vadd.f32 0.0, %v5683
      %5685 = vmatmul.bf16.gmra.mxu0 %v5623
      %v5686 = vpop.f32.mrf.mxu0
      %v5687 = vadd.f32 0.0, %v5686
      %v5688 = vpop.f32.mrf.mxu0
      %v5689 = vadd.f32 0.0, %v5688
      %5690 = vmatmul.bf16.gmra.mxu0 %v5625
      %v5691 = vpop.f32.mrf.mxu0
      %v5692 = vadd.f32 0.0, %v5691
      %v5693 = vpop.f32.mrf.mxu0
      %v5694 = vadd.f32 0.0, %v5693
      %5695 = vdwg.mxu0
      %5696 = vmatpush.bf16.xpose.msra.mxu0 0
      %5697 = vmatpush.bf16.xpose.msra.mxu0 0
      %5698 = vmatpush.bf16.xpose.msra.mxu0 0
      %5699 = vmatpush.bf16.xpose.msra.mxu0 0
      %5700 = vmatpush.bf16.xpose.msra.mxu0 0
      %5701 = vmatpush.bf16.xpose.msra.mxu0 0
      %5702 = vmatpush.bf16.xpose.msra.mxu0 %v5642
      %5703 = vmatpush.bf16.xpose.msra.mxu0 %v5640
      %5704 = vmatmul.bf16.gmra.mxu0 %v5612
      %v5705 = vpop.f32.mrf.mxu0
      %v5706 = vadd.f32 %v5657, %v5705
      %v5707 = vpop.f32.mrf.mxu0
      %v5708 = vadd.f32 %v5659, %v5707
      %5709 = vmatmul.bf16.gmra.mxu0 %v5614
      %v5710 = vpop.f32.mrf.mxu0
      %v5711 = vadd.f32 %v5662, %v5710
      %v5712 = vpop.f32.mrf.mxu0
      %v5713 = vadd.f32 %v5664, %v5712
      %5714 = vmatmul.bf16.gmra.mxu0 %v5616
      %v5715 = vpop.f32.mrf.mxu0
      %v5716 = vadd.f32 %v5667, %v5715
      %v5717 = vpop.f32.mrf.mxu0
      %v5718 = vadd.f32 %v5669, %v5717
      %5719 = vmatmul.bf16.gmra.mxu0 %v5618
      %v5720 = vpop.f32.mrf.mxu0
      %v5721 = vadd.f32 %v5672, %v5720
      %v5722 = vpop.f32.mrf.mxu0
      %v5723 = vadd.f32 %v5674, %v5722
      %5724 = vmatmul.bf16.gmra.mxu0 %v5620
      %v5725 = vpop.f32.mrf.mxu0
      %v5726 = vadd.f32 %v5677, %v5725
      %v5727 = vpop.f32.mrf.mxu0
      %v5728 = vadd.f32 %v5679, %v5727
      %5729 = vmatmul.bf16.gmra.mxu0 %v5622
      %v5730 = vpop.f32.mrf.mxu0
      %v5731 = vadd.f32 %v5682, %v5730
      %v5732 = vpop.f32.mrf.mxu0
      %v5733 = vadd.f32 %v5684, %v5732
      %5734 = vmatmul.bf16.gmra.mxu0 %v5624
      %v5735 = vpop.f32.mrf.mxu0
      %v5736 = vadd.f32 %v5687, %v5735
      %v5737 = vpop.f32.mrf.mxu0
      %v5738 = vadd.f32 %v5689, %v5737
      %5739 = vmatmul.bf16.gmra.mxu0 %v5626
      %v5740 = vpop.f32.mrf.mxu0
      %v5741 = vadd.f32 %v5692, %v5740
      %v5742 = vpop.f32.mrf.mxu0
      %v5743 = vadd.f32 %v5694, %v5742
      %5744 = vdwg.mxu0
      %v5745 = vrcp.pop %v5565
      %v5746 = vrcp.pop %v5568
      %v5747 = vrcp.pop %v5571
      %v5748 = vrcp.pop %v5574
      %v5749 = vrcp.pop %v5577
      %v5750 = vrcp.pop %v5580
      %v5751 = vrcp.pop %v5583
      %v5752 = vrcp.pop %v5586
      %v5753 = vrcp.pop %v5589
      %v5754 = vrcp.pop %v5592
      %v5755 = vrcp.pop %v5595
      %v5756 = vrcp.pop %v5598
      %v5757 = vrcp.pop %v5601
      %v5758 = vrcp.pop %v5604
      %v5759 = vrcp.pop %v5607
      %v5760 = vrcp.pop %v5610
      %v5761 = vmul.f32 %v5706, %v5745
      %v5762 = vmul.f32 %v5708, %v5746
      %v5763 = vmul.f32 %v5711, %v5747
      %v5764 = vmul.f32 %v5713, %v5748
      %v5765 = vmul.f32 %v5716, %v5749
      %v5766 = vmul.f32 %v5718, %v5750
      %v5767 = vmul.f32 %v5721, %v5751
      %v5768 = vmul.f32 %v5723, %v5752
      %v5769 = vmul.f32 %v5726, %v5753
      %v5770 = vmul.f32 %v5728, %v5754
      %v5771 = vmul.f32 %v5731, %v5755
      %v5772 = vmul.f32 %v5733, %v5756
      %v5773 = vmul.f32 %v5736, %v5757
      %v5774 = vmul.f32 %v5738, %v5758
      %v5775 = vmul.f32 %v5741, %v5759
      %v5776 = vmul.f32 %v5743, %v5760
      %v5777 = vadd.f32 %v5761, 0.0
      %v5778 = vadd.f32 %v5762, 0.0
      %v5779 = vadd.f32 %v5763, 0.0
      %v5780 = vadd.f32 %v5764, 0.0
      %v5781 = vadd.f32 %v5765, 0.0
      %v5782 = vadd.f32 %v5766, 0.0
      %v5783 = vadd.f32 %v5767, 0.0
      %v5784 = vadd.f32 %v5768, 0.0
      %v5785 = vadd.f32 %v5769, 0.0
      %v5786 = vadd.f32 %v5770, 0.0
      %v5787 = vadd.f32 %v5771, 0.0
      %v5788 = vadd.f32 %v5772, 0.0
      %v5789 = vadd.f32 %v5773, 0.0
      %v5790 = vadd.f32 %v5774, 0.0
      %v5791 = vadd.f32 %v5775, 0.0
      %v5792 = vadd.f32 %v5776, 0.0
      %v5793 = vld [vmem:[#allocation2 + $0x68] sm:$0xff]
      %v5794 = vld [vmem:[#allocation2 + $0x80] sm:$0xff]
      %v5795 = vld [vmem:[#allocation2 + $0x98] sm:$0xff]
      %v5796 = vld [vmem:[#allocation2 + $0xb0] sm:$0xff]
      %v5797 = vld [vmem:[#allocation2 + $0xc8] sm:$0xff]
      %v5798 = vld [vmem:[#allocation2 + $0xe0] sm:$0xff]
      %v5799 = vld [vmem:[#allocation2 + $0xf8] sm:$0xff]
      %v5800 = vld [vmem:[#allocation2 + $0x110] sm:$0xff]
      %v5805 = vunpack.c.l.b16 %v5793
      %v5806 = vunpack.c.h.b16 %v5793
      %v5807 = vunpack.c.l.b16 %v5794
      %v5808 = vunpack.c.h.b16 %v5794
      %v5809 = vunpack.c.l.b16 %v5795
      %v5810 = vunpack.c.h.b16 %v5795
      %v5811 = vunpack.c.l.b16 %v5796
      %v5812 = vunpack.c.h.b16 %v5796
      %v5813 = vpack.c.b16 %v5807, %v5805
      %v5814 = vpack.c.b16 %v5808, %v5806
      %v5815 = vpack.c.b16 %v5811, %v5809
      %v5816 = vpack.c.b16 %v5812, %v5810
      %5821 = vmatpush.bf16.msra.mxu0 0
      %5822 = vmatpush.bf16.msra.mxu0 0
      %5823 = vmatpush.bf16.msra.mxu0 0
      %5824 = vmatpush.bf16.msra.mxu0 0
      %5825 = vmatpush.bf16.msra.mxu0 0
      %5826 = vmatpush.bf16.msra.mxu0 0
      %5827 = vmatpush.bf16.msra.mxu0 %v5815
      %5828 = vmatpush.bf16.msra.mxu0 %v5813
      %5829 = vmatmul.bf16.gmra.mxu0 %v5298
      %v5830 = vpop.f32.mrf.mxu0
      %v5831 = vadd.f32 0.0, %v5830
      %v5832 = vpop.f32.mrf.mxu0
      %v5833 = vadd.f32 0.0, %v5832
      %5834 = vmatmul.bf16.gmra.mxu0 %v5301
      %v5835 = vpop.f32.mrf.mxu0
      %v5836 = vadd.f32 0.0, %v5835
      %v5837 = vpop.f32.mrf.mxu0
      %v5838 = vadd.f32 0.0, %v5837
      %5839 = vmatmul.bf16.gmra.mxu0 %v5304
      %v5840 = vpop.f32.mrf.mxu0
      %v5841 = vadd.f32 0.0, %v5840
      %v5842 = vpop.f32.mrf.mxu0
      %v5843 = vadd.f32 0.0, %v5842
      %5844 = vmatmul.bf16.gmra.mxu0 %v5307
      %v5845 = vpop.f32.mrf.mxu0
      %v5846 = vadd.f32 0.0, %v5845
      %v5847 = vpop.f32.mrf.mxu0
      %v5848 = vadd.f32 0.0, %v5847
      %5849 = vmatmul.bf16.gmra.mxu0 %v5310
      %v5850 = vpop.f32.mrf.mxu0
      %v5851 = vadd.f32 0.0, %v5850
      %v5852 = vpop.f32.mrf.mxu0
      %v5853 = vadd.f32 0.0, %v5852
      %5854 = vmatmul.bf16.gmra.mxu0 %v5313
      %v5855 = vpop.f32.mrf.mxu0
      %v5856 = vadd.f32 0.0, %v5855
      %v5857 = vpop.f32.mrf.mxu0
      %v5858 = vadd.f32 0.0, %v5857
      %5859 = vmatmul.bf16.gmra.mxu0 %v5316
      %v5860 = vpop.f32.mrf.mxu0
      %v5861 = vadd.f32 0.0, %v5860
      %v5862 = vpop.f32.mrf.mxu0
      %v5863 = vadd.f32 0.0, %v5862
      %5864 = vmatmul.bf16.gmra.mxu0 %v5319
      %v5865 = vpop.f32.mrf.mxu0
      %v5866 = vadd.f32 0.0, %v5865
      %v5867 = vpop.f32.mrf.mxu0
      %v5868 = vadd.f32 0.0, %v5867
      %5869 = vdwg.mxu0
      %5870 = vmatpush.bf16.msra.mxu0 0
      %5871 = vmatpush.bf16.msra.mxu0 0
      %5872 = vmatpush.bf16.msra.mxu0 0
      %5873 = vmatpush.bf16.msra.mxu0 0
      %5874 = vmatpush.bf16.msra.mxu0 0
      %5875 = vmatpush.bf16.msra.mxu0 0
      %5876 = vmatpush.bf16.msra.mxu0 %v5816
      %5877 = vmatpush.bf16.msra.mxu0 %v5814
      %5878 = vmatmul.bf16.gmra.mxu0 %v5298
      %v5879 = vpop.f32.mrf.mxu0
      %v5880 = vadd.f32 0.0, %v5879
      %v5881 = vpop.f32.mrf.mxu0
      %v5882 = vadd.f32 0.0, %v5881
      %5883 = vmatmul.bf16.gmra.mxu0 %v5301
      %v5884 = vpop.f32.mrf.mxu0
      %v5885 = vadd.f32 0.0, %v5884
      %v5886 = vpop.f32.mrf.mxu0
      %v5887 = vadd.f32 0.0, %v5886
      %5888 = vmatmul.bf16.gmra.mxu0 %v5304
      %v5889 = vpop.f32.mrf.mxu0
      %v5890 = vadd.f32 0.0, %v5889
      %v5891 = vpop.f32.mrf.mxu0
      %v5892 = vadd.f32 0.0, %v5891
      %5893 = vmatmul.bf16.gmra.mxu0 %v5307
      %v5894 = vpop.f32.mrf.mxu0
      %v5895 = vadd.f32 0.0, %v5894
      %v5896 = vpop.f32.mrf.mxu0
      %v5897 = vadd.f32 0.0, %v5896
      %5898 = vmatmul.bf16.gmra.mxu0 %v5310
      %v5899 = vpop.f32.mrf.mxu0
      %v5900 = vadd.f32 0.0, %v5899
      %v5901 = vpop.f32.mrf.mxu0
      %v5902 = vadd.f32 0.0, %v5901
      %5903 = vmatmul.bf16.gmra.mxu0 %v5313
      %v5904 = vpop.f32.mrf.mxu0
      %v5905 = vadd.f32 0.0, %v5904
      %v5906 = vpop.f32.mrf.mxu0
      %v5907 = vadd.f32 0.0, %v5906
      %5908 = vmatmul.bf16.gmra.mxu0 %v5316
      %v5909 = vpop.f32.mrf.mxu0
      %v5910 = vadd.f32 0.0, %v5909
      %v5911 = vpop.f32.mrf.mxu0
      %v5912 = vadd.f32 0.0, %v5911
      %5913 = vmatmul.bf16.gmra.mxu0 %v5319
      %v5914 = vpop.f32.mrf.mxu0
      %v5915 = vadd.f32 0.0, %v5914
      %v5916 = vpop.f32.mrf.mxu0
      %v5917 = vadd.f32 0.0, %v5916
      %5918 = vdwg.mxu0
      %v5919 = vmax.f32 %v5831, %v5880
      %5920 = vmax.xlane.f32.xlu0 %v5919
      %v5921 = vpop.xlane.xlu0 %5920
      %v5922 = vmax.f32 %v5833, %v5882
      %5923 = vmax.xlane.f32.xlu0 %v5922
      %v5924 = vpop.xlane.xlu0 %5923
      %v5925 = vmax.f32 %v5836, %v5885
      %5926 = vmax.xlane.f32.xlu0 %v5925
      %v5927 = vpop.xlane.xlu0 %5926
      %v5928 = vmax.f32 %v5838, %v5887
      %5929 = vmax.xlane.f32.xlu0 %v5928
      %v5930 = vpop.xlane.xlu0 %5929
      %v5931 = vmax.f32 %v5841, %v5890
      %5932 = vmax.xlane.f32.xlu0 %v5931
      %v5933 = vpop.xlane.xlu0 %5932
      %v5934 = vmax.f32 %v5843, %v5892
      %5935 = vmax.xlane.f32.xlu0 %v5934
      %v5936 = vpop.xlane.xlu0 %5935
      %v5937 = vmax.f32 %v5846, %v5895
      %5938 = vmax.xlane.f32.xlu0 %v5937
      %v5939 = vpop.xlane.xlu0 %5938
      %v5940 = vmax.f32 %v5848, %v5897
      %5941 = vmax.xlane.f32.xlu0 %v5940
      %v5942 = vpop.xlane.xlu0 %5941
      %v5943 = vmax.f32 %v5851, %v5900
      %5944 = vmax.xlane.f32.xlu0 %v5943
      %v5945 = vpop.xlane.xlu0 %5944
      %v5946 = vmax.f32 %v5853, %v5902
      %5947 = vmax.xlane.f32.xlu0 %v5946
      %v5948 = vpop.xlane.xlu0 %5947
      %v5949 = vmax.f32 %v5856, %v5905
      %5950 = vmax.xlane.f32.xlu0 %v5949
      %v5951 = vpop.xlane.xlu0 %5950
      %v5952 = vmax.f32 %v5858, %v5907
      %5953 = vmax.xlane.f32.xlu0 %v5952
      %v5954 = vpop.xlane.xlu0 %5953
      %v5955 = vmax.f32 %v5861, %v5910
      %5956 = vmax.xlane.f32.xlu0 %v5955
      %v5957 = vpop.xlane.xlu0 %5956
      %v5958 = vmax.f32 %v5863, %v5912
      %5959 = vmax.xlane.f32.xlu0 %v5958
      %v5960 = vpop.xlane.xlu0 %5959
      %v5961 = vmax.f32 %v5866, %v5915
      %5962 = vmax.xlane.f32.xlu0 %v5961
      %v5963 = vpop.xlane.xlu0 %5962
      %v5964 = vmax.f32 %v5868, %v5917
      %5965 = vmax.xlane.f32.xlu0 %v5964
      %v5966 = vpop.xlane.xlu0 %5965
      %v5967 = vsub.f32 %v5831, %v5921
      %v5968 = vsub.f32 %v5880, %v5921
      %v5969 = vsub.f32 %v5833, %v5924
      %v5970 = vsub.f32 %v5882, %v5924
      %v5971 = vsub.f32 %v5836, %v5927
      %v5972 = vsub.f32 %v5885, %v5927
      %v5973 = vsub.f32 %v5838, %v5930
      %v5974 = vsub.f32 %v5887, %v5930
      %v5975 = vsub.f32 %v5841, %v5933
      %v5976 = vsub.f32 %v5890, %v5933
      %v5977 = vsub.f32 %v5843, %v5936
      %v5978 = vsub.f32 %v5892, %v5936
      %v5979 = vsub.f32 %v5846, %v5939
      %v5980 = vsub.f32 %v5895, %v5939
      %v5981 = vsub.f32 %v5848, %v5942
      %v5982 = vsub.f32 %v5897, %v5942
      %v5983 = vsub.f32 %v5851, %v5945
      %v5984 = vsub.f32 %v5900, %v5945
      %v5985 = vsub.f32 %v5853, %v5948
      %v5986 = vsub.f32 %v5902, %v5948
      %v5987 = vsub.f32 %v5856, %v5951
      %v5988 = vsub.f32 %v5905, %v5951
      %v5989 = vsub.f32 %v5858, %v5954
      %v5990 = vsub.f32 %v5907, %v5954
      %v5991 = vsub.f32 %v5861, %v5957
      %v5992 = vsub.f32 %v5910, %v5957
      %v5993 = vsub.f32 %v5863, %v5960
      %v5994 = vsub.f32 %v5912, %v5960
      %v5995 = vsub.f32 %v5866, %v5963
      %v5996 = vsub.f32 %v5915, %v5963
      %v5997 = vsub.f32 %v5868, %v5966
      %v5998 = vsub.f32 %v5917, %v5966
      %v5999 = vmul.f32 %v5967, 1.442695
      %v6000 = vpow.pop %v5999
      %v6001 = vmul.f32 %v5968, 1.442695
      %v6002 = vpow.pop %v6001
      %v6003 = vmul.f32 %v5969, 1.442695
      %v6004 = vpow.pop %v6003
      %v6005 = vmul.f32 %v5970, 1.442695
      %v6006 = vpow.pop %v6005
      %v6007 = vmul.f32 %v5971, 1.442695
      %v6008 = vpow.pop %v6007
      %v6009 = vmul.f32 %v5972, 1.442695
      %v6010 = vpow.pop %v6009
      %v6011 = vmul.f32 %v5973, 1.442695
      %v6012 = vpow.pop %v6011
      %v6013 = vmul.f32 %v5974, 1.442695
      %v6014 = vpow.pop %v6013
      %v6015 = vmul.f32 %v5975, 1.442695
      %v6016 = vpow.pop %v6015
      %v6017 = vmul.f32 %v5976, 1.442695
      %v6018 = vpow.pop %v6017
      %v6019 = vmul.f32 %v5977, 1.442695
      %v6020 = vpow.pop %v6019
      %v6021 = vmul.f32 %v5978, 1.442695
      %v6022 = vpow.pop %v6021
      %v6023 = vmul.f32 %v5979, 1.442695
      %v6024 = vpow.pop %v6023
      %v6025 = vmul.f32 %v5980, 1.442695
      %v6026 = vpow.pop %v6025
      %v6027 = vmul.f32 %v5981, 1.442695
      %v6028 = vpow.pop %v6027
      %v6029 = vmul.f32 %v5982, 1.442695
      %v6030 = vpow.pop %v6029
      %v6031 = vmul.f32 %v5983, 1.442695
      %v6032 = vpow.pop %v6031
      %v6033 = vmul.f32 %v5984, 1.442695
      %v6034 = vpow.pop %v6033
      %v6035 = vmul.f32 %v5985, 1.442695
      %v6036 = vpow.pop %v6035
      %v6037 = vmul.f32 %v5986, 1.442695
      %v6038 = vpow.pop %v6037
      %v6039 = vmul.f32 %v5987, 1.442695
      %v6040 = vpow.pop %v6039
      %v6041 = vmul.f32 %v5988, 1.442695
      %v6042 = vpow.pop %v6041
      %v6043 = vmul.f32 %v5989, 1.442695
      %v6044 = vpow.pop %v6043
      %v6045 = vmul.f32 %v5990, 1.442695
      %v6046 = vpow.pop %v6045
      %v6047 = vmul.f32 %v5991, 1.442695
      %v6048 = vpow.pop %v6047
      %v6049 = vmul.f32 %v5992, 1.442695
      %v6050 = vpow.pop %v6049
      %v6051 = vmul.f32 %v5993, 1.442695
      %v6052 = vpow.pop %v6051
      %v6053 = vmul.f32 %v5994, 1.442695
      %v6054 = vpow.pop %v6053
      %v6055 = vmul.f32 %v5995, 1.442695
      %v6056 = vpow.pop %v6055
      %v6057 = vmul.f32 %v5996, 1.442695
      %v6058 = vpow.pop %v6057
      %v6059 = vmul.f32 %v5997, 1.442695
      %v6060 = vpow.pop %v6059
      %v6061 = vmul.f32 %v5998, 1.442695
      %v6062 = vpow.pop %v6061
      %v6063 = vadd.f32 %v6000, %v6002
      %6064 = vadd.xlane.f32.xlu0 %v6063
      %v6065 = vpop.xlane.xlu0 %6064
      %v6066 = vadd.f32 %v6004, %v6006
      %6067 = vadd.xlane.f32.xlu0 %v6066
      %v6068 = vpop.xlane.xlu0 %6067
      %v6069 = vadd.f32 %v6008, %v6010
      %6070 = vadd.xlane.f32.xlu0 %v6069
      %v6071 = vpop.xlane.xlu0 %6070
      %v6072 = vadd.f32 %v6012, %v6014
      %6073 = vadd.xlane.f32.xlu0 %v6072
      %v6074 = vpop.xlane.xlu0 %6073
      %v6075 = vadd.f32 %v6016, %v6018
      %6076 = vadd.xlane.f32.xlu0 %v6075
      %v6077 = vpop.xlane.xlu0 %6076
      %v6078 = vadd.f32 %v6020, %v6022
      %6079 = vadd.xlane.f32.xlu0 %v6078
      %v6080 = vpop.xlane.xlu0 %6079
      %v6081 = vadd.f32 %v6024, %v6026
      %6082 = vadd.xlane.f32.xlu0 %v6081
      %v6083 = vpop.xlane.xlu0 %6082
      %v6084 = vadd.f32 %v6028, %v6030
      %6085 = vadd.xlane.f32.xlu0 %v6084
      %v6086 = vpop.xlane.xlu0 %6085
      %v6087 = vadd.f32 %v6032, %v6034
      %6088 = vadd.xlane.f32.xlu0 %v6087
      %v6089 = vpop.xlane.xlu0 %6088
      %v6090 = vadd.f32 %v6036, %v6038
      %6091 = vadd.xlane.f32.xlu0 %v6090
      %v6092 = vpop.xlane.xlu0 %6091
      %v6093 = vadd.f32 %v6040, %v6042
      %6094 = vadd.xlane.f32.xlu0 %v6093
      %v6095 = vpop.xlane.xlu0 %6094
      %v6096 = vadd.f32 %v6044, %v6046
      %6097 = vadd.xlane.f32.xlu0 %v6096
      %v6098 = vpop.xlane.xlu0 %6097
      %v6099 = vadd.f32 %v6048, %v6050
      %6100 = vadd.xlane.f32.xlu0 %v6099
      %v6101 = vpop.xlane.xlu0 %6100
      %v6102 = vadd.f32 %v6052, %v6054
      %6103 = vadd.xlane.f32.xlu0 %v6102
      %v6104 = vpop.xlane.xlu0 %6103
      %v6105 = vadd.f32 %v6056, %v6058
      %6106 = vadd.xlane.f32.xlu0 %v6105
      %v6107 = vpop.xlane.xlu0 %6106
      %v6108 = vadd.f32 %v6060, %v6062
      %6109 = vadd.xlane.f32.xlu0 %v6108
      %v6110 = vpop.xlane.xlu0 %6109
      %v6111 = vpack.c.bf16 %v6004, %v6000
      %v6112 = vpack.c.bf16 %v6006, %v6002
      %v6113 = vpack.c.bf16 %v6012, %v6008
      %v6114 = vpack.c.bf16 %v6014, %v6010
      %v6115 = vpack.c.bf16 %v6020, %v6016
      %v6116 = vpack.c.bf16 %v6022, %v6018
      %v6117 = vpack.c.bf16 %v6028, %v6024
      %v6118 = vpack.c.bf16 %v6030, %v6026
      %v6119 = vpack.c.bf16 %v6036, %v6032
      %v6120 = vpack.c.bf16 %v6038, %v6034
      %v6121 = vpack.c.bf16 %v6044, %v6040
      %v6122 = vpack.c.bf16 %v6046, %v6042
      %v6123 = vpack.c.bf16 %v6052, %v6048
      %v6124 = vpack.c.bf16 %v6054, %v6050
      %v6125 = vpack.c.bf16 %v6060, %v6056
      %v6126 = vpack.c.bf16 %v6062, %v6058
      %v6131 = vunpack.c.l.b16 %v5797
      %v6132 = vunpack.c.h.b16 %v5797
      %v6133 = vunpack.c.l.b16 %v5798
      %v6134 = vunpack.c.h.b16 %v5798
      %v6135 = vunpack.c.l.b16 %v5799
      %v6136 = vunpack.c.h.b16 %v5799
      %v6137 = vunpack.c.l.b16 %v5800
      %v6138 = vunpack.c.h.b16 %v5800
      %v6139 = vpack.c.b16 %v6133, %v6131
      %v6140 = vpack.c.b16 %v6134, %v6132
      %v6141 = vpack.c.b16 %v6137, %v6135
      %v6142 = vpack.c.b16 %v6138, %v6136
      %6147 = vmatpush.bf16.xpose.msra.mxu0 0
      %6148 = vmatpush.bf16.xpose.msra.mxu0 0
      %6149 = vmatpush.bf16.xpose.msra.mxu0 0
      %6150 = vmatpush.bf16.xpose.msra.mxu0 0
      %6151 = vmatpush.bf16.xpose.msra.mxu0 0
      %6152 = vmatpush.bf16.xpose.msra.mxu0 0
      %6153 = vmatpush.bf16.xpose.msra.mxu0 %v6141
      %6154 = vmatpush.bf16.xpose.msra.mxu0 %v6139
      %6155 = vmatmul.bf16.gmra.mxu0 %v6111
      %v6156 = vpop.f32.mrf.mxu0
      %v6157 = vadd.f32 0.0, %v6156
      %v6158 = vpop.f32.mrf.mxu0
      %v6159 = vadd.f32 0.0, %v6158
      %6160 = vmatmul.bf16.gmra.mxu0 %v6113
      %v6161 = vpop.f32.mrf.mxu0
      %v6162 = vadd.f32 0.0, %v6161
      %v6163 = vpop.f32.mrf.mxu0
      %v6164 = vadd.f32 0.0, %v6163
      %6165 = vmatmul.bf16.gmra.mxu0 %v6115
      %v6166 = vpop.f32.mrf.mxu0
      %v6167 = vadd.f32 0.0, %v6166
      %v6168 = vpop.f32.mrf.mxu0
      %v6169 = vadd.f32 0.0, %v6168
      %6170 = vmatmul.bf16.gmra.mxu0 %v6117
      %v6171 = vpop.f32.mrf.mxu0
      %v6172 = vadd.f32 0.0, %v6171
      %v6173 = vpop.f32.mrf.mxu0
      %v6174 = vadd.f32 0.0, %v6173
      %6175 = vmatmul.bf16.gmra.mxu0 %v6119
      %v6176 = vpop.f32.mrf.mxu0
      %v6177 = vadd.f32 0.0, %v6176
      %v6178 = vpop.f32.mrf.mxu0
      %v6179 = vadd.f32 0.0, %v6178
      %6180 = vmatmul.bf16.gmra.mxu0 %v6121
      %v6181 = vpop.f32.mrf.mxu0
      %v6182 = vadd.f32 0.0, %v6181
      %v6183 = vpop.f32.mrf.mxu0
      %v6184 = vadd.f32 0.0, %v6183
      %6185 = vmatmul.bf16.gmra.mxu0 %v6123
      %v6186 = vpop.f32.mrf.mxu0
      %v6187 = vadd.f32 0.0, %v6186
      %v6188 = vpop.f32.mrf.mxu0
      %v6189 = vadd.f32 0.0, %v6188
      %6190 = vmatmul.bf16.gmra.mxu0 %v6125
      %v6191 = vpop.f32.mrf.mxu0
      %v6192 = vadd.f32 0.0, %v6191
      %v6193 = vpop.f32.mrf.mxu0
      %v6194 = vadd.f32 0.0, %v6193
      %6195 = vdwg.mxu0
      %6196 = vmatpush.bf16.xpose.msra.mxu0 0
      %6197 = vmatpush.bf16.xpose.msra.mxu0 0
      %6198 = vmatpush.bf16.xpose.msra.mxu0 0
      %6199 = vmatpush.bf16.xpose.msra.mxu0 0
      %6200 = vmatpush.bf16.xpose.msra.mxu0 0
      %6201 = vmatpush.bf16.xpose.msra.mxu0 0
      %6202 = vmatpush.bf16.xpose.msra.mxu0 %v6142
      %6203 = vmatpush.bf16.xpose.msra.mxu0 %v6140
      %6204 = vmatmul.bf16.gmra.mxu0 %v6112
      %v6205 = vpop.f32.mrf.mxu0
      %v6206 = vadd.f32 %v6157, %v6205
      %v6207 = vpop.f32.mrf.mxu0
      %v6208 = vadd.f32 %v6159, %v6207
      %6209 = vmatmul.bf16.gmra.mxu0 %v6114
      %v6210 = vpop.f32.mrf.mxu0
      %v6211 = vadd.f32 %v6162, %v6210
      %v6212 = vpop.f32.mrf.mxu0
      %v6213 = vadd.f32 %v6164, %v6212
      %6214 = vmatmul.bf16.gmra.mxu0 %v6116
      %v6215 = vpop.f32.mrf.mxu0
      %v6216 = vadd.f32 %v6167, %v6215
      %v6217 = vpop.f32.mrf.mxu0
      %v6218 = vadd.f32 %v6169, %v6217
      %6219 = vmatmul.bf16.gmra.mxu0 %v6118
      %v6220 = vpop.f32.mrf.mxu0
      %v6221 = vadd.f32 %v6172, %v6220
      %v6222 = vpop.f32.mrf.mxu0
      %v6223 = vadd.f32 %v6174, %v6222
      %6224 = vmatmul.bf16.gmra.mxu0 %v6120
      %v6225 = vpop.f32.mrf.mxu0
      %v6226 = vadd.f32 %v6177, %v6225
      %v6227 = vpop.f32.mrf.mxu0
      %v6228 = vadd.f32 %v6179, %v6227
      %6229 = vmatmul.bf16.gmra.mxu0 %v6122
      %v6230 = vpop.f32.mrf.mxu0
      %v6231 = vadd.f32 %v6182, %v6230
      %v6232 = vpop.f32.mrf.mxu0
      %v6233 = vadd.f32 %v6184, %v6232
      %6234 = vmatmul.bf16.gmra.mxu0 %v6124
      %v6235 = vpop.f32.mrf.mxu0
      %v6236 = vadd.f32 %v6187, %v6235
      %v6237 = vpop.f32.mrf.mxu0
      %v6238 = vadd.f32 %v6189, %v6237
      %6239 = vmatmul.bf16.gmra.mxu0 %v6126
      %v6240 = vpop.f32.mrf.mxu0
      %v6241 = vadd.f32 %v6192, %v6240
      %v6242 = vpop.f32.mrf.mxu0
      %v6243 = vadd.f32 %v6194, %v6242
      %6244 = vdwg.mxu0
      %v6245 = vrcp.pop %v6065
      %v6246 = vrcp.pop %v6068
      %v6247 = vrcp.pop %v6071
      %v6248 = vrcp.pop %v6074
      %v6249 = vrcp.pop %v6077
      %v6250 = vrcp.pop %v6080
      %v6251 = vrcp.pop %v6083
      %v6252 = vrcp.pop %v6086
      %v6253 = vrcp.pop %v6089
      %v6254 = vrcp.pop %v6092
      %v6255 = vrcp.pop %v6095
      %v6256 = vrcp.pop %v6098
      %v6257 = vrcp.pop %v6101
      %v6258 = vrcp.pop %v6104
      %v6259 = vrcp.pop %v6107
      %v6260 = vrcp.pop %v6110
      %v6261 = vmul.f32 %v6206, %v6245
      %v6262 = vmul.f32 %v6208, %v6246
      %v6263 = vmul.f32 %v6211, %v6247
      %v6264 = vmul.f32 %v6213, %v6248
      %v6265 = vmul.f32 %v6216, %v6249
      %v6266 = vmul.f32 %v6218, %v6250
      %v6267 = vmul.f32 %v6221, %v6251
      %v6268 = vmul.f32 %v6223, %v6252
      %v6269 = vmul.f32 %v6226, %v6253
      %v6270 = vmul.f32 %v6228, %v6254
      %v6271 = vmul.f32 %v6231, %v6255
      %v6272 = vmul.f32 %v6233, %v6256
      %v6273 = vmul.f32 %v6236, %v6257
      %v6274 = vmul.f32 %v6238, %v6258
      %v6275 = vmul.f32 %v6241, %v6259
      %v6276 = vmul.f32 %v6243, %v6260
      %v6277 = vadd.f32 %v5777, %v6261
      %v6278 = vadd.f32 %v5778, %v6262
      %v6279 = vadd.f32 %v5779, %v6263
      %v6280 = vadd.f32 %v5780, %v6264
      %v6281 = vadd.f32 %v5781, %v6265
      %v6282 = vadd.f32 %v5782, %v6266
      %v6283 = vadd.f32 %v5783, %v6267
      %v6284 = vadd.f32 %v5784, %v6268
      %v6285 = vadd.f32 %v5785, %v6269
      %v6286 = vadd.f32 %v5786, %v6270
      %v6287 = vadd.f32 %v5787, %v6271
      %v6288 = vadd.f32 %v5788, %v6272
      %v6289 = vadd.f32 %v5789, %v6273
      %v6290 = vadd.f32 %v5790, %v6274
      %v6291 = vadd.f32 %v5791, %v6275
      %v6292 = vadd.f32 %v5792, %v6276
      %v6293 = vpack.c.bf16 %v6278, %v6277
      %v6294 = vpack.c.bf16 %v6280, %v6279
      %v6295 = vpack.c.bf16 %v6282, %v6281
      %v6296 = vpack.c.bf16 %v6284, %v6283
      %v6297 = vpack.c.bf16 %v6286, %v6285
      %v6298 = vpack.c.bf16 %v6288, %v6287
      %v6299 = vpack.c.bf16 %v6290, %v6289
      %v6300 = vpack.c.bf16 %v6292, %v6291
      %v6302 = vsel %vm376, %v6293, 0
      %v6305 = vsel %vm376, %v6294, 0
      %v6308 = vsel %vm376, %v6295, 0
      %v6311 = vsel %vm376, %v6296, 0
      %v6314 = vsel %vm376, %v6297, 0
      %v6317 = vsel %vm376, %v6298, 0
      %v6320 = vsel %vm376, %v6299, 0
      %v6323 = vsel %vm376, %v6300, 0
      %6325 = vmatpush.bf16.xpose.msra.mxu0 %v6323
      %6326 = vmatpush.bf16.xpose.msra.mxu0 %v6320
      %6327 = vmatpush.bf16.xpose.msra.mxu0 %v6317
      %6328 = vmatpush.bf16.xpose.msra.mxu0 %v6314
      %6329 = vmatpush.bf16.xpose.msra.mxu0 %v6311
      %6330 = vmatpush.bf16.xpose.msra.mxu0 %v6308
      %6331 = vmatpush.bf16.xpose.msra.mxu0 %v6305
      %6332 = vmatpush.bf16.xpose.msra.mxu0 %v6302
      %6333 = vmatmul.bf16.gmra.mxu0 %v1784
      %v6334 = vpop.f32.mrf.mxu0
      %v6335 = vadd.f32 0.0, %v6334
      %v6336 = vpop.f32.mrf.mxu0
      %v6337 = vadd.f32 0.0, %v6336
      %6338 = vmatmul.bf16.gmra.mxu0 %v1787
      %v6339 = vpop.f32.mrf.mxu0
      %v6340 = vadd.f32 0.0, %v6339
      %v6341 = vpop.f32.mrf.mxu0
      %v6342 = vadd.f32 0.0, %v6341
      %6343 = vdwg.mxu0
      %v6344 = vld [vmem:[%s219 + $0x20] sm:$0xff]
      %v6345 = vld [vmem:[%s219 + $0x50] sm:$0xff]
      %v6346 = vld [vmem:[%s219 + $0x80] sm:$0xff]
      %v6347 = vld [vmem:[%s219 + $0xb0] sm:$0xff]
      %v6348 = vadd.f32 %v6344, %v6335
      %v6349 = vadd.f32 %v6345, %v6337
      %v6350 = vadd.f32 %v6346, %v6340
      %v6351 = vadd.f32 %v6347, %v6342
      %v6352 = vadd.f32 %v6348, %v1843
      %v6353 = vadd.f32 %v6349, %v1848
      %v6354 = vadd.f32 %v6350, %v1853
      %v6355 = vadd.f32 %v6351, %v1858
      %6356 = vst [vmem:[%s224 + $0x20] sm:$0xff] %v6352
      %6357 = vst [vmem:[%s224 + $0x50] sm:$0xff] %v6353
      %6358 = vst [vmem:[%s224 + $0x80] sm:$0xff] %v6354
      %6359 = vst [vmem:[%s224 + $0xb0] sm:$0xff] %v6355
      %v6360 = vld [vmem:[#allocation2 + $0x14] sm:$0xf]
      %v6361 = vld [vmem:[#allocation2 + $0x2c] sm:$0xf]
      %v6362 = vld [vmem:[#allocation2 + $0x44] sm:$0xf]
      %v6363 = vld [vmem:[#allocation2 + $0x5c] sm:$0xf]
      %v6364 = vld [vmem:[#allocation2 + $0x60] sm:$0xff]
      %v6365 = vld [vmem:[#allocation2 + $0x78] sm:$0xff]
      %v6366 = vld [vmem:[#allocation2 + $0x90] sm:$0xff]
      %v6367 = vld [vmem:[#allocation2 + $0xa8] sm:$0xff]
      %v6368 = vld [vmem:[#allocation2 + $0xc0] sm:$0xff]
      %v6369 = vld [vmem:[#allocation2 + $0xd8] sm:$0xff]
      %v6370 = vld [vmem:[#allocation2 + $0xf0] sm:$0xff]
      %v6371 = vld [vmem:[#allocation2 + $0x108] sm:$0xff]
      %v6376 = vunpack.c.l.b16 %v6360
      %v6377 = vunpack.c.l.b16 %v6361
      %v6378 = vunpack.c.l.b16 %v6362
      %v6379 = vunpack.c.l.b16 %v6363
      %v6380 = vpack.c.b16 %v6377, %v6376
      %v6381 = vpack.c.b16 %v6379, %v6378
      %6384 = vxpose.xlu0.c.b16.start [1/8] %v6380, 128
      %6385 = vxpose.xlu0.c.b16.cont [2/8] %v6381, 128
      %6386 = vxpose.xlu0.c.b16.cont [3/8] 0, 128
      %6387 = vxpose.xlu0.c.b16.cont [4/8] 0, 128
      %6388 = vxpose.xlu0.c.b16.cont [5/8] 0, 128
      %6389 = vxpose.xlu0.c.b16.cont [6/8] 0, 128
      %6390 = vxpose.xlu0.c.b16.cont [7/8] 0, 128
      %6391 = vxpose.xlu0.c.b16.end [8/8] 0, 128
      %v6392 = vpop.trf.xlu0
      %v6393 = vpop.trf.xlu0
      %v6394 = vpop.trf.xlu0
      %v6395 = vpop.trf.xlu0
      %v6396 = vpop.trf.xlu0
      %v6397 = vpop.trf.xlu0
      %v6398 = vpop.trf.xlu0
      %v6399 = vpop.trf.xlu0
      %v6404 = vunpack.c.l.b16 %v6364
      %v6405 = vunpack.c.h.b16 %v6364
      %v6406 = vunpack.c.l.b16 %v6365
      %v6407 = vunpack.c.h.b16 %v6365
      %v6408 = vunpack.c.l.b16 %v6366
      %v6409 = vunpack.c.h.b16 %v6366
      %v6410 = vunpack.c.l.b16 %v6367
      %v6411 = vunpack.c.h.b16 %v6367
      %v6412 = vpack.c.b16 %v6406, %v6404
      %v6413 = vpack.c.b16 %v6407, %v6405
      %v6414 = vpack.c.b16 %v6410, %v6408
      %v6415 = vpack.c.b16 %v6411, %v6409
      %v6421 = vsel %vm376, %v6392, 0
      %v6424 = vsel %vm376, %v6393, 0
      %v6427 = vsel %vm376, %v6394, 0
      %v6430 = vsel %vm376, %v6395, 0
      %v6433 = vsel %vm376, %v6396, 0
      %v6436 = vsel %vm376, %v6397, 0
      %v6439 = vsel %vm376, %v6398, 0
      %v6442 = vsel %vm376, %v6399, 0
      %6444 = vmatpush.bf16.msra.mxu0 0
      %6445 = vmatpush.bf16.msra.mxu0 0
      %6446 = vmatpush.bf16.msra.mxu0 0
      %6447 = vmatpush.bf16.msra.mxu0 0
      %6448 = vmatpush.bf16.msra.mxu0 0
      %6449 = vmatpush.bf16.msra.mxu0 0
      %6450 = vmatpush.bf16.msra.mxu0 %v6414
      %6451 = vmatpush.bf16.msra.mxu0 %v6412
      %6452 = vmatmul.bf16.gmra.mxu0 %v6421
      %v6453 = vpop.f32.mrf.mxu0
      %v6454 = vadd.f32 0.0, %v6453
      %v6455 = vpop.f32.mrf.mxu0
      %v6456 = vadd.f32 0.0, %v6455
      %6457 = vmatmul.bf16.gmra.mxu0 %v6424
      %v6458 = vpop.f32.mrf.mxu0
      %v6459 = vadd.f32 0.0, %v6458
      %v6460 = vpop.f32.mrf.mxu0
      %v6461 = vadd.f32 0.0, %v6460
      %6462 = vmatmul.bf16.gmra.mxu0 %v6427
      %v6463 = vpop.f32.mrf.mxu0
      %v6464 = vadd.f32 0.0, %v6463
      %v6465 = vpop.f32.mrf.mxu0
      %v6466 = vadd.f32 0.0, %v6465
      %6467 = vmatmul.bf16.gmra.mxu0 %v6430
      %v6468 = vpop.f32.mrf.mxu0
      %v6469 = vadd.f32 0.0, %v6468
      %v6470 = vpop.f32.mrf.mxu0
      %v6471 = vadd.f32 0.0, %v6470
      %6472 = vmatmul.bf16.gmra.mxu0 %v6433
      %v6473 = vpop.f32.mrf.mxu0
      %v6474 = vadd.f32 0.0, %v6473
      %v6475 = vpop.f32.mrf.mxu0
      %v6476 = vadd.f32 0.0, %v6475
      %6477 = vmatmul.bf16.gmra.mxu0 %v6436
      %v6478 = vpop.f32.mrf.mxu0
      %v6479 = vadd.f32 0.0, %v6478
      %v6480 = vpop.f32.mrf.mxu0
      %v6481 = vadd.f32 0.0, %v6480
      %6482 = vmatmul.bf16.gmra.mxu0 %v6439
      %v6483 = vpop.f32.mrf.mxu0
      %v6484 = vadd.f32 0.0, %v6483
      %v6485 = vpop.f32.mrf.mxu0
      %v6486 = vadd.f32 0.0, %v6485
      %6487 = vmatmul.bf16.gmra.mxu0 %v6442
      %v6488 = vpop.f32.mrf.mxu0
      %v6489 = vadd.f32 0.0, %v6488
      %v6490 = vpop.f32.mrf.mxu0
      %v6491 = vadd.f32 0.0, %v6490
      %6492 = vdwg.mxu0
      %6493 = vmatpush.bf16.msra.mxu0 0
      %6494 = vmatpush.bf16.msra.mxu0 0
      %6495 = vmatpush.bf16.msra.mxu0 0
      %6496 = vmatpush.bf16.msra.mxu0 0
      %6497 = vmatpush.bf16.msra.mxu0 0
      %6498 = vmatpush.bf16.msra.mxu0 0
      %6499 = vmatpush.bf16.msra.mxu0 %v6415
      %6500 = vmatpush.bf16.msra.mxu0 %v6413
      %6501 = vmatmul.bf16.gmra.mxu0 %v6421
      %v6502 = vpop.f32.mrf.mxu0
      %v6503 = vadd.f32 0.0, %v6502
      %v6504 = vpop.f32.mrf.mxu0
      %v6505 = vadd.f32 0.0, %v6504
      %6506 = vmatmul.bf16.gmra.mxu0 %v6424
      %v6507 = vpop.f32.mrf.mxu0
      %v6508 = vadd.f32 0.0, %v6507
      %v6509 = vpop.f32.mrf.mxu0
      %v6510 = vadd.f32 0.0, %v6509
      %6511 = vmatmul.bf16.gmra.mxu0 %v6427
      %v6512 = vpop.f32.mrf.mxu0
      %v6513 = vadd.f32 0.0, %v6512
      %v6514 = vpop.f32.mrf.mxu0
      %v6515 = vadd.f32 0.0, %v6514
      %6516 = vmatmul.bf16.gmra.mxu0 %v6430
      %v6517 = vpop.f32.mrf.mxu0
      %v6518 = vadd.f32 0.0, %v6517
      %v6519 = vpop.f32.mrf.mxu0
      %v6520 = vadd.f32 0.0, %v6519
      %6521 = vmatmul.bf16.gmra.mxu0 %v6433
      %v6522 = vpop.f32.mrf.mxu0
      %v6523 = vadd.f32 0.0, %v6522
      %v6524 = vpop.f32.mrf.mxu0
      %v6525 = vadd.f32 0.0, %v6524
      %6526 = vmatmul.bf16.gmra.mxu0 %v6436
      %v6527 = vpop.f32.mrf.mxu0
      %v6528 = vadd.f32 0.0, %v6527
      %v6529 = vpop.f32.mrf.mxu0
      %v6530 = vadd.f32 0.0, %v6529
      %6531 = vmatmul.bf16.gmra.mxu0 %v6439
      %v6532 = vpop.f32.mrf.mxu0
      %v6533 = vadd.f32 0.0, %v6532
      %v6534 = vpop.f32.mrf.mxu0
      %v6535 = vadd.f32 0.0, %v6534
      %6536 = vmatmul.bf16.gmra.mxu0 %v6442
      %v6537 = vpop.f32.mrf.mxu0
      %v6538 = vadd.f32 0.0, %v6537
      %v6539 = vpop.f32.mrf.mxu0
      %v6540 = vadd.f32 0.0, %v6539
      %6541 = vdwg.mxu0
      %v6542 = vmax.f32 %v6454, %v6503
      %6543 = vmax.xlane.f32.xlu0 %v6542
      %v6544 = vpop.xlane.xlu0 %6543
      %v6545 = vmax.f32 %v6456, %v6505
      %6546 = vmax.xlane.f32.xlu0 %v6545
      %v6547 = vpop.xlane.xlu0 %6546
      %v6548 = vmax.f32 %v6459, %v6508
      %6549 = vmax.xlane.f32.xlu0 %v6548
      %v6550 = vpop.xlane.xlu0 %6549
      %v6551 = vmax.f32 %v6461, %v6510
      %6552 = vmax.xlane.f32.xlu0 %v6551
      %v6553 = vpop.xlane.xlu0 %6552
      %v6554 = vmax.f32 %v6464, %v6513
      %6555 = vmax.xlane.f32.xlu0 %v6554
      %v6556 = vpop.xlane.xlu0 %6555
      %v6557 = vmax.f32 %v6466, %v6515
      %6558 = vmax.xlane.f32.xlu0 %v6557
      %v6559 = vpop.xlane.xlu0 %6558
      %v6560 = vmax.f32 %v6469, %v6518
      %6561 = vmax.xlane.f32.xlu0 %v6560
      %v6562 = vpop.xlane.xlu0 %6561
      %v6563 = vmax.f32 %v6471, %v6520
      %6564 = vmax.xlane.f32.xlu0 %v6563
      %v6565 = vpop.xlane.xlu0 %6564
      %v6566 = vmax.f32 %v6474, %v6523
      %6567 = vmax.xlane.f32.xlu0 %v6566
      %v6568 = vpop.xlane.xlu0 %6567
      %v6569 = vmax.f32 %v6476, %v6525
      %6570 = vmax.xlane.f32.xlu0 %v6569
      %v6571 = vpop.xlane.xlu0 %6570
      %v6572 = vmax.f32 %v6479, %v6528
      %6573 = vmax.xlane.f32.xlu0 %v6572
      %v6574 = vpop.xlane.xlu0 %6573
      %v6575 = vmax.f32 %v6481, %v6530
      %6576 = vmax.xlane.f32.xlu0 %v6575
      %v6577 = vpop.xlane.xlu0 %6576
      %v6578 = vmax.f32 %v6484, %v6533
      %6579 = vmax.xlane.f32.xlu0 %v6578
      %v6580 = vpop.xlane.xlu0 %6579
      %v6581 = vmax.f32 %v6486, %v6535
      %6582 = vmax.xlane.f32.xlu0 %v6581
      %v6583 = vpop.xlane.xlu0 %6582
      %v6584 = vmax.f32 %v6489, %v6538
      %6585 = vmax.xlane.f32.xlu0 %v6584
      %v6586 = vpop.xlane.xlu0 %6585
      %v6587 = vmax.f32 %v6491, %v6540
      %6588 = vmax.xlane.f32.xlu0 %v6587
      %v6589 = vpop.xlane.xlu0 %6588
      %v6590 = vsub.f32 %v6454, %v6544
      %v6591 = vsub.f32 %v6503, %v6544
      %v6592 = vsub.f32 %v6456, %v6547
      %v6593 = vsub.f32 %v6505, %v6547
      %v6594 = vsub.f32 %v6459, %v6550
      %v6595 = vsub.f32 %v6508, %v6550
      %v6596 = vsub.f32 %v6461, %v6553
      %v6597 = vsub.f32 %v6510, %v6553
      %v6598 = vsub.f32 %v6464, %v6556
      %v6599 = vsub.f32 %v6513, %v6556
      %v6600 = vsub.f32 %v6466, %v6559
      %v6601 = vsub.f32 %v6515, %v6559
      %v6602 = vsub.f32 %v6469, %v6562
      %v6603 = vsub.f32 %v6518, %v6562
      %v6604 = vsub.f32 %v6471, %v6565
      %v6605 = vsub.f32 %v6520, %v6565
      %v6606 = vsub.f32 %v6474, %v6568
      %v6607 = vsub.f32 %v6523, %v6568
      %v6608 = vsub.f32 %v6476, %v6571
      %v6609 = vsub.f32 %v6525, %v6571
      %v6610 = vsub.f32 %v6479, %v6574
      %v6611 = vsub.f32 %v6528, %v6574
      %v6612 = vsub.f32 %v6481, %v6577
      %v6613 = vsub.f32 %v6530, %v6577
      %v6614 = vsub.f32 %v6484, %v6580
      %v6615 = vsub.f32 %v6533, %v6580
      %v6616 = vsub.f32 %v6486, %v6583
      %v6617 = vsub.f32 %v6535, %v6583
      %v6618 = vsub.f32 %v6489, %v6586
      %v6619 = vsub.f32 %v6538, %v6586
      %v6620 = vsub.f32 %v6491, %v6589
      %v6621 = vsub.f32 %v6540, %v6589
      %v6622 = vmul.f32 %v6590, 1.442695
      %v6623 = vpow.pop %v6622
      %v6624 = vmul.f32 %v6591, 1.442695
      %v6625 = vpow.pop %v6624
      %v6626 = vmul.f32 %v6592, 1.442695
      %v6627 = vpow.pop %v6626
      %v6628 = vmul.f32 %v6593, 1.442695
      %v6629 = vpow.pop %v6628
      %v6630 = vmul.f32 %v6594, 1.442695
      %v6631 = vpow.pop %v6630
      %v6632 = vmul.f32 %v6595, 1.442695
      %v6633 = vpow.pop %v6632
      %v6634 = vmul.f32 %v6596, 1.442695
      %v6635 = vpow.pop %v6634
      %v6636 = vmul.f32 %v6597, 1.442695
      %v6637 = vpow.pop %v6636
      %v6638 = vmul.f32 %v6598, 1.442695
      %v6639 = vpow.pop %v6638
      %v6640 = vmul.f32 %v6599, 1.442695
      %v6641 = vpow.pop %v6640
      %v6642 = vmul.f32 %v6600, 1.442695
      %v6643 = vpow.pop %v6642
      %v6644 = vmul.f32 %v6601, 1.442695
      %v6645 = vpow.pop %v6644
      %v6646 = vmul.f32 %v6602, 1.442695
      %v6647 = vpow.pop %v6646
      %v6648 = vmul.f32 %v6603, 1.442695
      %v6649 = vpow.pop %v6648
      %v6650 = vmul.f32 %v6604, 1.442695
      %v6651 = vpow.pop %v6650
      %v6652 = vmul.f32 %v6605, 1.442695
      %v6653 = vpow.pop %v6652
      %v6654 = vmul.f32 %v6606, 1.442695
      %v6655 = vpow.pop %v6654
      %v6656 = vmul.f32 %v6607, 1.442695
      %v6657 = vpow.pop %v6656
      %v6658 = vmul.f32 %v6608, 1.442695
      %v6659 = vpow.pop %v6658
      %v6660 = vmul.f32 %v6609, 1.442695
      %v6661 = vpow.pop %v6660
      %v6662 = vmul.f32 %v6610, 1.442695
      %v6663 = vpow.pop %v6662
      %v6664 = vmul.f32 %v6611, 1.442695
      %v6665 = vpow.pop %v6664
      %v6666 = vmul.f32 %v6612, 1.442695
      %v6667 = vpow.pop %v6666
      %v6668 = vmul.f32 %v6613, 1.442695
      %v6669 = vpow.pop %v6668
      %v6670 = vmul.f32 %v6614, 1.442695
      %v6671 = vpow.pop %v6670
      %v6672 = vmul.f32 %v6615, 1.442695
      %v6673 = vpow.pop %v6672
      %v6674 = vmul.f32 %v6616, 1.442695
      %v6675 = vpow.pop %v6674
      %v6676 = vmul.f32 %v6617, 1.442695
      %v6677 = vpow.pop %v6676
      %v6678 = vmul.f32 %v6618, 1.442695
      %v6679 = vpow.pop %v6678
      %v6680 = vmul.f32 %v6619, 1.442695
      %v6681 = vpow.pop %v6680
      %v6682 = vmul.f32 %v6620, 1.442695
      %v6683 = vpow.pop %v6682
      %v6684 = vmul.f32 %v6621, 1.442695
      %v6685 = vpow.pop %v6684
      %v6686 = vadd.f32 %v6623, %v6625
      %6687 = vadd.xlane.f32.xlu0 %v6686
      %v6688 = vpop.xlane.xlu0 %6687
      %v6689 = vadd.f32 %v6627, %v6629
      %6690 = vadd.xlane.f32.xlu0 %v6689
      %v6691 = vpop.xlane.xlu0 %6690
      %v6692 = vadd.f32 %v6631, %v6633
      %6693 = vadd.xlane.f32.xlu0 %v6692
      %v6694 = vpop.xlane.xlu0 %6693
      %v6695 = vadd.f32 %v6635, %v6637
      %6696 = vadd.xlane.f32.xlu0 %v6695
      %v6697 = vpop.xlane.xlu0 %6696
      %v6698 = vadd.f32 %v6639, %v6641
      %6699 = vadd.xlane.f32.xlu0 %v6698
      %v6700 = vpop.xlane.xlu0 %6699
      %v6701 = vadd.f32 %v6643, %v6645
      %6702 = vadd.xlane.f32.xlu0 %v6701
      %v6703 = vpop.xlane.xlu0 %6702
      %v6704 = vadd.f32 %v6647, %v6649
      %6705 = vadd.xlane.f32.xlu0 %v6704
      %v6706 = vpop.xlane.xlu0 %6705
      %v6707 = vadd.f32 %v6651, %v6653
      %6708 = vadd.xlane.f32.xlu0 %v6707
      %v6709 = vpop.xlane.xlu0 %6708
      %v6710 = vadd.f32 %v6655, %v6657
      %6711 = vadd.xlane.f32.xlu0 %v6710
      %v6712 = vpop.xlane.xlu0 %6711
      %v6713 = vadd.f32 %v6659, %v6661
      %6714 = vadd.xlane.f32.xlu0 %v6713
      %v6715 = vpop.xlane.xlu0 %6714
      %v6716 = vadd.f32 %v6663, %v6665
      %6717 = vadd.xlane.f32.xlu0 %v6716
      %v6718 = vpop.xlane.xlu0 %6717
      %v6719 = vadd.f32 %v6667, %v6669
      %6720 = vadd.xlane.f32.xlu0 %v6719
      %v6721 = vpop.xlane.xlu0 %6720
      %v6722 = vadd.f32 %v6671, %v6673
      %6723 = vadd.xlane.f32.xlu0 %v6722
      %v6724 = vpop.xlane.xlu0 %6723
      %v6725 = vadd.f32 %v6675, %v6677
      %6726 = vadd.xlane.f32.xlu0 %v6725
      %v6727 = vpop.xlane.xlu0 %6726
      %v6728 = vadd.f32 %v6679, %v6681
      %6729 = vadd.xlane.f32.xlu0 %v6728
      %v6730 = vpop.xlane.xlu0 %6729
      %v6731 = vadd.f32 %v6683, %v6685
      %6732 = vadd.xlane.f32.xlu0 %v6731
      %v6733 = vpop.xlane.xlu0 %6732
      %v6734 = vpack.c.bf16 %v6627, %v6623
      %v6735 = vpack.c.bf16 %v6629, %v6625
      %v6736 = vpack.c.bf16 %v6635, %v6631
      %v6737 = vpack.c.bf16 %v6637, %v6633
      %v6738 = vpack.c.bf16 %v6643, %v6639
      %v6739 = vpack.c.bf16 %v6645, %v6641
      %v6740 = vpack.c.bf16 %v6651, %v6647
      %v6741 = vpack.c.bf16 %v6653, %v6649
      %v6742 = vpack.c.bf16 %v6659, %v6655
      %v6743 = vpack.c.bf16 %v6661, %v6657
      %v6744 = vpack.c.bf16 %v6667, %v6663
      %v6745 = vpack.c.bf16 %v6669, %v6665
      %v6746 = vpack.c.bf16 %v6675, %v6671
      %v6747 = vpack.c.bf16 %v6677, %v6673
      %v6748 = vpack.c.bf16 %v6683, %v6679
      %v6749 = vpack.c.bf16 %v6685, %v6681
      %v6754 = vunpack.c.l.b16 %v6368
      %v6755 = vunpack.c.h.b16 %v6368
      %v6756 = vunpack.c.l.b16 %v6369
      %v6757 = vunpack.c.h.b16 %v6369
      %v6758 = vunpack.c.l.b16 %v6370
      %v6759 = vunpack.c.h.b16 %v6370
      %v6760 = vunpack.c.l.b16 %v6371
      %v6761 = vunpack.c.h.b16 %v6371
      %v6762 = vpack.c.b16 %v6756, %v6754
      %v6763 = vpack.c.b16 %v6757, %v6755
      %v6764 = vpack.c.b16 %v6760, %v6758
      %v6765 = vpack.c.b16 %v6761, %v6759
      %6770 = vmatpush.bf16.xpose.msra.mxu0 0
      %6771 = vmatpush.bf16.xpose.msra.mxu0 0
      %6772 = vmatpush.bf16.xpose.msra.mxu0 0
      %6773 = vmatpush.bf16.xpose.msra.mxu0 0
      %6774 = vmatpush.bf16.xpose.msra.mxu0 0
      %6775 = vmatpush.bf16.xpose.msra.mxu0 0
      %6776 = vmatpush.bf16.xpose.msra.mxu0 %v6764
      %6777 = vmatpush.bf16.xpose.msra.mxu0 %v6762
      %6778 = vmatmul.bf16.gmra.mxu0 %v6734
      %v6779 = vpop.f32.mrf.mxu0
      %v6780 = vadd.f32 0.0, %v6779
      %v6781 = vpop.f32.mrf.mxu0
      %v6782 = vadd.f32 0.0, %v6781
      %6783 = vmatmul.bf16.gmra.mxu0 %v6736
      %v6784 = vpop.f32.mrf.mxu0
      %v6785 = vadd.f32 0.0, %v6784
      %v6786 = vpop.f32.mrf.mxu0
      %v6787 = vadd.f32 0.0, %v6786
      %6788 = vmatmul.bf16.gmra.mxu0 %v6738
      %v6789 = vpop.f32.mrf.mxu0
      %v6790 = vadd.f32 0.0, %v6789
      %v6791 = vpop.f32.mrf.mxu0
      %v6792 = vadd.f32 0.0, %v6791
      %6793 = vmatmul.bf16.gmra.mxu0 %v6740
      %v6794 = vpop.f32.mrf.mxu0
      %v6795 = vadd.f32 0.0, %v6794
      %v6796 = vpop.f32.mrf.mxu0
      %v6797 = vadd.f32 0.0, %v6796
      %6798 = vmatmul.bf16.gmra.mxu0 %v6742
      %v6799 = vpop.f32.mrf.mxu0
      %v6800 = vadd.f32 0.0, %v6799
      %v6801 = vpop.f32.mrf.mxu0
      %v6802 = vadd.f32 0.0, %v6801
      %6803 = vmatmul.bf16.gmra.mxu0 %v6744
      %v6804 = vpop.f32.mrf.mxu0
      %v6805 = vadd.f32 0.0, %v6804
      %v6806 = vpop.f32.mrf.mxu0
      %v6807 = vadd.f32 0.0, %v6806
      %6808 = vmatmul.bf16.gmra.mxu0 %v6746
      %v6809 = vpop.f32.mrf.mxu0
      %v6810 = vadd.f32 0.0, %v6809
      %v6811 = vpop.f32.mrf.mxu0
      %v6812 = vadd.f32 0.0, %v6811
      %6813 = vmatmul.bf16.gmra.mxu0 %v6748
      %v6814 = vpop.f32.mrf.mxu0
      %v6815 = vadd.f32 0.0, %v6814
      %v6816 = vpop.f32.mrf.mxu0
      %v6817 = vadd.f32 0.0, %v6816
      %6818 = vdwg.mxu0
      %6819 = vmatpush.bf16.xpose.msra.mxu0 0
      %6820 = vmatpush.bf16.xpose.msra.mxu0 0
      %6821 = vmatpush.bf16.xpose.msra.mxu0 0
      %6822 = vmatpush.bf16.xpose.msra.mxu0 0
      %6823 = vmatpush.bf16.xpose.msra.mxu0 0
      %6824 = vmatpush.bf16.xpose.msra.mxu0 0
      %6825 = vmatpush.bf16.xpose.msra.mxu0 %v6765
      %6826 = vmatpush.bf16.xpose.msra.mxu0 %v6763
      %6827 = vmatmul.bf16.gmra.mxu0 %v6735
      %v6828 = vpop.f32.mrf.mxu0
      %v6829 = vadd.f32 %v6780, %v6828
      %v6830 = vpop.f32.mrf.mxu0
      %v6831 = vadd.f32 %v6782, %v6830
      %6832 = vmatmul.bf16.gmra.mxu0 %v6737
      %v6833 = vpop.f32.mrf.mxu0
      %v6834 = vadd.f32 %v6785, %v6833
      %v6835 = vpop.f32.mrf.mxu0
      %v6836 = vadd.f32 %v6787, %v6835
      %6837 = vmatmul.bf16.gmra.mxu0 %v6739
      %v6838 = vpop.f32.mrf.mxu0
      %v6839 = vadd.f32 %v6790, %v6838
      %v6840 = vpop.f32.mrf.mxu0
      %v6841 = vadd.f32 %v6792, %v6840
      %6842 = vmatmul.bf16.gmra.mxu0 %v6741
      %v6843 = vpop.f32.mrf.mxu0
      %v6844 = vadd.f32 %v6795, %v6843
      %v6845 = vpop.f32.mrf.mxu0
      %v6846 = vadd.f32 %v6797, %v6845
      %6847 = vmatmul.bf16.gmra.mxu0 %v6743
      %v6848 = vpop.f32.mrf.mxu0
      %v6849 = vadd.f32 %v6800, %v6848
      %v6850 = vpop.f32.mrf.mxu0
      %v6851 = vadd.f32 %v6802, %v6850
      %6852 = vmatmul.bf16.gmra.mxu0 %v6745
      %v6853 = vpop.f32.mrf.mxu0
      %v6854 = vadd.f32 %v6805, %v6853
      %v6855 = vpop.f32.mrf.mxu0
      %v6856 = vadd.f32 %v6807, %v6855
      %6857 = vmatmul.bf16.gmra.mxu0 %v6747
      %v6858 = vpop.f32.mrf.mxu0
      %v6859 = vadd.f32 %v6810, %v6858
      %v6860 = vpop.f32.mrf.mxu0
      %v6861 = vadd.f32 %v6812, %v6860
      %6862 = vmatmul.bf16.gmra.mxu0 %v6749
      %v6863 = vpop.f32.mrf.mxu0
      %v6864 = vadd.f32 %v6815, %v6863
      %v6865 = vpop.f32.mrf.mxu0
      %v6866 = vadd.f32 %v6817, %v6865
      %6867 = vdwg.mxu0
      %v6868 = vrcp.pop %v6688
      %v6869 = vrcp.pop %v6691
      %v6870 = vrcp.pop %v6694
      %v6871 = vrcp.pop %v6697
      %v6872 = vrcp.pop %v6700
      %v6873 = vrcp.pop %v6703
      %v6874 = vrcp.pop %v6706
      %v6875 = vrcp.pop %v6709
      %v6876 = vrcp.pop %v6712
      %v6877 = vrcp.pop %v6715
      %v6878 = vrcp.pop %v6718
      %v6879 = vrcp.pop %v6721
      %v6880 = vrcp.pop %v6724
      %v6881 = vrcp.pop %v6727
      %v6882 = vrcp.pop %v6730
      %v6883 = vrcp.pop %v6733
      %v6884 = vmul.f32 %v6829, %v6868
      %v6885 = vmul.f32 %v6831, %v6869
      %v6886 = vmul.f32 %v6834, %v6870
      %v6887 = vmul.f32 %v6836, %v6871
      %v6888 = vmul.f32 %v6839, %v6872
      %v6889 = vmul.f32 %v6841, %v6873
      %v6890 = vmul.f32 %v6844, %v6874
      %v6891 = vmul.f32 %v6846, %v6875
      %v6892 = vmul.f32 %v6849, %v6876
      %v6893 = vmul.f32 %v6851, %v6877
      %v6894 = vmul.f32 %v6854, %v6878
      %v6895 = vmul.f32 %v6856, %v6879
      %v6896 = vmul.f32 %v6859, %v6880
      %v6897 = vmul.f32 %v6861, %v6881
      %v6898 = vmul.f32 %v6864, %v6882
      %v6899 = vmul.f32 %v6866, %v6883
      %v6900 = vadd.f32 %v6884, 0.0
      %v6901 = vadd.f32 %v6885, 0.0
      %v6902 = vadd.f32 %v6886, 0.0
      %v6903 = vadd.f32 %v6887, 0.0
      %v6904 = vadd.f32 %v6888, 0.0
      %v6905 = vadd.f32 %v6889, 0.0
      %v6906 = vadd.f32 %v6890, 0.0
      %v6907 = vadd.f32 %v6891, 0.0
      %v6908 = vadd.f32 %v6892, 0.0
      %v6909 = vadd.f32 %v6893, 0.0
      %v6910 = vadd.f32 %v6894, 0.0
      %v6911 = vadd.f32 %v6895, 0.0
      %v6912 = vadd.f32 %v6896, 0.0
      %v6913 = vadd.f32 %v6897, 0.0
      %v6914 = vadd.f32 %v6898, 0.0
      %v6915 = vadd.f32 %v6899, 0.0
      %v6916 = vld [vmem:[#allocation2 + $0x68] sm:$0xff]
      %v6917 = vld [vmem:[#allocation2 + $0x80] sm:$0xff]
      %v6918 = vld [vmem:[#allocation2 + $0x98] sm:$0xff]
      %v6919 = vld [vmem:[#allocation2 + $0xb0] sm:$0xff]
      %v6920 = vld [vmem:[#allocation2 + $0xc8] sm:$0xff]
      %v6921 = vld [vmem:[#allocation2 + $0xe0] sm:$0xff]
      %v6922 = vld [vmem:[#allocation2 + $0xf8] sm:$0xff]
      %v6923 = vld [vmem:[#allocation2 + $0x110] sm:$0xff]
      %v6928 = vunpack.c.l.b16 %v6916
      %v6929 = vunpack.c.h.b16 %v6916
      %v6930 = vunpack.c.l.b16 %v6917
      %v6931 = vunpack.c.h.b16 %v6917
      %v6932 = vunpack.c.l.b16 %v6918
      %v6933 = vunpack.c.h.b16 %v6918
      %v6934 = vunpack.c.l.b16 %v6919
      %v6935 = vunpack.c.h.b16 %v6919
      %v6936 = vpack.c.b16 %v6930, %v6928
      %v6937 = vpack.c.b16 %v6931, %v6929
      %v6938 = vpack.c.b16 %v6934, %v6932
      %v6939 = vpack.c.b16 %v6935, %v6933
      %6944 = vmatpush.bf16.msra.mxu0 0
      %6945 = vmatpush.bf16.msra.mxu0 0
      %6946 = vmatpush.bf16.msra.mxu0 0
      %6947 = vmatpush.bf16.msra.mxu0 0
      %6948 = vmatpush.bf16.msra.mxu0 0
      %6949 = vmatpush.bf16.msra.mxu0 0
      %6950 = vmatpush.bf16.msra.mxu0 %v6938
      %6951 = vmatpush.bf16.msra.mxu0 %v6936
      %6952 = vmatmul.bf16.gmra.mxu0 %v6421
      %v6953 = vpop.f32.mrf.mxu0
      %v6954 = vadd.f32 0.0, %v6953
      %v6955 = vpop.f32.mrf.mxu0
      %v6956 = vadd.f32 0.0, %v6955
      %6957 = vmatmul.bf16.gmra.mxu0 %v6424
      %v6958 = vpop.f32.mrf.mxu0
      %v6959 = vadd.f32 0.0, %v6958
      %v6960 = vpop.f32.mrf.mxu0
      %v6961 = vadd.f32 0.0, %v6960
      %6962 = vmatmul.bf16.gmra.mxu0 %v6427
      %v6963 = vpop.f32.mrf.mxu0
      %v6964 = vadd.f32 0.0, %v6963
      %v6965 = vpop.f32.mrf.mxu0
      %v6966 = vadd.f32 0.0, %v6965
      %6967 = vmatmul.bf16.gmra.mxu0 %v6430
      %v6968 = vpop.f32.mrf.mxu0
      %v6969 = vadd.f32 0.0, %v6968
      %v6970 = vpop.f32.mrf.mxu0
      %v6971 = vadd.f32 0.0, %v6970
      %6972 = vmatmul.bf16.gmra.mxu0 %v6433
      %v6973 = vpop.f32.mrf.mxu0
      %v6974 = vadd.f32 0.0, %v6973
      %v6975 = vpop.f32.mrf.mxu0
      %v6976 = vadd.f32 0.0, %v6975
      %6977 = vmatmul.bf16.gmra.mxu0 %v6436
      %v6978 = vpop.f32.mrf.mxu0
      %v6979 = vadd.f32 0.0, %v6978
      %v6980 = vpop.f32.mrf.mxu0
      %v6981 = vadd.f32 0.0, %v6980
      %6982 = vmatmul.bf16.gmra.mxu0 %v6439
      %v6983 = vpop.f32.mrf.mxu0
      %v6984 = vadd.f32 0.0, %v6983
      %v6985 = vpop.f32.mrf.mxu0
      %v6986 = vadd.f32 0.0, %v6985
      %6987 = vmatmul.bf16.gmra.mxu0 %v6442
      %v6988 = vpop.f32.mrf.mxu0
      %v6989 = vadd.f32 0.0, %v6988
      %v6990 = vpop.f32.mrf.mxu0
      %v6991 = vadd.f32 0.0, %v6990
      %6992 = vdwg.mxu0
      %6993 = vmatpush.bf16.msra.mxu0 0
      %6994 = vmatpush.bf16.msra.mxu0 0
      %6995 = vmatpush.bf16.msra.mxu0 0
      %6996 = vmatpush.bf16.msra.mxu0 0
      %6997 = vmatpush.bf16.msra.mxu0 0
      %6998 = vmatpush.bf16.msra.mxu0 0
      %6999 = vmatpush.bf16.msra.mxu0 %v6939
      %7000 = vmatpush.bf16.msra.mxu0 %v6937
      %7001 = vmatmul.bf16.gmra.mxu0 %v6421
      %v7002 = vpop.f32.mrf.mxu0
      %v7003 = vadd.f32 0.0, %v7002
      %v7004 = vpop.f32.mrf.mxu0
      %v7005 = vadd.f32 0.0, %v7004
      %7006 = vmatmul.bf16.gmra.mxu0 %v6424
      %v7007 = vpop.f32.mrf.mxu0
      %v7008 = vadd.f32 0.0, %v7007
      %v7009 = vpop.f32.mrf.mxu0
      %v7010 = vadd.f32 0.0, %v7009
      %7011 = vmatmul.bf16.gmra.mxu0 %v6427
      %v7012 = vpop.f32.mrf.mxu0
      %v7013 = vadd.f32 0.0, %v7012
      %v7014 = vpop.f32.mrf.mxu0
      %v7015 = vadd.f32 0.0, %v7014
      %7016 = vmatmul.bf16.gmra.mxu0 %v6430
      %v7017 = vpop.f32.mrf.mxu0
      %v7018 = vadd.f32 0.0, %v7017
      %v7019 = vpop.f32.mrf.mxu0
      %v7020 = vadd.f32 0.0, %v7019
      %7021 = vmatmul.bf16.gmra.mxu0 %v6433
      %v7022 = vpop.f32.mrf.mxu0
      %v7023 = vadd.f32 0.0, %v7022
      %v7024 = vpop.f32.mrf.mxu0
      %v7025 = vadd.f32 0.0, %v7024
      %7026 = vmatmul.bf16.gmra.mxu0 %v6436
      %v7027 = vpop.f32.mrf.mxu0
      %v7028 = vadd.f32 0.0, %v7027
      %v7029 = vpop.f32.mrf.mxu0
      %v7030 = vadd.f32 0.0, %v7029
      %7031 = vmatmul.bf16.gmra.mxu0 %v6439
      %v7032 = vpop.f32.mrf.mxu0
      %v7033 = vadd.f32 0.0, %v7032
      %v7034 = vpop.f32.mrf.mxu0
      %v7035 = vadd.f32 0.0, %v7034
      %7036 = vmatmul.bf16.gmra.mxu0 %v6442
      %v7037 = vpop.f32.mrf.mxu0
      %v7038 = vadd.f32 0.0, %v7037
      %v7039 = vpop.f32.mrf.mxu0
      %v7040 = vadd.f32 0.0, %v7039
      %7041 = vdwg.mxu0
      %v7042 = vmax.f32 %v6954, %v7003
      %7043 = vmax.xlane.f32.xlu0 %v7042
      %v7044 = vpop.xlane.xlu0 %7043
      %v7045 = vmax.f32 %v6956, %v7005
      %7046 = vmax.xlane.f32.xlu0 %v7045
      %v7047 = vpop.xlane.xlu0 %7046
      %v7048 = vmax.f32 %v6959, %v7008
      %7049 = vmax.xlane.f32.xlu0 %v7048
      %v7050 = vpop.xlane.xlu0 %7049
      %v7051 = vmax.f32 %v6961, %v7010
      %7052 = vmax.xlane.f32.xlu0 %v7051
      %v7053 = vpop.xlane.xlu0 %7052
      %v7054 = vmax.f32 %v6964, %v7013
      %7055 = vmax.xlane.f32.xlu0 %v7054
      %v7056 = vpop.xlane.xlu0 %7055
      %v7057 = vmax.f32 %v6966, %v7015
      %7058 = vmax.xlane.f32.xlu0 %v7057
      %v7059 = vpop.xlane.xlu0 %7058
      %v7060 = vmax.f32 %v6969, %v7018
      %7061 = vmax.xlane.f32.xlu0 %v7060
      %v7062 = vpop.xlane.xlu0 %7061
      %v7063 = vmax.f32 %v6971, %v7020
      %7064 = vmax.xlane.f32.xlu0 %v7063
      %v7065 = vpop.xlane.xlu0 %7064
      %v7066 = vmax.f32 %v6974, %v7023
      %7067 = vmax.xlane.f32.xlu0 %v7066
      %v7068 = vpop.xlane.xlu0 %7067
      %v7069 = vmax.f32 %v6976, %v7025
      %7070 = vmax.xlane.f32.xlu0 %v7069
      %v7071 = vpop.xlane.xlu0 %7070
      %v7072 = vmax.f32 %v6979, %v7028
      %7073 = vmax.xlane.f32.xlu0 %v7072
      %v7074 = vpop.xlane.xlu0 %7073
      %v7075 = vmax.f32 %v6981, %v7030
      %7076 = vmax.xlane.f32.xlu0 %v7075
      %v7077 = vpop.xlane.xlu0 %7076
      %v7078 = vmax.f32 %v6984, %v7033
      %7079 = vmax.xlane.f32.xlu0 %v7078
      %v7080 = vpop.xlane.xlu0 %7079
      %v7081 = vmax.f32 %v6986, %v7035
      %7082 = vmax.xlane.f32.xlu0 %v7081
      %v7083 = vpop.xlane.xlu0 %7082
      %v7084 = vmax.f32 %v6989, %v7038
      %7085 = vmax.xlane.f32.xlu0 %v7084
      %v7086 = vpop.xlane.xlu0 %7085
      %v7087 = vmax.f32 %v6991, %v7040
      %7088 = vmax.xlane.f32.xlu0 %v7087
      %v7089 = vpop.xlane.xlu0 %7088
      %v7090 = vsub.f32 %v6954, %v7044
      %v7091 = vsub.f32 %v7003, %v7044
      %v7092 = vsub.f32 %v6956, %v7047
      %v7093 = vsub.f32 %v7005, %v7047
      %v7094 = vsub.f32 %v6959, %v7050
      %v7095 = vsub.f32 %v7008, %v7050
      %v7096 = vsub.f32 %v6961, %v7053
      %v7097 = vsub.f32 %v7010, %v7053
      %v7098 = vsub.f32 %v6964, %v7056
      %v7099 = vsub.f32 %v7013, %v7056
      %v7100 = vsub.f32 %v6966, %v7059
      %v7101 = vsub.f32 %v7015, %v7059
      %v7102 = vsub.f32 %v6969, %v7062
      %v7103 = vsub.f32 %v7018, %v7062
      %v7104 = vsub.f32 %v6971, %v7065
      %v7105 = vsub.f32 %v7020, %v7065
      %v7106 = vsub.f32 %v6974, %v7068
      %v7107 = vsub.f32 %v7023, %v7068
      %v7108 = vsub.f32 %v6976, %v7071
      %v7109 = vsub.f32 %v7025, %v7071
      %v7110 = vsub.f32 %v6979, %v7074
      %v7111 = vsub.f32 %v7028, %v7074
      %v7112 = vsub.f32 %v6981, %v7077
      %v7113 = vsub.f32 %v7030, %v7077
      %v7114 = vsub.f32 %v6984, %v7080
      %v7115 = vsub.f32 %v7033, %v7080
      %v7116 = vsub.f32 %v6986, %v7083
      %v7117 = vsub.f32 %v7035, %v7083
      %v7118 = vsub.f32 %v6989, %v7086
      %v7119 = vsub.f32 %v7038, %v7086
      %v7120 = vsub.f32 %v6991, %v7089
      %v7121 = vsub.f32 %v7040, %v7089
      %v7122 = vmul.f32 %v7090, 1.442695
      %v7123 = vpow.pop %v7122
      %v7124 = vmul.f32 %v7091, 1.442695
      %v7125 = vpow.pop %v7124
      %v7126 = vmul.f32 %v7092, 1.442695
      %v7127 = vpow.pop %v7126
      %v7128 = vmul.f32 %v7093, 1.442695
      %v7129 = vpow.pop %v7128
      %v7130 = vmul.f32 %v7094, 1.442695
      %v7131 = vpow.pop %v7130
      %v7132 = vmul.f32 %v7095, 1.442695
      %v7133 = vpow.pop %v7132
      %v7134 = vmul.f32 %v7096, 1.442695
      %v7135 = vpow.pop %v7134
      %v7136 = vmul.f32 %v7097, 1.442695
      %v7137 = vpow.pop %v7136
      %v7138 = vmul.f32 %v7098, 1.442695
      %v7139 = vpow.pop %v7138
      %v7140 = vmul.f32 %v7099, 1.442695
      %v7141 = vpow.pop %v7140
      %v7142 = vmul.f32 %v7100, 1.442695
      %v7143 = vpow.pop %v7142
      %v7144 = vmul.f32 %v7101, 1.442695
      %v7145 = vpow.pop %v7144
      %v7146 = vmul.f32 %v7102, 1.442695
      %v7147 = vpow.pop %v7146
      %v7148 = vmul.f32 %v7103, 1.442695
      %v7149 = vpow.pop %v7148
      %v7150 = vmul.f32 %v7104, 1.442695
      %v7151 = vpow.pop %v7150
      %v7152 = vmul.f32 %v7105, 1.442695
      %v7153 = vpow.pop %v7152
      %v7154 = vmul.f32 %v7106, 1.442695
      %v7155 = vpow.pop %v7154
      %v7156 = vmul.f32 %v7107, 1.442695
      %v7157 = vpow.pop %v7156
      %v7158 = vmul.f32 %v7108, 1.442695
      %v7159 = vpow.pop %v7158
      %v7160 = vmul.f32 %v7109, 1.442695
      %v7161 = vpow.pop %v7160
      %v7162 = vmul.f32 %v7110, 1.442695
      %v7163 = vpow.pop %v7162
      %v7164 = vmul.f32 %v7111, 1.442695
      %v7165 = vpow.pop %v7164
      %v7166 = vmul.f32 %v7112, 1.442695
      %v7167 = vpow.pop %v7166
      %v7168 = vmul.f32 %v7113, 1.442695
      %v7169 = vpow.pop %v7168
      %v7170 = vmul.f32 %v7114, 1.442695
      %v7171 = vpow.pop %v7170
      %v7172 = vmul.f32 %v7115, 1.442695
      %v7173 = vpow.pop %v7172
      %v7174 = vmul.f32 %v7116, 1.442695
      %v7175 = vpow.pop %v7174
      %v7176 = vmul.f32 %v7117, 1.442695
      %v7177 = vpow.pop %v7176
      %v7178 = vmul.f32 %v7118, 1.442695
      %v7179 = vpow.pop %v7178
      %v7180 = vmul.f32 %v7119, 1.442695
      %v7181 = vpow.pop %v7180
      %v7182 = vmul.f32 %v7120, 1.442695
      %v7183 = vpow.pop %v7182
      %v7184 = vmul.f32 %v7121, 1.442695
      %v7185 = vpow.pop %v7184
      %v7186 = vadd.f32 %v7123, %v7125
      %7187 = vadd.xlane.f32.xlu0 %v7186
      %v7188 = vpop.xlane.xlu0 %7187
      %v7189 = vadd.f32 %v7127, %v7129
      %7190 = vadd.xlane.f32.xlu0 %v7189
      %v7191 = vpop.xlane.xlu0 %7190
      %v7192 = vadd.f32 %v7131, %v7133
      %7193 = vadd.xlane.f32.xlu0 %v7192
      %v7194 = vpop.xlane.xlu0 %7193
      %v7195 = vadd.f32 %v7135, %v7137
      %7196 = vadd.xlane.f32.xlu0 %v7195
      %v7197 = vpop.xlane.xlu0 %7196
      %v7198 = vadd.f32 %v7139, %v7141
      %7199 = vadd.xlane.f32.xlu0 %v7198
      %v7200 = vpop.xlane.xlu0 %7199
      %v7201 = vadd.f32 %v7143, %v7145
      %7202 = vadd.xlane.f32.xlu0 %v7201
      %v7203 = vpop.xlane.xlu0 %7202
      %v7204 = vadd.f32 %v7147, %v7149
      %7205 = vadd.xlane.f32.xlu0 %v7204
      %v7206 = vpop.xlane.xlu0 %7205
      %v7207 = vadd.f32 %v7151, %v7153
      %7208 = vadd.xlane.f32.xlu0 %v7207
      %v7209 = vpop.xlane.xlu0 %7208
      %v7210 = vadd.f32 %v7155, %v7157
      %7211 = vadd.xlane.f32.xlu0 %v7210
      %v7212 = vpop.xlane.xlu0 %7211
      %v7213 = vadd.f32 %v7159, %v7161
      %7214 = vadd.xlane.f32.xlu0 %v7213
      %v7215 = vpop.xlane.xlu0 %7214
      %v7216 = vadd.f32 %v7163, %v7165
      %7217 = vadd.xlane.f32.xlu0 %v7216
      %v7218 = vpop.xlane.xlu0 %7217
      %v7219 = vadd.f32 %v7167, %v7169
      %7220 = vadd.xlane.f32.xlu0 %v7219
      %v7221 = vpop.xlane.xlu0 %7220
      %v7222 = vadd.f32 %v7171, %v7173
      %7223 = vadd.xlane.f32.xlu0 %v7222
      %v7224 = vpop.xlane.xlu0 %7223
      %v7225 = vadd.f32 %v7175, %v7177
      %7226 = vadd.xlane.f32.xlu0 %v7225
      %v7227 = vpop.xlane.xlu0 %7226
      %v7228 = vadd.f32 %v7179, %v7181
      %7229 = vadd.xlane.f32.xlu0 %v7228
      %v7230 = vpop.xlane.xlu0 %7229
      %v7231 = vadd.f32 %v7183, %v7185
      %7232 = vadd.xlane.f32.xlu0 %v7231
      %v7233 = vpop.xlane.xlu0 %7232
      %v7234 = vpack.c.bf16 %v7127, %v7123
      %v7235 = vpack.c.bf16 %v7129, %v7125
      %v7236 = vpack.c.bf16 %v7135, %v7131
      %v7237 = vpack.c.bf16 %v7137, %v7133
      %v7238 = vpack.c.bf16 %v7143, %v7139
      %v7239 = vpack.c.bf16 %v7145, %v7141
      %v7240 = vpack.c.bf16 %v7151, %v7147
      %v7241 = vpack.c.bf16 %v7153, %v7149
      %v7242 = vpack.c.bf16 %v7159, %v7155
      %v7243 = vpack.c.bf16 %v7161, %v7157
      %v7244 = vpack.c.bf16 %v7167, %v7163
      %v7245 = vpack.c.bf16 %v7169, %v7165
      %v7246 = vpack.c.bf16 %v7175, %v7171
      %v7247 = vpack.c.bf16 %v7177, %v7173
      %v7248 = vpack.c.bf16 %v7183, %v7179
      %v7249 = vpack.c.bf16 %v7185, %v7181
      %v7254 = vunpack.c.l.b16 %v6920
      %v7255 = vunpack.c.h.b16 %v6920
      %v7256 = vunpack.c.l.b16 %v6921
      %v7257 = vunpack.c.h.b16 %v6921
      %v7258 = vunpack.c.l.b16 %v6922
      %v7259 = vunpack.c.h.b16 %v6922
      %v7260 = vunpack.c.l.b16 %v6923
      %v7261 = vunpack.c.h.b16 %v6923
      %v7262 = vpack.c.b16 %v7256, %v7254
      %v7263 = vpack.c.b16 %v7257, %v7255
      %v7264 = vpack.c.b16 %v7260, %v7258
      %v7265 = vpack.c.b16 %v7261, %v7259
      %7270 = vmatpush.bf16.xpose.msra.mxu0 0
      %7271 = vmatpush.bf16.xpose.msra.mxu0 0
      %7272 = vmatpush.bf16.xpose.msra.mxu0 0
      %7273 = vmatpush.bf16.xpose.msra.mxu0 0
      %7274 = vmatpush.bf16.xpose.msra.mxu0 0
      %7275 = vmatpush.bf16.xpose.msra.mxu0 0
      %7276 = vmatpush.bf16.xpose.msra.mxu0 %v7264
      %7277 = vmatpush.bf16.xpose.msra.mxu0 %v7262
      %7278 = vmatmul.bf16.gmra.mxu0 %v7234
      %v7279 = vpop.f32.mrf.mxu0
      %v7280 = vadd.f32 0.0, %v7279
      %v7281 = vpop.f32.mrf.mxu0
      %v7282 = vadd.f32 0.0, %v7281
      %7283 = vmatmul.bf16.gmra.mxu0 %v7236
      %v7284 = vpop.f32.mrf.mxu0
      %v7285 = vadd.f32 0.0, %v7284
      %v7286 = vpop.f32.mrf.mxu0
      %v7287 = vadd.f32 0.0, %v7286
      %7288 = vmatmul.bf16.gmra.mxu0 %v7238
      %v7289 = vpop.f32.mrf.mxu0
      %v7290 = vadd.f32 0.0, %v7289
      %v7291 = vpop.f32.mrf.mxu0
      %v7292 = vadd.f32 0.0, %v7291
      %7293 = vmatmul.bf16.gmra.mxu0 %v7240
      %v7294 = vpop.f32.mrf.mxu0
      %v7295 = vadd.f32 0.0, %v7294
      %v7296 = vpop.f32.mrf.mxu0
      %v7297 = vadd.f32 0.0, %v7296
      %7298 = vmatmul.bf16.gmra.mxu0 %v7242
      %v7299 = vpop.f32.mrf.mxu0
      %v7300 = vadd.f32 0.0, %v7299
      %v7301 = vpop.f32.mrf.mxu0
      %v7302 = vadd.f32 0.0, %v7301
      %7303 = vmatmul.bf16.gmra.mxu0 %v7244
      %v7304 = vpop.f32.mrf.mxu0
      %v7305 = vadd.f32 0.0, %v7304
      %v7306 = vpop.f32.mrf.mxu0
      %v7307 = vadd.f32 0.0, %v7306
      %7308 = vmatmul.bf16.gmra.mxu0 %v7246
      %v7309 = vpop.f32.mrf.mxu0
      %v7310 = vadd.f32 0.0, %v7309
      %v7311 = vpop.f32.mrf.mxu0
      %v7312 = vadd.f32 0.0, %v7311
      %7313 = vmatmul.bf16.gmra.mxu0 %v7248
      %v7314 = vpop.f32.mrf.mxu0
      %v7315 = vadd.f32 0.0, %v7314
      %v7316 = vpop.f32.mrf.mxu0
      %v7317 = vadd.f32 0.0, %v7316
      %7318 = vdwg.mxu0
      %7319 = vmatpush.bf16.xpose.msra.mxu0 0
      %7320 = vmatpush.bf16.xpose.msra.mxu0 0
      %7321 = vmatpush.bf16.xpose.msra.mxu0 0
      %7322 = vmatpush.bf16.xpose.msra.mxu0 0
      %7323 = vmatpush.bf16.xpose.msra.mxu0 0
      %7324 = vmatpush.bf16.xpose.msra.mxu0 0
      %7325 = vmatpush.bf16.xpose.msra.mxu0 %v7265
      %7326 = vmatpush.bf16.xpose.msra.mxu0 %v7263
      %7327 = vmatmul.bf16.gmra.mxu0 %v7235
      %v7328 = vpop.f32.mrf.mxu0
      %v7329 = vadd.f32 %v7280, %v7328
      %v7330 = vpop.f32.mrf.mxu0
      %v7331 = vadd.f32 %v7282, %v7330
      %7332 = vmatmul.bf16.gmra.mxu0 %v7237
      %v7333 = vpop.f32.mrf.mxu0
      %v7334 = vadd.f32 %v7285, %v7333
      %v7335 = vpop.f32.mrf.mxu0
      %v7336 = vadd.f32 %v7287, %v7335
      %7337 = vmatmul.bf16.gmra.mxu0 %v7239
      %v7338 = vpop.f32.mrf.mxu0
      %v7339 = vadd.f32 %v7290, %v7338
      %v7340 = vpop.f32.mrf.mxu0
      %v7341 = vadd.f32 %v7292, %v7340
      %7342 = vmatmul.bf16.gmra.mxu0 %v7241
      %v7343 = vpop.f32.mrf.mxu0
      %v7344 = vadd.f32 %v7295, %v7343
      %v7345 = vpop.f32.mrf.mxu0
      %v7346 = vadd.f32 %v7297, %v7345
      %7347 = vmatmul.bf16.gmra.mxu0 %v7243
      %v7348 = vpop.f32.mrf.mxu0
      %v7349 = vadd.f32 %v7300, %v7348
      %v7350 = vpop.f32.mrf.mxu0
      %v7351 = vadd.f32 %v7302, %v7350
      %7352 = vmatmul.bf16.gmra.mxu0 %v7245
      %v7353 = vpop.f32.mrf.mxu0
      %v7354 = vadd.f32 %v7305, %v7353
      %v7355 = vpop.f32.mrf.mxu0
      %v7356 = vadd.f32 %v7307, %v7355
      %7357 = vmatmul.bf16.gmra.mxu0 %v7247
      %v7358 = vpop.f32.mrf.mxu0
      %v7359 = vadd.f32 %v7310, %v7358
      %v7360 = vpop.f32.mrf.mxu0
      %v7361 = vadd.f32 %v7312, %v7360
      %7362 = vmatmul.bf16.gmra.mxu0 %v7249
      %v7363 = vpop.f32.mrf.mxu0
      %v7364 = vadd.f32 %v7315, %v7363
      %v7365 = vpop.f32.mrf.mxu0
      %v7366 = vadd.f32 %v7317, %v7365
      %7367 = vdwg.mxu0
      %v7368 = vrcp.pop %v7188
      %v7369 = vrcp.pop %v7191
      %v7370 = vrcp.pop %v7194
      %v7371 = vrcp.pop %v7197
      %v7372 = vrcp.pop %v7200
      %v7373 = vrcp.pop %v7203
      %v7374 = vrcp.pop %v7206
      %v7375 = vrcp.pop %v7209
      %v7376 = vrcp.pop %v7212
      %v7377 = vrcp.pop %v7215
      %v7378 = vrcp.pop %v7218
      %v7379 = vrcp.pop %v7221
      %v7380 = vrcp.pop %v7224
      %v7381 = vrcp.pop %v7227
      %v7382 = vrcp.pop %v7230
      %v7383 = vrcp.pop %v7233
      %v7384 = vmul.f32 %v7329, %v7368
      %v7385 = vmul.f32 %v7331, %v7369
      %v7386 = vmul.f32 %v7334, %v7370
      %v7387 = vmul.f32 %v7336, %v7371
      %v7388 = vmul.f32 %v7339, %v7372
      %v7389 = vmul.f32 %v7341, %v7373
      %v7390 = vmul.f32 %v7344, %v7374
      %v7391 = vmul.f32 %v7346, %v7375
      %v7392 = vmul.f32 %v7349, %v7376
      %v7393 = vmul.f32 %v7351, %v7377
      %v7394 = vmul.f32 %v7354, %v7378
      %v7395 = vmul.f32 %v7356, %v7379
      %v7396 = vmul.f32 %v7359, %v7380
      %v7397 = vmul.f32 %v7361, %v7381
      %v7398 = vmul.f32 %v7364, %v7382
      %v7399 = vmul.f32 %v7366, %v7383
      %v7400 = vadd.f32 %v6900, %v7384
      %v7401 = vadd.f32 %v6901, %v7385
      %v7402 = vadd.f32 %v6902, %v7386
      %v7403 = vadd.f32 %v6903, %v7387
      %v7404 = vadd.f32 %v6904, %v7388
      %v7405 = vadd.f32 %v6905, %v7389
      %v7406 = vadd.f32 %v6906, %v7390
      %v7407 = vadd.f32 %v6907, %v7391
      %v7408 = vadd.f32 %v6908, %v7392
      %v7409 = vadd.f32 %v6909, %v7393
      %v7410 = vadd.f32 %v6910, %v7394
      %v7411 = vadd.f32 %v6911, %v7395
      %v7412 = vadd.f32 %v6912, %v7396
      %v7413 = vadd.f32 %v6913, %v7397
      %v7414 = vadd.f32 %v6914, %v7398
      %v7415 = vadd.f32 %v6915, %v7399
      %v7416 = vpack.c.bf16 %v7401, %v7400
      %v7417 = vpack.c.bf16 %v7403, %v7402
      %v7418 = vpack.c.bf16 %v7405, %v7404
      %v7419 = vpack.c.bf16 %v7407, %v7406
      %v7420 = vpack.c.bf16 %v7409, %v7408
      %v7421 = vpack.c.bf16 %v7411, %v7410
      %v7422 = vpack.c.bf16 %v7413, %v7412
      %v7423 = vpack.c.bf16 %v7415, %v7414
      %v7425 = vsel %vm376, %v7416, 0
      %v7428 = vsel %vm376, %v7417, 0
      %v7431 = vsel %vm376, %v7418, 0
      %v7434 = vsel %vm376, %v7419, 0
      %v7437 = vsel %vm376, %v7420, 0
      %v7440 = vsel %vm376, %v7421, 0
      %v7443 = vsel %vm376, %v7422, 0
      %v7446 = vsel %vm376, %v7423, 0
      %7448 = vmatpush.bf16.xpose.msra.mxu0 %v7446
      %7449 = vmatpush.bf16.xpose.msra.mxu0 %v7443
      %7450 = vmatpush.bf16.xpose.msra.mxu0 %v7440
      %7451 = vmatpush.bf16.xpose.msra.mxu0 %v7437
      %7452 = vmatpush.bf16.xpose.msra.mxu0 %v7434
      %7453 = vmatpush.bf16.xpose.msra.mxu0 %v7431
      %7454 = vmatpush.bf16.xpose.msra.mxu0 %v7428
      %7455 = vmatpush.bf16.xpose.msra.mxu0 %v7425
      %7456 = vmatmul.bf16.gmra.mxu0 %v1784
      %v7457 = vpop.f32.mrf.mxu0
      %v7458 = vadd.f32 0.0, %v7457
      %v7459 = vpop.f32.mrf.mxu0
      %v7460 = vadd.f32 0.0, %v7459
      %7461 = vmatmul.bf16.gmra.mxu0 %v1787
      %v7462 = vpop.f32.mrf.mxu0
      %v7463 = vadd.f32 0.0, %v7462
      %v7464 = vpop.f32.mrf.mxu0
      %v7465 = vadd.f32 0.0, %v7464
      %7466 = vdwg.mxu0
      %v7467 = vld [vmem:[%s219 + $0x28] sm:$0xff]
      %v7468 = vld [vmem:[%s219 + $0x58] sm:$0xff]
      %v7469 = vld [vmem:[%s219 + $0x88] sm:$0xff]
      %v7470 = vld [vmem:[%s219 + $0xb8] sm:$0xff]
      %v7471 = vadd.f32 %v7467, %v7458
      %v7472 = vadd.f32 %v7468, %v7460
      %v7473 = vadd.f32 %v7469, %v7463
      %v7474 = vadd.f32 %v7470, %v7465
      %v7475 = vadd.f32 %v7471, %v1843
      %v7476 = vadd.f32 %v7472, %v1848
      %v7477 = vadd.f32 %v7473, %v1853
      %v7478 = vadd.f32 %v7474, %v1858
      %7479 = vst [vmem:[%s224 + $0x28] sm:$0xff] %v7475
      %7480 = vst [vmem:[%s224 + $0x58] sm:$0xff] %v7476
      %7481 = vst [vmem:[%s224 + $0x88] sm:$0xff] %v7477
      %7482 = vst [vmem:[%s224 + $0xb8] sm:$0xff] %v7478
      %p7483 = scmp.lt.s32.totalorder %s16, 1
      %s7484 = scalar_select %p7483, %s16, 1
      %s7485 = smul.addr %s7484, 24
      %s7486 = smul.addr %s7485, 8
      %s7487 = scalar_lea.vmem %s5, %s7486
      // Predicated region
      $region41: #{cross_modal_attention.1} parent=39 // pred_check
        %p7488 = pneg %p144
      $region42: #{cross_modal_attention.1} parent=39 // pred_check_branch
        %7490 = sbr.rel (%p7488) target = $region44
      $region43: #{cross_modal_attention.1} parent=39 // pred_region
        _
      $region44: #{cross_modal_attention.1} parent=39 // pred_fallthru
        _
    $region40: #{cross_modal_attention.1} parent=5 // pred_fallthru
      _
    %p7491 = scmp.le.s32.totalorder 2, %s11
    // Predicated region
    $region45: #{cross_modal_attention.1} parent=5 // pred_check
      %p7492 = pneg %p7491
    $region46: #{cross_modal_attention.1} parent=5 // pred_check_branch
      %7494 = sbr.rel (%p7492) target = $region48
    $region47: #{cross_modal_attention.1} parent=5 // pred_region
      %s7495 = ssub.s32 %s11, 2
      // Predicated region
      $region49: #{cross_modal_attention.1} parent=47 // pred_check
        %p7496 = pneg %p150
      $region50: #{cross_modal_attention.1} parent=47 // pred_check_branch
        %7498 = sbr.rel (%p7496) target = $region52
      $region51: #{cross_modal_attention.1} parent=47 // pred_region
        %p7499 = scmp.lt.s32.totalorder %s17, 1
        %s7500 = scalar_select %p7499, %s17, 1
        %s7501 = smul.addr %s7500, 24
        %s7502 = smul.addr %s7501, 8
        %s7503 = scalar_lea.vmem %s5, %s7502
      $region52: #{cross_modal_attention.1} parent=47 // pred_fallthru
        _
    $region48: #{cross_modal_attention.1} parent=5 // pred_fallthru
      _
  $region6: #{cross_modal_attention.1} parent=0 // loop_footer
    %s15 = sadd.s32 1, %s11
  $region7: #{cross_modal_attention.1} parent=0 // loop_footer_branch
    %10 = sbr.rel target = $region3
  $region8: #{cross_modal_attention.1} parent=0 // loop_exit
    _

</llo_original>
